<compile_context>
chip_gen: v6e
topology: v6e:2x2x1
jax: 0.10.0
libtpu: 0.0.40
codegen_flags: <defaults>
</compile_context>

<pallas_src>
import functools
import numpy as np
import jax
import jax.numpy as jnp
from jax import lax
from jax.experimental import pallas as pl
from jax.experimental.pallas import tpu as pltpu

NEG_SLOPE = 0.01   # PyTorch nn.LeakyReLU / F.leaky_relu default
CP = 128           # lane padding for channels / features
POOL = 8           # AdaptiveAvgPool2d output side
KS = 3             # conv kernel size


def _leaky(x):
    return jnp.where(x >= 0, x, NEG_SLOPE * x)


# ------------------------------ fused kernel ---------------------------------
def _dqn_kernel(x_ref, w1_ref, b1_ref, w2_ref, b2_ref, w3_ref, b3_ref,
                qf_ref, w1r_ref, fb1_ref, w3fc_ref, fb3_ref,
                out_ref, p1_ref, p2_ref, *, H, W, C3, PNP):
    HW = H * W

    def conv3x3(in_ref, w_ref, b_ref):
        # valid 3x3 conv as 9 shifted full-plane GEMMs, channels-last, f32 acc.
        acc = jnp.zeros((HW, CP), jnp.float32)
        for ky in range(KS):
            for kx in range(KS):
                s = ky * W + kx
                acc = acc + jnp.dot(in_ref[s:s + HW, :], w_ref[ky * KS + kx],
                                    preferred_element_type=jnp.float32)
        return _leaky(acc + b_ref[...])

    # keep the shift-padding rows of the scratch planes at exact zero
    zpad = jnp.zeros((PNP - HW, CP), jnp.float32)
    p1_ref[HW:PNP, :] = zpad
    p2_ref[HW:PNP, :] = zpad

    p1_ref[0:HW, :] = conv3x3(x_ref, w1_ref, b1_ref)     # conv1 + leaky
    p2_ref[0:HW, :] = conv3x3(p1_ref, w2_ref, b2_ref)    # conv2 + leaky
    z3 = conv3x3(p2_ref, w3_ref, b3_ref)                 # conv3 + leaky, (HW, CP)

    # AdaptiveAvgPool2d((8,8)): exact bin weights, zero on invalid plane rows.
    pooled = jnp.dot(qf_ref[...], z3, preferred_element_type=jnp.float32)  # (64, CP)
    pooled_t = pooled.T                                  # (CP, 64): rows=channel, cols=pool pos

    # fc1 (Linear 1024->64): sum over real channels of (1,64)@(64,128) GEMMs.
    acc1 = jnp.zeros((1, CP), jnp.float32)
    for c in range(C3):
        acc1 = acc1 + jnp.dot(pooled_t[c:c + 1, :], w1r_ref[c],
                              preferred_element_type=jnp.float32)
    z1 = _leaky(acc1 + fb1_ref[...])                     # (1, CP)

    # fc3 (Linear 64->outputs), lane-padded to 128.
    out = jnp.dot(z1, w3fc_ref[...], preferred_element_type=jnp.float32) + fb3_ref[...]
    out_ref[0, :, :] = jnp.broadcast_to(out, (8, CP))


# ------------------------------ wrapper / glue --------------------------------
def _adaptive_pool_matrix(in_size, out_size):
    """Exact nn.AdaptiveAvgPool2d bin weights (numpy, trace-time constant)."""
    P = np.zeros((out_size, in_size), np.float32)
    for i in range(out_size):
        s = (i * in_size) // out_size
        e = -(-((i + 1) * in_size) // out_size)   # ceil
        P[i, s:e] = 1.0 / (e - s)
    return P


def _round_up(v, m):
    return (v + m - 1) // m * m


def _conv_weight_planes(w):
    # torch (Cout, Cin, 3, 3) -> (9, CP, CP) with [ky*3+kx, cin, cout], zero padded.
    cout, cin = int(w.shape[0]), int(w.shape[1])
    wk = jnp.transpose(w, (2, 3, 1, 0)).reshape(KS * KS, cin, cout)
    return jnp.pad(wk, ((0, 0), (0, CP - cin), (0, CP - cout)))


def _row_pad(v):
    return jnp.pad(v.reshape(1, -1), ((0, 0), (0, CP - v.shape[0])))


def dqn_forward(x, params):
    """x: (B, 6, H, W) NCHW float32 -> (B, outputs). Single fused Pallas kernel."""
    B, cin, H, W = x.shape
    H3, W3 = H - 6, W - 6                 # spatial size after the three valid convs
    HW = H * W
    PNP = _round_up(HW + 2 * W + 2, 8)    # plane rows + shift padding
    C3 = int(params['w3'].shape[0])       # channels entering pool/flatten (16)
    n_out = int(params['fc3_w'].shape[0])
    assert C3 * POOL * POOL == params['fc1_w'].shape[1]

    # activations: NCHW -> channels-last planes (B*PNP, CP), zero padded
    xp = jnp.transpose(x, (0, 2, 3, 1)).reshape(B, HW, cin)
    xp = jnp.pad(xp, ((0, 0), (0, PNP - HW), (0, CP - cin))).reshape(B * PNP, CP)

    # weights re-laid out once (cheap XLA glue under jit)
    w1p = _conv_weight_planes(params['w1']); b1p = _row_pad(params['b1'])
    w2p = _conv_weight_planes(params['w2']); b2p = _row_pad(params['b2'])
    w3p = _conv_weight_planes(params['w3']); b3p = _row_pad(params['b3'])

    # exact AdaptiveAvgPool2d((8,8)) weights over the full H*W plane (trace-time const)
    ph = _adaptive_pool_matrix(H3, POOL)
    pw = _adaptive_pool_matrix(W3, POOL)
    qf_np = np.zeros((POOL * POOL, HW), np.float32)
    for i in range(POOL):
        for j in range(POOL):
            blk = np.zeros((H, W), np.float32)
            blk[:H3, :W3] = np.outer(ph[i], pw[j])
            qf_np[i * POOL + j] = blk.reshape(-1)
    qf = jnp.asarray(qf_np)                                       # (64, HW)

    # fc1: (64, C3*64) -> (C3, 64, CP) with [c, p, o] (flatten order c*64+p)
    w1r = params['fc1_w'].reshape(64, C3, POOL * POOL).transpose(1, 2, 0)
    w1r = jnp.pad(w1r, ((0, 0), (0, 0), (0, CP - 64)))
    fb1 = _row_pad(params['fc1_b'])
    # fc3: (n_out, 64) -> (CP, CP) with [in, out]
    w3fc = jnp.pad(params['fc3_w'].T, ((0, CP - 64), (0, CP - n_out)))
    fb3 = _row_pad(params['fc3_b'])

    kern = functools.partial(_dqn_kernel, H=H, W=W, C3=C3, PNP=PNP)
    out = pl.pallas_call(
        kern,
        grid=(B,),
        in_specs=[
            pl.BlockSpec((PNP, CP), lambda b: (b, 0)),            # x plane (per batch)
            pl.BlockSpec((KS * KS, CP, CP), lambda b: (0, 0, 0)), # conv1 w
            pl.BlockSpec((1, CP), lambda b: (0, 0)),              # conv1 b
            pl.BlockSpec((KS * KS, CP, CP), lambda b: (0, 0, 0)), # conv2 w
            pl.BlockSpec((1, CP), lambda b: (0, 0)),              # conv2 b
            pl.BlockSpec((KS * KS, CP, CP), lambda b: (0, 0, 0)), # conv3 w
            pl.BlockSpec((1, CP), lambda b: (0, 0)),              # conv3 b
            pl.BlockSpec((POOL * POOL, HW), lambda b: (0, 0)),    # pool matrix
            pl.BlockSpec((C3, POOL * POOL, CP), lambda b: (0, 0, 0)),  # fc1 w (c,p,o)
            pl.BlockSpec((1, CP), lambda b: (0, 0)),              # fc1 b
            pl.BlockSpec((CP, CP), lambda b: (0, 0)),             # fc3 w
            pl.BlockSpec((1, CP), lambda b: (0, 0)),              # fc3 b
        ],
        out_specs=pl.BlockSpec((1, 8, CP), lambda b: (b, 0, 0)),
        out_shape=jax.ShapeDtypeStruct((B, 8, CP), jnp.float32),
        scratch_shapes=[pltpu.VMEM((PNP, CP), jnp.float32),       # conv1 output plane
                        pltpu.VMEM((PNP, CP), jnp.float32)],      # conv2 output plane
        compiler_params=pltpu.CompilerParams(
            dimension_semantics=("parallel",)),                   # 2 TCs on v7x
    )(xp, w1p, b1p, w2p, b2p, w3p, b3p, qf, w1r, fb1, w3fc, fb3)
    # TODO(synk): for large replay batches (>~256) tile the per-step plane further
    # and set vmem_limit_bytes explicitly; not needed at these toy sizes.
    return out[:, 0, :n_out]


# --------------------------- pure-JAX reference -------------------------------
def reference_forward(x, params):
    z = x
    for w, b in ((params['w1'], params['b1']),
                 (params['w2'], params['b2']),
                 (params['w3'], params['b3'])):
        z = lax.conv_general_dilated(z, w, (1, 1), 'VALID',
                                     dimension_numbers=('NCHW', 'OIHW', 'NCHW'))
        z = z + b[None, :, None, None]
        z = jnp.where(z >= 0, z, NEG_SLOPE * z)
    Ph = jnp.asarray(_adaptive_pool_matrix(z.shape[2], POOL))
    Pw = jnp.asarray(_adaptive_pool_matrix(z.shape[3], POOL))
    z = jnp.einsum('bchw,ih,jw->bcij', z, Ph, Pw)
    z = z.reshape(z.shape[0], -1)
    z = z @ params['fc1_w'].T + params['fc1_b']
    z = jnp.where(z >= 0, z, NEG_SLOPE * z)
    return z @ params['fc3_w'].T + params['fc3_b']


# ---------------------------------- main --------------------------------------
if __name__ == "__main__":
    outputs = 5
    key = jax.random.PRNGKey(0)
    ks = jax.random.split(key, 11)
    params = dict(
        w1=0.10 * jax.random.normal(ks[0], (16, 6, 3, 3), jnp.float32),
        b1=0.10 * jax.random.normal(ks[1], (16,), jnp.float32),
        w2=0.10 * jax.random.normal(ks[2], (32, 16, 3, 3), jnp.float32),
        b2=0.10 * jax.random.normal(ks[3], (32,), jnp.float32),
        w3=0.10 * jax.random.normal(ks[4], (16, 32, 3, 3), jnp.float32),
        b3=0.10 * jax.random.normal(ks[5], (16,), jnp.float32),
        fc1_w=0.05 * jax.random.normal(ks[6], (64, 1024), jnp.float32),
        fc1_b=0.05 * jax.random.normal(ks[7], (64,), jnp.float32),
        fc3_w=0.05 * jax.random.normal(ks[8], (outputs, 64), jnp.float32),
        fc3_b=0.05 * jax.random.normal(ks[9], (outputs,), jnp.float32),
    )
    # NCHW input, 6 channels; 16x16 spatial -> 14 -> 12 -> 10 -> adaptive pool 8x8.
    x = jax.random.normal(ks[10], (2, 6, 16, 16), jnp.float32)

    fwd = jax.jit(dqn_forward)
    out = jax.block_until_ready(fwd(x, params))
    ref = reference_forward(x, params)
    assert out.shape == (2, outputs)
    err = float(jnp.max(jnp.abs(out - ref)))
    assert err < 1e-2, f"mismatch vs reference: max abs err {err}"
    print("KERNEL_OK")
</pallas_src>

<mosaic_0001>
module attributes {stable_mosaic.version = 11 : i64} {
  func.func @_dqn_kernel(%arg0: i32, %arg1: memref<296x128xf32, #tpu.memory_space<vmem>>, %arg2: memref<9x128x128xf32, #tpu.memory_space<vmem>>, %arg3: memref<1x128xf32, #tpu.memory_space<vmem>>, %arg4: memref<9x128x128xf32, #tpu.memory_space<vmem>>, %arg5: memref<1x128xf32, #tpu.memory_space<vmem>>, %arg6: memref<9x128x128xf32, #tpu.memory_space<vmem>>, %arg7: memref<1x128xf32, #tpu.memory_space<vmem>>, %arg8: memref<64x256xf32, #tpu.memory_space<vmem>>, %arg9: memref<16x64x128xf32, #tpu.memory_space<vmem>>, %arg10: memref<1x128xf32, #tpu.memory_space<vmem>>, %arg11: memref<128x128xf32, #tpu.memory_space<vmem>>, %arg12: memref<1x128xf32, #tpu.memory_space<vmem>>, %arg13: memref<1x8x128xf32, #tpu.memory_space<vmem>>, %arg14: memref<296x128xf32, #tpu.memory_space<vmem>>, %arg15: memref<296x128xf32, #tpu.memory_space<vmem>>) attributes {dimension_semantics = [#tpu.dimension_semantics<parallel>], iteration_bounds = array<i64: 2>, scalar_prefetch = 0 : i64, scratch_operands = 2 : i64, tpu.core_type = #tpu.core_type<tc>, window_params = [{transform_indices = @transform_0, window_bounds = array<i64: 296, 128>}, {pipeline_mode = #tpu.pipeline_mode<synchronous>, transform_indices = @transform_1, window_bounds = array<i64: 9, 128, 128>}, {pipeline_mode = #tpu.pipeline_mode<synchronous>, transform_indices = @transform_2, window_bounds = array<i64: 1, 128>}, {pipeline_mode = #tpu.pipeline_mode<synchronous>, transform_indices = @transform_3, window_bounds = array<i64: 9, 128, 128>}, {pipeline_mode = #tpu.pipeline_mode<synchronous>, transform_indices = @transform_4, window_bounds = array<i64: 1, 128>}, {pipeline_mode = #tpu.pipeline_mode<synchronous>, transform_indices = @transform_5, window_bounds = array<i64: 9, 128, 128>}, {pipeline_mode = #tpu.pipeline_mode<synchronous>, transform_indices = @transform_6, window_bounds = array<i64: 1, 128>}, {pipeline_mode = #tpu.pipeline_mode<synchronous>, transform_indices = @transform_7, window_bounds = array<i64: 64, 256>}, {pipeline_mode = #tpu.pipeline_mode<synchronous>, transform_indices = @transform_8, window_bounds = array<i64: 16, 64, 128>}, {pipeline_mode = #tpu.pipeline_mode<synchronous>, transform_indices = @transform_9, window_bounds = array<i64: 1, 128>}, {pipeline_mode = #tpu.pipeline_mode<synchronous>, transform_indices = @transform_10, window_bounds = array<i64: 128, 128>}, {pipeline_mode = #tpu.pipeline_mode<synchronous>, transform_indices = @transform_11, window_bounds = array<i64: 1, 128>}, {transform_indices = @transform_12, window_bounds = array<i64: 1, 8, 128>}]} {
    %cst = arith.constant 0.000000e+00 : f32
    %0 = vector.broadcast %cst : f32 to vector<40x128xf32>
    %c256 = arith.constant 256 : index
    %c0 = arith.constant 0 : index
    %1 = vector.load %arg14[%c256, %c0] : memref<296x128xf32, #tpu.memory_space<vmem>>, vector<40x128xf32>
    tpu.vector_store %arg14[%c256, %c0], %0 {strides = array<i32>} : memref<296x128xf32, #tpu.memory_space<vmem>>, vector<40x128xf32>,
    %c256_0 = arith.constant 256 : index
    %c0_1 = arith.constant 0 : index
    %2 = vector.load %arg15[%c256_0, %c0_1] : memref<296x128xf32, #tpu.memory_space<vmem>>, vector<40x128xf32>
    tpu.vector_store %arg15[%c256_0, %c0_1], %0 {strides = array<i32>} : memref<296x128xf32, #tpu.memory_space<vmem>>, vector<40x128xf32>,
    %cst_2 = arith.constant 0.000000e+00 : f32
    %3 = vector.broadcast %cst_2 : f32 to vector<256x128xf32>
    %c0_3 = arith.constant 0 : index
    %c0_4 = arith.constant 0 : index
    %4 = vector.load %arg1[%c0_3, %c0_4] : memref<296x128xf32, #tpu.memory_space<vmem>>, vector<256x128xf32>
    %c0_5 = arith.constant 0 : index
    %c0_6 = arith.constant 0 : index
    %c0_7 = arith.constant 0 : index
    %5 = vector.load %arg2[%c0_5, %c0_6, %c0_7] : memref<9x128x128xf32, #tpu.memory_space<vmem>>, vector<1x128x128xf32>
    %6 = vector.shape_cast %5 : vector<1x128x128xf32> to vector<128x128xf32>
    %cst_8 = arith.constant dense<0.000000e+00> : vector<256x128xf32>
    %7 = tpu.matmul %4, %6, %cst_8 {dimension_numbers = #tpu.dot_dimension_numbers<[1], [0], [0], [1], [0, 0, 1, 1], [], []>} : vector<256x128xf32>, vector<128x128xf32>, vector<256x128xf32> -> vector<256x128xf32>
    %8 = arith.addf %3, %7 : vector<256x128xf32>
    %c1 = arith.constant 1 : index
    %c0_9 = arith.constant 0 : index
    %9 = vector.load %arg1[%c1, %c0_9] : memref<296x128xf32, #tpu.memory_space<vmem>>, vector<256x128xf32>
    %c1_10 = arith.constant 1 : index
    %c0_11 = arith.constant 0 : index
    %c0_12 = arith.constant 0 : index
    %10 = vector.load %arg2[%c1_10, %c0_11, %c0_12] : memref<9x128x128xf32, #tpu.memory_space<vmem>>, vector<1x128x128xf32>
    %11 = vector.shape_cast %10 : vector<1x128x128xf32> to vector<128x128xf32>
    %cst_13 = arith.constant dense<0.000000e+00> : vector<256x128xf32>
    %12 = tpu.matmul %9, %11, %cst_13 {dimension_numbers = #tpu.dot_dimension_numbers<[1], [0], [0], [1], [0, 0, 1, 1], [], []>} : vector<256x128xf32>, vector<128x128xf32>, vector<256x128xf32> -> vector<256x128xf32>
    %13 = arith.addf %8, %12 : vector<256x128xf32>
    %c2 = arith.constant 2 : index
    %c0_14 = arith.constant 0 : index
    %14 = vector.load %arg1[%c2, %c0_14] : memref<296x128xf32, #tpu.memory_space<vmem>>, vector<256x128xf32>
    %c2_15 = arith.constant 2 : index
    %c0_16 = arith.constant 0 : index
    %c0_17 = arith.constant 0 : index
    %15 = vector.load %arg2[%c2_15, %c0_16, %c0_17] : memref<9x128x128xf32, #tpu.memory_space<vmem>>, vector<1x128x128xf32>
    %16 = vector.shape_cast %15 : vector<1x128x128xf32> to vector<128x128xf32>
    %cst_18 = arith.constant dense<0.000000e+00> : vector<256x128xf32>
    %17 = tpu.matmul %14, %16, %cst_18 {dimension_numbers = #tpu.dot_dimension_numbers<[1], [0], [0], [1], [0, 0, 1, 1], [], []>} : vector<256x128xf32>, vector<128x128xf32>, vector<256x128xf32> -> vector<256x128xf32>
    %18 = arith.addf %13, %17 : vector<256x128xf32>
    %c16 = arith.constant 16 : index
    %c0_19 = arith.constant 0 : index
    %19 = vector.load %arg1[%c16, %c0_19] : memref<296x128xf32, #tpu.memory_space<vmem>>, vector<256x128xf32>
    %c3 = arith.constant 3 : index
    %c0_20 = arith.constant 0 : index
    %c0_21 = arith.constant 0 : index
    %20 = vector.load %arg2[%c3, %c0_20, %c0_21] : memref<9x128x128xf32, #tpu.memory_space<vmem>>, vector<1x128x128xf32>
    %21 = vector.shape_cast %20 : vector<1x128x128xf32> to vector<128x128xf32>
    %cst_22 = arith.constant dense<0.000000e+00> : vector<256x128xf32>
    %22 = tpu.matmul %19, %21, %cst_22 {dimension_numbers = #tpu.dot_dimension_numbers<[1], [0], [0], [1], [0, 0, 1, 1], [], []>} : vector<256x128xf32>, vector<128x128xf32>, vector<256x128xf32> -> vector<256x128xf32>
    %23 = arith.addf %18, %22 : vector<256x128xf32>
    %c17 = arith.constant 17 : index
    %c0_23 = arith.constant 0 : index
    %24 = vector.load %arg1[%c17, %c0_23] : memref<296x128xf32, #tpu.memory_space<vmem>>, vector<256x128xf32>
    %c4 = arith.constant 4 : index
    %c0_24 = arith.constant 0 : index
    %c0_25 = arith.constant 0 : index
    %25 = vector.load %arg2[%c4, %c0_24, %c0_25] : memref<9x128x128xf32, #tpu.memory_space<vmem>>, vector<1x128x128xf32>
    %26 = vector.shape_cast %25 : vector<1x128x128xf32> to vector<128x128xf32>
    %cst_26 = arith.constant dense<0.000000e+00> : vector<256x128xf32>
    %27 = tpu.matmul %24, %26, %cst_26 {dimension_numbers = #tpu.dot_dimension_numbers<[1], [0], [0], [1], [0, 0, 1, 1], [], []>} : vector<256x128xf32>, vector<128x128xf32>, vector<256x128xf32> -> vector<256x128xf32>
    %28 = arith.addf %23, %27 : vector<256x128xf32>
    %c18 = arith.constant 18 : index
    %c0_27 = arith.constant 0 : index
    %29 = vector.load %arg1[%c18, %c0_27] : memref<296x128xf32, #tpu.memory_space<vmem>>, vector<256x128xf32>
    %c5 = arith.constant 5 : index
    %c0_28 = arith.constant 0 : index
    %c0_29 = arith.constant 0 : index
    %30 = vector.load %arg2[%c5, %c0_28, %c0_29] : memref<9x128x128xf32, #tpu.memory_space<vmem>>, vector<1x128x128xf32>
    %31 = vector.shape_cast %30 : vector<1x128x128xf32> to vector<128x128xf32>
    %cst_30 = arith.constant dense<0.000000e+00> : vector<256x128xf32>
    %32 = tpu.matmul %29, %31, %cst_30 {dimension_numbers = #tpu.dot_dimension_numbers<[1], [0], [0], [1], [0, 0, 1, 1], [], []>} : vector<256x128xf32>, vector<128x128xf32>, vector<256x128xf32> -> vector<256x128xf32>
    %33 = arith.addf %28, %32 : vector<256x128xf32>
    %c32 = arith.constant 32 : index
    %c0_31 = arith.constant 0 : index
    %34 = vector.load %arg1[%c32, %c0_31] : memref<296x128xf32, #tpu.memory_space<vmem>>, vector<256x128xf32>
    %c6 = arith.constant 6 : index
    %c0_32 = arith.constant 0 : index
    %c0_33 = arith.constant 0 : index
    %35 = vector.load %arg2[%c6, %c0_32, %c0_33] : memref<9x128x128xf32, #tpu.memory_space<vmem>>, vector<1x128x128xf32>
    %36 = vector.shape_cast %35 : vector<1x128x128xf32> to vector<128x128xf32>
    %cst_34 = arith.constant dense<0.000000e+00> : vector<256x128xf32>
    %37 = tpu.matmul %34, %36, %cst_34 {dimension_numbers = #tpu.dot_dimension_numbers<[1], [0], [0], [1], [0, 0, 1, 1], [], []>} : vector<256x128xf32>, vector<128x128xf32>, vector<256x128xf32> -> vector<256x128xf32>
    %38 = arith.addf %33, %37 : vector<256x128xf32>
    %c33 = arith.constant 33 : index
    %c0_35 = arith.constant 0 : index
    %39 = vector.load %arg1[%c33, %c0_35] : memref<296x128xf32, #tpu.memory_space<vmem>>, vector<256x128xf32>
    %c7 = arith.constant 7 : index
    %c0_36 = arith.constant 0 : index
    %c0_37 = arith.constant 0 : index
    %40 = vector.load %arg2[%c7, %c0_36, %c0_37] : memref<9x128x128xf32, #tpu.memory_space<vmem>>, vector<1x128x128xf32>
    %41 = vector.shape_cast %40 : vector<1x128x128xf32> to vector<128x128xf32>
    %cst_38 = arith.constant dense<0.000000e+00> : vector<256x128xf32>
    %42 = tpu.matmul %39, %41, %cst_38 {dimension_numbers = #tpu.dot_dimension_numbers<[1], [0], [0], [1], [0, 0, 1, 1], [], []>} : vector<256x128xf32>, vector<128x128xf32>, vector<256x128xf32> -> vector<256x128xf32>
    %43 = arith.addf %38, %42 : vector<256x128xf32>
    %c34 = arith.constant 34 : index
    %c0_39 = arith.constant 0 : index
    %44 = vector.load %arg1[%c34, %c0_39] : memref<296x128xf32, #tpu.memory_space<vmem>>, vector<256x128xf32>
    %c8 = arith.constant 8 : index
    %c0_40 = arith.constant 0 : index
    %c0_41 = arith.constant 0 : index
    %45 = vector.load %arg2[%c8, %c0_40, %c0_41] : memref<9x128x128xf32, #tpu.memory_space<vmem>>, vector<1x128x128xf32>
    %46 = vector.shape_cast %45 : vector<1x128x128xf32> to vector<128x128xf32>
    %cst_42 = arith.constant dense<0.000000e+00> : vector<256x128xf32>
    %47 = tpu.matmul %44, %46, %cst_42 {dimension_numbers = #tpu.dot_dimension_numbers<[1], [0], [0], [1], [0, 0, 1, 1], [], []>} : vector<256x128xf32>, vector<128x128xf32>, vector<256x128xf32> -> vector<256x128xf32>
    %48 = arith.addf %43, %47 : vector<256x128xf32>
    %c0_43 = arith.constant 0 : index
    %c0_44 = arith.constant 0 : index
    %49 = vector.load %arg3[%c0_43, %c0_44] : memref<1x128xf32, #tpu.memory_space<vmem>>, vector<1x128xf32>
    %50 = vector.broadcast %49 : vector<1x128xf32> to vector<256x128xf32>
    %51 = arith.addf %48, %50 : vector<256x128xf32>
    %cst_45 = arith.constant 0.000000e+00 : f32
    %52 = vector.broadcast %cst_45 : f32 to vector<256x128xf32>
    %53 = arith.cmpf oge, %51, %52 : vector<256x128xf32>
    %cst_46 = arith.constant 0.00999999977 : f32
    %54 = vector.broadcast %cst_46 : f32 to vector<256x128xf32>
    %55 = arith.mulf %54, %51 : vector<256x128xf32>
    %56 = arith.select %53, %51, %55 : vector<256x128xi1>, vector<256x128xf32>
    %c0_47 = arith.constant 0 : index
    %c0_48 = arith.constant 0 : index
    %57 = vector.load %arg14[%c0_47, %c0_48] : memref<296x128xf32, #tpu.memory_space<vmem>>, vector<256x128xf32>
    tpu.vector_store %arg14[%c0_47, %c0_48], %56 {strides = array<i32>} : memref<296x128xf32, #tpu.memory_space<vmem>>, vector<256x128xf32>,
    %cst_49 = arith.constant 0.000000e+00 : f32
    %58 = vector.broadcast %cst_49 : f32 to vector<256x128xf32>
    %c0_50 = arith.constant 0 : index
    %c0_51 = arith.constant 0 : index
    %59 = vector.load %arg14[%c0_50, %c0_51] : memref<296x128xf32, #tpu.memory_space<vmem>>, vector<256x128xf32>
    %c0_52 = arith.constant 0 : index
    %c0_53 = arith.constant 0 : index
    %c0_54 = arith.constant 0 : index
    %60 = vector.load %arg4[%c0_52, %c0_53, %c0_54] : memref<9x128x128xf32, #tpu.memory_space<vmem>>, vector<1x128x128xf32>
    %61 = vector.shape_cast %60 : vector<1x128x128xf32> to vector<128x128xf32>
    %cst_55 = arith.constant dense<0.000000e+00> : vector<256x128xf32>
    %62 = tpu.matmul %59, %61, %cst_55 {dimension_numbers = #tpu.dot_dimension_numbers<[1], [0], [0], [1], [0, 0, 1, 1], [], []>} : vector<256x128xf32>, vector<128x128xf32>, vector<256x128xf32> -> vector<256x128xf32>
    %63 = arith.addf %58, %62 : vector<256x128xf32>
    %c1_56 = arith.constant 1 : index
    %c0_57 = arith.constant 0 : index
    %64 = vector.load %arg14[%c1_56, %c0_57] : memref<296x128xf32, #tpu.memory_space<vmem>>, vector<256x128xf32>
    %c1_58 = arith.constant 1 : index
    %c0_59 = arith.constant 0 : index
    %c0_60 = arith.constant 0 : index
    %65 = vector.load %arg4[%c1_58, %c0_59, %c0_60] : memref<9x128x128xf32, #tpu.memory_space<vmem>>, vector<1x128x128xf32>
    %66 = vector.shape_cast %65 : vector<1x128x128xf32> to vector<128x128xf32>
    %cst_61 = arith.constant dense<0.000000e+00> : vector<256x128xf32>
    %67 = tpu.matmul %64, %66, %cst_61 {dimension_numbers = #tpu.dot_dimension_numbers<[1], [0], [0], [1], [0, 0, 1, 1], [], []>} : vector<256x128xf32>, vector<128x128xf32>, vector<256x128xf32> -> vector<256x128xf32>
    %68 = arith.addf %63, %67 : vector<256x128xf32>
    %c2_62 = arith.constant 2 : index
    %c0_63 = arith.constant 0 : index
    %69 = vector.load %arg14[%c2_62, %c0_63] : memref<296x128xf32, #tpu.memory_space<vmem>>, vector<256x128xf32>
    %c2_64 = arith.constant 2 : index
    %c0_65 = arith.constant 0 : index
    %c0_66 = arith.constant 0 : index
    %70 = vector.load %arg4[%c2_64, %c0_65, %c0_66] : memref<9x128x128xf32, #tpu.memory_space<vmem>>, vector<1x128x128xf32>
    %71 = vector.shape_cast %70 : vector<1x128x128xf32> to vector<128x128xf32>
    %cst_67 = arith.constant dense<0.000000e+00> : vector<256x128xf32>
    %72 = tpu.matmul %69, %71, %cst_67 {dimension_numbers = #tpu.dot_dimension_numbers<[1], [0], [0], [1], [0, 0, 1, 1], [], []>} : vector<256x128xf32>, vector<128x128xf32>, vector<256x128xf32> -> vector<256x128xf32>
    %73 = arith.addf %68, %72 : vector<256x128xf32>
    %c16_68 = arith.constant 16 : index
    %c0_69 = arith.constant 0 : index
    %74 = vector.load %arg14[%c16_68, %c0_69] : memref<296x128xf32, #tpu.memory_space<vmem>>, vector<256x128xf32>
    %c3_70 = arith.constant 3 : index
    %c0_71 = arith.constant 0 : index
    %c0_72 = arith.constant 0 : index
    %75 = vector.load %arg4[%c3_70, %c0_71, %c0_72] : memref<9x128x128xf32, #tpu.memory_space<vmem>>, vector<1x128x128xf32>
    %76 = vector.shape_cast %75 : vector<1x128x128xf32> to vector<128x128xf32>
    %cst_73 = arith.constant dense<0.000000e+00> : vector<256x128xf32>
    %77 = tpu.matmul %74, %76, %cst_73 {dimension_numbers = #tpu.dot_dimension_numbers<[1], [0], [0], [1], [0, 0, 1, 1], [], []>} : vector<256x128xf32>, vector<128x128xf32>, vector<256x128xf32> -> vector<256x128xf32>
    %78 = arith.addf %73, %77 : vector<256x128xf32>
    %c17_74 = arith.constant 17 : index
    %c0_75 = arith.constant 0 : index
    %79 = vector.load %arg14[%c17_74, %c0_75] : memref<296x128xf32, #tpu.memory_space<vmem>>, vector<256x128xf32>
    %c4_76 = arith.constant 4 : index
    %c0_77 = arith.constant 0 : index
    %c0_78 = arith.constant 0 : index
    %80 = vector.load %arg4[%c4_76, %c0_77, %c0_78] : memref<9x128x128xf32, #tpu.memory_space<vmem>>, vector<1x128x128xf32>
    %81 = vector.shape_cast %80 : vector<1x128x128xf32> to vector<128x128xf32>
    %cst_79 = arith.constant dense<0.000000e+00> : vector<256x128xf32>
    %82 = tpu.matmul %79, %81, %cst_79 {dimension_numbers = #tpu.dot_dimension_numbers<[1], [0], [0], [1], [0, 0, 1, 1], [], []>} : vector<256x128xf32>, vector<128x128xf32>, vector<256x128xf32> -> vector<256x128xf32>
    %83 = arith.addf %78, %82 : vector<256x128xf32>
    %c18_80 = arith.constant 18 : index
    %c0_81 = arith.constant 0 : index
    %84 = vector.load %arg14[%c18_80, %c0_81] : memref<296x128xf32, #tpu.memory_space<vmem>>, vector<256x128xf32>
    %c5_82 = arith.constant 5 : index
    %c0_83 = arith.constant 0 : index
    %c0_84 = arith.constant 0 : index
    %85 = vector.load %arg4[%c5_82, %c0_83, %c0_84] : memref<9x128x128xf32, #tpu.memory_space<vmem>>, vector<1x128x128xf32>
    %86 = vector.shape_cast %85 : vector<1x128x128xf32> to vector<128x128xf32>
    %cst_85 = arith.constant dense<0.000000e+00> : vector<256x128xf32>
    %87 = tpu.matmul %84, %86, %cst_85 {dimension_numbers = #tpu.dot_dimension_numbers<[1], [0], [0], [1], [0, 0, 1, 1], [], []>} : vector<256x128xf32>, vector<128x128xf32>, vector<256x128xf32> -> vector<256x128xf32>
    %88 = arith.addf %83, %87 : vector<256x128xf32>
    %c32_86 = arith.constant 32 : index
    %c0_87 = arith.constant 0 : index
    %89 = vector.load %arg14[%c32_86, %c0_87] : memref<296x128xf32, #tpu.memory_space<vmem>>, vector<256x128xf32>
    %c6_88 = arith.constant 6 : index
    %c0_89 = arith.constant 0 : index
    %c0_90 = arith.constant 0 : index
    %90 = vector.load %arg4[%c6_88, %c0_89, %c0_90] : memref<9x128x128xf32, #tpu.memory_space<vmem>>, vector<1x128x128xf32>
    %91 = vector.shape_cast %90 : vector<1x128x128xf32> to vector<128x128xf32>
    %cst_91 = arith.constant dense<0.000000e+00> : vector<256x128xf32>
    %92 = tpu.matmul %89, %91, %cst_91 {dimension_numbers = #tpu.dot_dimension_numbers<[1], [0], [0], [1], [0, 0, 1, 1], [], []>} : vector<256x128xf32>, vector<128x128xf32>, vector<256x128xf32> -> vector<256x128xf32>
    %93 = arith.addf %88, %92 : vector<256x128xf32>
    %c33_92 = arith.constant 33 : index
    %c0_93 = arith.constant 0 : index
    %94 = vector.load %arg14[%c33_92, %c0_93] : memref<296x128xf32, #tpu.memory_space<vmem>>, vector<256x128xf32>
    %c7_94 = arith.constant 7 : index
    %c0_95 = arith.constant 0 : index
    %c0_96 = arith.constant 0 : index
    %95 = vector.load %arg4[%c7_94, %c0_95, %c0_96] : memref<9x128x128xf32, #tpu.memory_space<vmem>>, vector<1x128x128xf32>
    %96 = vector.shape_cast %95 : vector<1x128x128xf32> to vector<128x128xf32>
    %cst_97 = arith.constant dense<0.000000e+00> : vector<256x128xf32>
    %97 = tpu.matmul %94, %96, %cst_97 {dimension_numbers = #tpu.dot_dimension_numbers<[1], [0], [0], [1], [0, 0, 1, 1], [], []>} : vector<256x128xf32>, vector<128x128xf32>, vector<256x128xf32> -> vector<256x128xf32>
    %98 = arith.addf %93, %97 : vector<256x128xf32>
    %c34_98 = arith.constant 34 : index
    %c0_99 = arith.constant 0 : index
    %99 = vector.load %arg14[%c34_98, %c0_99] : memref<296x128xf32, #tpu.memory_space<vmem>>, vector<256x128xf32>
    %c8_100 = arith.constant 8 : index
    %c0_101 = arith.constant 0 : index
    %c0_102 = arith.constant 0 : index
    %100 = vector.load %arg4[%c8_100, %c0_101, %c0_102] : memref<9x128x128xf32, #tpu.memory_space<vmem>>, vector<1x128x128xf32>
    %101 = vector.shape_cast %100 : vector<1x128x128xf32> to vector<128x128xf32>
    %cst_103 = arith.constant dense<0.000000e+00> : vector<256x128xf32>
    %102 = tpu.matmul %99, %101, %cst_103 {dimension_numbers = #tpu.dot_dimension_numbers<[1], [0], [0], [1], [0, 0, 1, 1], [], []>} : vector<256x128xf32>, vector<128x128xf32>, vector<256x128xf32> -> vector<256x128xf32>
    %103 = arith.addf %98, %102 : vector<256x128xf32>
    %c0_104 = arith.constant 0 : index
    %c0_105 = arith.constant 0 : index
    %104 = vector.load %arg5[%c0_104, %c0_105] : memref<1x128xf32, #tpu.memory_space<vmem>>, vector<1x128xf32>
    %105 = vector.broadcast %104 : vector<1x128xf32> to vector<256x128xf32>
    %106 = arith.addf %103, %105 : vector<256x128xf32>
    %cst_106 = arith.constant 0.000000e+00 : f32
    %107 = vector.broadcast %cst_106 : f32 to vector<256x128xf32>
    %108 = arith.cmpf oge, %106, %107 : vector<256x128xf32>
    %cst_107 = arith.constant 0.00999999977 : f32
    %109 = vector.broadcast %cst_107 : f32 to vector<256x128xf32>
    %110 = arith.mulf %109, %106 : vector<256x128xf32>
    %111 = arith.select %108, %106, %110 : vector<256x128xi1>, vector<256x128xf32>
    %c0_108 = arith.constant 0 : index
    %c0_109 = arith.constant 0 : index
    %112 = vector.load %arg15[%c0_108, %c0_109] : memref<296x128xf32, #tpu.memory_space<vmem>>, vector<256x128xf32>
    tpu.vector_store %arg15[%c0_108, %c0_109], %111 {strides = array<i32>} : memref<296x128xf32, #tpu.memory_space<vmem>>, vector<256x128xf32>,
    %cst_110 = arith.constant 0.000000e+00 : f32
    %113 = vector.broadcast %cst_110 : f32 to vector<256x128xf32>
    %c0_111 = arith.constant 0 : index
    %c0_112 = arith.constant 0 : index
    %114 = vector.load %arg15[%c0_111, %c0_112] : memref<296x128xf32, #tpu.memory_space<vmem>>, vector<256x128xf32>
    %c0_113 = arith.constant 0 : index
    %c0_114 = arith.constant 0 : index
    %c0_115 = arith.constant 0 : index
    %115 = vector.load %arg6[%c0_113, %c0_114, %c0_115] : memref<9x128x128xf32, #tpu.memory_space<vmem>>, vector<1x128x128xf32>
    %116 = vector.shape_cast %115 : vector<1x128x128xf32> to vector<128x128xf32>
    %cst_116 = arith.constant dense<0.000000e+00> : vector<256x128xf32>
    %117 = tpu.matmul %114, %116, %cst_116 {dimension_numbers = #tpu.dot_dimension_numbers<[1], [0], [0], [1], [0, 0, 1, 1], [], []>} : vector<256x128xf32>, vector<128x128xf32>, vector<256x128xf32> -> vector<256x128xf32>
    %118 = arith.addf %113, %117 : vector<256x128xf32>
    %c1_117 = arith.constant 1 : index
    %c0_118 = arith.constant 0 : index
    %119 = vector.load %arg15[%c1_117, %c0_118] : memref<296x128xf32, #tpu.memory_space<vmem>>, vector<256x128xf32>
    %c1_119 = arith.constant 1 : index
    %c0_120 = arith.constant 0 : index
    %c0_121 = arith.constant 0 : index
    %120 = vector.load %arg6[%c1_119, %c0_120, %c0_121] : memref<9x128x128xf32, #tpu.memory_space<vmem>>, vector<1x128x128xf32>
    %121 = vector.shape_cast %120 : vector<1x128x128xf32> to vector<128x128xf32>
    %cst_122 = arith.constant dense<0.000000e+00> : vector<256x128xf32>
    %122 = tpu.matmul %119, %121, %cst_122 {dimension_numbers = #tpu.dot_dimension_numbers<[1], [0], [0], [1], [0, 0, 1, 1], [], []>} : vector<256x128xf32>, vector<128x128xf32>, vector<256x128xf32> -> vector<256x128xf32>
    %123 = arith.addf %118, %122 : vector<256x128xf32>
    %c2_123 = arith.constant 2 : index
    %c0_124 = arith.constant 0 : index
    %124 = vector.load %arg15[%c2_123, %c0_124] : memref<296x128xf32, #tpu.memory_space<vmem>>, vector<256x128xf32>
    %c2_125 = arith.constant 2 : index
    %c0_126 = arith.constant 0 : index
    %c0_127 = arith.constant 0 : index
    %125 = vector.load %arg6[%c2_125, %c0_126, %c0_127] : memref<9x128x128xf32, #tpu.memory_space<vmem>>, vector<1x128x128xf32>
    %126 = vector.shape_cast %125 : vector<1x128x128xf32> to vector<128x128xf32>
    %cst_128 = arith.constant dense<0.000000e+00> : vector<256x128xf32>
    %127 = tpu.matmul %124, %126, %cst_128 {dimension_numbers = #tpu.dot_dimension_numbers<[1], [0], [0], [1], [0, 0, 1, 1], [], []>} : vector<256x128xf32>, vector<128x128xf32>, vector<256x128xf32> -> vector<256x128xf32>
    %128 = arith.addf %123, %127 : vector<256x128xf32>
    %c16_129 = arith.constant 16 : index
    %c0_130 = arith.constant 0 : index
    %129 = vector.load %arg15[%c16_129, %c0_130] : memref<296x128xf32, #tpu.memory_space<vmem>>, vector<256x128xf32>
    %c3_131 = arith.constant 3 : index
    %c0_132 = arith.constant 0 : index
    %c0_133 = arith.constant 0 : index
    %130 = vector.load %arg6[%c3_131, %c0_132, %c0_133] : memref<9x128x128xf32, #tpu.memory_space<vmem>>, vector<1x128x128xf32>
    %131 = vector.shape_cast %130 : vector<1x128x128xf32> to vector<128x128xf32>
    %cst_134 = arith.constant dense<0.000000e+00> : vector<256x128xf32>
    %132 = tpu.matmul %129, %131, %cst_134 {dimension_numbers = #tpu.dot_dimension_numbers<[1], [0], [0], [1], [0, 0, 1, 1], [], []>} : vector<256x128xf32>, vector<128x128xf32>, vector<256x128xf32> -> vector<256x128xf32>
    %133 = arith.addf %128, %132 : vector<256x128xf32>
    %c17_135 = arith.constant 17 : index
    %c0_136 = arith.constant 0 : index
    %134 = vector.load %arg15[%c17_135, %c0_136] : memref<296x128xf32, #tpu.memory_space<vmem>>, vector<256x128xf32>
    %c4_137 = arith.constant 4 : index
    %c0_138 = arith.constant 0 : index
    %c0_139 = arith.constant 0 : index
    %135 = vector.load %arg6[%c4_137, %c0_138, %c0_139] : memref<9x128x128xf32, #tpu.memory_space<vmem>>, vector<1x128x128xf32>
    %136 = vector.shape_cast %135 : vector<1x128x128xf32> to vector<128x128xf32>
    %cst_140 = arith.constant dense<0.000000e+00> : vector<256x128xf32>
    %137 = tpu.matmul %134, %136, %cst_140 {dimension_numbers = #tpu.dot_dimension_numbers<[1], [0], [0], [1], [0, 0, 1, 1], [], []>} : vector<256x128xf32>, vector<128x128xf32>, vector<256x128xf32> -> vector<256x128xf32>
    %138 = arith.addf %133, %137 : vector<256x128xf32>
    %c18_141 = arith.constant 18 : index
    %c0_142 = arith.constant 0 : index
    %139 = vector.load %arg15[%c18_141, %c0_142] : memref<296x128xf32, #tpu.memory_space<vmem>>, vector<256x128xf32>
    %c5_143 = arith.constant 5 : index
    %c0_144 = arith.constant 0 : index
    %c0_145 = arith.constant 0 : index
    %140 = vector.load %arg6[%c5_143, %c0_144, %c0_145] : memref<9x128x128xf32, #tpu.memory_space<vmem>>, vector<1x128x128xf32>
    %141 = vector.shape_cast %140 : vector<1x128x128xf32> to vector<128x128xf32>
    %cst_146 = arith.constant dense<0.000000e+00> : vector<256x128xf32>
    %142 = tpu.matmul %139, %141, %cst_146 {dimension_numbers = #tpu.dot_dimension_numbers<[1], [0], [0], [1], [0, 0, 1, 1], [], []>} : vector<256x128xf32>, vector<128x128xf32>, vector<256x128xf32> -> vector<256x128xf32>
    %143 = arith.addf %138, %142 : vector<256x128xf32>
    %c32_147 = arith.constant 32 : index
    %c0_148 = arith.constant 0 : index
    %144 = vector.load %arg15[%c32_147, %c0_148] : memref<296x128xf32, #tpu.memory_space<vmem>>, vector<256x128xf32>
    %c6_149 = arith.constant 6 : index
    %c0_150 = arith.constant 0 : index
    %c0_151 = arith.constant 0 : index
    %145 = vector.load %arg6[%c6_149, %c0_150, %c0_151] : memref<9x128x128xf32, #tpu.memory_space<vmem>>, vector<1x128x128xf32>
    %146 = vector.shape_cast %145 : vector<1x128x128xf32> to vector<128x128xf32>
    %cst_152 = arith.constant dense<0.000000e+00> : vector<256x128xf32>
    %147 = tpu.matmul %144, %146, %cst_152 {dimension_numbers = #tpu.dot_dimension_numbers<[1], [0], [0], [1], [0, 0, 1, 1], [], []>} : vector<256x128xf32>, vector<128x128xf32>, vector<256x128xf32> -> vector<256x128xf32>
    %148 = arith.addf %143, %147 : vector<256x128xf32>
    %c33_153 = arith.constant 33 : index
    %c0_154 = arith.constant 0 : index
    %149 = vector.load %arg15[%c33_153, %c0_154] : memref<296x128xf32, #tpu.memory_space<vmem>>, vector<256x128xf32>
    %c7_155 = arith.constant 7 : index
    %c0_156 = arith.constant 0 : index
    %c0_157 = arith.constant 0 : index
    %150 = vector.load %arg6[%c7_155, %c0_156, %c0_157] : memref<9x128x128xf32, #tpu.memory_space<vmem>>, vector<1x128x128xf32>
    %151 = vector.shape_cast %150 : vector<1x128x128xf32> to vector<128x128xf32>
    %cst_158 = arith.constant dense<0.000000e+00> : vector<256x128xf32>
    %152 = tpu.matmul %149, %151, %cst_158 {dimension_numbers = #tpu.dot_dimension_numbers<[1], [0], [0], [1], [0, 0, 1, 1], [], []>} : vector<256x128xf32>, vector<128x128xf32>, vector<256x128xf32> -> vector<256x128xf32>
    %153 = arith.addf %148, %152 : vector<256x128xf32>
    %c34_159 = arith.constant 34 : index
    %c0_160 = arith.constant 0 : index
    %154 = vector.load %arg15[%c34_159, %c0_160] : memref<296x128xf32, #tpu.memory_space<vmem>>, vector<256x128xf32>
    %c8_161 = arith.constant 8 : index
    %c0_162 = arith.constant 0 : index
    %c0_163 = arith.constant 0 : index
    %155 = vector.load %arg6[%c8_161, %c0_162, %c0_163] : memref<9x128x128xf32, #tpu.memory_space<vmem>>, vector<1x128x128xf32>
    %156 = vector.shape_cast %155 : vector<1x128x128xf32> to vector<128x128xf32>
    %cst_164 = arith.constant dense<0.000000e+00> : vector<256x128xf32>
    %157 = tpu.matmul %154, %156, %cst_164 {dimension_numbers = #tpu.dot_dimension_numbers<[1], [0], [0], [1], [0, 0, 1, 1], [], []>} : vector<256x128xf32>, vector<128x128xf32>, vector<256x128xf32> -> vector<256x128xf32>
    %158 = arith.addf %153, %157 : vector<256x128xf32>
    %c0_165 = arith.constant 0 : index
    %c0_166 = arith.constant 0 : index
    %159 = vector.load %arg7[%c0_165, %c0_166] : memref<1x128xf32, #tpu.memory_space<vmem>>, vector<1x128xf32>
    %160 = vector.broadcast %159 : vector<1x128xf32> to vector<256x128xf32>
    %161 = arith.addf %158, %160 : vector<256x128xf32>
    %cst_167 = arith.constant 0.000000e+00 : f32
    %162 = vector.broadcast %cst_167 : f32 to vector<256x128xf32>
    %163 = arith.cmpf oge, %161, %162 : vector<256x128xf32>
    %cst_168 = arith.constant 0.00999999977 : f32
    %164 = vector.broadcast %cst_168 : f32 to vector<256x128xf32>
    %165 = arith.mulf %164, %161 : vector<256x128xf32>
    %166 = arith.select %163, %161, %165 : vector<256x128xi1>, vector<256x128xf32>
    %c0_169 = arith.constant 0 : index
    %c0_170 = arith.constant 0 : index
    %167 = vector.load %arg8[%c0_169, %c0_170] : memref<64x256xf32, #tpu.memory_space<vmem>>, vector<64x256xf32>
    %cst_171 = arith.constant dense<0.000000e+00> : vector<64x128xf32>
    %168 = tpu.matmul %167, %166, %cst_171 {dimension_numbers = #tpu.dot_dimension_numbers<[1], [0], [0], [1], [0, 0, 1, 1], [], []>} : vector<64x256xf32>, vector<256x128xf32>, vector<64x128xf32> -> vector<64x128xf32>
    %169 = tpu.transpose %168, [1, 0] : vector<64x128xf32> -> vector<128x64xf32>
    %cst_172 = arith.constant 0.000000e+00 : f32
    %170 = vector.broadcast %cst_172 : f32 to vector<1x128xf32>
    %171 = vector.extract_strided_slice %169 {offsets = [0, 0], sizes = [1, 64], strides = [1, 1]} : vector<128x64xf32> to vector<1x64xf32>
    %c0_173 = arith.constant 0 : index
    %c0_174 = arith.constant 0 : index
    %c0_175 = arith.constant 0 : index
    %172 = vector.load %arg9[%c0_173, %c0_174, %c0_175] : memref<16x64x128xf32, #tpu.memory_space<vmem>>, vector<1x64x128xf32>
    %173 = vector.shape_cast %172 : vector<1x64x128xf32> to vector<64x128xf32>
    %cst_176 = arith.constant dense<0.000000e+00> : vector<1x128xf32>
    %174 = tpu.matmul %171, %173, %cst_176 {dimension_numbers = #tpu.dot_dimension_numbers<[1], [0], [0], [1], [0, 0, 1, 1], [], []>} : vector<1x64xf32>, vector<64x128xf32>, vector<1x128xf32> -> vector<1x128xf32>
    %175 = arith.addf %170, %174 : vector<1x128xf32>
    %176 = vector.extract_strided_slice %169 {offsets = [1, 0], sizes = [1, 64], strides = [1, 1]} : vector<128x64xf32> to vector<1x64xf32>
    %c1_177 = arith.constant 1 : index
    %c0_178 = arith.constant 0 : index
    %c0_179 = arith.constant 0 : index
    %177 = vector.load %arg9[%c1_177, %c0_178, %c0_179] : memref<16x64x128xf32, #tpu.memory_space<vmem>>, vector<1x64x128xf32>
    %178 = vector.shape_cast %177 : vector<1x64x128xf32> to vector<64x128xf32>
    %cst_180 = arith.constant dense<0.000000e+00> : vector<1x128xf32>
    %179 = tpu.matmul %176, %178, %cst_180 {dimension_numbers = #tpu.dot_dimension_numbers<[1], [0], [0], [1], [0, 0, 1, 1], [], []>} : vector<1x64xf32>, vector<64x128xf32>, vector<1x128xf32> -> vector<1x128xf32>
    %180 = arith.addf %175, %179 : vector<1x128xf32>
    %181 = vector.extract_strided_slice %169 {offsets = [2, 0], sizes = [1, 64], strides = [1, 1]} : vector<128x64xf32> to vector<1x64xf32>
    %c2_181 = arith.constant 2 : index
    %c0_182 = arith.constant 0 : index
    %c0_183 = arith.constant 0 : index
    %182 = vector.load %arg9[%c2_181, %c0_182, %c0_183] : memref<16x64x128xf32, #tpu.memory_space<vmem>>, vector<1x64x128xf32>
    %183 = vector.shape_cast %182 : vector<1x64x128xf32> to vector<64x128xf32>
    %cst_184 = arith.constant dense<0.000000e+00> : vector<1x128xf32>
    %184 = tpu.matmul %181, %183, %cst_184 {dimension_numbers = #tpu.dot_dimension_numbers<[1], [0], [0], [1], [0, 0, 1, 1], [], []>} : vector<1x64xf32>, vector<64x128xf32>, vector<1x128xf32> -> vector<1x128xf32>
    %185 = arith.addf %180, %184 : vector<1x128xf32>
    %186 = vector.extract_strided_slice %169 {offsets = [3, 0], sizes = [1, 64], strides = [1, 1]} : vector<128x64xf32> to vector<1x64xf32>
    %c3_185 = arith.constant 3 : index
    %c0_186 = arith.constant 0 : index
    %c0_187 = arith.constant 0 : index
    %187 = vector.load %arg9[%c3_185, %c0_186, %c0_187] : memref<16x64x128xf32, #tpu.memory_space<vmem>>, vector<1x64x128xf32>
    %188 = vector.shape_cast %187 : vector<1x64x128xf32> to vector<64x128xf32>
    %cst_188 = arith.constant dense<0.000000e+00> : vector<1x128xf32>
    %189 = tpu.matmul %186, %188, %cst_188 {dimension_numbers = #tpu.dot_dimension_numbers<[1], [0], [0], [1], [0, 0, 1, 1], [], []>} : vector<1x64xf32>, vector<64x128xf32>, vector<1x128xf32> -> vector<1x128xf32>
    %190 = arith.addf %185, %189 : vector<1x128xf32>
    %191 = vector.extract_strided_slice %169 {offsets = [4, 0], sizes = [1, 64], strides = [1, 1]} : vector<128x64xf32> to vector<1x64xf32>
    %c4_189 = arith.constant 4 : index
    %c0_190 = arith.constant 0 : index
    %c0_191 = arith.constant 0 : index
    %192 = vector.load %arg9[%c4_189, %c0_190, %c0_191] : memref<16x64x128xf32, #tpu.memory_space<vmem>>, vector<1x64x128xf32>
    %193 = vector.shape_cast %192 : vector<1x64x128xf32> to vector<64x128xf32>
    %cst_192 = arith.constant dense<0.000000e+00> : vector<1x128xf32>
    %194 = tpu.matmul %191, %193, %cst_192 {dimension_numbers = #tpu.dot_dimension_numbers<[1], [0], [0], [1], [0, 0, 1, 1], [], []>} : vector<1x64xf32>, vector<64x128xf32>, vector<1x128xf32> -> vector<1x128xf32>
    %195 = arith.addf %190, %194 : vector<1x128xf32>
    %196 = vector.extract_strided_slice %169 {offsets = [5, 0], sizes = [1, 64], strides = [1, 1]} : vector<128x64xf32> to vector<1x64xf32>
    %c5_193 = arith.constant 5 : index
    %c0_194 = arith.constant 0 : index
    %c0_195 = arith.constant 0 : index
    %197 = vector.load %arg9[%c5_193, %c0_194, %c0_195] : memref<16x64x128xf32, #tpu.memory_space<vmem>>, vector<1x64x128xf32>
    %198 = vector.shape_cast %197 : vector<1x64x128xf32> to vector<64x128xf32>
    %cst_196 = arith.constant dense<0.000000e+00> : vector<1x128xf32>
    %199 = tpu.matmul %196, %198, %cst_196 {dimension_numbers = #tpu.dot_dimension_numbers<[1], [0], [0], [1], [0, 0, 1, 1], [], []>} : vector<1x64xf32>, vector<64x128xf32>, vector<1x128xf32> -> vector<1x128xf32>
    %200 = arith.addf %195, %199 : vector<1x128xf32>
    %201 = vector.extract_strided_slice %169 {offsets = [6, 0], sizes = [1, 64], strides = [1, 1]} : vector<128x64xf32> to vector<1x64xf32>
    %c6_197 = arith.constant 6 : index
    %c0_198 = arith.constant 0 : index
    %c0_199 = arith.constant 0 : index
    %202 = vector.load %arg9[%c6_197, %c0_198, %c0_199] : memref<16x64x128xf32, #tpu.memory_space<vmem>>, vector<1x64x128xf32>
    %203 = vector.shape_cast %202 : vector<1x64x128xf32> to vector<64x128xf32>
    %cst_200 = arith.constant dense<0.000000e+00> : vector<1x128xf32>
    %204 = tpu.matmul %201, %203, %cst_200 {dimension_numbers = #tpu.dot_dimension_numbers<[1], [0], [0], [1], [0, 0, 1, 1], [], []>} : vector<1x64xf32>, vector<64x128xf32>, vector<1x128xf32> -> vector<1x128xf32>
    %205 = arith.addf %200, %204 : vector<1x128xf32>
    %206 = vector.extract_strided_slice %169 {offsets = [7, 0], sizes = [1, 64], strides = [1, 1]} : vector<128x64xf32> to vector<1x64xf32>
    %c7_201 = arith.constant 7 : index
    %c0_202 = arith.constant 0 : index
    %c0_203 = arith.constant 0 : index
    %207 = vector.load %arg9[%c7_201, %c0_202, %c0_203] : memref<16x64x128xf32, #tpu.memory_space<vmem>>, vector<1x64x128xf32>
    %208 = vector.shape_cast %207 : vector<1x64x128xf32> to vector<64x128xf32>
    %cst_204 = arith.constant dense<0.000000e+00> : vector<1x128xf32>
    %209 = tpu.matmul %206, %208, %cst_204 {dimension_numbers = #tpu.dot_dimension_numbers<[1], [0], [0], [1], [0, 0, 1, 1], [], []>} : vector<1x64xf32>, vector<64x128xf32>, vector<1x128xf32> -> vector<1x128xf32>
    %210 = arith.addf %205, %209 : vector<1x128xf32>
    %211 = vector.extract_strided_slice %169 {offsets = [8, 0], sizes = [1, 64], strides = [1, 1]} : vector<128x64xf32> to vector<1x64xf32>
    %c8_205 = arith.constant 8 : index
    %c0_206 = arith.constant 0 : index
    %c0_207 = arith.constant 0 : index
    %212 = vector.load %arg9[%c8_205, %c0_206, %c0_207] : memref<16x64x128xf32, #tpu.memory_space<vmem>>, vector<1x64x128xf32>
    %213 = vector.shape_cast %212 : vector<1x64x128xf32> to vector<64x128xf32>
    %cst_208 = arith.constant dense<0.000000e+00> : vector<1x128xf32>
    %214 = tpu.matmul %211, %213, %cst_208 {dimension_numbers = #tpu.dot_dimension_numbers<[1], [0], [0], [1], [0, 0, 1, 1], [], []>} : vector<1x64xf32>, vector<64x128xf32>, vector<1x128xf32> -> vector<1x128xf32>
    %215 = arith.addf %210, %214 : vector<1x128xf32>
    %216 = vector.extract_strided_slice %169 {offsets = [9, 0], sizes = [1, 64], strides = [1, 1]} : vector<128x64xf32> to vector<1x64xf32>
    %c9 = arith.constant 9 : index
    %c0_209 = arith.constant 0 : index
    %c0_210 = arith.constant 0 : index
    %217 = vector.load %arg9[%c9, %c0_209, %c0_210] : memref<16x64x128xf32, #tpu.memory_space<vmem>>, vector<1x64x128xf32>
    %218 = vector.shape_cast %217 : vector<1x64x128xf32> to vector<64x128xf32>
    %cst_211 = arith.constant dense<0.000000e+00> : vector<1x128xf32>
    %219 = tpu.matmul %216, %218, %cst_211 {dimension_numbers = #tpu.dot_dimension_numbers<[1], [0], [0], [1], [0, 0, 1, 1], [], []>} : vector<1x64xf32>, vector<64x128xf32>, vector<1x128xf32> -> vector<1x128xf32>
    %220 = arith.addf %215, %219 : vector<1x128xf32>
    %221 = vector.extract_strided_slice %169 {offsets = [10, 0], sizes = [1, 64], strides = [1, 1]} : vector<128x64xf32> to vector<1x64xf32>
    %c10 = arith.constant 10 : index
    %c0_212 = arith.constant 0 : index
    %c0_213 = arith.constant 0 : index
    %222 = vector.load %arg9[%c10, %c0_212, %c0_213] : memref<16x64x128xf32, #tpu.memory_space<vmem>>, vector<1x64x128xf32>
    %223 = vector.shape_cast %222 : vector<1x64x128xf32> to vector<64x128xf32>
    %cst_214 = arith.constant dense<0.000000e+00> : vector<1x128xf32>
    %224 = tpu.matmul %221, %223, %cst_214 {dimension_numbers = #tpu.dot_dimension_numbers<[1], [0], [0], [1], [0, 0, 1, 1], [], []>} : vector<1x64xf32>, vector<64x128xf32>, vector<1x128xf32> -> vector<1x128xf32>
    %225 = arith.addf %220, %224 : vector<1x128xf32>
    %226 = vector.extract_strided_slice %169 {offsets = [11, 0], sizes = [1, 64], strides = [1, 1]} : vector<128x64xf32> to vector<1x64xf32>
    %c11 = arith.constant 11 : index
    %c0_215 = arith.constant 0 : index
    %c0_216 = arith.constant 0 : index
    %227 = vector.load %arg9[%c11, %c0_215, %c0_216] : memref<16x64x128xf32, #tpu.memory_space<vmem>>, vector<1x64x128xf32>
    %228 = vector.shape_cast %227 : vector<1x64x128xf32> to vector<64x128xf32>
    %cst_217 = arith.constant dense<0.000000e+00> : vector<1x128xf32>
    %229 = tpu.matmul %226, %228, %cst_217 {dimension_numbers = #tpu.dot_dimension_numbers<[1], [0], [0], [1], [0, 0, 1, 1], [], []>} : vector<1x64xf32>, vector<64x128xf32>, vector<1x128xf32> -> vector<1x128xf32>
    %230 = arith.addf %225, %229 : vector<1x128xf32>
    %231 = vector.extract_strided_slice %169 {offsets = [12, 0], sizes = [1, 64], strides = [1, 1]} : vector<128x64xf32> to vector<1x64xf32>
    %c12 = arith.constant 12 : index
    %c0_218 = arith.constant 0 : index
    %c0_219 = arith.constant 0 : index
    %232 = vector.load %arg9[%c12, %c0_218, %c0_219] : memref<16x64x128xf32, #tpu.memory_space<vmem>>, vector<1x64x128xf32>
    %233 = vector.shape_cast %232 : vector<1x64x128xf32> to vector<64x128xf32>
    %cst_220 = arith.constant dense<0.000000e+00> : vector<1x128xf32>
    %234 = tpu.matmul %231, %233, %cst_220 {dimension_numbers = #tpu.dot_dimension_numbers<[1], [0], [0], [1], [0, 0, 1, 1], [], []>} : vector<1x64xf32>, vector<64x128xf32>, vector<1x128xf32> -> vector<1x128xf32>
    %235 = arith.addf %230, %234 : vector<1x128xf32>
    %236 = vector.extract_strided_slice %169 {offsets = [13, 0], sizes = [1, 64], strides = [1, 1]} : vector<128x64xf32> to vector<1x64xf32>
    %c13 = arith.constant 13 : index
    %c0_221 = arith.constant 0 : index
    %c0_222 = arith.constant 0 : index
    %237 = vector.load %arg9[%c13, %c0_221, %c0_222] : memref<16x64x128xf32, #tpu.memory_space<vmem>>, vector<1x64x128xf32>
    %238 = vector.shape_cast %237 : vector<1x64x128xf32> to vector<64x128xf32>
    %cst_223 = arith.constant dense<0.000000e+00> : vector<1x128xf32>
    %239 = tpu.matmul %236, %238, %cst_223 {dimension_numbers = #tpu.dot_dimension_numbers<[1], [0], [0], [1], [0, 0, 1, 1], [], []>} : vector<1x64xf32>, vector<64x128xf32>, vector<1x128xf32> -> vector<1x128xf32>
    %240 = arith.addf %235, %239 : vector<1x128xf32>
    %241 = vector.extract_strided_slice %169 {offsets = [14, 0], sizes = [1, 64], strides = [1, 1]} : vector<128x64xf32> to vector<1x64xf32>
    %c14 = arith.constant 14 : index
    %c0_224 = arith.constant 0 : index
    %c0_225 = arith.constant 0 : index
    %242 = vector.load %arg9[%c14, %c0_224, %c0_225] : memref<16x64x128xf32, #tpu.memory_space<vmem>>, vector<1x64x128xf32>
    %243 = vector.shape_cast %242 : vector<1x64x128xf32> to vector<64x128xf32>
    %cst_226 = arith.constant dense<0.000000e+00> : vector<1x128xf32>
    %244 = tpu.matmul %241, %243, %cst_226 {dimension_numbers = #tpu.dot_dimension_numbers<[1], [0], [0], [1], [0, 0, 1, 1], [], []>} : vector<1x64xf32>, vector<64x128xf32>, vector<1x128xf32> -> vector<1x128xf32>
    %245 = arith.addf %240, %244 : vector<1x128xf32>
    %246 = vector.extract_strided_slice %169 {offsets = [15, 0], sizes = [1, 64], strides = [1, 1]} : vector<128x64xf32> to vector<1x64xf32>
    %c15 = arith.constant 15 : index
    %c0_227 = arith.constant 0 : index
    %c0_228 = arith.constant 0 : index
    %247 = vector.load %arg9[%c15, %c0_227, %c0_228] : memref<16x64x128xf32, #tpu.memory_space<vmem>>, vector<1x64x128xf32>
    %248 = vector.shape_cast %247 : vector<1x64x128xf32> to vector<64x128xf32>
    %cst_229 = arith.constant dense<0.000000e+00> : vector<1x128xf32>
    %249 = tpu.matmul %246, %248, %cst_229 {dimension_numbers = #tpu.dot_dimension_numbers<[1], [0], [0], [1], [0, 0, 1, 1], [], []>} : vector<1x64xf32>, vector<64x128xf32>, vector<1x128xf32> -> vector<1x128xf32>
    %250 = arith.addf %245, %249 : vector<1x128xf32>
    %c0_230 = arith.constant 0 : index
    %c0_231 = arith.constant 0 : index
    %251 = vector.load %arg10[%c0_230, %c0_231] : memref<1x128xf32, #tpu.memory_space<vmem>>, vector<1x128xf32>
    %252 = arith.addf %250, %251 : vector<1x128xf32>
    %cst_232 = arith.constant 0.000000e+00 : f32
    %253 = vector.broadcast %cst_232 : f32 to vector<1x128xf32>
    %254 = arith.cmpf oge, %252, %253 : vector<1x128xf32>
    %cst_233 = arith.constant 0.00999999977 : f32
    %255 = vector.broadcast %cst_233 : f32 to vector<1x128xf32>
    %256 = arith.mulf %255, %252 : vector<1x128xf32>
    %257 = arith.select %254, %252, %256 : vector<1x128xi1>, vector<1x128xf32>
    %c0_234 = arith.constant 0 : index
    %c0_235 = arith.constant 0 : index
    %258 = vector.load %arg11[%c0_234, %c0_235] : memref<128x128xf32, #tpu.memory_space<vmem>>, vector<128x128xf32>
    %cst_236 = arith.constant dense<0.000000e+00> : vector<1x128xf32>
    %259 = tpu.matmul %257, %258, %cst_236 {dimension_numbers = #tpu.dot_dimension_numbers<[1], [0], [0], [1], [0, 0, 1, 1], [], []>} : vector<1x128xf32>, vector<128x128xf32>, vector<1x128xf32> -> vector<1x128xf32>
    %c0_237 = arith.constant 0 : index
    %c0_238 = arith.constant 0 : index
    %260 = vector.load %arg12[%c0_237, %c0_238] : memref<1x128xf32, #tpu.memory_space<vmem>>, vector<1x128xf32>
    %261 = arith.addf %259, %260 : vector<1x128xf32>
    %262 = vector.shape_cast %261 : vector<1x128xf32> to vector<1x128xf32>
    %263 = vector.broadcast %262 : vector<1x128xf32> to vector<8x128xf32>
    %c0_239 = arith.constant 0 : index
    %c0_240 = arith.constant 0 : index
    %c0_241 = arith.constant 0 : index
    %264 = vector.load %arg13[%c0_239, %c0_240, %c0_241] : memref<1x8x128xf32, #tpu.memory_space<vmem>>, vector<1x8x128xf32>
    %265 = vector.shape_cast %264 : vector<1x8x128xf32> to vector<8x128xf32>
    %266 = vector.shape_cast %263 : vector<8x128xf32> to vector<1x8x128xf32>
    tpu.vector_store %arg13[%c0_239, %c0_240, %c0_241], %266 {strides = array<i32>} : memref<1x8x128xf32, #tpu.memory_space<vmem>>, vector<1x8x128xf32>,
    return
  }
  func.func @transform_0(%arg0: i32) -> (i32, i32) {
    %c0_i32 = arith.constant 0 : i32
    %c0_i32_0 = arith.constant 0 : i32
    return %arg0, %c0_i32 : i32, i32
  }
  func.func @transform_1(%arg0: i32) -> (i32, i32, i32) {
    %c0_i32 = arith.constant 0 : i32
    %c0_i32_0 = arith.constant 0 : i32
    %c0_i32_1 = arith.constant 0 : i32
    %c0_i32_2 = arith.constant 0 : i32
    return %c0_i32, %c0_i32_0, %c0_i32_1 : i32, i32, i32
  }
  func.func @transform_2(%arg0: i32) -> (i32, i32) {
    %c0_i32 = arith.constant 0 : i32
    %c0_i32_0 = arith.constant 0 : i32
    %c0_i32_1 = arith.constant 0 : i32
    return %c0_i32, %c0_i32_0 : i32, i32
  }
  func.func @transform_3(%arg0: i32) -> (i32, i32, i32) {
    %c0_i32 = arith.constant 0 : i32
    %c0_i32_0 = arith.constant 0 : i32
    %c0_i32_1 = arith.constant 0 : i32
    %c0_i32_2 = arith.constant 0 : i32
    return %c0_i32, %c0_i32_0, %c0_i32_1 : i32, i32, i32
  }
  func.func @transform_4(%arg0: i32) -> (i32, i32) {
    %c0_i32 = arith.constant 0 : i32
    %c0_i32_0 = arith.constant 0 : i32
    %c0_i32_1 = arith.constant 0 : i32
    return %c0_i32, %c0_i32_0 : i32, i32
  }
  func.func @transform_5(%arg0: i32) -> (i32, i32, i32) {
    %c0_i32 = arith.constant 0 : i32
    %c0_i32_0 = arith.constant 0 : i32
    %c0_i32_1 = arith.constant 0 : i32
    %c0_i32_2 = arith.constant 0 : i32
    return %c0_i32, %c0_i32_0, %c0_i32_1 : i32, i32, i32
  }
  func.func @transform_6(%arg0: i32) -> (i32, i32) {
    %c0_i32 = arith.constant 0 : i32
    %c0_i32_0 = arith.constant 0 : i32
    %c0_i32_1 = arith.constant 0 : i32
    return %c0_i32, %c0_i32_0 : i32, i32
  }
  func.func @transform_7(%arg0: i32) -> (i32, i32) {
    %c0_i32 = arith.constant 0 : i32
    %c0_i32_0 = arith.constant 0 : i32
    %c0_i32_1 = arith.constant 0 : i32
    return %c0_i32, %c0_i32_0 : i32, i32
  }
  func.func @transform_8(%arg0: i32) -> (i32, i32, i32) {
    %c0_i32 = arith.constant 0 : i32
    %c0_i32_0 = arith.constant 0 : i32
    %c0_i32_1 = arith.constant 0 : i32
    %c0_i32_2 = arith.constant 0 : i32
    return %c0_i32, %c0_i32_0, %c0_i32_1 : i32, i32, i32
  }
  func.func @transform_9(%arg0: i32) -> (i32, i32) {
    %c0_i32 = arith.constant 0 : i32
    %c0_i32_0 = arith.constant 0 : i32
    %c0_i32_1 = arith.constant 0 : i32
    return %c0_i32, %c0_i32_0 : i32, i32
  }
  func.func @transform_10(%arg0: i32) -> (i32, i32) {
    %c0_i32 = arith.constant 0 : i32
    %c0_i32_0 = arith.constant 0 : i32
    %c0_i32_1 = arith.constant 0 : i32
    return %c0_i32, %c0_i32_0 : i32, i32
  }
  func.func @transform_11(%arg0: i32) -> (i32, i32) {
    %c0_i32 = arith.constant 0 : i32
    %c0_i32_0 = arith.constant 0 : i32
    %c0_i32_1 = arith.constant 0 : i32
    return %c0_i32, %c0_i32_0 : i32, i32
  }
  func.func @transform_12(%arg0: i32) -> (i32, i32, i32) {
    %c0_i32 = arith.constant 0 : i32
    %c0_i32_0 = arith.constant 0 : i32
    %c0_i32_1 = arith.constant 0 : i32
    return %arg0, %c0_i32, %c0_i32_0 : i32, i32, i32
  }
}

</mosaic_0001>

<llo_original>
// kernel: dqn_forward.1
$region0: #{dqn_forward.1}
  #allocation0 [shape = 'u32[]', space=smem, size = 0x4, offset = 0x4, fixed_abs, tag = 'smem constant byte address 0x4 - core index']
  #allocation1 [shape = 'u32[144,128]{1,0:T(1,128)}', space=vmem, size = 0x12000, scoped, tag = 'internal scratch']
  #allocation2 [shape = 'f32[296,128]{1,0:T(8,128)}', space=vmem, size = 0x25000, scoped, tag = 'scratch operand']
  #allocation3 [shape = 'f32[296,128]{1,0:T(8,128)}', space=vmem, size = 0x25000, scoped, tag = 'scratch operand']
  %s0 = inlined_call_operand.vmem [shape: f32[592,128], index: 0, kind: input, shape index: {}]
  %s1 = inlined_call_operand.vmem [shape: f32[9,128,128], index: 1, kind: input, shape index: {}]
  %s2 = inlined_call_operand.vmem [shape: f32[1,128], index: 2, kind: input, shape index: {}]
  %s3 = inlined_call_operand.vmem [shape: f32[9,128,128], index: 3, kind: input, shape index: {}]
  %s4 = inlined_call_operand.vmem [shape: f32[1,128], index: 4, kind: input, shape index: {}]
  %s5 = inlined_call_operand.vmem [shape: f32[9,128,128], index: 5, kind: input, shape index: {}]
  %s6 = inlined_call_operand.vmem [shape: f32[1,128], index: 6, kind: input, shape index: {}]
  %s7 = inlined_call_operand.vmem [shape: f32[64,256], index: 7, kind: input, shape index: {}]
  %s8 = inlined_call_operand.vmem [shape: f32[16,64,128], index: 8, kind: input, shape index: {}]
  %s9 = inlined_call_operand.vmem [shape: f32[1,128], index: 9, kind: input, shape index: {}]
  %s10 = inlined_call_operand.vmem [shape: f32[128,128], index: 10, kind: input, shape index: {}]
  %s11 = inlined_call_operand.vmem [shape: f32[1,128], index: 11, kind: input, shape index: {}]
  %s12 = inlined_call_operand.vmem [shape: f32[2,8,128], index: 12, kind: output, shape index: {}]
  %s13 = sld [smem:[#allocation0]]
  $region81: #{dqn_forward.1} parent=0
    _
  %s15 = ssub.s32 1, %s13
  %s16 = scalar_select 0, %s15, %s13
  loop: start=0, step=1, limit=4
  $region2: #{dqn_forward.1} parent=0 // loop_pre_header
    _
  $region3: #{dqn_forward.1} parent=0 // loop_header
    %s18 = sphi 0, %s22
    %p19 = scmp.ge.s32.totalorder %s18, 4
    %s28 = sphi 0, %s30
    %s31 = sphi 0, %s28
    %s32 = sphi 0, %s31
    %s48 = sphi 0, %s32
    %s52 = sphi 0, %s52
    %s54 = sphi 0, %s52
    %s55 = sphi 0, %s54
    %s69 = sphi 0, %s55
    %s73 = sphi 0, %s73
    %s75 = sphi 0, %s73
    %s76 = sphi 0, %s75
    %s90 = sphi 0, %s76
    %s94 = sphi 0, %s94
    %s96 = sphi 0, %s94
    %s97 = sphi 0, %s96
    %s111 = sphi 0, %s97
    %s115 = sphi 0, %s115
    %s117 = sphi 0, %s115
    %s118 = sphi 0, %s117
    %s132 = sphi 0, %s118
    %s136 = sphi 0, %s136
    %s138 = sphi 0, %s136
    %s139 = sphi 0, %s138
    %s153 = sphi 0, %s139
    %s157 = sphi 0, %s157
    %s159 = sphi 0, %s157
    %s160 = sphi 0, %s159
    %s174 = sphi 0, %s160
    %s178 = sphi 0, %s178
    %s180 = sphi 0, %s178
    %s181 = sphi 0, %s180
    %s195 = sphi 0, %s181
    %s199 = sphi 0, %s199
    %s201 = sphi 0, %s199
    %s202 = sphi 0, %s201
    %s216 = sphi 0, %s202
    %s220 = sphi 0, %s220
    %s222 = sphi 0, %s220
    %s223 = sphi 0, %s222
    %s237 = sphi 0, %s223
    %s241 = sphi 0, %s241
    %s243 = sphi 0, %s241
    %s244 = sphi 0, %s243
    %s258 = sphi 0, %s244
    %s262 = sphi 0, %s262
    %s264 = sphi 0, %s262
    %s265 = sphi 0, %s264
    %s279 = sphi 0, %s265
    %s285 = sphi 0, %s287
    %s288 = sphi 0, %s285
    %s289 = sphi 0, %s288
    %s305 = sphi 0, %s289
  $region4: #{dqn_forward.1} parent=0 // loop_header_branch
    %21 = sbr.rel (%p19) target = $region8
  $region5: #{dqn_forward.1} parent=0 // loop_body
    %s23 = ssub.s32 %s18, 1
    %s24 = ssub.s32 %s18, 2
    %s25 = sadd.s32 %s18, 1
    %s26 = ssub.s32 %s18, %s25
    %p27 = scmp.eq.s32.totalorder %s26, 0
    %s29 = sadd.s32 %s28, 1
    %s30 = scalar_select %p27, %s28, %s29
    %p33 = pneg %p27
    %p34 = scmp.eq.s32.totalorder %s18, 1
    %p35 = por %p33, %p34
    %p36 = scmp.ne.s32.totalorder %s28, %s31
    %p37 = scmp.eq.s32.totalorder %s18, 0
    %p38 = por %p36, %p37
    %p39 = scmp.ne.s32.totalorder %s28, %s31
    %p40 = scmp.eq.s32.totalorder %s23, 1
    %p41 = por %p39, %p40
    %p42 = scmp.ne.s32.totalorder %s31, %s32
    %p43 = scmp.eq.s32.totalorder %s23, 0
    %p44 = por %p42, %p43
    %p45 = scmp.ne.s32.totalorder %s31, %s32
    %p46 = scmp.eq.s32.totalorder %s24, 1
    %p47 = por %p45, %p46
    %p49 = scmp.ne.s32.totalorder %s32, %s48
    %p50 = scmp.eq.s32.totalorder %s24, 0
    %p51 = por %p49, %p50
    %s53 = sadd.s32 %s52, 1
    %p56 = scmp.eq.s32.totalorder %s18, 1
    %p57 = scmp.ne.s32.totalorder %s52, %s54
    %p58 = scmp.eq.s32.totalorder %s18, 0
    %p59 = por %p57, %p58
    %p60 = scmp.ne.s32.totalorder %s52, %s54
    %p61 = scmp.eq.s32.totalorder %s23, 1
    %p62 = por %p60, %p61
    %p63 = scmp.ne.s32.totalorder %s54, %s55
    %p64 = scmp.eq.s32.totalorder %s23, 0
    %p65 = por %p63, %p64
    %p66 = scmp.ne.s32.totalorder %s54, %s55
    %p67 = scmp.eq.s32.totalorder %s24, 1
    %p68 = por %p66, %p67
    %p70 = scmp.ne.s32.totalorder %s55, %s69
    %p71 = scmp.eq.s32.totalorder %s24, 0
    %p72 = por %p70, %p71
    %s74 = sadd.s32 %s73, 1
    %p77 = scmp.eq.s32.totalorder %s18, 1
    %p78 = scmp.ne.s32.totalorder %s73, %s75
    %p79 = scmp.eq.s32.totalorder %s18, 0
    %p80 = por %p78, %p79
    %p81 = scmp.ne.s32.totalorder %s73, %s75
    %p82 = scmp.eq.s32.totalorder %s23, 1
    %p83 = por %p81, %p82
    %p84 = scmp.ne.s32.totalorder %s75, %s76
    %p85 = scmp.eq.s32.totalorder %s23, 0
    %p86 = por %p84, %p85
    %p87 = scmp.ne.s32.totalorder %s75, %s76
    %p88 = scmp.eq.s32.totalorder %s24, 1
    %p89 = por %p87, %p88
    %p91 = scmp.ne.s32.totalorder %s76, %s90
    %p92 = scmp.eq.s32.totalorder %s24, 0
    %p93 = por %p91, %p92
    %s95 = sadd.s32 %s94, 1
    %p98 = scmp.eq.s32.totalorder %s18, 1
    %p99 = scmp.ne.s32.totalorder %s94, %s96
    %p100 = scmp.eq.s32.totalorder %s18, 0
    %p101 = por %p99, %p100
    %p102 = scmp.ne.s32.totalorder %s94, %s96
    %p103 = scmp.eq.s32.totalorder %s23, 1
    %p104 = por %p102, %p103
    %p105 = scmp.ne.s32.totalorder %s96, %s97
    %p106 = scmp.eq.s32.totalorder %s23, 0
    %p107 = por %p105, %p106
    %p108 = scmp.ne.s32.totalorder %s96, %s97
    %p109 = scmp.eq.s32.totalorder %s24, 1
    %p110 = por %p108, %p109
    %p112 = scmp.ne.s32.totalorder %s97, %s111
    %p113 = scmp.eq.s32.totalorder %s24, 0
    %p114 = por %p112, %p113
    %s116 = sadd.s32 %s115, 1
    %p119 = scmp.eq.s32.totalorder %s18, 1
    %p120 = scmp.ne.s32.totalorder %s115, %s117
    %p121 = scmp.eq.s32.totalorder %s18, 0
    %p122 = por %p120, %p121
    %p123 = scmp.ne.s32.totalorder %s115, %s117
    %p124 = scmp.eq.s32.totalorder %s23, 1
    %p125 = por %p123, %p124
    %p126 = scmp.ne.s32.totalorder %s117, %s118
    %p127 = scmp.eq.s32.totalorder %s23, 0
    %p128 = por %p126, %p127
    %p129 = scmp.ne.s32.totalorder %s117, %s118
    %p130 = scmp.eq.s32.totalorder %s24, 1
    %p131 = por %p129, %p130
    %p133 = scmp.ne.s32.totalorder %s118, %s132
    %p134 = scmp.eq.s32.totalorder %s24, 0
    %p135 = por %p133, %p134
    %s137 = sadd.s32 %s136, 1
    %p140 = scmp.eq.s32.totalorder %s18, 1
    %p141 = scmp.ne.s32.totalorder %s136, %s138
    %p142 = scmp.eq.s32.totalorder %s18, 0
    %p143 = por %p141, %p142
    %p144 = scmp.ne.s32.totalorder %s136, %s138
    %p145 = scmp.eq.s32.totalorder %s23, 1
    %p146 = por %p144, %p145
    %p147 = scmp.ne.s32.totalorder %s138, %s139
    %p148 = scmp.eq.s32.totalorder %s23, 0
    %p149 = por %p147, %p148
    %p150 = scmp.ne.s32.totalorder %s138, %s139
    %p151 = scmp.eq.s32.totalorder %s24, 1
    %p152 = por %p150, %p151
    %p154 = scmp.ne.s32.totalorder %s139, %s153
    %p155 = scmp.eq.s32.totalorder %s24, 0
    %p156 = por %p154, %p155
    %s158 = sadd.s32 %s157, 1
    %p161 = scmp.eq.s32.totalorder %s18, 1
    %p162 = scmp.ne.s32.totalorder %s157, %s159
    %p163 = scmp.eq.s32.totalorder %s18, 0
    %p164 = por %p162, %p163
    %p165 = scmp.ne.s32.totalorder %s157, %s159
    %p166 = scmp.eq.s32.totalorder %s23, 1
    %p167 = por %p165, %p166
    %p168 = scmp.ne.s32.totalorder %s159, %s160
    %p169 = scmp.eq.s32.totalorder %s23, 0
    %p170 = por %p168, %p169
    %p171 = scmp.ne.s32.totalorder %s159, %s160
    %p172 = scmp.eq.s32.totalorder %s24, 1
    %p173 = por %p171, %p172
    %p175 = scmp.ne.s32.totalorder %s160, %s174
    %p176 = scmp.eq.s32.totalorder %s24, 0
    %p177 = por %p175, %p176
    %s179 = sadd.s32 %s178, 1
    %p182 = scmp.eq.s32.totalorder %s18, 1
    %p183 = scmp.ne.s32.totalorder %s178, %s180
    %p184 = scmp.eq.s32.totalorder %s18, 0
    %p185 = por %p183, %p184
    %p186 = scmp.ne.s32.totalorder %s178, %s180
    %p187 = scmp.eq.s32.totalorder %s23, 1
    %p188 = por %p186, %p187
    %p189 = scmp.ne.s32.totalorder %s180, %s181
    %p190 = scmp.eq.s32.totalorder %s23, 0
    %p191 = por %p189, %p190
    %p192 = scmp.ne.s32.totalorder %s180, %s181
    %p193 = scmp.eq.s32.totalorder %s24, 1
    %p194 = por %p192, %p193
    %p196 = scmp.ne.s32.totalorder %s181, %s195
    %p197 = scmp.eq.s32.totalorder %s24, 0
    %p198 = por %p196, %p197
    %s200 = sadd.s32 %s199, 1
    %p203 = scmp.eq.s32.totalorder %s18, 1
    %p204 = scmp.ne.s32.totalorder %s199, %s201
    %p205 = scmp.eq.s32.totalorder %s18, 0
    %p206 = por %p204, %p205
    %p207 = scmp.ne.s32.totalorder %s199, %s201
    %p208 = scmp.eq.s32.totalorder %s23, 1
    %p209 = por %p207, %p208
    %p210 = scmp.ne.s32.totalorder %s201, %s202
    %p211 = scmp.eq.s32.totalorder %s23, 0
    %p212 = por %p210, %p211
    %p213 = scmp.ne.s32.totalorder %s201, %s202
    %p214 = scmp.eq.s32.totalorder %s24, 1
    %p215 = por %p213, %p214
    %p217 = scmp.ne.s32.totalorder %s202, %s216
    %p218 = scmp.eq.s32.totalorder %s24, 0
    %p219 = por %p217, %p218
    %s221 = sadd.s32 %s220, 1
    %p224 = scmp.eq.s32.totalorder %s18, 1
    %p225 = scmp.ne.s32.totalorder %s220, %s222
    %p226 = scmp.eq.s32.totalorder %s18, 0
    %p227 = por %p225, %p226
    %p228 = scmp.ne.s32.totalorder %s220, %s222
    %p229 = scmp.eq.s32.totalorder %s23, 1
    %p230 = por %p228, %p229
    %p231 = scmp.ne.s32.totalorder %s222, %s223
    %p232 = scmp.eq.s32.totalorder %s23, 0
    %p233 = por %p231, %p232
    %p234 = scmp.ne.s32.totalorder %s222, %s223
    %p235 = scmp.eq.s32.totalorder %s24, 1
    %p236 = por %p234, %p235
    %p238 = scmp.ne.s32.totalorder %s223, %s237
    %p239 = scmp.eq.s32.totalorder %s24, 0
    %p240 = por %p238, %p239
    %s242 = sadd.s32 %s241, 1
    %p245 = scmp.eq.s32.totalorder %s18, 1
    %p246 = scmp.ne.s32.totalorder %s241, %s243
    %p247 = scmp.eq.s32.totalorder %s18, 0
    %p248 = por %p246, %p247
    %p249 = scmp.ne.s32.totalorder %s241, %s243
    %p250 = scmp.eq.s32.totalorder %s23, 1
    %p251 = por %p249, %p250
    %p252 = scmp.ne.s32.totalorder %s243, %s244
    %p253 = scmp.eq.s32.totalorder %s23, 0
    %p254 = por %p252, %p253
    %p255 = scmp.ne.s32.totalorder %s243, %s244
    %p256 = scmp.eq.s32.totalorder %s24, 1
    %p257 = por %p255, %p256
    %p259 = scmp.ne.s32.totalorder %s244, %s258
    %p260 = scmp.eq.s32.totalorder %s24, 0
    %p261 = por %p259, %p260
    %s263 = sadd.s32 %s262, 1
    %p266 = scmp.eq.s32.totalorder %s18, 1
    %p267 = scmp.ne.s32.totalorder %s262, %s264
    %p268 = scmp.eq.s32.totalorder %s18, 0
    %p269 = por %p267, %p268
    %p270 = scmp.ne.s32.totalorder %s262, %s264
    %p271 = scmp.eq.s32.totalorder %s23, 1
    %p272 = por %p270, %p271
    %p273 = scmp.ne.s32.totalorder %s264, %s265
    %p274 = scmp.eq.s32.totalorder %s23, 0
    %p275 = por %p273, %p274
    %p276 = scmp.ne.s32.totalorder %s264, %s265
    %p277 = scmp.eq.s32.totalorder %s24, 1
    %p278 = por %p276, %p277
    %p280 = scmp.ne.s32.totalorder %s265, %s279
    %p281 = scmp.eq.s32.totalorder %s24, 0
    %p282 = por %p280, %p281
    %s283 = ssub.s32 %s18, %s25
    %p284 = scmp.eq.s32.totalorder %s283, 0
    %s286 = sadd.s32 %s285, 1
    %s287 = scalar_select %p284, %s285, %s286
    %p290 = pneg %p284
    %p291 = scmp.eq.s32.totalorder %s18, 1
    %p292 = por %p290, %p291
    %p293 = scmp.ne.s32.totalorder %s285, %s288
    %p294 = scmp.eq.s32.totalorder %s18, 0
    %p295 = por %p293, %p294
    %p296 = scmp.ne.s32.totalorder %s285, %s288
    %p297 = scmp.eq.s32.totalorder %s23, 1
    %p298 = por %p296, %p297
    %p299 = scmp.ne.s32.totalorder %s288, %s289
    %p300 = scmp.eq.s32.totalorder %s23, 0
    %p301 = por %p299, %p300
    %p302 = scmp.ne.s32.totalorder %s288, %s289
    %p303 = scmp.eq.s32.totalorder %s24, 1
    %p304 = por %p302, %p303
    %p306 = scmp.ne.s32.totalorder %s289, %s305
    %p307 = scmp.eq.s32.totalorder %s24, 0
    %p308 = por %p306, %p307
    %p309 = scmp.le.s32.totalorder 1, %s18
    %p310 = scmp.lt.s32.totalorder %s18, 3
    %p311 = pnand %p309, %p310
    %p312 = pneg %p311
    // Predicated region
    $region9: #{dqn_forward.1} parent=5 // pred_check
      _
    $region10: #{dqn_forward.1} parent=5 // pred_check_branch
      %314 = sbr.rel (%p311) target = $region12
    $region11: #{dqn_forward.1} parent=5 // pred_region
      %s315 = ssub.s32 %s18, 1
      // Predicated region
      $region13: #{dqn_forward.1} parent=11 // pred_check
        %p316 = pneg %p65
      $region14: #{dqn_forward.1} parent=11 // pred_check_branch
        %318 = sbr.rel (%p316) target = $region16
      $region15: #{dqn_forward.1} parent=11 // pred_region
        _
      $region16: #{dqn_forward.1} parent=11 // pred_fallthru
        _
      // Predicated region
      $region17: #{dqn_forward.1} parent=11 // pred_check
        %p319 = pneg %p86
      $region18: #{dqn_forward.1} parent=11 // pred_check_branch
        %321 = sbr.rel (%p319) target = $region20
      $region19: #{dqn_forward.1} parent=11 // pred_region
        _
      $region20: #{dqn_forward.1} parent=11 // pred_fallthru
        _
      // Predicated region
      $region21: #{dqn_forward.1} parent=11 // pred_check
        %p322 = pneg %p107
      $region22: #{dqn_forward.1} parent=11 // pred_check_branch
        %324 = sbr.rel (%p322) target = $region24
      $region23: #{dqn_forward.1} parent=11 // pred_region
        _
      $region24: #{dqn_forward.1} parent=11 // pred_fallthru
        _
      // Predicated region
      $region25: #{dqn_forward.1} parent=11 // pred_check
        %p325 = pneg %p128
      $region26: #{dqn_forward.1} parent=11 // pred_check_branch
        %327 = sbr.rel (%p325) target = $region28
      $region27: #{dqn_forward.1} parent=11 // pred_region
        _
      $region28: #{dqn_forward.1} parent=11 // pred_fallthru
        _
      // Predicated region
      $region29: #{dqn_forward.1} parent=11 // pred_check
        %p328 = pneg %p149
      $region30: #{dqn_forward.1} parent=11 // pred_check_branch
        %330 = sbr.rel (%p328) target = $region32
      $region31: #{dqn_forward.1} parent=11 // pred_region
        _
      $region32: #{dqn_forward.1} parent=11 // pred_fallthru
        _
      // Predicated region
      $region33: #{dqn_forward.1} parent=11 // pred_check
        %p331 = pneg %p170
      $region34: #{dqn_forward.1} parent=11 // pred_check_branch
        %333 = sbr.rel (%p331) target = $region36
      $region35: #{dqn_forward.1} parent=11 // pred_region
        _
      $region36: #{dqn_forward.1} parent=11 // pred_fallthru
        _
      // Predicated region
      $region37: #{dqn_forward.1} parent=11 // pred_check
        %p334 = pneg %p191
      $region38: #{dqn_forward.1} parent=11 // pred_check_branch
        %336 = sbr.rel (%p334) target = $region40
      $region39: #{dqn_forward.1} parent=11 // pred_region
        _
      $region40: #{dqn_forward.1} parent=11 // pred_fallthru
        _
      // Predicated region
      $region41: #{dqn_forward.1} parent=11 // pred_check
        %p337 = pneg %p212
      $region42: #{dqn_forward.1} parent=11 // pred_check_branch
        %339 = sbr.rel (%p337) target = $region44
      $region43: #{dqn_forward.1} parent=11 // pred_region
        _
      $region44: #{dqn_forward.1} parent=11 // pred_fallthru
        _
      // Predicated region
      $region45: #{dqn_forward.1} parent=11 // pred_check
        %p340 = pneg %p233
      $region46: #{dqn_forward.1} parent=11 // pred_check_branch
        %342 = sbr.rel (%p340) target = $region48
      $region47: #{dqn_forward.1} parent=11 // pred_region
        _
      $region48: #{dqn_forward.1} parent=11 // pred_fallthru
        _
      // Predicated region
      $region49: #{dqn_forward.1} parent=11 // pred_check
        %p343 = pneg %p254
      $region50: #{dqn_forward.1} parent=11 // pred_check_branch
        %345 = sbr.rel (%p343) target = $region52
      $region51: #{dqn_forward.1} parent=11 // pred_region
        _
      $region52: #{dqn_forward.1} parent=11 // pred_fallthru
        _
      // Predicated region
      $region53: #{dqn_forward.1} parent=11 // pred_check
        %p346 = pneg %p275
      $region54: #{dqn_forward.1} parent=11 // pred_check_branch
        %348 = sbr.rel (%p346) target = $region56
      $region55: #{dqn_forward.1} parent=11 // pred_region
        _
      $region56: #{dqn_forward.1} parent=11 // pred_fallthru
        _
    $region12: #{dqn_forward.1} parent=5 // pred_fallthru
      _
    %p349 = scmp.lt.s32.totalorder %s18, 2
    // Predicated region
    $region57: #{dqn_forward.1} parent=5 // pred_check
      %p350 = pneg %p349
    $region58: #{dqn_forward.1} parent=5 // pred_check_branch
      %352 = sbr.rel (%p350) target = $region60
    $region59: #{dqn_forward.1} parent=5 // pred_region
      // Predicated region
      $region61: #{dqn_forward.1} parent=59 // pred_check
        %p353 = pneg %p38
      $region62: #{dqn_forward.1} parent=59 // pred_check_branch
        %355 = sbr.rel (%p353) target = $region64
      $region63: #{dqn_forward.1} parent=59 // pred_region
        %s356 = smul.u32 37, %s18
        %p357 = scmp.lt.s32.totalorder %s356, 73
        %s358 = scalar_select %p357, %s356, 73
        %s359 = smul.addr %s358, 8
        %s360 = scalar_lea.vmem %s0, %s359
        %s361 = smul.u32 37, %s18
      $region64: #{dqn_forward.1} parent=59 // pred_fallthru
        _
    $region60: #{dqn_forward.1} parent=5 // pred_fallthru
      _
    %p362 = scmp.le.s32.totalorder 1, %s18
    %p363 = scmp.lt.s32.totalorder %s18, 3
    %p364 = pnand %p362, %p363
    %p365 = pneg %p364
    // Predicated region
    $region65: #{dqn_forward.1} parent=5 // pred_check
      _
    $region66: #{dqn_forward.1} parent=5 // pred_check_branch
      %367 = sbr.rel (%p364) target = $region68
    $region67: #{dqn_forward.1} parent=5 // pred_region
      %s368 = ssub.s32 %s18, 1
      %s369 = smul.u32 37, %s23
      %p370 = scmp.lt.s32.totalorder %s369, 73
      %s371 = scalar_select %p370, %s369, 73
      %s372 = smul.addr %s371, 8
      %s373 = scalar_lea.vmem %s0, %s372
      %p374 = pneg %p44
      %p375 = pneg %p41
      %p376 = pneg %p65
      %p377 = pneg %p62
      %p378 = pneg %p86
      %p379 = pneg %p83
      %p380 = pneg %p107
      %p381 = pneg %p104
      %p382 = pneg %p128
      %p383 = pneg %p125
      %p384 = pneg %p149
      %p385 = pneg %p146
      %p386 = pneg %p170
      %p387 = pneg %p167
      %p388 = pneg %p191
      %p389 = pneg %p188
      %p390 = pneg %p212
      %p391 = pneg %p209
      %p392 = pneg %p233
      %p393 = pneg %p230
      %p394 = pneg %p254
      %p395 = pneg %p251
      %p396 = pneg %p275
      %p397 = pneg %p272
      %p398 = pneg %p301
      %p399 = pneg %p298
      %p400 = scmp.lt.s32.totalorder %s23, 1
      %s401 = scalar_select %p400, %s23, 1
      %s402 = smul.addr %s401, 8
      %s403 = scalar_lea.vmem %s12, %s402
      %s404 = smul.u32 37, %s23
      %p405 = scmp.lt.s32.totalorder %s404, 73
      %s406 = scalar_select %p405, %s404, 73
      %s407 = smul.addr %s406, 8
      %s408 = scalar_lea.vmem %s0, %s407
      %s409 = smul.u32 37, %s23
      %p410 = scmp.lt.s32.totalorder %s23, 1
      %s411 = scalar_select %p410, %s23, 1
      %s412 = smul.addr %s411, 8
      %s413 = scalar_lea.vmem %s12, %s412
      %414 = vst [vmem:[#allocation2 + $0x100] sm:$0xff] 0.0
      %415 = vst [vmem:[#allocation2 + $0x108] sm:$0xff] 0.0
      %416 = vst [vmem:[#allocation2 + $0x110] sm:$0xff] 0.0
      %417 = vst [vmem:[#allocation2 + $0x118] sm:$0xff] 0.0
      %418 = vst [vmem:[#allocation2 + $0x120] sm:$0xff] 0.0
      %419 = vst [vmem:[#allocation3 + $0x100] sm:$0xff] 0.0
      %420 = vst [vmem:[#allocation3 + $0x108] sm:$0xff] 0.0
      %421 = vst [vmem:[#allocation3 + $0x110] sm:$0xff] 0.0
      %422 = vst [vmem:[#allocation3 + $0x118] sm:$0xff] 0.0
      %423 = vst [vmem:[#allocation3 + $0x120] sm:$0xff] 0.0
      %v424 = vld [vmem:[%s408] sm:$0xff]
      %v425 = vld [vmem:[%s408 + $0x8] sm:$0xff]
      %v426 = vld [vmem:[%s408 + $0x10] sm:$0xff]
      %v427 = vld [vmem:[%s408 + $0x18] sm:$0xff]
      %v428 = vld [vmem:[%s408 + $0x20] sm:$0xff]
      %v429 = vld [vmem:[%s408 + $0x28] sm:$0xff]
      %v430 = vld [vmem:[%s408 + $0x30] sm:$0xff]
      %v431 = vld [vmem:[%s408 + $0x38] sm:$0xff]
      %v432 = vld [vmem:[%s408 + $0x40] sm:$0xff]
      %v433 = vld [vmem:[%s408 + $0x48] sm:$0xff]
      %v434 = vld [vmem:[%s408 + $0x50] sm:$0xff]
      %v435 = vld [vmem:[%s408 + $0x58] sm:$0xff]
      %v436 = vld [vmem:[%s408 + $0x60] sm:$0xff]
      %v437 = vld [vmem:[%s408 + $0x68] sm:$0xff]
      %v438 = vld [vmem:[%s408 + $0x70] sm:$0xff]
      %v439 = vld [vmem:[%s408 + $0x78] sm:$0xff]
      %v440 = vld [vmem:[%s408 + $0x80] sm:$0xff]
      %v441 = vld [vmem:[%s408 + $0x88] sm:$0xff]
      %v442 = vld [vmem:[%s408 + $0x90] sm:$0xff]
      %v443 = vld [vmem:[%s408 + $0x98] sm:$0xff]
      %v444 = vld [vmem:[%s408 + $0xa0] sm:$0xff]
      %v445 = vld [vmem:[%s408 + $0xa8] sm:$0xff]
      %v446 = vld [vmem:[%s408 + $0xb0] sm:$0xff]
      %v447 = vld [vmem:[%s408 + $0xb8] sm:$0xff]
      %v448 = vld [vmem:[%s408 + $0xc0] sm:$0xff]
      %v449 = vld [vmem:[%s408 + $0xc8] sm:$0xff]
      %v450 = vld [vmem:[%s408 + $0xd0] sm:$0xff]
      %v451 = vld [vmem:[%s408 + $0xd8] sm:$0xff]
      %v452 = vld [vmem:[%s408 + $0xe0] sm:$0xff]
      %v453 = vld [vmem:[%s408 + $0xe8] sm:$0xff]
      %v454 = vld [vmem:[%s408 + $0xf0] sm:$0xff]
      %v455 = vld [vmem:[%s408 + $0xf8] sm:$0xff]
      %v456 = vld [vmem:[%s1] sm:$0xff]
      %v457 = vld [vmem:[%s1 + $0x8] sm:$0xff]
      %v458 = vld [vmem:[%s1 + $0x10] sm:$0xff]
      %v459 = vld [vmem:[%s1 + $0x18] sm:$0xff]
      %v460 = vld [vmem:[%s1 + $0x20] sm:$0xff]
      %v461 = vld [vmem:[%s1 + $0x28] sm:$0xff]
      %v462 = vld [vmem:[%s1 + $0x30] sm:$0xff]
      %v463 = vld [vmem:[%s1 + $0x38] sm:$0xff]
      %v464 = vld [vmem:[%s1 + $0x40] sm:$0xff]
      %v465 = vld [vmem:[%s1 + $0x48] sm:$0xff]
      %v466 = vld [vmem:[%s1 + $0x50] sm:$0xff]
      %v467 = vld [vmem:[%s1 + $0x58] sm:$0xff]
      %v468 = vld [vmem:[%s1 + $0x60] sm:$0xff]
      %v469 = vld [vmem:[%s1 + $0x68] sm:$0xff]
      %v470 = vld [vmem:[%s1 + $0x70] sm:$0xff]
      %v471 = vld [vmem:[%s1 + $0x78] sm:$0xff]
      %v472 = vld [vmem:[%s408 + $0x1] sm:$0xff]
      %v473 = vld [vmem:[%s408 + $0x9] sm:$0xff]
      %v474 = vld [vmem:[%s408 + $0x11] sm:$0xff]
      %v475 = vld [vmem:[%s408 + $0x19] sm:$0xff]
      %v476 = vld [vmem:[%s408 + $0x21] sm:$0xff]
      %v477 = vld [vmem:[%s408 + $0x29] sm:$0xff]
      %v478 = vld [vmem:[%s408 + $0x31] sm:$0xff]
      %v479 = vld [vmem:[%s408 + $0x39] sm:$0xff]
      %v480 = vld [vmem:[%s408 + $0x41] sm:$0xff]
      %v481 = vld [vmem:[%s408 + $0x49] sm:$0xff]
      %v482 = vld [vmem:[%s408 + $0x51] sm:$0xff]
      %v483 = vld [vmem:[%s408 + $0x59] sm:$0xff]
      %v484 = vld [vmem:[%s408 + $0x61] sm:$0xff]
      %v485 = vld [vmem:[%s408 + $0x69] sm:$0xff]
      %v486 = vld [vmem:[%s408 + $0x71] sm:$0xff]
      %v487 = vld [vmem:[%s408 + $0x79] sm:$0xff]
      %v488 = vld [vmem:[%s408 + $0x81] sm:$0xff]
      %v489 = vld [vmem:[%s408 + $0x89] sm:$0xff]
      %v490 = vld [vmem:[%s408 + $0x91] sm:$0xff]
      %v491 = vld [vmem:[%s408 + $0x99] sm:$0xff]
      %v492 = vld [vmem:[%s408 + $0xa1] sm:$0xff]
      %v493 = vld [vmem:[%s408 + $0xa9] sm:$0xff]
      %v494 = vld [vmem:[%s408 + $0xb1] sm:$0xff]
      %v495 = vld [vmem:[%s408 + $0xb9] sm:$0xff]
      %v496 = vld [vmem:[%s408 + $0xc1] sm:$0xff]
      %v497 = vld [vmem:[%s408 + $0xc9] sm:$0xff]
      %v498 = vld [vmem:[%s408 + $0xd1] sm:$0xff]
      %v499 = vld [vmem:[%s408 + $0xd9] sm:$0xff]
      %v500 = vld [vmem:[%s408 + $0xe1] sm:$0xff]
      %v501 = vld [vmem:[%s408 + $0xe9] sm:$0xff]
      %v502 = vld [vmem:[%s408 + $0xf1] sm:$0xff]
      %v503 = vld [vmem:[%s408 + $0xf9] sm:$0xff]
      %s504 = scalar_lea.vmem %s1, 128
      %v505 = vld [vmem:[%s504] sm:$0xff]
      %v506 = vld [vmem:[%s504 + $0x8] sm:$0xff]
      %v507 = vld [vmem:[%s504 + $0x10] sm:$0xff]
      %v508 = vld [vmem:[%s504 + $0x18] sm:$0xff]
      %v509 = vld [vmem:[%s504 + $0x20] sm:$0xff]
      %v510 = vld [vmem:[%s504 + $0x28] sm:$0xff]
      %v511 = vld [vmem:[%s504 + $0x30] sm:$0xff]
      %v512 = vld [vmem:[%s504 + $0x38] sm:$0xff]
      %v513 = vld [vmem:[%s504 + $0x40] sm:$0xff]
      %v514 = vld [vmem:[%s504 + $0x48] sm:$0xff]
      %v515 = vld [vmem:[%s504 + $0x50] sm:$0xff]
      %v516 = vld [vmem:[%s504 + $0x58] sm:$0xff]
      %v517 = vld [vmem:[%s504 + $0x60] sm:$0xff]
      %v518 = vld [vmem:[%s504 + $0x68] sm:$0xff]
      %v519 = vld [vmem:[%s504 + $0x70] sm:$0xff]
      %v520 = vld [vmem:[%s504 + $0x78] sm:$0xff]
      %521 = vmatprep.subr.mxu0 0.0
      %522 = vmatpush1.msra.mxu0 %v520
      %523 = vmatprep.subr.mxu0 0.0
      %524 = vmatpush1.msra.mxu0 %v519
      %525 = vmatprep.subr.mxu0 0.0
      %526 = vmatpush1.msra.mxu0 %v518
      %527 = vmatprep.subr.mxu0 0.0
      %528 = vmatpush1.msra.mxu0 %v517
      %529 = vmatprep.subr.mxu0 0.0
      %530 = vmatpush1.msra.mxu0 %v516
      %531 = vmatprep.subr.mxu0 0.0
      %532 = vmatpush1.msra.mxu0 %v515
      %533 = vmatprep.subr.mxu0 0.0
      %534 = vmatpush1.msra.mxu0 %v514
      %535 = vmatprep.subr.mxu0 0.0
      %536 = vmatpush1.msra.mxu0 %v513
      %537 = vmatprep.subr.mxu0 0.0
      %538 = vmatpush1.msra.mxu0 %v512
      %539 = vmatprep.subr.mxu0 0.0
      %540 = vmatpush1.msra.mxu0 %v511
      %541 = vmatprep.subr.mxu0 0.0
      %542 = vmatpush1.msra.mxu0 %v510
      %543 = vmatprep.subr.mxu0 0.0
      %544 = vmatpush1.msra.mxu0 %v509
      %545 = vmatprep.subr.mxu0 0.0
      %546 = vmatpush1.msra.mxu0 %v508
      %547 = vmatprep.subr.mxu0 0.0
      %548 = vmatpush1.msra.mxu0 %v507
      %549 = vmatprep.subr.mxu0 0.0
      %550 = vmatpush1.msra.mxu0 %v506
      %551 = vmatprep.subr.mxu0 0.0
      %552 = vmatpush1.msra.mxu0 %v505
      %553 = vmatprep.subr.mxu0 0.0
      %554 = vmatpush2.msra.mxu0 0.0
      %555 = vmatprep.subr.mxu0 0.0
      %556 = vmatpush2.msra.mxu0 0.0
      %557 = vmatprep.subr.mxu0 0.0
      %558 = vmatpush2.msra.mxu0 0.0
      %559 = vmatprep.subr.mxu0 0.0
      %560 = vmatpush2.msra.mxu0 0.0
      %561 = vmatprep.subr.mxu0 0.0
      %562 = vmatpush2.msra.mxu0 0.0
      %563 = vmatprep.subr.mxu0 0.0
      %564 = vmatpush2.msra.mxu0 0.0
      %565 = vmatprep.subr.mxu0 0.0
      %566 = vmatpush2.msra.mxu0 0.0
      %567 = vmatprep.subr.mxu0 0.0
      %568 = vmatpush2.msra.mxu0 0.0
      %569 = vmatprep.subr.mxu0 0.0
      %570 = vmatpush2.msra.mxu0 0.0
      %571 = vmatprep.subr.mxu0 0.0
      %572 = vmatpush2.msra.mxu0 0.0
      %573 = vmatprep.subr.mxu0 0.0
      %574 = vmatpush2.msra.mxu0 0.0
      %575 = vmatprep.subr.mxu0 0.0
      %576 = vmatpush2.msra.mxu0 0.0
      %577 = vmatprep.subr.mxu0 0.0
      %578 = vmatpush2.msra.mxu0 0.0
      %579 = vmatprep.subr.mxu0 0.0
      %580 = vmatpush2.msra.mxu0 0.0
      %581 = vmatprep.subr.mxu0 0.0
      %582 = vmatpush2.msra.mxu0 0.0
      %583 = vmatprep.subr.mxu0 0.0
      %584 = vmatpush2.msra.mxu0 0.0
      %585 = vmatprep.mubr.f32.mxu0 0.0
      %586 = vmatmul.mubr.f32.gmra.mxu0 %v472
      %v587 = vpop.f32.mrf.mxu0
      %v588 = vadd.f32 0.0, %v587
      %v589 = vpop.f32.mrf.mxu0
      %590 = vmatprep.mubr.f32.mxu0 0.0
      %591 = vmatmul.mubr.f32.gmra.mxu0 %v473
      %v592 = vpop.f32.mrf.mxu0
      %v593 = vadd.f32 0.0, %v592
      %v594 = vpop.f32.mrf.mxu0
      %595 = vmatprep.mubr.f32.mxu0 0.0
      %596 = vmatmul.mubr.f32.gmra.mxu0 %v474
      %v597 = vpop.f32.mrf.mxu0
      %v598 = vadd.f32 0.0, %v597
      %v599 = vpop.f32.mrf.mxu0
      %600 = vmatprep.mubr.f32.mxu0 0.0
      %601 = vmatmul.mubr.f32.gmra.mxu0 %v475
      %v602 = vpop.f32.mrf.mxu0
      %v603 = vadd.f32 0.0, %v602
      %v604 = vpop.f32.mrf.mxu0
      %605 = vmatprep.mubr.f32.mxu0 0.0
      %606 = vmatmul.mubr.f32.gmra.mxu0 %v476
      %v607 = vpop.f32.mrf.mxu0
      %v608 = vadd.f32 0.0, %v607
      %v609 = vpop.f32.mrf.mxu0
      %610 = vmatprep.mubr.f32.mxu0 0.0
      %611 = vmatmul.mubr.f32.gmra.mxu0 %v477
      %v612 = vpop.f32.mrf.mxu0
      %v613 = vadd.f32 0.0, %v612
      %v614 = vpop.f32.mrf.mxu0
      %615 = vmatprep.mubr.f32.mxu0 0.0
      %616 = vmatmul.mubr.f32.gmra.mxu0 %v478
      %v617 = vpop.f32.mrf.mxu0
      %v618 = vadd.f32 0.0, %v617
      %v619 = vpop.f32.mrf.mxu0
      %620 = vmatprep.mubr.f32.mxu0 0.0
      %621 = vmatmul.mubr.f32.gmra.mxu0 %v479
      %v622 = vpop.f32.mrf.mxu0
      %v623 = vadd.f32 0.0, %v622
      %v624 = vpop.f32.mrf.mxu0
      %625 = vmatprep.mubr.f32.mxu0 0.0
      %626 = vmatmul.mubr.f32.gmra.mxu0 %v480
      %v627 = vpop.f32.mrf.mxu0
      %v628 = vadd.f32 0.0, %v627
      %v629 = vpop.f32.mrf.mxu0
      %630 = vmatprep.mubr.f32.mxu0 0.0
      %631 = vmatmul.mubr.f32.gmra.mxu0 %v481
      %v632 = vpop.f32.mrf.mxu0
      %v633 = vadd.f32 0.0, %v632
      %v634 = vpop.f32.mrf.mxu0
      %635 = vmatprep.mubr.f32.mxu0 0.0
      %636 = vmatmul.mubr.f32.gmra.mxu0 %v482
      %v637 = vpop.f32.mrf.mxu0
      %v638 = vadd.f32 0.0, %v637
      %v639 = vpop.f32.mrf.mxu0
      %640 = vmatprep.mubr.f32.mxu0 0.0
      %641 = vmatmul.mubr.f32.gmra.mxu0 %v483
      %v642 = vpop.f32.mrf.mxu0
      %v643 = vadd.f32 0.0, %v642
      %v644 = vpop.f32.mrf.mxu0
      %645 = vmatprep.mubr.f32.mxu0 0.0
      %646 = vmatmul.mubr.f32.gmra.mxu0 %v484
      %v647 = vpop.f32.mrf.mxu0
      %v648 = vadd.f32 0.0, %v647
      %v649 = vpop.f32.mrf.mxu0
      %650 = vmatprep.mubr.f32.mxu0 0.0
      %651 = vmatmul.mubr.f32.gmra.mxu0 %v485
      %v652 = vpop.f32.mrf.mxu0
      %v653 = vadd.f32 0.0, %v652
      %v654 = vpop.f32.mrf.mxu0
      %655 = vmatprep.mubr.f32.mxu0 0.0
      %656 = vmatmul.mubr.f32.gmra.mxu0 %v486
      %v657 = vpop.f32.mrf.mxu0
      %v658 = vadd.f32 0.0, %v657
      %v659 = vpop.f32.mrf.mxu0
      %660 = vmatprep.mubr.f32.mxu0 0.0
      %661 = vmatmul.mubr.f32.gmra.mxu0 %v487
      %v662 = vpop.f32.mrf.mxu0
      %v663 = vadd.f32 0.0, %v662
      %v664 = vpop.f32.mrf.mxu0
      %665 = vmatprep.mubr.f32.mxu0 0.0
      %666 = vmatmul.mubr.f32.gmra.mxu0 %v488
      %v667 = vpop.f32.mrf.mxu0
      %v668 = vadd.f32 0.0, %v667
      %v669 = vpop.f32.mrf.mxu0
      %670 = vmatprep.mubr.f32.mxu0 0.0
      %671 = vmatmul.mubr.f32.gmra.mxu0 %v489
      %v672 = vpop.f32.mrf.mxu0
      %v673 = vadd.f32 0.0, %v672
      %v674 = vpop.f32.mrf.mxu0
      %675 = vmatprep.mubr.f32.mxu0 0.0
      %676 = vmatmul.mubr.f32.gmra.mxu0 %v490
      %v677 = vpop.f32.mrf.mxu0
      %v678 = vadd.f32 0.0, %v677
      %v679 = vpop.f32.mrf.mxu0
      %680 = vmatprep.mubr.f32.mxu0 0.0
      %681 = vmatmul.mubr.f32.gmra.mxu0 %v491
      %v682 = vpop.f32.mrf.mxu0
      %v683 = vadd.f32 0.0, %v682
      %v684 = vpop.f32.mrf.mxu0
      %685 = vmatprep.mubr.f32.mxu0 0.0
      %686 = vmatmul.mubr.f32.gmra.mxu0 %v492
      %v687 = vpop.f32.mrf.mxu0
      %v688 = vadd.f32 0.0, %v687
      %v689 = vpop.f32.mrf.mxu0
      %690 = vmatprep.mubr.f32.mxu0 0.0
      %691 = vmatmul.mubr.f32.gmra.mxu0 %v493
      %v692 = vpop.f32.mrf.mxu0
      %v693 = vadd.f32 0.0, %v692
      %v694 = vpop.f32.mrf.mxu0
      %695 = vmatprep.mubr.f32.mxu0 0.0
      %696 = vmatmul.mubr.f32.gmra.mxu0 %v494
      %v697 = vpop.f32.mrf.mxu0
      %v698 = vadd.f32 0.0, %v697
      %v699 = vpop.f32.mrf.mxu0
      %700 = vmatprep.mubr.f32.mxu0 0.0
      %701 = vmatmul.mubr.f32.gmra.mxu0 %v495
      %v702 = vpop.f32.mrf.mxu0
      %v703 = vadd.f32 0.0, %v702
      %v704 = vpop.f32.mrf.mxu0
      %705 = vmatprep.mubr.f32.mxu0 0.0
      %706 = vmatmul.mubr.f32.gmra.mxu0 %v496
      %v707 = vpop.f32.mrf.mxu0
      %v708 = vadd.f32 0.0, %v707
      %v709 = vpop.f32.mrf.mxu0
      %710 = vmatprep.mubr.f32.mxu0 0.0
      %711 = vmatmul.mubr.f32.gmra.mxu0 %v497
      %v712 = vpop.f32.mrf.mxu0
      %v713 = vadd.f32 0.0, %v712
      %v714 = vpop.f32.mrf.mxu0
      %715 = vmatprep.mubr.f32.mxu0 0.0
      %716 = vmatmul.mubr.f32.gmra.mxu0 %v498
      %v717 = vpop.f32.mrf.mxu0
      %v718 = vadd.f32 0.0, %v717
      %v719 = vpop.f32.mrf.mxu0
      %720 = vmatprep.mubr.f32.mxu0 0.0
      %721 = vmatmul.mubr.f32.gmra.mxu0 %v499
      %v722 = vpop.f32.mrf.mxu0
      %v723 = vadd.f32 0.0, %v722
      %v724 = vpop.f32.mrf.mxu0
      %725 = vmatprep.mubr.f32.mxu0 0.0
      %726 = vmatmul.mubr.f32.gmra.mxu0 %v500
      %v727 = vpop.f32.mrf.mxu0
      %v728 = vadd.f32 0.0, %v727
      %v729 = vpop.f32.mrf.mxu0
      %730 = vmatprep.mubr.f32.mxu0 0.0
      %731 = vmatmul.mubr.f32.gmra.mxu0 %v501
      %v732 = vpop.f32.mrf.mxu0
      %v733 = vadd.f32 0.0, %v732
      %v734 = vpop.f32.mrf.mxu0
      %735 = vmatprep.mubr.f32.mxu0 0.0
      %736 = vmatmul.mubr.f32.gmra.mxu0 %v502
      %v737 = vpop.f32.mrf.mxu0
      %v738 = vadd.f32 0.0, %v737
      %v739 = vpop.f32.mrf.mxu0
      %740 = vmatprep.mubr.f32.mxu0 0.0
      %741 = vmatmul.mubr.f32.gmra.mxu0 %v503
      %v742 = vpop.f32.mrf.mxu0
      %v743 = vadd.f32 0.0, %v742
      %v744 = vpop.f32.mrf.mxu0
      %745 = vdwg.mxu0
      %746 = vmatprep.subr.mxu0 0.0
      %747 = vmatpush1.msra.mxu0 %v471
      %748 = vmatprep.subr.mxu0 0.0
      %749 = vmatpush1.msra.mxu0 %v470
      %750 = vmatprep.subr.mxu0 0.0
      %751 = vmatpush1.msra.mxu0 %v469
      %752 = vmatprep.subr.mxu0 0.0
      %753 = vmatpush1.msra.mxu0 %v468
      %754 = vmatprep.subr.mxu0 0.0
      %755 = vmatpush1.msra.mxu0 %v467
      %756 = vmatprep.subr.mxu0 0.0
      %757 = vmatpush1.msra.mxu0 %v466
      %758 = vmatprep.subr.mxu0 0.0
      %759 = vmatpush1.msra.mxu0 %v465
      %760 = vmatprep.subr.mxu0 0.0
      %761 = vmatpush1.msra.mxu0 %v464
      %762 = vmatprep.subr.mxu0 0.0
      %763 = vmatpush1.msra.mxu0 %v463
      %764 = vmatprep.subr.mxu0 0.0
      %765 = vmatpush1.msra.mxu0 %v462
      %766 = vmatprep.subr.mxu0 0.0
      %767 = vmatpush1.msra.mxu0 %v461
      %768 = vmatprep.subr.mxu0 0.0
      %769 = vmatpush1.msra.mxu0 %v460
      %770 = vmatprep.subr.mxu0 0.0
      %771 = vmatpush1.msra.mxu0 %v459
      %772 = vmatprep.subr.mxu0 0.0
      %773 = vmatpush1.msra.mxu0 %v458
      %774 = vmatprep.subr.mxu0 0.0
      %775 = vmatpush1.msra.mxu0 %v457
      %776 = vmatprep.subr.mxu0 0.0
      %777 = vmatpush1.msra.mxu0 %v456
      %778 = vmatprep.subr.mxu0 0.0
      %779 = vmatpush2.msra.mxu0 0.0
      %780 = vmatprep.subr.mxu0 0.0
      %781 = vmatpush2.msra.mxu0 0.0
      %782 = vmatprep.subr.mxu0 0.0
      %783 = vmatpush2.msra.mxu0 0.0
      %784 = vmatprep.subr.mxu0 0.0
      %785 = vmatpush2.msra.mxu0 0.0
      %786 = vmatprep.subr.mxu0 0.0
      %787 = vmatpush2.msra.mxu0 0.0
      %788 = vmatprep.subr.mxu0 0.0
      %789 = vmatpush2.msra.mxu0 0.0
      %790 = vmatprep.subr.mxu0 0.0
      %791 = vmatpush2.msra.mxu0 0.0
      %792 = vmatprep.subr.mxu0 0.0
      %793 = vmatpush2.msra.mxu0 0.0
      %794 = vmatprep.subr.mxu0 0.0
      %795 = vmatpush2.msra.mxu0 0.0
      %796 = vmatprep.subr.mxu0 0.0
      %797 = vmatpush2.msra.mxu0 0.0
      %798 = vmatprep.subr.mxu0 0.0
      %799 = vmatpush2.msra.mxu0 0.0
      %800 = vmatprep.subr.mxu0 0.0
      %801 = vmatpush2.msra.mxu0 0.0
      %802 = vmatprep.subr.mxu0 0.0
      %803 = vmatpush2.msra.mxu0 0.0
      %804 = vmatprep.subr.mxu0 0.0
      %805 = vmatpush2.msra.mxu0 0.0
      %806 = vmatprep.subr.mxu0 0.0
      %807 = vmatpush2.msra.mxu0 0.0
      %808 = vmatprep.subr.mxu0 0.0
      %809 = vmatpush2.msra.mxu0 0.0
      %810 = vmatprep.mubr.f32.mxu0 0.0
      %811 = vmatmul.mubr.f32.gmra.mxu0 %v424
      %v812 = vpop.f32.mrf.mxu0
      %v813 = vadd.f32 %v588, %v812
      %v814 = vpop.f32.mrf.mxu0
      %815 = vmatprep.mubr.f32.mxu0 0.0
      %816 = vmatmul.mubr.f32.gmra.mxu0 %v425
      %v817 = vpop.f32.mrf.mxu0
      %v818 = vadd.f32 %v593, %v817
      %v819 = vpop.f32.mrf.mxu0
      %820 = vmatprep.mubr.f32.mxu0 0.0
      %821 = vmatmul.mubr.f32.gmra.mxu0 %v426
      %v822 = vpop.f32.mrf.mxu0
      %v823 = vadd.f32 %v598, %v822
      %v824 = vpop.f32.mrf.mxu0
      %825 = vmatprep.mubr.f32.mxu0 0.0
      %826 = vmatmul.mubr.f32.gmra.mxu0 %v427
      %v827 = vpop.f32.mrf.mxu0
      %v828 = vadd.f32 %v603, %v827
      %v829 = vpop.f32.mrf.mxu0
      %830 = vmatprep.mubr.f32.mxu0 0.0
      %831 = vmatmul.mubr.f32.gmra.mxu0 %v428
      %v832 = vpop.f32.mrf.mxu0
      %v833 = vadd.f32 %v608, %v832
      %v834 = vpop.f32.mrf.mxu0
      %835 = vmatprep.mubr.f32.mxu0 0.0
      %836 = vmatmul.mubr.f32.gmra.mxu0 %v429
      %v837 = vpop.f32.mrf.mxu0
      %v838 = vadd.f32 %v613, %v837
      %v839 = vpop.f32.mrf.mxu0
      %840 = vmatprep.mubr.f32.mxu0 0.0
      %841 = vmatmul.mubr.f32.gmra.mxu0 %v430
      %v842 = vpop.f32.mrf.mxu0
      %v843 = vadd.f32 %v618, %v842
      %v844 = vpop.f32.mrf.mxu0
      %845 = vmatprep.mubr.f32.mxu0 0.0
      %846 = vmatmul.mubr.f32.gmra.mxu0 %v431
      %v847 = vpop.f32.mrf.mxu0
      %v848 = vadd.f32 %v623, %v847
      %v849 = vpop.f32.mrf.mxu0
      %850 = vmatprep.mubr.f32.mxu0 0.0
      %851 = vmatmul.mubr.f32.gmra.mxu0 %v432
      %v852 = vpop.f32.mrf.mxu0
      %v853 = vadd.f32 %v628, %v852
      %v854 = vpop.f32.mrf.mxu0
      %855 = vmatprep.mubr.f32.mxu0 0.0
      %856 = vmatmul.mubr.f32.gmra.mxu0 %v433
      %v857 = vpop.f32.mrf.mxu0
      %v858 = vadd.f32 %v633, %v857
      %v859 = vpop.f32.mrf.mxu0
      %860 = vmatprep.mubr.f32.mxu0 0.0
      %861 = vmatmul.mubr.f32.gmra.mxu0 %v434
      %v862 = vpop.f32.mrf.mxu0
      %v863 = vadd.f32 %v638, %v862
      %v864 = vpop.f32.mrf.mxu0
      %865 = vmatprep.mubr.f32.mxu0 0.0
      %866 = vmatmul.mubr.f32.gmra.mxu0 %v435
      %v867 = vpop.f32.mrf.mxu0
      %v868 = vadd.f32 %v643, %v867
      %v869 = vpop.f32.mrf.mxu0
      %870 = vmatprep.mubr.f32.mxu0 0.0
      %871 = vmatmul.mubr.f32.gmra.mxu0 %v436
      %v872 = vpop.f32.mrf.mxu0
      %v873 = vadd.f32 %v648, %v872
      %v874 = vpop.f32.mrf.mxu0
      %875 = vmatprep.mubr.f32.mxu0 0.0
      %876 = vmatmul.mubr.f32.gmra.mxu0 %v437
      %v877 = vpop.f32.mrf.mxu0
      %v878 = vadd.f32 %v653, %v877
      %v879 = vpop.f32.mrf.mxu0
      %880 = vmatprep.mubr.f32.mxu0 0.0
      %881 = vmatmul.mubr.f32.gmra.mxu0 %v438
      %v882 = vpop.f32.mrf.mxu0
      %v883 = vadd.f32 %v658, %v882
      %v884 = vpop.f32.mrf.mxu0
      %885 = vmatprep.mubr.f32.mxu0 0.0
      %886 = vmatmul.mubr.f32.gmra.mxu0 %v439
      %v887 = vpop.f32.mrf.mxu0
      %v888 = vadd.f32 %v663, %v887
      %v889 = vpop.f32.mrf.mxu0
      %890 = vmatprep.mubr.f32.mxu0 0.0
      %891 = vmatmul.mubr.f32.gmra.mxu0 %v440
      %v892 = vpop.f32.mrf.mxu0
      %v893 = vadd.f32 %v668, %v892
      %v894 = vpop.f32.mrf.mxu0
      %895 = vmatprep.mubr.f32.mxu0 0.0
      %896 = vmatmul.mubr.f32.gmra.mxu0 %v441
      %v897 = vpop.f32.mrf.mxu0
      %v898 = vadd.f32 %v673, %v897
      %v899 = vpop.f32.mrf.mxu0
      %900 = vmatprep.mubr.f32.mxu0 0.0
      %901 = vmatmul.mubr.f32.gmra.mxu0 %v442
      %v902 = vpop.f32.mrf.mxu0
      %v903 = vadd.f32 %v678, %v902
      %v904 = vpop.f32.mrf.mxu0
      %905 = vmatprep.mubr.f32.mxu0 0.0
      %906 = vmatmul.mubr.f32.gmra.mxu0 %v443
      %v907 = vpop.f32.mrf.mxu0
      %v908 = vadd.f32 %v683, %v907
      %v909 = vpop.f32.mrf.mxu0
      %910 = vmatprep.mubr.f32.mxu0 0.0
      %911 = vmatmul.mubr.f32.gmra.mxu0 %v444
      %v912 = vpop.f32.mrf.mxu0
      %v913 = vadd.f32 %v688, %v912
      %v914 = vpop.f32.mrf.mxu0
      %915 = vmatprep.mubr.f32.mxu0 0.0
      %916 = vmatmul.mubr.f32.gmra.mxu0 %v445
      %v917 = vpop.f32.mrf.mxu0
      %v918 = vadd.f32 %v693, %v917
      %v919 = vpop.f32.mrf.mxu0
      %920 = vmatprep.mubr.f32.mxu0 0.0
      %921 = vmatmul.mubr.f32.gmra.mxu0 %v446
      %v922 = vpop.f32.mrf.mxu0
      %v923 = vadd.f32 %v698, %v922
      %v924 = vpop.f32.mrf.mxu0
      %925 = vmatprep.mubr.f32.mxu0 0.0
      %926 = vmatmul.mubr.f32.gmra.mxu0 %v447
      %v927 = vpop.f32.mrf.mxu0
      %v928 = vadd.f32 %v703, %v927
      %v929 = vpop.f32.mrf.mxu0
      %930 = vmatprep.mubr.f32.mxu0 0.0
      %931 = vmatmul.mubr.f32.gmra.mxu0 %v448
      %v932 = vpop.f32.mrf.mxu0
      %v933 = vadd.f32 %v708, %v932
      %v934 = vpop.f32.mrf.mxu0
      %935 = vmatprep.mubr.f32.mxu0 0.0
      %936 = vmatmul.mubr.f32.gmra.mxu0 %v449
      %v937 = vpop.f32.mrf.mxu0
      %v938 = vadd.f32 %v713, %v937
      %v939 = vpop.f32.mrf.mxu0
      %940 = vmatprep.mubr.f32.mxu0 0.0
      %941 = vmatmul.mubr.f32.gmra.mxu0 %v450
      %v942 = vpop.f32.mrf.mxu0
      %v943 = vadd.f32 %v718, %v942
      %v944 = vpop.f32.mrf.mxu0
      %945 = vmatprep.mubr.f32.mxu0 0.0
      %946 = vmatmul.mubr.f32.gmra.mxu0 %v451
      %v947 = vpop.f32.mrf.mxu0
      %v948 = vadd.f32 %v723, %v947
      %v949 = vpop.f32.mrf.mxu0
      %950 = vmatprep.mubr.f32.mxu0 0.0
      %951 = vmatmul.mubr.f32.gmra.mxu0 %v452
      %v952 = vpop.f32.mrf.mxu0
      %v953 = vadd.f32 %v728, %v952
      %v954 = vpop.f32.mrf.mxu0
      %955 = vmatprep.mubr.f32.mxu0 0.0
      %956 = vmatmul.mubr.f32.gmra.mxu0 %v453
      %v957 = vpop.f32.mrf.mxu0
      %v958 = vadd.f32 %v733, %v957
      %v959 = vpop.f32.mrf.mxu0
      %960 = vmatprep.mubr.f32.mxu0 0.0
      %961 = vmatmul.mubr.f32.gmra.mxu0 %v454
      %v962 = vpop.f32.mrf.mxu0
      %v963 = vadd.f32 %v738, %v962
      %v964 = vpop.f32.mrf.mxu0
      %965 = vmatprep.mubr.f32.mxu0 0.0
      %966 = vmatmul.mubr.f32.gmra.mxu0 %v455
      %v967 = vpop.f32.mrf.mxu0
      %v968 = vadd.f32 %v743, %v967
      %v969 = vpop.f32.mrf.mxu0
      %970 = vdwg.mxu0
      %v971 = vld [vmem:[%s408 + $0x2] sm:$0xff]
      %v972 = vld [vmem:[%s408 + $0xa] sm:$0xff]
      %v973 = vld [vmem:[%s408 + $0x12] sm:$0xff]
      %v974 = vld [vmem:[%s408 + $0x1a] sm:$0xff]
      %v975 = vld [vmem:[%s408 + $0x22] sm:$0xff]
      %v976 = vld [vmem:[%s408 + $0x2a] sm:$0xff]
      %v977 = vld [vmem:[%s408 + $0x32] sm:$0xff]
      %v978 = vld [vmem:[%s408 + $0x3a] sm:$0xff]
      %v979 = vld [vmem:[%s408 + $0x42] sm:$0xff]
      %v980 = vld [vmem:[%s408 + $0x4a] sm:$0xff]
      %v981 = vld [vmem:[%s408 + $0x52] sm:$0xff]
      %v982 = vld [vmem:[%s408 + $0x5a] sm:$0xff]
      %v983 = vld [vmem:[%s408 + $0x62] sm:$0xff]
      %v984 = vld [vmem:[%s408 + $0x6a] sm:$0xff]
      %v985 = vld [vmem:[%s408 + $0x72] sm:$0xff]
      %v986 = vld [vmem:[%s408 + $0x7a] sm:$0xff]
      %v987 = vld [vmem:[%s408 + $0x82] sm:$0xff]
      %v988 = vld [vmem:[%s408 + $0x8a] sm:$0xff]
      %v989 = vld [vmem:[%s408 + $0x92] sm:$0xff]
      %v990 = vld [vmem:[%s408 + $0x9a] sm:$0xff]
      %v991 = vld [vmem:[%s408 + $0xa2] sm:$0xff]
      %v992 = vld [vmem:[%s408 + $0xaa] sm:$0xff]
      %v993 = vld [vmem:[%s408 + $0xb2] sm:$0xff]
      %v994 = vld [vmem:[%s408 + $0xba] sm:$0xff]
      %v995 = vld [vmem:[%s408 + $0xc2] sm:$0xff]
      %v996 = vld [vmem:[%s408 + $0xca] sm:$0xff]
      %v997 = vld [vmem:[%s408 + $0xd2] sm:$0xff]
      %v998 = vld [vmem:[%s408 + $0xda] sm:$0xff]
      %v999 = vld [vmem:[%s408 + $0xe2] sm:$0xff]
      %v1000 = vld [vmem:[%s408 + $0xea] sm:$0xff]
      %v1001 = vld [vmem:[%s408 + $0xf2] sm:$0xff]
      %v1002 = vld [vmem:[%s408 + $0xfa] sm:$0xff]
      %s1003 = scalar_lea.vmem %s1, 256
      %v1004 = vld [vmem:[%s1003] sm:$0xff]
      %v1005 = vld [vmem:[%s1003 + $0x8] sm:$0xff]
      %v1006 = vld [vmem:[%s1003 + $0x10] sm:$0xff]
      %v1007 = vld [vmem:[%s1003 + $0x18] sm:$0xff]
      %v1008 = vld [vmem:[%s1003 + $0x20] sm:$0xff]
      %v1009 = vld [vmem:[%s1003 + $0x28] sm:$0xff]
      %v1010 = vld [vmem:[%s1003 + $0x30] sm:$0xff]
      %v1011 = vld [vmem:[%s1003 + $0x38] sm:$0xff]
      %v1012 = vld [vmem:[%s1003 + $0x40] sm:$0xff]
      %v1013 = vld [vmem:[%s1003 + $0x48] sm:$0xff]
      %v1014 = vld [vmem:[%s1003 + $0x50] sm:$0xff]
      %v1015 = vld [vmem:[%s1003 + $0x58] sm:$0xff]
      %v1016 = vld [vmem:[%s1003 + $0x60] sm:$0xff]
      %v1017 = vld [vmem:[%s1003 + $0x68] sm:$0xff]
      %v1018 = vld [vmem:[%s1003 + $0x70] sm:$0xff]
      %v1019 = vld [vmem:[%s1003 + $0x78] sm:$0xff]
      %1020 = vmatprep.subr.mxu0 0.0
      %1021 = vmatpush1.msra.mxu0 %v1019
      %1022 = vmatprep.subr.mxu0 0.0
      %1023 = vmatpush1.msra.mxu0 %v1018
      %1024 = vmatprep.subr.mxu0 0.0
      %1025 = vmatpush1.msra.mxu0 %v1017
      %1026 = vmatprep.subr.mxu0 0.0
      %1027 = vmatpush1.msra.mxu0 %v1016
      %1028 = vmatprep.subr.mxu0 0.0
      %1029 = vmatpush1.msra.mxu0 %v1015
      %1030 = vmatprep.subr.mxu0 0.0
      %1031 = vmatpush1.msra.mxu0 %v1014
      %1032 = vmatprep.subr.mxu0 0.0
      %1033 = vmatpush1.msra.mxu0 %v1013
      %1034 = vmatprep.subr.mxu0 0.0
      %1035 = vmatpush1.msra.mxu0 %v1012
      %1036 = vmatprep.subr.mxu0 0.0
      %1037 = vmatpush1.msra.mxu0 %v1011
      %1038 = vmatprep.subr.mxu0 0.0
      %1039 = vmatpush1.msra.mxu0 %v1010
      %1040 = vmatprep.subr.mxu0 0.0
      %1041 = vmatpush1.msra.mxu0 %v1009
      %1042 = vmatprep.subr.mxu0 0.0
      %1043 = vmatpush1.msra.mxu0 %v1008
      %1044 = vmatprep.subr.mxu0 0.0
      %1045 = vmatpush1.msra.mxu0 %v1007
      %1046 = vmatprep.subr.mxu0 0.0
      %1047 = vmatpush1.msra.mxu0 %v1006
      %1048 = vmatprep.subr.mxu0 0.0
      %1049 = vmatpush1.msra.mxu0 %v1005
      %1050 = vmatprep.subr.mxu0 0.0
      %1051 = vmatpush1.msra.mxu0 %v1004
      %1052 = vmatprep.subr.mxu0 0.0
      %1053 = vmatpush2.msra.mxu0 0.0
      %1054 = vmatprep.subr.mxu0 0.0
      %1055 = vmatpush2.msra.mxu0 0.0
      %1056 = vmatprep.subr.mxu0 0.0
      %1057 = vmatpush2.msra.mxu0 0.0
      %1058 = vmatprep.subr.mxu0 0.0
      %1059 = vmatpush2.msra.mxu0 0.0
      %1060 = vmatprep.subr.mxu0 0.0
      %1061 = vmatpush2.msra.mxu0 0.0
      %1062 = vmatprep.subr.mxu0 0.0
      %1063 = vmatpush2.msra.mxu0 0.0
      %1064 = vmatprep.subr.mxu0 0.0
      %1065 = vmatpush2.msra.mxu0 0.0
      %1066 = vmatprep.subr.mxu0 0.0
      %1067 = vmatpush2.msra.mxu0 0.0
      %1068 = vmatprep.subr.mxu0 0.0
      %1069 = vmatpush2.msra.mxu0 0.0
      %1070 = vmatprep.subr.mxu0 0.0
      %1071 = vmatpush2.msra.mxu0 0.0
      %1072 = vmatprep.subr.mxu0 0.0
      %1073 = vmatpush2.msra.mxu0 0.0
      %1074 = vmatprep.subr.mxu0 0.0
      %1075 = vmatpush2.msra.mxu0 0.0
      %1076 = vmatprep.subr.mxu0 0.0
      %1077 = vmatpush2.msra.mxu0 0.0
      %1078 = vmatprep.subr.mxu0 0.0
      %1079 = vmatpush2.msra.mxu0 0.0
      %1080 = vmatprep.subr.mxu0 0.0
      %1081 = vmatpush2.msra.mxu0 0.0
      %1082 = vmatprep.subr.mxu0 0.0
      %1083 = vmatpush2.msra.mxu0 0.0
      %1084 = vmatprep.mubr.f32.mxu0 0.0
      %1085 = vmatmul.mubr.f32.gmra.mxu0 %v971
      %v1086 = vpop.f32.mrf.mxu0
      %v1087 = vadd.f32 0.0, %v1086
      %v1088 = vpop.f32.mrf.mxu0
      %1089 = vmatprep.mubr.f32.mxu0 0.0
      %1090 = vmatmul.mubr.f32.gmra.mxu0 %v972
      %v1091 = vpop.f32.mrf.mxu0
      %v1092 = vadd.f32 0.0, %v1091
      %v1093 = vpop.f32.mrf.mxu0
      %1094 = vmatprep.mubr.f32.mxu0 0.0
      %1095 = vmatmul.mubr.f32.gmra.mxu0 %v973
      %v1096 = vpop.f32.mrf.mxu0
      %v1097 = vadd.f32 0.0, %v1096
      %v1098 = vpop.f32.mrf.mxu0
      %1099 = vmatprep.mubr.f32.mxu0 0.0
      %1100 = vmatmul.mubr.f32.gmra.mxu0 %v974
      %v1101 = vpop.f32.mrf.mxu0
      %v1102 = vadd.f32 0.0, %v1101
      %v1103 = vpop.f32.mrf.mxu0
      %1104 = vmatprep.mubr.f32.mxu0 0.0
      %1105 = vmatmul.mubr.f32.gmra.mxu0 %v975
      %v1106 = vpop.f32.mrf.mxu0
      %v1107 = vadd.f32 0.0, %v1106
      %v1108 = vpop.f32.mrf.mxu0
      %1109 = vmatprep.mubr.f32.mxu0 0.0
      %1110 = vmatmul.mubr.f32.gmra.mxu0 %v976
      %v1111 = vpop.f32.mrf.mxu0
      %v1112 = vadd.f32 0.0, %v1111
      %v1113 = vpop.f32.mrf.mxu0
      %1114 = vmatprep.mubr.f32.mxu0 0.0
      %1115 = vmatmul.mubr.f32.gmra.mxu0 %v977
      %v1116 = vpop.f32.mrf.mxu0
      %v1117 = vadd.f32 0.0, %v1116
      %v1118 = vpop.f32.mrf.mxu0
      %1119 = vmatprep.mubr.f32.mxu0 0.0
      %1120 = vmatmul.mubr.f32.gmra.mxu0 %v978
      %v1121 = vpop.f32.mrf.mxu0
      %v1122 = vadd.f32 0.0, %v1121
      %v1123 = vpop.f32.mrf.mxu0
      %1124 = vmatprep.mubr.f32.mxu0 0.0
      %1125 = vmatmul.mubr.f32.gmra.mxu0 %v979
      %v1126 = vpop.f32.mrf.mxu0
      %v1127 = vadd.f32 0.0, %v1126
      %v1128 = vpop.f32.mrf.mxu0
      %1129 = vmatprep.mubr.f32.mxu0 0.0
      %1130 = vmatmul.mubr.f32.gmra.mxu0 %v980
      %v1131 = vpop.f32.mrf.mxu0
      %v1132 = vadd.f32 0.0, %v1131
      %v1133 = vpop.f32.mrf.mxu0
      %1134 = vmatprep.mubr.f32.mxu0 0.0
      %1135 = vmatmul.mubr.f32.gmra.mxu0 %v981
      %v1136 = vpop.f32.mrf.mxu0
      %v1137 = vadd.f32 0.0, %v1136
      %v1138 = vpop.f32.mrf.mxu0
      %1139 = vmatprep.mubr.f32.mxu0 0.0
      %1140 = vmatmul.mubr.f32.gmra.mxu0 %v982
      %v1141 = vpop.f32.mrf.mxu0
      %v1142 = vadd.f32 0.0, %v1141
      %v1143 = vpop.f32.mrf.mxu0
      %1144 = vmatprep.mubr.f32.mxu0 0.0
      %1145 = vmatmul.mubr.f32.gmra.mxu0 %v983
      %v1146 = vpop.f32.mrf.mxu0
      %v1147 = vadd.f32 0.0, %v1146
      %v1148 = vpop.f32.mrf.mxu0
      %1149 = vmatprep.mubr.f32.mxu0 0.0
      %1150 = vmatmul.mubr.f32.gmra.mxu0 %v984
      %v1151 = vpop.f32.mrf.mxu0
      %v1152 = vadd.f32 0.0, %v1151
      %v1153 = vpop.f32.mrf.mxu0
      %1154 = vmatprep.mubr.f32.mxu0 0.0
      %1155 = vmatmul.mubr.f32.gmra.mxu0 %v985
      %v1156 = vpop.f32.mrf.mxu0
      %v1157 = vadd.f32 0.0, %v1156
      %v1158 = vpop.f32.mrf.mxu0
      %1159 = vmatprep.mubr.f32.mxu0 0.0
      %1160 = vmatmul.mubr.f32.gmra.mxu0 %v986
      %v1161 = vpop.f32.mrf.mxu0
      %v1162 = vadd.f32 0.0, %v1161
      %v1163 = vpop.f32.mrf.mxu0
      %1164 = vmatprep.mubr.f32.mxu0 0.0
      %1165 = vmatmul.mubr.f32.gmra.mxu0 %v987
      %v1166 = vpop.f32.mrf.mxu0
      %v1167 = vadd.f32 0.0, %v1166
      %v1168 = vpop.f32.mrf.mxu0
      %1169 = vmatprep.mubr.f32.mxu0 0.0
      %1170 = vmatmul.mubr.f32.gmra.mxu0 %v988
      %v1171 = vpop.f32.mrf.mxu0
      %v1172 = vadd.f32 0.0, %v1171
      %v1173 = vpop.f32.mrf.mxu0
      %1174 = vmatprep.mubr.f32.mxu0 0.0
      %1175 = vmatmul.mubr.f32.gmra.mxu0 %v989
      %v1176 = vpop.f32.mrf.mxu0
      %v1177 = vadd.f32 0.0, %v1176
      %v1178 = vpop.f32.mrf.mxu0
      %1179 = vmatprep.mubr.f32.mxu0 0.0
      %1180 = vmatmul.mubr.f32.gmra.mxu0 %v990
      %v1181 = vpop.f32.mrf.mxu0
      %v1182 = vadd.f32 0.0, %v1181
      %v1183 = vpop.f32.mrf.mxu0
      %1184 = vmatprep.mubr.f32.mxu0 0.0
      %1185 = vmatmul.mubr.f32.gmra.mxu0 %v991
      %v1186 = vpop.f32.mrf.mxu0
      %v1187 = vadd.f32 0.0, %v1186
      %v1188 = vpop.f32.mrf.mxu0
      %1189 = vmatprep.mubr.f32.mxu0 0.0
      %1190 = vmatmul.mubr.f32.gmra.mxu0 %v992
      %v1191 = vpop.f32.mrf.mxu0
      %v1192 = vadd.f32 0.0, %v1191
      %v1193 = vpop.f32.mrf.mxu0
      %1194 = vmatprep.mubr.f32.mxu0 0.0
      %1195 = vmatmul.mubr.f32.gmra.mxu0 %v993
      %v1196 = vpop.f32.mrf.mxu0
      %v1197 = vadd.f32 0.0, %v1196
      %v1198 = vpop.f32.mrf.mxu0
      %1199 = vmatprep.mubr.f32.mxu0 0.0
      %1200 = vmatmul.mubr.f32.gmra.mxu0 %v994
      %v1201 = vpop.f32.mrf.mxu0
      %v1202 = vadd.f32 0.0, %v1201
      %v1203 = vpop.f32.mrf.mxu0
      %1204 = vmatprep.mubr.f32.mxu0 0.0
      %1205 = vmatmul.mubr.f32.gmra.mxu0 %v995
      %v1206 = vpop.f32.mrf.mxu0
      %v1207 = vadd.f32 0.0, %v1206
      %v1208 = vpop.f32.mrf.mxu0
      %1209 = vmatprep.mubr.f32.mxu0 0.0
      %1210 = vmatmul.mubr.f32.gmra.mxu0 %v996
      %v1211 = vpop.f32.mrf.mxu0
      %v1212 = vadd.f32 0.0, %v1211
      %v1213 = vpop.f32.mrf.mxu0
      %1214 = vmatprep.mubr.f32.mxu0 0.0
      %1215 = vmatmul.mubr.f32.gmra.mxu0 %v997
      %v1216 = vpop.f32.mrf.mxu0
      %v1217 = vadd.f32 0.0, %v1216
      %v1218 = vpop.f32.mrf.mxu0
      %1219 = vmatprep.mubr.f32.mxu0 0.0
      %1220 = vmatmul.mubr.f32.gmra.mxu0 %v998
      %v1221 = vpop.f32.mrf.mxu0
      %v1222 = vadd.f32 0.0, %v1221
      %v1223 = vpop.f32.mrf.mxu0
      %1224 = vmatprep.mubr.f32.mxu0 0.0
      %1225 = vmatmul.mubr.f32.gmra.mxu0 %v999
      %v1226 = vpop.f32.mrf.mxu0
      %v1227 = vadd.f32 0.0, %v1226
      %v1228 = vpop.f32.mrf.mxu0
      %1229 = vmatprep.mubr.f32.mxu0 0.0
      %1230 = vmatmul.mubr.f32.gmra.mxu0 %v1000
      %v1231 = vpop.f32.mrf.mxu0
      %v1232 = vadd.f32 0.0, %v1231
      %v1233 = vpop.f32.mrf.mxu0
      %1234 = vmatprep.mubr.f32.mxu0 0.0
      %1235 = vmatmul.mubr.f32.gmra.mxu0 %v1001
      %v1236 = vpop.f32.mrf.mxu0
      %v1237 = vadd.f32 0.0, %v1236
      %v1238 = vpop.f32.mrf.mxu0
      %1239 = vmatprep.mubr.f32.mxu0 0.0
      %1240 = vmatmul.mubr.f32.gmra.mxu0 %v1002
      %v1241 = vpop.f32.mrf.mxu0
      %v1242 = vadd.f32 0.0, %v1241
      %v1243 = vpop.f32.mrf.mxu0
      %1244 = vdwg.mxu0
      %v1245 = vadd.f32 %v813, %v1087
      %v1246 = vadd.f32 %v818, %v1092
      %v1247 = vadd.f32 %v823, %v1097
      %v1248 = vadd.f32 %v828, %v1102
      %v1249 = vadd.f32 %v833, %v1107
      %v1250 = vadd.f32 %v838, %v1112
      %v1251 = vadd.f32 %v843, %v1117
      %v1252 = vadd.f32 %v848, %v1122
      %v1253 = vadd.f32 %v853, %v1127
      %v1254 = vadd.f32 %v858, %v1132
      %v1255 = vadd.f32 %v863, %v1137
      %v1256 = vadd.f32 %v868, %v1142
      %v1257 = vadd.f32 %v873, %v1147
      %v1258 = vadd.f32 %v878, %v1152
      %v1259 = vadd.f32 %v883, %v1157
      %v1260 = vadd.f32 %v888, %v1162
      %v1261 = vadd.f32 %v893, %v1167
      %v1262 = vadd.f32 %v898, %v1172
      %v1263 = vadd.f32 %v903, %v1177
      %v1264 = vadd.f32 %v908, %v1182
      %v1265 = vadd.f32 %v913, %v1187
      %v1266 = vadd.f32 %v918, %v1192
      %v1267 = vadd.f32 %v923, %v1197
      %v1268 = vadd.f32 %v928, %v1202
      %v1269 = vadd.f32 %v933, %v1207
      %v1270 = vadd.f32 %v938, %v1212
      %v1271 = vadd.f32 %v943, %v1217
      %v1272 = vadd.f32 %v948, %v1222
      %v1273 = vadd.f32 %v953, %v1227
      %v1274 = vadd.f32 %v958, %v1232
      %v1275 = vadd.f32 %v963, %v1237
      %v1276 = vadd.f32 %v968, %v1242
      %v1277 = vld [vmem:[%s408 + $0x10] sm:$0xff]
      %v1278 = vld [vmem:[%s408 + $0x18] sm:$0xff]
      %v1279 = vld [vmem:[%s408 + $0x20] sm:$0xff]
      %v1280 = vld [vmem:[%s408 + $0x28] sm:$0xff]
      %v1281 = vld [vmem:[%s408 + $0x30] sm:$0xff]
      %v1282 = vld [vmem:[%s408 + $0x38] sm:$0xff]
      %v1283 = vld [vmem:[%s408 + $0x40] sm:$0xff]
      %v1284 = vld [vmem:[%s408 + $0x48] sm:$0xff]
      %v1285 = vld [vmem:[%s408 + $0x50] sm:$0xff]
      %v1286 = vld [vmem:[%s408 + $0x58] sm:$0xff]
      %v1287 = vld [vmem:[%s408 + $0x60] sm:$0xff]
      %v1288 = vld [vmem:[%s408 + $0x68] sm:$0xff]
      %v1289 = vld [vmem:[%s408 + $0x70] sm:$0xff]
      %v1290 = vld [vmem:[%s408 + $0x78] sm:$0xff]
      %v1291 = vld [vmem:[%s408 + $0x80] sm:$0xff]
      %v1292 = vld [vmem:[%s408 + $0x88] sm:$0xff]
      %v1293 = vld [vmem:[%s408 + $0x90] sm:$0xff]
      %v1294 = vld [vmem:[%s408 + $0x98] sm:$0xff]
      %v1295 = vld [vmem:[%s408 + $0xa0] sm:$0xff]
      %v1296 = vld [vmem:[%s408 + $0xa8] sm:$0xff]
      %v1297 = vld [vmem:[%s408 + $0xb0] sm:$0xff]
      %v1298 = vld [vmem:[%s408 + $0xb8] sm:$0xff]
      %v1299 = vld [vmem:[%s408 + $0xc0] sm:$0xff]
      %v1300 = vld [vmem:[%s408 + $0xc8] sm:$0xff]
      %v1301 = vld [vmem:[%s408 + $0xd0] sm:$0xff]
      %v1302 = vld [vmem:[%s408 + $0xd8] sm:$0xff]
      %v1303 = vld [vmem:[%s408 + $0xe0] sm:$0xff]
      %v1304 = vld [vmem:[%s408 + $0xe8] sm:$0xff]
      %v1305 = vld [vmem:[%s408 + $0xf0] sm:$0xff]
      %v1306 = vld [vmem:[%s408 + $0xf8] sm:$0xff]
      %v1307 = vld [vmem:[%s408 + $0x100] sm:$0xff]
      %v1308 = vld [vmem:[%s408 + $0x108] sm:$0xff]
      %s1309 = scalar_lea.vmem %s1, 384
      %v1310 = vld [vmem:[%s1309] sm:$0xff]
      %v1311 = vld [vmem:[%s1309 + $0x8] sm:$0xff]
      %v1312 = vld [vmem:[%s1309 + $0x10] sm:$0xff]
      %v1313 = vld [vmem:[%s1309 + $0x18] sm:$0xff]
      %v1314 = vld [vmem:[%s1309 + $0x20] sm:$0xff]
      %v1315 = vld [vmem:[%s1309 + $0x28] sm:$0xff]
      %v1316 = vld [vmem:[%s1309 + $0x30] sm:$0xff]
      %v1317 = vld [vmem:[%s1309 + $0x38] sm:$0xff]
      %v1318 = vld [vmem:[%s1309 + $0x40] sm:$0xff]
      %v1319 = vld [vmem:[%s1309 + $0x48] sm:$0xff]
      %v1320 = vld [vmem:[%s1309 + $0x50] sm:$0xff]
      %v1321 = vld [vmem:[%s1309 + $0x58] sm:$0xff]
      %v1322 = vld [vmem:[%s1309 + $0x60] sm:$0xff]
      %v1323 = vld [vmem:[%s1309 + $0x68] sm:$0xff]
      %v1324 = vld [vmem:[%s1309 + $0x70] sm:$0xff]
      %v1325 = vld [vmem:[%s1309 + $0x78] sm:$0xff]
      %1326 = vmatprep.subr.mxu0 0.0
      %1327 = vmatpush1.msra.mxu0 %v1325
      %1328 = vmatprep.subr.mxu0 0.0
      %1329 = vmatpush1.msra.mxu0 %v1324
      %1330 = vmatprep.subr.mxu0 0.0
      %1331 = vmatpush1.msra.mxu0 %v1323
      %1332 = vmatprep.subr.mxu0 0.0
      %1333 = vmatpush1.msra.mxu0 %v1322
      %1334 = vmatprep.subr.mxu0 0.0
      %1335 = vmatpush1.msra.mxu0 %v1321
      %1336 = vmatprep.subr.mxu0 0.0
      %1337 = vmatpush1.msra.mxu0 %v1320
      %1338 = vmatprep.subr.mxu0 0.0
      %1339 = vmatpush1.msra.mxu0 %v1319
      %1340 = vmatprep.subr.mxu0 0.0
      %1341 = vmatpush1.msra.mxu0 %v1318
      %1342 = vmatprep.subr.mxu0 0.0
      %1343 = vmatpush1.msra.mxu0 %v1317
      %1344 = vmatprep.subr.mxu0 0.0
      %1345 = vmatpush1.msra.mxu0 %v1316
      %1346 = vmatprep.subr.mxu0 0.0
      %1347 = vmatpush1.msra.mxu0 %v1315
      %1348 = vmatprep.subr.mxu0 0.0
      %1349 = vmatpush1.msra.mxu0 %v1314
      %1350 = vmatprep.subr.mxu0 0.0
      %1351 = vmatpush1.msra.mxu0 %v1313
      %1352 = vmatprep.subr.mxu0 0.0
      %1353 = vmatpush1.msra.mxu0 %v1312
      %1354 = vmatprep.subr.mxu0 0.0
      %1355 = vmatpush1.msra.mxu0 %v1311
      %1356 = vmatprep.subr.mxu0 0.0
      %1357 = vmatpush1.msra.mxu0 %v1310
      %1358 = vmatprep.subr.mxu0 0.0
      %1359 = vmatpush2.msra.mxu0 0.0
      %1360 = vmatprep.subr.mxu0 0.0
      %1361 = vmatpush2.msra.mxu0 0.0
      %1362 = vmatprep.subr.mxu0 0.0
      %1363 = vmatpush2.msra.mxu0 0.0
      %1364 = vmatprep.subr.mxu0 0.0
      %1365 = vmatpush2.msra.mxu0 0.0
      %1366 = vmatprep.subr.mxu0 0.0
      %1367 = vmatpush2.msra.mxu0 0.0
      %1368 = vmatprep.subr.mxu0 0.0
      %1369 = vmatpush2.msra.mxu0 0.0
      %1370 = vmatprep.subr.mxu0 0.0
      %1371 = vmatpush2.msra.mxu0 0.0
      %1372 = vmatprep.subr.mxu0 0.0
      %1373 = vmatpush2.msra.mxu0 0.0
      %1374 = vmatprep.subr.mxu0 0.0
      %1375 = vmatpush2.msra.mxu0 0.0
      %1376 = vmatprep.subr.mxu0 0.0
      %1377 = vmatpush2.msra.mxu0 0.0
      %1378 = vmatprep.subr.mxu0 0.0
      %1379 = vmatpush2.msra.mxu0 0.0
      %1380 = vmatprep.subr.mxu0 0.0
      %1381 = vmatpush2.msra.mxu0 0.0
      %1382 = vmatprep.subr.mxu0 0.0
      %1383 = vmatpush2.msra.mxu0 0.0
      %1384 = vmatprep.subr.mxu0 0.0
      %1385 = vmatpush2.msra.mxu0 0.0
      %1386 = vmatprep.subr.mxu0 0.0
      %1387 = vmatpush2.msra.mxu0 0.0
      %1388 = vmatprep.subr.mxu0 0.0
      %1389 = vmatpush2.msra.mxu0 0.0
      %1390 = vmatprep.mubr.f32.mxu0 0.0
      %1391 = vmatmul.mubr.f32.gmra.mxu0 %v1277
      %v1392 = vpop.f32.mrf.mxu0
      %v1393 = vadd.f32 0.0, %v1392
      %v1394 = vpop.f32.mrf.mxu0
      %1395 = vmatprep.mubr.f32.mxu0 0.0
      %1396 = vmatmul.mubr.f32.gmra.mxu0 %v1278
      %v1397 = vpop.f32.mrf.mxu0
      %v1398 = vadd.f32 0.0, %v1397
      %v1399 = vpop.f32.mrf.mxu0
      %1400 = vmatprep.mubr.f32.mxu0 0.0
      %1401 = vmatmul.mubr.f32.gmra.mxu0 %v1279
      %v1402 = vpop.f32.mrf.mxu0
      %v1403 = vadd.f32 0.0, %v1402
      %v1404 = vpop.f32.mrf.mxu0
      %1405 = vmatprep.mubr.f32.mxu0 0.0
      %1406 = vmatmul.mubr.f32.gmra.mxu0 %v1280
      %v1407 = vpop.f32.mrf.mxu0
      %v1408 = vadd.f32 0.0, %v1407
      %v1409 = vpop.f32.mrf.mxu0
      %1410 = vmatprep.mubr.f32.mxu0 0.0
      %1411 = vmatmul.mubr.f32.gmra.mxu0 %v1281
      %v1412 = vpop.f32.mrf.mxu0
      %v1413 = vadd.f32 0.0, %v1412
      %v1414 = vpop.f32.mrf.mxu0
      %1415 = vmatprep.mubr.f32.mxu0 0.0
      %1416 = vmatmul.mubr.f32.gmra.mxu0 %v1282
      %v1417 = vpop.f32.mrf.mxu0
      %v1418 = vadd.f32 0.0, %v1417
      %v1419 = vpop.f32.mrf.mxu0
      %1420 = vmatprep.mubr.f32.mxu0 0.0
      %1421 = vmatmul.mubr.f32.gmra.mxu0 %v1283
      %v1422 = vpop.f32.mrf.mxu0
      %v1423 = vadd.f32 0.0, %v1422
      %v1424 = vpop.f32.mrf.mxu0
      %1425 = vmatprep.mubr.f32.mxu0 0.0
      %1426 = vmatmul.mubr.f32.gmra.mxu0 %v1284
      %v1427 = vpop.f32.mrf.mxu0
      %v1428 = vadd.f32 0.0, %v1427
      %v1429 = vpop.f32.mrf.mxu0
      %1430 = vmatprep.mubr.f32.mxu0 0.0
      %1431 = vmatmul.mubr.f32.gmra.mxu0 %v1285
      %v1432 = vpop.f32.mrf.mxu0
      %v1433 = vadd.f32 0.0, %v1432
      %v1434 = vpop.f32.mrf.mxu0
      %1435 = vmatprep.mubr.f32.mxu0 0.0
      %1436 = vmatmul.mubr.f32.gmra.mxu0 %v1286
      %v1437 = vpop.f32.mrf.mxu0
      %v1438 = vadd.f32 0.0, %v1437
      %v1439 = vpop.f32.mrf.mxu0
      %1440 = vmatprep.mubr.f32.mxu0 0.0
      %1441 = vmatmul.mubr.f32.gmra.mxu0 %v1287
      %v1442 = vpop.f32.mrf.mxu0
      %v1443 = vadd.f32 0.0, %v1442
      %v1444 = vpop.f32.mrf.mxu0
      %1445 = vmatprep.mubr.f32.mxu0 0.0
      %1446 = vmatmul.mubr.f32.gmra.mxu0 %v1288
      %v1447 = vpop.f32.mrf.mxu0
      %v1448 = vadd.f32 0.0, %v1447
      %v1449 = vpop.f32.mrf.mxu0
      %1450 = vmatprep.mubr.f32.mxu0 0.0
      %1451 = vmatmul.mubr.f32.gmra.mxu0 %v1289
      %v1452 = vpop.f32.mrf.mxu0
      %v1453 = vadd.f32 0.0, %v1452
      %v1454 = vpop.f32.mrf.mxu0
      %1455 = vmatprep.mubr.f32.mxu0 0.0
      %1456 = vmatmul.mubr.f32.gmra.mxu0 %v1290
      %v1457 = vpop.f32.mrf.mxu0
      %v1458 = vadd.f32 0.0, %v1457
      %v1459 = vpop.f32.mrf.mxu0
      %1460 = vmatprep.mubr.f32.mxu0 0.0
      %1461 = vmatmul.mubr.f32.gmra.mxu0 %v1291
      %v1462 = vpop.f32.mrf.mxu0
      %v1463 = vadd.f32 0.0, %v1462
      %v1464 = vpop.f32.mrf.mxu0
      %1465 = vmatprep.mubr.f32.mxu0 0.0
      %1466 = vmatmul.mubr.f32.gmra.mxu0 %v1292
      %v1467 = vpop.f32.mrf.mxu0
      %v1468 = vadd.f32 0.0, %v1467
      %v1469 = vpop.f32.mrf.mxu0
      %1470 = vmatprep.mubr.f32.mxu0 0.0
      %1471 = vmatmul.mubr.f32.gmra.mxu0 %v1293
      %v1472 = vpop.f32.mrf.mxu0
      %v1473 = vadd.f32 0.0, %v1472
      %v1474 = vpop.f32.mrf.mxu0
      %1475 = vmatprep.mubr.f32.mxu0 0.0
      %1476 = vmatmul.mubr.f32.gmra.mxu0 %v1294
      %v1477 = vpop.f32.mrf.mxu0
      %v1478 = vadd.f32 0.0, %v1477
      %v1479 = vpop.f32.mrf.mxu0
      %1480 = vmatprep.mubr.f32.mxu0 0.0
      %1481 = vmatmul.mubr.f32.gmra.mxu0 %v1295
      %v1482 = vpop.f32.mrf.mxu0
      %v1483 = vadd.f32 0.0, %v1482
      %v1484 = vpop.f32.mrf.mxu0
      %1485 = vmatprep.mubr.f32.mxu0 0.0
      %1486 = vmatmul.mubr.f32.gmra.mxu0 %v1296
      %v1487 = vpop.f32.mrf.mxu0
      %v1488 = vadd.f32 0.0, %v1487
      %v1489 = vpop.f32.mrf.mxu0
      %1490 = vmatprep.mubr.f32.mxu0 0.0
      %1491 = vmatmul.mubr.f32.gmra.mxu0 %v1297
      %v1492 = vpop.f32.mrf.mxu0
      %v1493 = vadd.f32 0.0, %v1492
      %v1494 = vpop.f32.mrf.mxu0
      %1495 = vmatprep.mubr.f32.mxu0 0.0
      %1496 = vmatmul.mubr.f32.gmra.mxu0 %v1298
      %v1497 = vpop.f32.mrf.mxu0
      %v1498 = vadd.f32 0.0, %v1497
      %v1499 = vpop.f32.mrf.mxu0
      %1500 = vmatprep.mubr.f32.mxu0 0.0
      %1501 = vmatmul.mubr.f32.gmra.mxu0 %v1299
      %v1502 = vpop.f32.mrf.mxu0
      %v1503 = vadd.f32 0.0, %v1502
      %v1504 = vpop.f32.mrf.mxu0
      %1505 = vmatprep.mubr.f32.mxu0 0.0
      %1506 = vmatmul.mubr.f32.gmra.mxu0 %v1300
      %v1507 = vpop.f32.mrf.mxu0
      %v1508 = vadd.f32 0.0, %v1507
      %v1509 = vpop.f32.mrf.mxu0
      %1510 = vmatprep.mubr.f32.mxu0 0.0
      %1511 = vmatmul.mubr.f32.gmra.mxu0 %v1301
      %v1512 = vpop.f32.mrf.mxu0
      %v1513 = vadd.f32 0.0, %v1512
      %v1514 = vpop.f32.mrf.mxu0
      %1515 = vmatprep.mubr.f32.mxu0 0.0
      %1516 = vmatmul.mubr.f32.gmra.mxu0 %v1302
      %v1517 = vpop.f32.mrf.mxu0
      %v1518 = vadd.f32 0.0, %v1517
      %v1519 = vpop.f32.mrf.mxu0
      %1520 = vmatprep.mubr.f32.mxu0 0.0
      %1521 = vmatmul.mubr.f32.gmra.mxu0 %v1303
      %v1522 = vpop.f32.mrf.mxu0
      %v1523 = vadd.f32 0.0, %v1522
      %v1524 = vpop.f32.mrf.mxu0
      %1525 = vmatprep.mubr.f32.mxu0 0.0
      %1526 = vmatmul.mubr.f32.gmra.mxu0 %v1304
      %v1527 = vpop.f32.mrf.mxu0
      %v1528 = vadd.f32 0.0, %v1527
      %v1529 = vpop.f32.mrf.mxu0
      %1530 = vmatprep.mubr.f32.mxu0 0.0
      %1531 = vmatmul.mubr.f32.gmra.mxu0 %v1305
      %v1532 = vpop.f32.mrf.mxu0
      %v1533 = vadd.f32 0.0, %v1532
      %v1534 = vpop.f32.mrf.mxu0
      %1535 = vmatprep.mubr.f32.mxu0 0.0
      %1536 = vmatmul.mubr.f32.gmra.mxu0 %v1306
      %v1537 = vpop.f32.mrf.mxu0
      %v1538 = vadd.f32 0.0, %v1537
      %v1539 = vpop.f32.mrf.mxu0
      %1540 = vmatprep.mubr.f32.mxu0 0.0
      %1541 = vmatmul.mubr.f32.gmra.mxu0 %v1307
      %v1542 = vpop.f32.mrf.mxu0
      %v1543 = vadd.f32 0.0, %v1542
      %v1544 = vpop.f32.mrf.mxu0
      %1545 = vmatprep.mubr.f32.mxu0 0.0
      %1546 = vmatmul.mubr.f32.gmra.mxu0 %v1308
      %v1547 = vpop.f32.mrf.mxu0
      %v1548 = vadd.f32 0.0, %v1547
      %v1549 = vpop.f32.mrf.mxu0
      %1550 = vdwg.mxu0
      %v1551 = vadd.f32 %v1245, %v1393
      %v1552 = vadd.f32 %v1246, %v1398
      %v1553 = vadd.f32 %v1247, %v1403
      %v1554 = vadd.f32 %v1248, %v1408
      %v1555 = vadd.f32 %v1249, %v1413
      %v1556 = vadd.f32 %v1250, %v1418
      %v1557 = vadd.f32 %v1251, %v1423
      %v1558 = vadd.f32 %v1252, %v1428
      %v1559 = vadd.f32 %v1253, %v1433
      %v1560 = vadd.f32 %v1254, %v1438
      %v1561 = vadd.f32 %v1255, %v1443
      %v1562 = vadd.f32 %v1256, %v1448
      %v1563 = vadd.f32 %v1257, %v1453
      %v1564 = vadd.f32 %v1258, %v1458
      %v1565 = vadd.f32 %v1259, %v1463
      %v1566 = vadd.f32 %v1260, %v1468
      %v1567 = vadd.f32 %v1261, %v1473
      %v1568 = vadd.f32 %v1262, %v1478
      %v1569 = vadd.f32 %v1263, %v1483
      %v1570 = vadd.f32 %v1264, %v1488
      %v1571 = vadd.f32 %v1265, %v1493
      %v1572 = vadd.f32 %v1266, %v1498
      %v1573 = vadd.f32 %v1267, %v1503
      %v1574 = vadd.f32 %v1268, %v1508
      %v1575 = vadd.f32 %v1269, %v1513
      %v1576 = vadd.f32 %v1270, %v1518
      %v1577 = vadd.f32 %v1271, %v1523
      %v1578 = vadd.f32 %v1272, %v1528
      %v1579 = vadd.f32 %v1273, %v1533
      %v1580 = vadd.f32 %v1274, %v1538
      %v1581 = vadd.f32 %v1275, %v1543
      %v1582 = vadd.f32 %v1276, %v1548
      %v1583 = vld [vmem:[%s408 + $0x11] sm:$0xff]
      %v1584 = vld [vmem:[%s408 + $0x19] sm:$0xff]
      %v1585 = vld [vmem:[%s408 + $0x21] sm:$0xff]
      %v1586 = vld [vmem:[%s408 + $0x29] sm:$0xff]
      %v1587 = vld [vmem:[%s408 + $0x31] sm:$0xff]
      %v1588 = vld [vmem:[%s408 + $0x39] sm:$0xff]
      %v1589 = vld [vmem:[%s408 + $0x41] sm:$0xff]
      %v1590 = vld [vmem:[%s408 + $0x49] sm:$0xff]
      %v1591 = vld [vmem:[%s408 + $0x51] sm:$0xff]
      %v1592 = vld [vmem:[%s408 + $0x59] sm:$0xff]
      %v1593 = vld [vmem:[%s408 + $0x61] sm:$0xff]
      %v1594 = vld [vmem:[%s408 + $0x69] sm:$0xff]
      %v1595 = vld [vmem:[%s408 + $0x71] sm:$0xff]
      %v1596 = vld [vmem:[%s408 + $0x79] sm:$0xff]
      %v1597 = vld [vmem:[%s408 + $0x81] sm:$0xff]
      %v1598 = vld [vmem:[%s408 + $0x89] sm:$0xff]
      %v1599 = vld [vmem:[%s408 + $0x91] sm:$0xff]
      %v1600 = vld [vmem:[%s408 + $0x99] sm:$0xff]
      %v1601 = vld [vmem:[%s408 + $0xa1] sm:$0xff]
      %v1602 = vld [vmem:[%s408 + $0xa9] sm:$0xff]
      %v1603 = vld [vmem:[%s408 + $0xb1] sm:$0xff]
      %v1604 = vld [vmem:[%s408 + $0xb9] sm:$0xff]
      %v1605 = vld [vmem:[%s408 + $0xc1] sm:$0xff]
      %v1606 = vld [vmem:[%s408 + $0xc9] sm:$0xff]
      %v1607 = vld [vmem:[%s408 + $0xd1] sm:$0xff]
      %v1608 = vld [vmem:[%s408 + $0xd9] sm:$0xff]
      %v1609 = vld [vmem:[%s408 + $0xe1] sm:$0xff]
      %v1610 = vld [vmem:[%s408 + $0xe9] sm:$0xff]
      %v1611 = vld [vmem:[%s408 + $0xf1] sm:$0xff]
      %v1612 = vld [vmem:[%s408 + $0xf9] sm:$0xff]
      %v1613 = vld [vmem:[%s408 + $0x101] sm:$0xff]
      %v1614 = vld [vmem:[%s408 + $0x109] sm:$0xff]
      %s1615 = scalar_lea.vmem %s1, 512
      %v1616 = vld [vmem:[%s1615] sm:$0xff]
      %v1617 = vld [vmem:[%s1615 + $0x8] sm:$0xff]
      %v1618 = vld [vmem:[%s1615 + $0x10] sm:$0xff]
      %v1619 = vld [vmem:[%s1615 + $0x18] sm:$0xff]
      %v1620 = vld [vmem:[%s1615 + $0x20] sm:$0xff]
      %v1621 = vld [vmem:[%s1615 + $0x28] sm:$0xff]
      %v1622 = vld [vmem:[%s1615 + $0x30] sm:$0xff]
      %v1623 = vld [vmem:[%s1615 + $0x38] sm:$0xff]
      %v1624 = vld [vmem:[%s1615 + $0x40] sm:$0xff]
      %v1625 = vld [vmem:[%s1615 + $0x48] sm:$0xff]
      %v1626 = vld [vmem:[%s1615 + $0x50] sm:$0xff]
      %v1627 = vld [vmem:[%s1615 + $0x58] sm:$0xff]
      %v1628 = vld [vmem:[%s1615 + $0x60] sm:$0xff]
      %v1629 = vld [vmem:[%s1615 + $0x68] sm:$0xff]
      %v1630 = vld [vmem:[%s1615 + $0x70] sm:$0xff]
      %v1631 = vld [vmem:[%s1615 + $0x78] sm:$0xff]
      %1632 = vmatprep.subr.mxu0 0.0
      %1633 = vmatpush1.msra.mxu0 %v1631
      %1634 = vmatprep.subr.mxu0 0.0
      %1635 = vmatpush1.msra.mxu0 %v1630
      %1636 = vmatprep.subr.mxu0 0.0
      %1637 = vmatpush1.msra.mxu0 %v1629
      %1638 = vmatprep.subr.mxu0 0.0
      %1639 = vmatpush1.msra.mxu0 %v1628
      %1640 = vmatprep.subr.mxu0 0.0
      %1641 = vmatpush1.msra.mxu0 %v1627
      %1642 = vmatprep.subr.mxu0 0.0
      %1643 = vmatpush1.msra.mxu0 %v1626
      %1644 = vmatprep.subr.mxu0 0.0
      %1645 = vmatpush1.msra.mxu0 %v1625
      %1646 = vmatprep.subr.mxu0 0.0
      %1647 = vmatpush1.msra.mxu0 %v1624
      %1648 = vmatprep.subr.mxu0 0.0
      %1649 = vmatpush1.msra.mxu0 %v1623
      %1650 = vmatprep.subr.mxu0 0.0
      %1651 = vmatpush1.msra.mxu0 %v1622
      %1652 = vmatprep.subr.mxu0 0.0
      %1653 = vmatpush1.msra.mxu0 %v1621
      %1654 = vmatprep.subr.mxu0 0.0
      %1655 = vmatpush1.msra.mxu0 %v1620
      %1656 = vmatprep.subr.mxu0 0.0
      %1657 = vmatpush1.msra.mxu0 %v1619
      %1658 = vmatprep.subr.mxu0 0.0
      %1659 = vmatpush1.msra.mxu0 %v1618
      %1660 = vmatprep.subr.mxu0 0.0
      %1661 = vmatpush1.msra.mxu0 %v1617
      %1662 = vmatprep.subr.mxu0 0.0
      %1663 = vmatpush1.msra.mxu0 %v1616
      %1664 = vmatprep.subr.mxu0 0.0
      %1665 = vmatpush2.msra.mxu0 0.0
      %1666 = vmatprep.subr.mxu0 0.0
      %1667 = vmatpush2.msra.mxu0 0.0
      %1668 = vmatprep.subr.mxu0 0.0
      %1669 = vmatpush2.msra.mxu0 0.0
      %1670 = vmatprep.subr.mxu0 0.0
      %1671 = vmatpush2.msra.mxu0 0.0
      %1672 = vmatprep.subr.mxu0 0.0
      %1673 = vmatpush2.msra.mxu0 0.0
      %1674 = vmatprep.subr.mxu0 0.0
      %1675 = vmatpush2.msra.mxu0 0.0
      %1676 = vmatprep.subr.mxu0 0.0
      %1677 = vmatpush2.msra.mxu0 0.0
      %1678 = vmatprep.subr.mxu0 0.0
      %1679 = vmatpush2.msra.mxu0 0.0
      %1680 = vmatprep.subr.mxu0 0.0
      %1681 = vmatpush2.msra.mxu0 0.0
      %1682 = vmatprep.subr.mxu0 0.0
      %1683 = vmatpush2.msra.mxu0 0.0
      %1684 = vmatprep.subr.mxu0 0.0
      %1685 = vmatpush2.msra.mxu0 0.0
      %1686 = vmatprep.subr.mxu0 0.0
      %1687 = vmatpush2.msra.mxu0 0.0
      %1688 = vmatprep.subr.mxu0 0.0
      %1689 = vmatpush2.msra.mxu0 0.0
      %1690 = vmatprep.subr.mxu0 0.0
      %1691 = vmatpush2.msra.mxu0 0.0
      %1692 = vmatprep.subr.mxu0 0.0
      %1693 = vmatpush2.msra.mxu0 0.0
      %1694 = vmatprep.subr.mxu0 0.0
      %1695 = vmatpush2.msra.mxu0 0.0
      %1696 = vmatprep.mubr.f32.mxu0 0.0
      %1697 = vmatmul.mubr.f32.gmra.mxu0 %v1583
      %v1698 = vpop.f32.mrf.mxu0
      %v1699 = vadd.f32 0.0, %v1698
      %v1700 = vpop.f32.mrf.mxu0
      %1701 = vmatprep.mubr.f32.mxu0 0.0
      %1702 = vmatmul.mubr.f32.gmra.mxu0 %v1584
      %v1703 = vpop.f32.mrf.mxu0
      %v1704 = vadd.f32 0.0, %v1703
      %v1705 = vpop.f32.mrf.mxu0
      %1706 = vmatprep.mubr.f32.mxu0 0.0
      %1707 = vmatmul.mubr.f32.gmra.mxu0 %v1585
      %v1708 = vpop.f32.mrf.mxu0
      %v1709 = vadd.f32 0.0, %v1708
      %v1710 = vpop.f32.mrf.mxu0
      %1711 = vmatprep.mubr.f32.mxu0 0.0
      %1712 = vmatmul.mubr.f32.gmra.mxu0 %v1586
      %v1713 = vpop.f32.mrf.mxu0
      %v1714 = vadd.f32 0.0, %v1713
      %v1715 = vpop.f32.mrf.mxu0
      %1716 = vmatprep.mubr.f32.mxu0 0.0
      %1717 = vmatmul.mubr.f32.gmra.mxu0 %v1587
      %v1718 = vpop.f32.mrf.mxu0
      %v1719 = vadd.f32 0.0, %v1718
      %v1720 = vpop.f32.mrf.mxu0
      %1721 = vmatprep.mubr.f32.mxu0 0.0
      %1722 = vmatmul.mubr.f32.gmra.mxu0 %v1588
      %v1723 = vpop.f32.mrf.mxu0
      %v1724 = vadd.f32 0.0, %v1723
      %v1725 = vpop.f32.mrf.mxu0
      %1726 = vmatprep.mubr.f32.mxu0 0.0
      %1727 = vmatmul.mubr.f32.gmra.mxu0 %v1589
      %v1728 = vpop.f32.mrf.mxu0
      %v1729 = vadd.f32 0.0, %v1728
      %v1730 = vpop.f32.mrf.mxu0
      %1731 = vmatprep.mubr.f32.mxu0 0.0
      %1732 = vmatmul.mubr.f32.gmra.mxu0 %v1590
      %v1733 = vpop.f32.mrf.mxu0
      %v1734 = vadd.f32 0.0, %v1733
      %v1735 = vpop.f32.mrf.mxu0
      %1736 = vmatprep.mubr.f32.mxu0 0.0
      %1737 = vmatmul.mubr.f32.gmra.mxu0 %v1591
      %v1738 = vpop.f32.mrf.mxu0
      %v1739 = vadd.f32 0.0, %v1738
      %v1740 = vpop.f32.mrf.mxu0
      %1741 = vmatprep.mubr.f32.mxu0 0.0
      %1742 = vmatmul.mubr.f32.gmra.mxu0 %v1592
      %v1743 = vpop.f32.mrf.mxu0
      %v1744 = vadd.f32 0.0, %v1743
      %v1745 = vpop.f32.mrf.mxu0
      %1746 = vmatprep.mubr.f32.mxu0 0.0
      %1747 = vmatmul.mubr.f32.gmra.mxu0 %v1593
      %v1748 = vpop.f32.mrf.mxu0
      %v1749 = vadd.f32 0.0, %v1748
      %v1750 = vpop.f32.mrf.mxu0
      %1751 = vmatprep.mubr.f32.mxu0 0.0
      %1752 = vmatmul.mubr.f32.gmra.mxu0 %v1594
      %v1753 = vpop.f32.mrf.mxu0
      %v1754 = vadd.f32 0.0, %v1753
      %v1755 = vpop.f32.mrf.mxu0
      %1756 = vmatprep.mubr.f32.mxu0 0.0
      %1757 = vmatmul.mubr.f32.gmra.mxu0 %v1595
      %v1758 = vpop.f32.mrf.mxu0
      %v1759 = vadd.f32 0.0, %v1758
      %v1760 = vpop.f32.mrf.mxu0
      %1761 = vmatprep.mubr.f32.mxu0 0.0
      %1762 = vmatmul.mubr.f32.gmra.mxu0 %v1596
      %v1763 = vpop.f32.mrf.mxu0
      %v1764 = vadd.f32 0.0, %v1763
      %v1765 = vpop.f32.mrf.mxu0
      %1766 = vmatprep.mubr.f32.mxu0 0.0
      %1767 = vmatmul.mubr.f32.gmra.mxu0 %v1597
      %v1768 = vpop.f32.mrf.mxu0
      %v1769 = vadd.f32 0.0, %v1768
      %v1770 = vpop.f32.mrf.mxu0
      %1771 = vmatprep.mubr.f32.mxu0 0.0
      %1772 = vmatmul.mubr.f32.gmra.mxu0 %v1598
      %v1773 = vpop.f32.mrf.mxu0
      %v1774 = vadd.f32 0.0, %v1773
      %v1775 = vpop.f32.mrf.mxu0
      %1776 = vmatprep.mubr.f32.mxu0 0.0
      %1777 = vmatmul.mubr.f32.gmra.mxu0 %v1599
      %v1778 = vpop.f32.mrf.mxu0
      %v1779 = vadd.f32 0.0, %v1778
      %v1780 = vpop.f32.mrf.mxu0
      %1781 = vmatprep.mubr.f32.mxu0 0.0
      %1782 = vmatmul.mubr.f32.gmra.mxu0 %v1600
      %v1783 = vpop.f32.mrf.mxu0
      %v1784 = vadd.f32 0.0, %v1783
      %v1785 = vpop.f32.mrf.mxu0
      %1786 = vmatprep.mubr.f32.mxu0 0.0
      %1787 = vmatmul.mubr.f32.gmra.mxu0 %v1601
      %v1788 = vpop.f32.mrf.mxu0
      %v1789 = vadd.f32 0.0, %v1788
      %v1790 = vpop.f32.mrf.mxu0
      %1791 = vmatprep.mubr.f32.mxu0 0.0
      %1792 = vmatmul.mubr.f32.gmra.mxu0 %v1602
      %v1793 = vpop.f32.mrf.mxu0
      %v1794 = vadd.f32 0.0, %v1793
      %v1795 = vpop.f32.mrf.mxu0
      %1796 = vmatprep.mubr.f32.mxu0 0.0
      %1797 = vmatmul.mubr.f32.gmra.mxu0 %v1603
      %v1798 = vpop.f32.mrf.mxu0
      %v1799 = vadd.f32 0.0, %v1798
      %v1800 = vpop.f32.mrf.mxu0
      %1801 = vmatprep.mubr.f32.mxu0 0.0
      %1802 = vmatmul.mubr.f32.gmra.mxu0 %v1604
      %v1803 = vpop.f32.mrf.mxu0
      %v1804 = vadd.f32 0.0, %v1803
      %v1805 = vpop.f32.mrf.mxu0
      %1806 = vmatprep.mubr.f32.mxu0 0.0
      %1807 = vmatmul.mubr.f32.gmra.mxu0 %v1605
      %v1808 = vpop.f32.mrf.mxu0
      %v1809 = vadd.f32 0.0, %v1808
      %v1810 = vpop.f32.mrf.mxu0
      %1811 = vmatprep.mubr.f32.mxu0 0.0
      %1812 = vmatmul.mubr.f32.gmra.mxu0 %v1606
      %v1813 = vpop.f32.mrf.mxu0
      %v1814 = vadd.f32 0.0, %v1813
      %v1815 = vpop.f32.mrf.mxu0
      %1816 = vmatprep.mubr.f32.mxu0 0.0
      %1817 = vmatmul.mubr.f32.gmra.mxu0 %v1607
      %v1818 = vpop.f32.mrf.mxu0
      %v1819 = vadd.f32 0.0, %v1818
      %v1820 = vpop.f32.mrf.mxu0
      %1821 = vmatprep.mubr.f32.mxu0 0.0
      %1822 = vmatmul.mubr.f32.gmra.mxu0 %v1608
      %v1823 = vpop.f32.mrf.mxu0
      %v1824 = vadd.f32 0.0, %v1823
      %v1825 = vpop.f32.mrf.mxu0
      %1826 = vmatprep.mubr.f32.mxu0 0.0
      %1827 = vmatmul.mubr.f32.gmra.mxu0 %v1609
      %v1828 = vpop.f32.mrf.mxu0
      %v1829 = vadd.f32 0.0, %v1828
      %v1830 = vpop.f32.mrf.mxu0
      %1831 = vmatprep.mubr.f32.mxu0 0.0
      %1832 = vmatmul.mubr.f32.gmra.mxu0 %v1610
      %v1833 = vpop.f32.mrf.mxu0
      %v1834 = vadd.f32 0.0, %v1833
      %v1835 = vpop.f32.mrf.mxu0
      %1836 = vmatprep.mubr.f32.mxu0 0.0
      %1837 = vmatmul.mubr.f32.gmra.mxu0 %v1611
      %v1838 = vpop.f32.mrf.mxu0
      %v1839 = vadd.f32 0.0, %v1838
      %v1840 = vpop.f32.mrf.mxu0
      %1841 = vmatprep.mubr.f32.mxu0 0.0
      %1842 = vmatmul.mubr.f32.gmra.mxu0 %v1612
      %v1843 = vpop.f32.mrf.mxu0
      %v1844 = vadd.f32 0.0, %v1843
      %v1845 = vpop.f32.mrf.mxu0
      %1846 = vmatprep.mubr.f32.mxu0 0.0
      %1847 = vmatmul.mubr.f32.gmra.mxu0 %v1613
      %v1848 = vpop.f32.mrf.mxu0
      %v1849 = vadd.f32 0.0, %v1848
      %v1850 = vpop.f32.mrf.mxu0
      %1851 = vmatprep.mubr.f32.mxu0 0.0
      %1852 = vmatmul.mubr.f32.gmra.mxu0 %v1614
      %v1853 = vpop.f32.mrf.mxu0
      %v1854 = vadd.f32 0.0, %v1853
      %v1855 = vpop.f32.mrf.mxu0
      %1856 = vdwg.mxu0
      %v1857 = vadd.f32 %v1551, %v1699
      %v1858 = vadd.f32 %v1552, %v1704
      %v1859 = vadd.f32 %v1553, %v1709
      %v1860 = vadd.f32 %v1554, %v1714
      %v1861 = vadd.f32 %v1555, %v1719
      %v1862 = vadd.f32 %v1556, %v1724
      %v1863 = vadd.f32 %v1557, %v1729
      %v1864 = vadd.f32 %v1558, %v1734
      %v1865 = vadd.f32 %v1559, %v1739
      %v1866 = vadd.f32 %v1560, %v1744
      %v1867 = vadd.f32 %v1561, %v1749
      %v1868 = vadd.f32 %v1562, %v1754
      %v1869 = vadd.f32 %v1563, %v1759
      %v1870 = vadd.f32 %v1564, %v1764
      %v1871 = vadd.f32 %v1565, %v1769
      %v1872 = vadd.f32 %v1566, %v1774
      %v1873 = vadd.f32 %v1567, %v1779
      %v1874 = vadd.f32 %v1568, %v1784
      %v1875 = vadd.f32 %v1569, %v1789
      %v1876 = vadd.f32 %v1570, %v1794
      %v1877 = vadd.f32 %v1571, %v1799
      %v1878 = vadd.f32 %v1572, %v1804
      %v1879 = vadd.f32 %v1573, %v1809
      %v1880 = vadd.f32 %v1574, %v1814
      %v1881 = vadd.f32 %v1575, %v1819
      %v1882 = vadd.f32 %v1576, %v1824
      %v1883 = vadd.f32 %v1577, %v1829
      %v1884 = vadd.f32 %v1578, %v1834
      %v1885 = vadd.f32 %v1579, %v1839
      %v1886 = vadd.f32 %v1580, %v1844
      %v1887 = vadd.f32 %v1581, %v1849
      %v1888 = vadd.f32 %v1582, %v1854
      %v1889 = vld [vmem:[%s408 + $0x12] sm:$0xff]
      %v1890 = vld [vmem:[%s408 + $0x1a] sm:$0xff]
      %v1891 = vld [vmem:[%s408 + $0x22] sm:$0xff]
      %v1892 = vld [vmem:[%s408 + $0x2a] sm:$0xff]
      %v1893 = vld [vmem:[%s408 + $0x32] sm:$0xff]
      %v1894 = vld [vmem:[%s408 + $0x3a] sm:$0xff]
      %v1895 = vld [vmem:[%s408 + $0x42] sm:$0xff]
      %v1896 = vld [vmem:[%s408 + $0x4a] sm:$0xff]
      %v1897 = vld [vmem:[%s408 + $0x52] sm:$0xff]
      %v1898 = vld [vmem:[%s408 + $0x5a] sm:$0xff]
      %v1899 = vld [vmem:[%s408 + $0x62] sm:$0xff]
      %v1900 = vld [vmem:[%s408 + $0x6a] sm:$0xff]
      %v1901 = vld [vmem:[%s408 + $0x72] sm:$0xff]
      %v1902 = vld [vmem:[%s408 + $0x7a] sm:$0xff]
      %v1903 = vld [vmem:[%s408 + $0x82] sm:$0xff]
      %v1904 = vld [vmem:[%s408 + $0x8a] sm:$0xff]
      %v1905 = vld [vmem:[%s408 + $0x92] sm:$0xff]
      %v1906 = vld [vmem:[%s408 + $0x9a] sm:$0xff]
      %v1907 = vld [vmem:[%s408 + $0xa2] sm:$0xff]
      %v1908 = vld [vmem:[%s408 + $0xaa] sm:$0xff]
      %v1909 = vld [vmem:[%s408 + $0xb2] sm:$0xff]
      %v1910 = vld [vmem:[%s408 + $0xba] sm:$0xff]
      %v1911 = vld [vmem:[%s408 + $0xc2] sm:$0xff]
      %v1912 = vld [vmem:[%s408 + $0xca] sm:$0xff]
      %v1913 = vld [vmem:[%s408 + $0xd2] sm:$0xff]
      %v1914 = vld [vmem:[%s408 + $0xda] sm:$0xff]
      %v1915 = vld [vmem:[%s408 + $0xe2] sm:$0xff]
      %v1916 = vld [vmem:[%s408 + $0xea] sm:$0xff]
      %v1917 = vld [vmem:[%s408 + $0xf2] sm:$0xff]
      %v1918 = vld [vmem:[%s408 + $0xfa] sm:$0xff]
      %v1919 = vld [vmem:[%s408 + $0x102] sm:$0xff]
      %v1920 = vld [vmem:[%s408 + $0x10a] sm:$0xff]
      %s1921 = scalar_lea.vmem %s1, 640
      %v1922 = vld [vmem:[%s1921] sm:$0xff]
      %v1923 = vld [vmem:[%s1921 + $0x8] sm:$0xff]
      %v1924 = vld [vmem:[%s1921 + $0x10] sm:$0xff]
      %v1925 = vld [vmem:[%s1921 + $0x18] sm:$0xff]
      %v1926 = vld [vmem:[%s1921 + $0x20] sm:$0xff]
      %v1927 = vld [vmem:[%s1921 + $0x28] sm:$0xff]
      %v1928 = vld [vmem:[%s1921 + $0x30] sm:$0xff]
      %v1929 = vld [vmem:[%s1921 + $0x38] sm:$0xff]
      %v1930 = vld [vmem:[%s1921 + $0x40] sm:$0xff]
      %v1931 = vld [vmem:[%s1921 + $0x48] sm:$0xff]
      %v1932 = vld [vmem:[%s1921 + $0x50] sm:$0xff]
      %v1933 = vld [vmem:[%s1921 + $0x58] sm:$0xff]
      %v1934 = vld [vmem:[%s1921 + $0x60] sm:$0xff]
      %v1935 = vld [vmem:[%s1921 + $0x68] sm:$0xff]
      %v1936 = vld [vmem:[%s1921 + $0x70] sm:$0xff]
      %v1937 = vld [vmem:[%s1921 + $0x78] sm:$0xff]
      %1938 = vmatprep.subr.mxu0 0.0
      %1939 = vmatpush1.msra.mxu0 %v1937
      %1940 = vmatprep.subr.mxu0 0.0
      %1941 = vmatpush1.msra.mxu0 %v1936
      %1942 = vmatprep.subr.mxu0 0.0
      %1943 = vmatpush1.msra.mxu0 %v1935
      %1944 = vmatprep.subr.mxu0 0.0
      %1945 = vmatpush1.msra.mxu0 %v1934
      %1946 = vmatprep.subr.mxu0 0.0
      %1947 = vmatpush1.msra.mxu0 %v1933
      %1948 = vmatprep.subr.mxu0 0.0
      %1949 = vmatpush1.msra.mxu0 %v1932
      %1950 = vmatprep.subr.mxu0 0.0
      %1951 = vmatpush1.msra.mxu0 %v1931
      %1952 = vmatprep.subr.mxu0 0.0
      %1953 = vmatpush1.msra.mxu0 %v1930
      %1954 = vmatprep.subr.mxu0 0.0
      %1955 = vmatpush1.msra.mxu0 %v1929
      %1956 = vmatprep.subr.mxu0 0.0
      %1957 = vmatpush1.msra.mxu0 %v1928
      %1958 = vmatprep.subr.mxu0 0.0
      %1959 = vmatpush1.msra.mxu0 %v1927
      %1960 = vmatprep.subr.mxu0 0.0
      %1961 = vmatpush1.msra.mxu0 %v1926
      %1962 = vmatprep.subr.mxu0 0.0
      %1963 = vmatpush1.msra.mxu0 %v1925
      %1964 = vmatprep.subr.mxu0 0.0
      %1965 = vmatpush1.msra.mxu0 %v1924
      %1966 = vmatprep.subr.mxu0 0.0
      %1967 = vmatpush1.msra.mxu0 %v1923
      %1968 = vmatprep.subr.mxu0 0.0
      %1969 = vmatpush1.msra.mxu0 %v1922
      %1970 = vmatprep.subr.mxu0 0.0
      %1971 = vmatpush2.msra.mxu0 0.0
      %1972 = vmatprep.subr.mxu0 0.0
      %1973 = vmatpush2.msra.mxu0 0.0
      %1974 = vmatprep.subr.mxu0 0.0
      %1975 = vmatpush2.msra.mxu0 0.0
      %1976 = vmatprep.subr.mxu0 0.0
      %1977 = vmatpush2.msra.mxu0 0.0
      %1978 = vmatprep.subr.mxu0 0.0
      %1979 = vmatpush2.msra.mxu0 0.0
      %1980 = vmatprep.subr.mxu0 0.0
      %1981 = vmatpush2.msra.mxu0 0.0
      %1982 = vmatprep.subr.mxu0 0.0
      %1983 = vmatpush2.msra.mxu0 0.0
      %1984 = vmatprep.subr.mxu0 0.0
      %1985 = vmatpush2.msra.mxu0 0.0
      %1986 = vmatprep.subr.mxu0 0.0
      %1987 = vmatpush2.msra.mxu0 0.0
      %1988 = vmatprep.subr.mxu0 0.0
      %1989 = vmatpush2.msra.mxu0 0.0
      %1990 = vmatprep.subr.mxu0 0.0
      %1991 = vmatpush2.msra.mxu0 0.0
      %1992 = vmatprep.subr.mxu0 0.0
      %1993 = vmatpush2.msra.mxu0 0.0
      %1994 = vmatprep.subr.mxu0 0.0
      %1995 = vmatpush2.msra.mxu0 0.0
      %1996 = vmatprep.subr.mxu0 0.0
      %1997 = vmatpush2.msra.mxu0 0.0
      %1998 = vmatprep.subr.mxu0 0.0
      %1999 = vmatpush2.msra.mxu0 0.0
      %2000 = vmatprep.subr.mxu0 0.0
      %2001 = vmatpush2.msra.mxu0 0.0
      %2002 = vmatprep.mubr.f32.mxu0 0.0
      %2003 = vmatmul.mubr.f32.gmra.mxu0 %v1889
      %v2004 = vpop.f32.mrf.mxu0
      %v2005 = vadd.f32 0.0, %v2004
      %v2006 = vpop.f32.mrf.mxu0
      %2007 = vmatprep.mubr.f32.mxu0 0.0
      %2008 = vmatmul.mubr.f32.gmra.mxu0 %v1890
      %v2009 = vpop.f32.mrf.mxu0
      %v2010 = vadd.f32 0.0, %v2009
      %v2011 = vpop.f32.mrf.mxu0
      %2012 = vmatprep.mubr.f32.mxu0 0.0
      %2013 = vmatmul.mubr.f32.gmra.mxu0 %v1891
      %v2014 = vpop.f32.mrf.mxu0
      %v2015 = vadd.f32 0.0, %v2014
      %v2016 = vpop.f32.mrf.mxu0
      %2017 = vmatprep.mubr.f32.mxu0 0.0
      %2018 = vmatmul.mubr.f32.gmra.mxu0 %v1892
      %v2019 = vpop.f32.mrf.mxu0
      %v2020 = vadd.f32 0.0, %v2019
      %v2021 = vpop.f32.mrf.mxu0
      %2022 = vmatprep.mubr.f32.mxu0 0.0
      %2023 = vmatmul.mubr.f32.gmra.mxu0 %v1893
      %v2024 = vpop.f32.mrf.mxu0
      %v2025 = vadd.f32 0.0, %v2024
      %v2026 = vpop.f32.mrf.mxu0
      %2027 = vmatprep.mubr.f32.mxu0 0.0
      %2028 = vmatmul.mubr.f32.gmra.mxu0 %v1894
      %v2029 = vpop.f32.mrf.mxu0
      %v2030 = vadd.f32 0.0, %v2029
      %v2031 = vpop.f32.mrf.mxu0
      %2032 = vmatprep.mubr.f32.mxu0 0.0
      %2033 = vmatmul.mubr.f32.gmra.mxu0 %v1895
      %v2034 = vpop.f32.mrf.mxu0
      %v2035 = vadd.f32 0.0, %v2034
      %v2036 = vpop.f32.mrf.mxu0
      %2037 = vmatprep.mubr.f32.mxu0 0.0
      %2038 = vmatmul.mubr.f32.gmra.mxu0 %v1896
      %v2039 = vpop.f32.mrf.mxu0
      %v2040 = vadd.f32 0.0, %v2039
      %v2041 = vpop.f32.mrf.mxu0
      %2042 = vmatprep.mubr.f32.mxu0 0.0
      %2043 = vmatmul.mubr.f32.gmra.mxu0 %v1897
      %v2044 = vpop.f32.mrf.mxu0
      %v2045 = vadd.f32 0.0, %v2044
      %v2046 = vpop.f32.mrf.mxu0
      %2047 = vmatprep.mubr.f32.mxu0 0.0
      %2048 = vmatmul.mubr.f32.gmra.mxu0 %v1898
      %v2049 = vpop.f32.mrf.mxu0
      %v2050 = vadd.f32 0.0, %v2049
      %v2051 = vpop.f32.mrf.mxu0
      %2052 = vmatprep.mubr.f32.mxu0 0.0
      %2053 = vmatmul.mubr.f32.gmra.mxu0 %v1899
      %v2054 = vpop.f32.mrf.mxu0
      %v2055 = vadd.f32 0.0, %v2054
      %v2056 = vpop.f32.mrf.mxu0
      %2057 = vmatprep.mubr.f32.mxu0 0.0
      %2058 = vmatmul.mubr.f32.gmra.mxu0 %v1900
      %v2059 = vpop.f32.mrf.mxu0
      %v2060 = vadd.f32 0.0, %v2059
      %v2061 = vpop.f32.mrf.mxu0
      %2062 = vmatprep.mubr.f32.mxu0 0.0
      %2063 = vmatmul.mubr.f32.gmra.mxu0 %v1901
      %v2064 = vpop.f32.mrf.mxu0
      %v2065 = vadd.f32 0.0, %v2064
      %v2066 = vpop.f32.mrf.mxu0
      %2067 = vmatprep.mubr.f32.mxu0 0.0
      %2068 = vmatmul.mubr.f32.gmra.mxu0 %v1902
      %v2069 = vpop.f32.mrf.mxu0
      %v2070 = vadd.f32 0.0, %v2069
      %v2071 = vpop.f32.mrf.mxu0
      %2072 = vmatprep.mubr.f32.mxu0 0.0
      %2073 = vmatmul.mubr.f32.gmra.mxu0 %v1903
      %v2074 = vpop.f32.mrf.mxu0
      %v2075 = vadd.f32 0.0, %v2074
      %v2076 = vpop.f32.mrf.mxu0
      %2077 = vmatprep.mubr.f32.mxu0 0.0
      %2078 = vmatmul.mubr.f32.gmra.mxu0 %v1904
      %v2079 = vpop.f32.mrf.mxu0
      %v2080 = vadd.f32 0.0, %v2079
      %v2081 = vpop.f32.mrf.mxu0
      %2082 = vmatprep.mubr.f32.mxu0 0.0
      %2083 = vmatmul.mubr.f32.gmra.mxu0 %v1905
      %v2084 = vpop.f32.mrf.mxu0
      %v2085 = vadd.f32 0.0, %v2084
      %v2086 = vpop.f32.mrf.mxu0
      %2087 = vmatprep.mubr.f32.mxu0 0.0
      %2088 = vmatmul.mubr.f32.gmra.mxu0 %v1906
      %v2089 = vpop.f32.mrf.mxu0
      %v2090 = vadd.f32 0.0, %v2089
      %v2091 = vpop.f32.mrf.mxu0
      %2092 = vmatprep.mubr.f32.mxu0 0.0
      %2093 = vmatmul.mubr.f32.gmra.mxu0 %v1907
      %v2094 = vpop.f32.mrf.mxu0
      %v2095 = vadd.f32 0.0, %v2094
      %v2096 = vpop.f32.mrf.mxu0
      %2097 = vmatprep.mubr.f32.mxu0 0.0
      %2098 = vmatmul.mubr.f32.gmra.mxu0 %v1908
      %v2099 = vpop.f32.mrf.mxu0
      %v2100 = vadd.f32 0.0, %v2099
      %v2101 = vpop.f32.mrf.mxu0
      %2102 = vmatprep.mubr.f32.mxu0 0.0
      %2103 = vmatmul.mubr.f32.gmra.mxu0 %v1909
      %v2104 = vpop.f32.mrf.mxu0
      %v2105 = vadd.f32 0.0, %v2104
      %v2106 = vpop.f32.mrf.mxu0
      %2107 = vmatprep.mubr.f32.mxu0 0.0
      %2108 = vmatmul.mubr.f32.gmra.mxu0 %v1910
      %v2109 = vpop.f32.mrf.mxu0
      %v2110 = vadd.f32 0.0, %v2109
      %v2111 = vpop.f32.mrf.mxu0
      %2112 = vmatprep.mubr.f32.mxu0 0.0
      %2113 = vmatmul.mubr.f32.gmra.mxu0 %v1911
      %v2114 = vpop.f32.mrf.mxu0
      %v2115 = vadd.f32 0.0, %v2114
      %v2116 = vpop.f32.mrf.mxu0
      %2117 = vmatprep.mubr.f32.mxu0 0.0
      %2118 = vmatmul.mubr.f32.gmra.mxu0 %v1912
      %v2119 = vpop.f32.mrf.mxu0
      %v2120 = vadd.f32 0.0, %v2119
      %v2121 = vpop.f32.mrf.mxu0
      %2122 = vmatprep.mubr.f32.mxu0 0.0
      %2123 = vmatmul.mubr.f32.gmra.mxu0 %v1913
      %v2124 = vpop.f32.mrf.mxu0
      %v2125 = vadd.f32 0.0, %v2124
      %v2126 = vpop.f32.mrf.mxu0
      %2127 = vmatprep.mubr.f32.mxu0 0.0
      %2128 = vmatmul.mubr.f32.gmra.mxu0 %v1914
      %v2129 = vpop.f32.mrf.mxu0
      %v2130 = vadd.f32 0.0, %v2129
      %v2131 = vpop.f32.mrf.mxu0
      %2132 = vmatprep.mubr.f32.mxu0 0.0
      %2133 = vmatmul.mubr.f32.gmra.mxu0 %v1915
      %v2134 = vpop.f32.mrf.mxu0
      %v2135 = vadd.f32 0.0, %v2134
      %v2136 = vpop.f32.mrf.mxu0
      %2137 = vmatprep.mubr.f32.mxu0 0.0
      %2138 = vmatmul.mubr.f32.gmra.mxu0 %v1916
      %v2139 = vpop.f32.mrf.mxu0
      %v2140 = vadd.f32 0.0, %v2139
      %v2141 = vpop.f32.mrf.mxu0
      %2142 = vmatprep.mubr.f32.mxu0 0.0
      %2143 = vmatmul.mubr.f32.gmra.mxu0 %v1917
      %v2144 = vpop.f32.mrf.mxu0
      %v2145 = vadd.f32 0.0, %v2144
      %v2146 = vpop.f32.mrf.mxu0
      %2147 = vmatprep.mubr.f32.mxu0 0.0
      %2148 = vmatmul.mubr.f32.gmra.mxu0 %v1918
      %v2149 = vpop.f32.mrf.mxu0
      %v2150 = vadd.f32 0.0, %v2149
      %v2151 = vpop.f32.mrf.mxu0
      %2152 = vmatprep.mubr.f32.mxu0 0.0
      %2153 = vmatmul.mubr.f32.gmra.mxu0 %v1919
      %v2154 = vpop.f32.mrf.mxu0
      %v2155 = vadd.f32 0.0, %v2154
      %v2156 = vpop.f32.mrf.mxu0
      %2157 = vmatprep.mubr.f32.mxu0 0.0
      %2158 = vmatmul.mubr.f32.gmra.mxu0 %v1920
      %v2159 = vpop.f32.mrf.mxu0
      %v2160 = vadd.f32 0.0, %v2159
      %v2161 = vpop.f32.mrf.mxu0
      %2162 = vdwg.mxu0
      %v2163 = vadd.f32 %v1857, %v2005
      %v2164 = vadd.f32 %v1858, %v2010
      %v2165 = vadd.f32 %v1859, %v2015
      %v2166 = vadd.f32 %v1860, %v2020
      %v2167 = vadd.f32 %v1861, %v2025
      %v2168 = vadd.f32 %v1862, %v2030
      %v2169 = vadd.f32 %v1863, %v2035
      %v2170 = vadd.f32 %v1864, %v2040
      %v2171 = vadd.f32 %v1865, %v2045
      %v2172 = vadd.f32 %v1866, %v2050
      %v2173 = vadd.f32 %v1867, %v2055
      %v2174 = vadd.f32 %v1868, %v2060
      %v2175 = vadd.f32 %v1869, %v2065
      %v2176 = vadd.f32 %v1870, %v2070
      %v2177 = vadd.f32 %v1871, %v2075
      %v2178 = vadd.f32 %v1872, %v2080
      %v2179 = vadd.f32 %v1873, %v2085
      %v2180 = vadd.f32 %v1874, %v2090
      %v2181 = vadd.f32 %v1875, %v2095
      %v2182 = vadd.f32 %v1876, %v2100
      %v2183 = vadd.f32 %v1877, %v2105
      %v2184 = vadd.f32 %v1878, %v2110
      %v2185 = vadd.f32 %v1879, %v2115
      %v2186 = vadd.f32 %v1880, %v2120
      %v2187 = vadd.f32 %v1881, %v2125
      %v2188 = vadd.f32 %v1882, %v2130
      %v2189 = vadd.f32 %v1883, %v2135
      %v2190 = vadd.f32 %v1884, %v2140
      %v2191 = vadd.f32 %v1885, %v2145
      %v2192 = vadd.f32 %v1886, %v2150
      %v2193 = vadd.f32 %v1887, %v2155
      %v2194 = vadd.f32 %v1888, %v2160
      %v2195 = vld [vmem:[%s408 + $0x20] sm:$0xff]
      %v2196 = vld [vmem:[%s408 + $0x28] sm:$0xff]
      %v2197 = vld [vmem:[%s408 + $0x30] sm:$0xff]
      %v2198 = vld [vmem:[%s408 + $0x38] sm:$0xff]
      %v2199 = vld [vmem:[%s408 + $0x40] sm:$0xff]
      %v2200 = vld [vmem:[%s408 + $0x48] sm:$0xff]
      %v2201 = vld [vmem:[%s408 + $0x50] sm:$0xff]
      %v2202 = vld [vmem:[%s408 + $0x58] sm:$0xff]
      %v2203 = vld [vmem:[%s408 + $0x60] sm:$0xff]
      %v2204 = vld [vmem:[%s408 + $0x68] sm:$0xff]
      %v2205 = vld [vmem:[%s408 + $0x70] sm:$0xff]
      %v2206 = vld [vmem:[%s408 + $0x78] sm:$0xff]
      %v2207 = vld [vmem:[%s408 + $0x80] sm:$0xff]
      %v2208 = vld [vmem:[%s408 + $0x88] sm:$0xff]
      %v2209 = vld [vmem:[%s408 + $0x90] sm:$0xff]
      %v2210 = vld [vmem:[%s408 + $0x98] sm:$0xff]
      %v2211 = vld [vmem:[%s408 + $0xa0] sm:$0xff]
      %v2212 = vld [vmem:[%s408 + $0xa8] sm:$0xff]
      %v2213 = vld [vmem:[%s408 + $0xb0] sm:$0xff]
      %v2214 = vld [vmem:[%s408 + $0xb8] sm:$0xff]
      %v2215 = vld [vmem:[%s408 + $0xc0] sm:$0xff]
      %v2216 = vld [vmem:[%s408 + $0xc8] sm:$0xff]
      %v2217 = vld [vmem:[%s408 + $0xd0] sm:$0xff]
      %v2218 = vld [vmem:[%s408 + $0xd8] sm:$0xff]
      %v2219 = vld [vmem:[%s408 + $0xe0] sm:$0xff]
      %v2220 = vld [vmem:[%s408 + $0xe8] sm:$0xff]
      %v2221 = vld [vmem:[%s408 + $0xf0] sm:$0xff]
      %v2222 = vld [vmem:[%s408 + $0xf8] sm:$0xff]
      %v2223 = vld [vmem:[%s408 + $0x100] sm:$0xff]
      %v2224 = vld [vmem:[%s408 + $0x108] sm:$0xff]
      %v2225 = vld [vmem:[%s408 + $0x110] sm:$0xff]
      %v2226 = vld [vmem:[%s408 + $0x118] sm:$0xff]
      %s2227 = scalar_lea.vmem %s1, 768
      %v2228 = vld [vmem:[%s2227] sm:$0xff]
      %v2229 = vld [vmem:[%s2227 + $0x8] sm:$0xff]
      %v2230 = vld [vmem:[%s2227 + $0x10] sm:$0xff]
      %v2231 = vld [vmem:[%s2227 + $0x18] sm:$0xff]
      %v2232 = vld [vmem:[%s2227 + $0x20] sm:$0xff]
      %v2233 = vld [vmem:[%s2227 + $0x28] sm:$0xff]
      %v2234 = vld [vmem:[%s2227 + $0x30] sm:$0xff]
      %v2235 = vld [vmem:[%s2227 + $0x38] sm:$0xff]
      %v2236 = vld [vmem:[%s2227 + $0x40] sm:$0xff]
      %v2237 = vld [vmem:[%s2227 + $0x48] sm:$0xff]
      %v2238 = vld [vmem:[%s2227 + $0x50] sm:$0xff]
      %v2239 = vld [vmem:[%s2227 + $0x58] sm:$0xff]
      %v2240 = vld [vmem:[%s2227 + $0x60] sm:$0xff]
      %v2241 = vld [vmem:[%s2227 + $0x68] sm:$0xff]
      %v2242 = vld [vmem:[%s2227 + $0x70] sm:$0xff]
      %v2243 = vld [vmem:[%s2227 + $0x78] sm:$0xff]
      %2244 = vmatprep.subr.mxu0 0.0
      %2245 = vmatpush1.msra.mxu0 %v2243
      %2246 = vmatprep.subr.mxu0 0.0
      %2247 = vmatpush1.msra.mxu0 %v2242
      %2248 = vmatprep.subr.mxu0 0.0
      %2249 = vmatpush1.msra.mxu0 %v2241
      %2250 = vmatprep.subr.mxu0 0.0
      %2251 = vmatpush1.msra.mxu0 %v2240
      %2252 = vmatprep.subr.mxu0 0.0
      %2253 = vmatpush1.msra.mxu0 %v2239
      %2254 = vmatprep.subr.mxu0 0.0
      %2255 = vmatpush1.msra.mxu0 %v2238
      %2256 = vmatprep.subr.mxu0 0.0
      %2257 = vmatpush1.msra.mxu0 %v2237
      %2258 = vmatprep.subr.mxu0 0.0
      %2259 = vmatpush1.msra.mxu0 %v2236
      %2260 = vmatprep.subr.mxu0 0.0
      %2261 = vmatpush1.msra.mxu0 %v2235
      %2262 = vmatprep.subr.mxu0 0.0
      %2263 = vmatpush1.msra.mxu0 %v2234
      %2264 = vmatprep.subr.mxu0 0.0
      %2265 = vmatpush1.msra.mxu0 %v2233
      %2266 = vmatprep.subr.mxu0 0.0
      %2267 = vmatpush1.msra.mxu0 %v2232
      %2268 = vmatprep.subr.mxu0 0.0
      %2269 = vmatpush1.msra.mxu0 %v2231
      %2270 = vmatprep.subr.mxu0 0.0
      %2271 = vmatpush1.msra.mxu0 %v2230
      %2272 = vmatprep.subr.mxu0 0.0
      %2273 = vmatpush1.msra.mxu0 %v2229
      %2274 = vmatprep.subr.mxu0 0.0
      %2275 = vmatpush1.msra.mxu0 %v2228
      %2276 = vmatprep.subr.mxu0 0.0
      %2277 = vmatpush2.msra.mxu0 0.0
      %2278 = vmatprep.subr.mxu0 0.0
      %2279 = vmatpush2.msra.mxu0 0.0
      %2280 = vmatprep.subr.mxu0 0.0
      %2281 = vmatpush2.msra.mxu0 0.0
      %2282 = vmatprep.subr.mxu0 0.0
      %2283 = vmatpush2.msra.mxu0 0.0
      %2284 = vmatprep.subr.mxu0 0.0
      %2285 = vmatpush2.msra.mxu0 0.0
      %2286 = vmatprep.subr.mxu0 0.0
      %2287 = vmatpush2.msra.mxu0 0.0
      %2288 = vmatprep.subr.mxu0 0.0
      %2289 = vmatpush2.msra.mxu0 0.0
      %2290 = vmatprep.subr.mxu0 0.0
      %2291 = vmatpush2.msra.mxu0 0.0
      %2292 = vmatprep.subr.mxu0 0.0
      %2293 = vmatpush2.msra.mxu0 0.0
      %2294 = vmatprep.subr.mxu0 0.0
      %2295 = vmatpush2.msra.mxu0 0.0
      %2296 = vmatprep.subr.mxu0 0.0
      %2297 = vmatpush2.msra.mxu0 0.0
      %2298 = vmatprep.subr.mxu0 0.0
      %2299 = vmatpush2.msra.mxu0 0.0
      %2300 = vmatprep.subr.mxu0 0.0
      %2301 = vmatpush2.msra.mxu0 0.0
      %2302 = vmatprep.subr.mxu0 0.0
      %2303 = vmatpush2.msra.mxu0 0.0
      %2304 = vmatprep.subr.mxu0 0.0
      %2305 = vmatpush2.msra.mxu0 0.0
      %2306 = vmatprep.subr.mxu0 0.0
      %2307 = vmatpush2.msra.mxu0 0.0
      %2308 = vmatprep.mubr.f32.mxu0 0.0
      %2309 = vmatmul.mubr.f32.gmra.mxu0 %v2195
      %v2310 = vpop.f32.mrf.mxu0
      %v2311 = vadd.f32 0.0, %v2310
      %v2312 = vpop.f32.mrf.mxu0
      %2313 = vmatprep.mubr.f32.mxu0 0.0
      %2314 = vmatmul.mubr.f32.gmra.mxu0 %v2196
      %v2315 = vpop.f32.mrf.mxu0
      %v2316 = vadd.f32 0.0, %v2315
      %v2317 = vpop.f32.mrf.mxu0
      %2318 = vmatprep.mubr.f32.mxu0 0.0
      %2319 = vmatmul.mubr.f32.gmra.mxu0 %v2197
      %v2320 = vpop.f32.mrf.mxu0
      %v2321 = vadd.f32 0.0, %v2320
      %v2322 = vpop.f32.mrf.mxu0
      %2323 = vmatprep.mubr.f32.mxu0 0.0
      %2324 = vmatmul.mubr.f32.gmra.mxu0 %v2198
      %v2325 = vpop.f32.mrf.mxu0
      %v2326 = vadd.f32 0.0, %v2325
      %v2327 = vpop.f32.mrf.mxu0
      %2328 = vmatprep.mubr.f32.mxu0 0.0
      %2329 = vmatmul.mubr.f32.gmra.mxu0 %v2199
      %v2330 = vpop.f32.mrf.mxu0
      %v2331 = vadd.f32 0.0, %v2330
      %v2332 = vpop.f32.mrf.mxu0
      %2333 = vmatprep.mubr.f32.mxu0 0.0
      %2334 = vmatmul.mubr.f32.gmra.mxu0 %v2200
      %v2335 = vpop.f32.mrf.mxu0
      %v2336 = vadd.f32 0.0, %v2335
      %v2337 = vpop.f32.mrf.mxu0
      %2338 = vmatprep.mubr.f32.mxu0 0.0
      %2339 = vmatmul.mubr.f32.gmra.mxu0 %v2201
      %v2340 = vpop.f32.mrf.mxu0
      %v2341 = vadd.f32 0.0, %v2340
      %v2342 = vpop.f32.mrf.mxu0
      %2343 = vmatprep.mubr.f32.mxu0 0.0
      %2344 = vmatmul.mubr.f32.gmra.mxu0 %v2202
      %v2345 = vpop.f32.mrf.mxu0
      %v2346 = vadd.f32 0.0, %v2345
      %v2347 = vpop.f32.mrf.mxu0
      %2348 = vmatprep.mubr.f32.mxu0 0.0
      %2349 = vmatmul.mubr.f32.gmra.mxu0 %v2203
      %v2350 = vpop.f32.mrf.mxu0
      %v2351 = vadd.f32 0.0, %v2350
      %v2352 = vpop.f32.mrf.mxu0
      %2353 = vmatprep.mubr.f32.mxu0 0.0
      %2354 = vmatmul.mubr.f32.gmra.mxu0 %v2204
      %v2355 = vpop.f32.mrf.mxu0
      %v2356 = vadd.f32 0.0, %v2355
      %v2357 = vpop.f32.mrf.mxu0
      %2358 = vmatprep.mubr.f32.mxu0 0.0
      %2359 = vmatmul.mubr.f32.gmra.mxu0 %v2205
      %v2360 = vpop.f32.mrf.mxu0
      %v2361 = vadd.f32 0.0, %v2360
      %v2362 = vpop.f32.mrf.mxu0
      %2363 = vmatprep.mubr.f32.mxu0 0.0
      %2364 = vmatmul.mubr.f32.gmra.mxu0 %v2206
      %v2365 = vpop.f32.mrf.mxu0
      %v2366 = vadd.f32 0.0, %v2365
      %v2367 = vpop.f32.mrf.mxu0
      %2368 = vmatprep.mubr.f32.mxu0 0.0
      %2369 = vmatmul.mubr.f32.gmra.mxu0 %v2207
      %v2370 = vpop.f32.mrf.mxu0
      %v2371 = vadd.f32 0.0, %v2370
      %v2372 = vpop.f32.mrf.mxu0
      %2373 = vmatprep.mubr.f32.mxu0 0.0
      %2374 = vmatmul.mubr.f32.gmra.mxu0 %v2208
      %v2375 = vpop.f32.mrf.mxu0
      %v2376 = vadd.f32 0.0, %v2375
      %v2377 = vpop.f32.mrf.mxu0
      %2378 = vmatprep.mubr.f32.mxu0 0.0
      %2379 = vmatmul.mubr.f32.gmra.mxu0 %v2209
      %v2380 = vpop.f32.mrf.mxu0
      %v2381 = vadd.f32 0.0, %v2380
      %v2382 = vpop.f32.mrf.mxu0
      %2383 = vmatprep.mubr.f32.mxu0 0.0
      %2384 = vmatmul.mubr.f32.gmra.mxu0 %v2210
      %v2385 = vpop.f32.mrf.mxu0
      %v2386 = vadd.f32 0.0, %v2385
      %v2387 = vpop.f32.mrf.mxu0
      %2388 = vmatprep.mubr.f32.mxu0 0.0
      %2389 = vmatmul.mubr.f32.gmra.mxu0 %v2211
      %v2390 = vpop.f32.mrf.mxu0
      %v2391 = vadd.f32 0.0, %v2390
      %v2392 = vpop.f32.mrf.mxu0
      %2393 = vmatprep.mubr.f32.mxu0 0.0
      %2394 = vmatmul.mubr.f32.gmra.mxu0 %v2212
      %v2395 = vpop.f32.mrf.mxu0
      %v2396 = vadd.f32 0.0, %v2395
      %v2397 = vpop.f32.mrf.mxu0
      %2398 = vmatprep.mubr.f32.mxu0 0.0
      %2399 = vmatmul.mubr.f32.gmra.mxu0 %v2213
      %v2400 = vpop.f32.mrf.mxu0
      %v2401 = vadd.f32 0.0, %v2400
      %v2402 = vpop.f32.mrf.mxu0
      %2403 = vmatprep.mubr.f32.mxu0 0.0
      %2404 = vmatmul.mubr.f32.gmra.mxu0 %v2214
      %v2405 = vpop.f32.mrf.mxu0
      %v2406 = vadd.f32 0.0, %v2405
      %v2407 = vpop.f32.mrf.mxu0
      %2408 = vmatprep.mubr.f32.mxu0 0.0
      %2409 = vmatmul.mubr.f32.gmra.mxu0 %v2215
      %v2410 = vpop.f32.mrf.mxu0
      %v2411 = vadd.f32 0.0, %v2410
      %v2412 = vpop.f32.mrf.mxu0
      %2413 = vmatprep.mubr.f32.mxu0 0.0
      %2414 = vmatmul.mubr.f32.gmra.mxu0 %v2216
      %v2415 = vpop.f32.mrf.mxu0
      %v2416 = vadd.f32 0.0, %v2415
      %v2417 = vpop.f32.mrf.mxu0
      %2418 = vmatprep.mubr.f32.mxu0 0.0
      %2419 = vmatmul.mubr.f32.gmra.mxu0 %v2217
      %v2420 = vpop.f32.mrf.mxu0
      %v2421 = vadd.f32 0.0, %v2420
      %v2422 = vpop.f32.mrf.mxu0
      %2423 = vmatprep.mubr.f32.mxu0 0.0
      %2424 = vmatmul.mubr.f32.gmra.mxu0 %v2218
      %v2425 = vpop.f32.mrf.mxu0
      %v2426 = vadd.f32 0.0, %v2425
      %v2427 = vpop.f32.mrf.mxu0
      %2428 = vmatprep.mubr.f32.mxu0 0.0
      %2429 = vmatmul.mubr.f32.gmra.mxu0 %v2219
      %v2430 = vpop.f32.mrf.mxu0
      %v2431 = vadd.f32 0.0, %v2430
      %v2432 = vpop.f32.mrf.mxu0
      %2433 = vmatprep.mubr.f32.mxu0 0.0
      %2434 = vmatmul.mubr.f32.gmra.mxu0 %v2220
      %v2435 = vpop.f32.mrf.mxu0
      %v2436 = vadd.f32 0.0, %v2435
      %v2437 = vpop.f32.mrf.mxu0
      %2438 = vmatprep.mubr.f32.mxu0 0.0
      %2439 = vmatmul.mubr.f32.gmra.mxu0 %v2221
      %v2440 = vpop.f32.mrf.mxu0
      %v2441 = vadd.f32 0.0, %v2440
      %v2442 = vpop.f32.mrf.mxu0
      %2443 = vmatprep.mubr.f32.mxu0 0.0
      %2444 = vmatmul.mubr.f32.gmra.mxu0 %v2222
      %v2445 = vpop.f32.mrf.mxu0
      %v2446 = vadd.f32 0.0, %v2445
      %v2447 = vpop.f32.mrf.mxu0
      %2448 = vmatprep.mubr.f32.mxu0 0.0
      %2449 = vmatmul.mubr.f32.gmra.mxu0 %v2223
      %v2450 = vpop.f32.mrf.mxu0
      %v2451 = vadd.f32 0.0, %v2450
      %v2452 = vpop.f32.mrf.mxu0
      %2453 = vmatprep.mubr.f32.mxu0 0.0
      %2454 = vmatmul.mubr.f32.gmra.mxu0 %v2224
      %v2455 = vpop.f32.mrf.mxu0
      %v2456 = vadd.f32 0.0, %v2455
      %v2457 = vpop.f32.mrf.mxu0
      %2458 = vmatprep.mubr.f32.mxu0 0.0
      %2459 = vmatmul.mubr.f32.gmra.mxu0 %v2225
      %v2460 = vpop.f32.mrf.mxu0
      %v2461 = vadd.f32 0.0, %v2460
      %v2462 = vpop.f32.mrf.mxu0
      %2463 = vmatprep.mubr.f32.mxu0 0.0
      %2464 = vmatmul.mubr.f32.gmra.mxu0 %v2226
      %v2465 = vpop.f32.mrf.mxu0
      %v2466 = vadd.f32 0.0, %v2465
      %v2467 = vpop.f32.mrf.mxu0
      %2468 = vdwg.mxu0
      %v2469 = vadd.f32 %v2163, %v2311
      %v2470 = vadd.f32 %v2164, %v2316
      %v2471 = vadd.f32 %v2165, %v2321
      %v2472 = vadd.f32 %v2166, %v2326
      %v2473 = vadd.f32 %v2167, %v2331
      %v2474 = vadd.f32 %v2168, %v2336
      %v2475 = vadd.f32 %v2169, %v2341
      %v2476 = vadd.f32 %v2170, %v2346
      %v2477 = vadd.f32 %v2171, %v2351
      %v2478 = vadd.f32 %v2172, %v2356
      %v2479 = vadd.f32 %v2173, %v2361
      %v2480 = vadd.f32 %v2174, %v2366
      %v2481 = vadd.f32 %v2175, %v2371
      %v2482 = vadd.f32 %v2176, %v2376
      %v2483 = vadd.f32 %v2177, %v2381
      %v2484 = vadd.f32 %v2178, %v2386
      %v2485 = vadd.f32 %v2179, %v2391
      %v2486 = vadd.f32 %v2180, %v2396
      %v2487 = vadd.f32 %v2181, %v2401
      %v2488 = vadd.f32 %v2182, %v2406
      %v2489 = vadd.f32 %v2183, %v2411
      %v2490 = vadd.f32 %v2184, %v2416
      %v2491 = vadd.f32 %v2185, %v2421
      %v2492 = vadd.f32 %v2186, %v2426
      %v2493 = vadd.f32 %v2187, %v2431
      %v2494 = vadd.f32 %v2188, %v2436
      %v2495 = vadd.f32 %v2189, %v2441
      %v2496 = vadd.f32 %v2190, %v2446
      %v2497 = vadd.f32 %v2191, %v2451
      %v2498 = vadd.f32 %v2192, %v2456
      %v2499 = vadd.f32 %v2193, %v2461
      %v2500 = vadd.f32 %v2194, %v2466
      %v2501 = vld [vmem:[%s408 + $0x21] sm:$0xff]
      %v2502 = vld [vmem:[%s408 + $0x29] sm:$0xff]
      %v2503 = vld [vmem:[%s408 + $0x31] sm:$0xff]
      %v2504 = vld [vmem:[%s408 + $0x39] sm:$0xff]
      %v2505 = vld [vmem:[%s408 + $0x41] sm:$0xff]
      %v2506 = vld [vmem:[%s408 + $0x49] sm:$0xff]
      %v2507 = vld [vmem:[%s408 + $0x51] sm:$0xff]
      %v2508 = vld [vmem:[%s408 + $0x59] sm:$0xff]
      %v2509 = vld [vmem:[%s408 + $0x61] sm:$0xff]
      %v2510 = vld [vmem:[%s408 + $0x69] sm:$0xff]
      %v2511 = vld [vmem:[%s408 + $0x71] sm:$0xff]
      %v2512 = vld [vmem:[%s408 + $0x79] sm:$0xff]
      %v2513 = vld [vmem:[%s408 + $0x81] sm:$0xff]
      %v2514 = vld [vmem:[%s408 + $0x89] sm:$0xff]
      %v2515 = vld [vmem:[%s408 + $0x91] sm:$0xff]
      %v2516 = vld [vmem:[%s408 + $0x99] sm:$0xff]
      %v2517 = vld [vmem:[%s408 + $0xa1] sm:$0xff]
      %v2518 = vld [vmem:[%s408 + $0xa9] sm:$0xff]
      %v2519 = vld [vmem:[%s408 + $0xb1] sm:$0xff]
      %v2520 = vld [vmem:[%s408 + $0xb9] sm:$0xff]
      %v2521 = vld [vmem:[%s408 + $0xc1] sm:$0xff]
      %v2522 = vld [vmem:[%s408 + $0xc9] sm:$0xff]
      %v2523 = vld [vmem:[%s408 + $0xd1] sm:$0xff]
      %v2524 = vld [vmem:[%s408 + $0xd9] sm:$0xff]
      %v2525 = vld [vmem:[%s408 + $0xe1] sm:$0xff]
      %v2526 = vld [vmem:[%s408 + $0xe9] sm:$0xff]
      %v2527 = vld [vmem:[%s408 + $0xf1] sm:$0xff]
      %v2528 = vld [vmem:[%s408 + $0xf9] sm:$0xff]
      %v2529 = vld [vmem:[%s408 + $0x101] sm:$0xff]
      %v2530 = vld [vmem:[%s408 + $0x109] sm:$0xff]
      %v2531 = vld [vmem:[%s408 + $0x111] sm:$0xff]
      %v2532 = vld [vmem:[%s408 + $0x119] sm:$0xff]
      %s2533 = scalar_lea.vmem %s1, 896
      %v2534 = vld [vmem:[%s2533] sm:$0xff]
      %v2535 = vld [vmem:[%s2533 + $0x8] sm:$0xff]
      %v2536 = vld [vmem:[%s2533 + $0x10] sm:$0xff]
      %v2537 = vld [vmem:[%s2533 + $0x18] sm:$0xff]
      %v2538 = vld [vmem:[%s2533 + $0x20] sm:$0xff]
      %v2539 = vld [vmem:[%s2533 + $0x28] sm:$0xff]
      %v2540 = vld [vmem:[%s2533 + $0x30] sm:$0xff]
      %v2541 = vld [vmem:[%s2533 + $0x38] sm:$0xff]
      %v2542 = vld [vmem:[%s2533 + $0x40] sm:$0xff]
      %v2543 = vld [vmem:[%s2533 + $0x48] sm:$0xff]
      %v2544 = vld [vmem:[%s2533 + $0x50] sm:$0xff]
      %v2545 = vld [vmem:[%s2533 + $0x58] sm:$0xff]
      %v2546 = vld [vmem:[%s2533 + $0x60] sm:$0xff]
      %v2547 = vld [vmem:[%s2533 + $0x68] sm:$0xff]
      %v2548 = vld [vmem:[%s2533 + $0x70] sm:$0xff]
      %v2549 = vld [vmem:[%s2533 + $0x78] sm:$0xff]
      %2550 = vmatprep.subr.mxu0 0.0
      %2551 = vmatpush1.msra.mxu0 %v2549
      %2552 = vmatprep.subr.mxu0 0.0
      %2553 = vmatpush1.msra.mxu0 %v2548
      %2554 = vmatprep.subr.mxu0 0.0
      %2555 = vmatpush1.msra.mxu0 %v2547
      %2556 = vmatprep.subr.mxu0 0.0
      %2557 = vmatpush1.msra.mxu0 %v2546
      %2558 = vmatprep.subr.mxu0 0.0
      %2559 = vmatpush1.msra.mxu0 %v2545
      %2560 = vmatprep.subr.mxu0 0.0
      %2561 = vmatpush1.msra.mxu0 %v2544
      %2562 = vmatprep.subr.mxu0 0.0
      %2563 = vmatpush1.msra.mxu0 %v2543
      %2564 = vmatprep.subr.mxu0 0.0
      %2565 = vmatpush1.msra.mxu0 %v2542
      %2566 = vmatprep.subr.mxu0 0.0
      %2567 = vmatpush1.msra.mxu0 %v2541
      %2568 = vmatprep.subr.mxu0 0.0
      %2569 = vmatpush1.msra.mxu0 %v2540
      %2570 = vmatprep.subr.mxu0 0.0
      %2571 = vmatpush1.msra.mxu0 %v2539
      %2572 = vmatprep.subr.mxu0 0.0
      %2573 = vmatpush1.msra.mxu0 %v2538
      %2574 = vmatprep.subr.mxu0 0.0
      %2575 = vmatpush1.msra.mxu0 %v2537
      %2576 = vmatprep.subr.mxu0 0.0
      %2577 = vmatpush1.msra.mxu0 %v2536
      %2578 = vmatprep.subr.mxu0 0.0
      %2579 = vmatpush1.msra.mxu0 %v2535
      %2580 = vmatprep.subr.mxu0 0.0
      %2581 = vmatpush1.msra.mxu0 %v2534
      %2582 = vmatprep.subr.mxu0 0.0
      %2583 = vmatpush2.msra.mxu0 0.0
      %2584 = vmatprep.subr.mxu0 0.0
      %2585 = vmatpush2.msra.mxu0 0.0
      %2586 = vmatprep.subr.mxu0 0.0
      %2587 = vmatpush2.msra.mxu0 0.0
      %2588 = vmatprep.subr.mxu0 0.0
      %2589 = vmatpush2.msra.mxu0 0.0
      %2590 = vmatprep.subr.mxu0 0.0
      %2591 = vmatpush2.msra.mxu0 0.0
      %2592 = vmatprep.subr.mxu0 0.0
      %2593 = vmatpush2.msra.mxu0 0.0
      %2594 = vmatprep.subr.mxu0 0.0
      %2595 = vmatpush2.msra.mxu0 0.0
      %2596 = vmatprep.subr.mxu0 0.0
      %2597 = vmatpush2.msra.mxu0 0.0
      %2598 = vmatprep.subr.mxu0 0.0
      %2599 = vmatpush2.msra.mxu0 0.0
      %2600 = vmatprep.subr.mxu0 0.0
      %2601 = vmatpush2.msra.mxu0 0.0
      %2602 = vmatprep.subr.mxu0 0.0
      %2603 = vmatpush2.msra.mxu0 0.0
      %2604 = vmatprep.subr.mxu0 0.0
      %2605 = vmatpush2.msra.mxu0 0.0
      %2606 = vmatprep.subr.mxu0 0.0
      %2607 = vmatpush2.msra.mxu0 0.0
      %2608 = vmatprep.subr.mxu0 0.0
      %2609 = vmatpush2.msra.mxu0 0.0
      %2610 = vmatprep.subr.mxu0 0.0
      %2611 = vmatpush2.msra.mxu0 0.0
      %2612 = vmatprep.subr.mxu0 0.0
      %2613 = vmatpush2.msra.mxu0 0.0
      %2614 = vmatprep.mubr.f32.mxu0 0.0
      %2615 = vmatmul.mubr.f32.gmra.mxu0 %v2501
      %v2616 = vpop.f32.mrf.mxu0
      %v2617 = vadd.f32 0.0, %v2616
      %v2618 = vpop.f32.mrf.mxu0
      %2619 = vmatprep.mubr.f32.mxu0 0.0
      %2620 = vmatmul.mubr.f32.gmra.mxu0 %v2502
      %v2621 = vpop.f32.mrf.mxu0
      %v2622 = vadd.f32 0.0, %v2621
      %v2623 = vpop.f32.mrf.mxu0
      %2624 = vmatprep.mubr.f32.mxu0 0.0
      %2625 = vmatmul.mubr.f32.gmra.mxu0 %v2503
      %v2626 = vpop.f32.mrf.mxu0
      %v2627 = vadd.f32 0.0, %v2626
      %v2628 = vpop.f32.mrf.mxu0
      %2629 = vmatprep.mubr.f32.mxu0 0.0
      %2630 = vmatmul.mubr.f32.gmra.mxu0 %v2504
      %v2631 = vpop.f32.mrf.mxu0
      %v2632 = vadd.f32 0.0, %v2631
      %v2633 = vpop.f32.mrf.mxu0
      %2634 = vmatprep.mubr.f32.mxu0 0.0
      %2635 = vmatmul.mubr.f32.gmra.mxu0 %v2505
      %v2636 = vpop.f32.mrf.mxu0
      %v2637 = vadd.f32 0.0, %v2636
      %v2638 = vpop.f32.mrf.mxu0
      %2639 = vmatprep.mubr.f32.mxu0 0.0
      %2640 = vmatmul.mubr.f32.gmra.mxu0 %v2506
      %v2641 = vpop.f32.mrf.mxu0
      %v2642 = vadd.f32 0.0, %v2641
      %v2643 = vpop.f32.mrf.mxu0
      %2644 = vmatprep.mubr.f32.mxu0 0.0
      %2645 = vmatmul.mubr.f32.gmra.mxu0 %v2507
      %v2646 = vpop.f32.mrf.mxu0
      %v2647 = vadd.f32 0.0, %v2646
      %v2648 = vpop.f32.mrf.mxu0
      %2649 = vmatprep.mubr.f32.mxu0 0.0
      %2650 = vmatmul.mubr.f32.gmra.mxu0 %v2508
      %v2651 = vpop.f32.mrf.mxu0
      %v2652 = vadd.f32 0.0, %v2651
      %v2653 = vpop.f32.mrf.mxu0
      %2654 = vmatprep.mubr.f32.mxu0 0.0
      %2655 = vmatmul.mubr.f32.gmra.mxu0 %v2509
      %v2656 = vpop.f32.mrf.mxu0
      %v2657 = vadd.f32 0.0, %v2656
      %v2658 = vpop.f32.mrf.mxu0
      %2659 = vmatprep.mubr.f32.mxu0 0.0
      %2660 = vmatmul.mubr.f32.gmra.mxu0 %v2510
      %v2661 = vpop.f32.mrf.mxu0
      %v2662 = vadd.f32 0.0, %v2661
      %v2663 = vpop.f32.mrf.mxu0
      %2664 = vmatprep.mubr.f32.mxu0 0.0
      %2665 = vmatmul.mubr.f32.gmra.mxu0 %v2511
      %v2666 = vpop.f32.mrf.mxu0
      %v2667 = vadd.f32 0.0, %v2666
      %v2668 = vpop.f32.mrf.mxu0
      %2669 = vmatprep.mubr.f32.mxu0 0.0
      %2670 = vmatmul.mubr.f32.gmra.mxu0 %v2512
      %v2671 = vpop.f32.mrf.mxu0
      %v2672 = vadd.f32 0.0, %v2671
      %v2673 = vpop.f32.mrf.mxu0
      %2674 = vmatprep.mubr.f32.mxu0 0.0
      %2675 = vmatmul.mubr.f32.gmra.mxu0 %v2513
      %v2676 = vpop.f32.mrf.mxu0
      %v2677 = vadd.f32 0.0, %v2676
      %v2678 = vpop.f32.mrf.mxu0
      %2679 = vmatprep.mubr.f32.mxu0 0.0
      %2680 = vmatmul.mubr.f32.gmra.mxu0 %v2514
      %v2681 = vpop.f32.mrf.mxu0
      %v2682 = vadd.f32 0.0, %v2681
      %v2683 = vpop.f32.mrf.mxu0
      %2684 = vmatprep.mubr.f32.mxu0 0.0
      %2685 = vmatmul.mubr.f32.gmra.mxu0 %v2515
      %v2686 = vpop.f32.mrf.mxu0
      %v2687 = vadd.f32 0.0, %v2686
      %v2688 = vpop.f32.mrf.mxu0
      %2689 = vmatprep.mubr.f32.mxu0 0.0
      %2690 = vmatmul.mubr.f32.gmra.mxu0 %v2516
      %v2691 = vpop.f32.mrf.mxu0
      %v2692 = vadd.f32 0.0, %v2691
      %v2693 = vpop.f32.mrf.mxu0
      %2694 = vmatprep.mubr.f32.mxu0 0.0
      %2695 = vmatmul.mubr.f32.gmra.mxu0 %v2517
      %v2696 = vpop.f32.mrf.mxu0
      %v2697 = vadd.f32 0.0, %v2696
      %v2698 = vpop.f32.mrf.mxu0
      %2699 = vmatprep.mubr.f32.mxu0 0.0
      %2700 = vmatmul.mubr.f32.gmra.mxu0 %v2518
      %v2701 = vpop.f32.mrf.mxu0
      %v2702 = vadd.f32 0.0, %v2701
      %v2703 = vpop.f32.mrf.mxu0
      %2704 = vmatprep.mubr.f32.mxu0 0.0
      %2705 = vmatmul.mubr.f32.gmra.mxu0 %v2519
      %v2706 = vpop.f32.mrf.mxu0
      %v2707 = vadd.f32 0.0, %v2706
      %v2708 = vpop.f32.mrf.mxu0
      %2709 = vmatprep.mubr.f32.mxu0 0.0
      %2710 = vmatmul.mubr.f32.gmra.mxu0 %v2520
      %v2711 = vpop.f32.mrf.mxu0
      %v2712 = vadd.f32 0.0, %v2711
      %v2713 = vpop.f32.mrf.mxu0
      %2714 = vmatprep.mubr.f32.mxu0 0.0
      %2715 = vmatmul.mubr.f32.gmra.mxu0 %v2521
      %v2716 = vpop.f32.mrf.mxu0
      %v2717 = vadd.f32 0.0, %v2716
      %v2718 = vpop.f32.mrf.mxu0
      %2719 = vmatprep.mubr.f32.mxu0 0.0
      %2720 = vmatmul.mubr.f32.gmra.mxu0 %v2522
      %v2721 = vpop.f32.mrf.mxu0
      %v2722 = vadd.f32 0.0, %v2721
      %v2723 = vpop.f32.mrf.mxu0
      %2724 = vmatprep.mubr.f32.mxu0 0.0
      %2725 = vmatmul.mubr.f32.gmra.mxu0 %v2523
      %v2726 = vpop.f32.mrf.mxu0
      %v2727 = vadd.f32 0.0, %v2726
      %v2728 = vpop.f32.mrf.mxu0
      %2729 = vmatprep.mubr.f32.mxu0 0.0
      %2730 = vmatmul.mubr.f32.gmra.mxu0 %v2524
      %v2731 = vpop.f32.mrf.mxu0
      %v2732 = vadd.f32 0.0, %v2731
      %v2733 = vpop.f32.mrf.mxu0
      %2734 = vmatprep.mubr.f32.mxu0 0.0
      %2735 = vmatmul.mubr.f32.gmra.mxu0 %v2525
      %v2736 = vpop.f32.mrf.mxu0
      %v2737 = vadd.f32 0.0, %v2736
      %v2738 = vpop.f32.mrf.mxu0
      %2739 = vmatprep.mubr.f32.mxu0 0.0
      %2740 = vmatmul.mubr.f32.gmra.mxu0 %v2526
      %v2741 = vpop.f32.mrf.mxu0
      %v2742 = vadd.f32 0.0, %v2741
      %v2743 = vpop.f32.mrf.mxu0
      %2744 = vmatprep.mubr.f32.mxu0 0.0
      %2745 = vmatmul.mubr.f32.gmra.mxu0 %v2527
      %v2746 = vpop.f32.mrf.mxu0
      %v2747 = vadd.f32 0.0, %v2746
      %v2748 = vpop.f32.mrf.mxu0
      %2749 = vmatprep.mubr.f32.mxu0 0.0
      %2750 = vmatmul.mubr.f32.gmra.mxu0 %v2528
      %v2751 = vpop.f32.mrf.mxu0
      %v2752 = vadd.f32 0.0, %v2751
      %v2753 = vpop.f32.mrf.mxu0
      %2754 = vmatprep.mubr.f32.mxu0 0.0
      %2755 = vmatmul.mubr.f32.gmra.mxu0 %v2529
      %v2756 = vpop.f32.mrf.mxu0
      %v2757 = vadd.f32 0.0, %v2756
      %v2758 = vpop.f32.mrf.mxu0
      %2759 = vmatprep.mubr.f32.mxu0 0.0
      %2760 = vmatmul.mubr.f32.gmra.mxu0 %v2530
      %v2761 = vpop.f32.mrf.mxu0
      %v2762 = vadd.f32 0.0, %v2761
      %v2763 = vpop.f32.mrf.mxu0
      %2764 = vmatprep.mubr.f32.mxu0 0.0
      %2765 = vmatmul.mubr.f32.gmra.mxu0 %v2531
      %v2766 = vpop.f32.mrf.mxu0
      %v2767 = vadd.f32 0.0, %v2766
      %v2768 = vpop.f32.mrf.mxu0
      %2769 = vmatprep.mubr.f32.mxu0 0.0
      %2770 = vmatmul.mubr.f32.gmra.mxu0 %v2532
      %v2771 = vpop.f32.mrf.mxu0
      %v2772 = vadd.f32 0.0, %v2771
      %v2773 = vpop.f32.mrf.mxu0
      %2774 = vdwg.mxu0
      %v2775 = vadd.f32 %v2469, %v2617
      %v2776 = vadd.f32 %v2470, %v2622
      %v2777 = vadd.f32 %v2471, %v2627
      %v2778 = vadd.f32 %v2472, %v2632
      %v2779 = vadd.f32 %v2473, %v2637
      %v2780 = vadd.f32 %v2474, %v2642
      %v2781 = vadd.f32 %v2475, %v2647
      %v2782 = vadd.f32 %v2476, %v2652
      %v2783 = vadd.f32 %v2477, %v2657
      %v2784 = vadd.f32 %v2478, %v2662
      %v2785 = vadd.f32 %v2479, %v2667
      %v2786 = vadd.f32 %v2480, %v2672
      %v2787 = vadd.f32 %v2481, %v2677
      %v2788 = vadd.f32 %v2482, %v2682
      %v2789 = vadd.f32 %v2483, %v2687
      %v2790 = vadd.f32 %v2484, %v2692
      %v2791 = vadd.f32 %v2485, %v2697
      %v2792 = vadd.f32 %v2486, %v2702
      %v2793 = vadd.f32 %v2487, %v2707
      %v2794 = vadd.f32 %v2488, %v2712
      %v2795 = vadd.f32 %v2489, %v2717
      %v2796 = vadd.f32 %v2490, %v2722
      %v2797 = vadd.f32 %v2491, %v2727
      %v2798 = vadd.f32 %v2492, %v2732
      %v2799 = vadd.f32 %v2493, %v2737
      %v2800 = vadd.f32 %v2494, %v2742
      %v2801 = vadd.f32 %v2495, %v2747
      %v2802 = vadd.f32 %v2496, %v2752
      %v2803 = vadd.f32 %v2497, %v2757
      %v2804 = vadd.f32 %v2498, %v2762
      %v2805 = vadd.f32 %v2499, %v2767
      %v2806 = vadd.f32 %v2500, %v2772
      %v2807 = vld [vmem:[%s408 + $0x22] sm:$0xff]
      %v2808 = vld [vmem:[%s408 + $0x2a] sm:$0xff]
      %v2809 = vld [vmem:[%s408 + $0x32] sm:$0xff]
      %v2810 = vld [vmem:[%s408 + $0x3a] sm:$0xff]
      %v2811 = vld [vmem:[%s408 + $0x42] sm:$0xff]
      %v2812 = vld [vmem:[%s408 + $0x4a] sm:$0xff]
      %v2813 = vld [vmem:[%s408 + $0x52] sm:$0xff]
      %v2814 = vld [vmem:[%s408 + $0x5a] sm:$0xff]
      %v2815 = vld [vmem:[%s408 + $0x62] sm:$0xff]
      %v2816 = vld [vmem:[%s408 + $0x6a] sm:$0xff]
      %v2817 = vld [vmem:[%s408 + $0x72] sm:$0xff]
      %v2818 = vld [vmem:[%s408 + $0x7a] sm:$0xff]
      %v2819 = vld [vmem:[%s408 + $0x82] sm:$0xff]
      %v2820 = vld [vmem:[%s408 + $0x8a] sm:$0xff]
      %v2821 = vld [vmem:[%s408 + $0x92] sm:$0xff]
      %v2822 = vld [vmem:[%s408 + $0x9a] sm:$0xff]
      %v2823 = vld [vmem:[%s408 + $0xa2] sm:$0xff]
      %v2824 = vld [vmem:[%s408 + $0xaa] sm:$0xff]
      %v2825 = vld [vmem:[%s408 + $0xb2] sm:$0xff]
      %v2826 = vld [vmem:[%s408 + $0xba] sm:$0xff]
      %v2827 = vld [vmem:[%s408 + $0xc2] sm:$0xff]
      %v2828 = vld [vmem:[%s408 + $0xca] sm:$0xff]
      %v2829 = vld [vmem:[%s408 + $0xd2] sm:$0xff]
      %v2830 = vld [vmem:[%s408 + $0xda] sm:$0xff]
      %v2831 = vld [vmem:[%s408 + $0xe2] sm:$0xff]
      %v2832 = vld [vmem:[%s408 + $0xea] sm:$0xff]
      %v2833 = vld [vmem:[%s408 + $0xf2] sm:$0xff]
      %v2834 = vld [vmem:[%s408 + $0xfa] sm:$0xff]
      %v2835 = vld [vmem:[%s408 + $0x102] sm:$0xff]
      %v2836 = vld [vmem:[%s408 + $0x10a] sm:$0xff]
      %v2837 = vld [vmem:[%s408 + $0x112] sm:$0xff]
      %v2838 = vld [vmem:[%s408 + $0x11a] sm:$0xff]
      %s2839 = scalar_lea.vmem %s1, 1024
      %v2840 = vld [vmem:[%s2839] sm:$0xff]
      %v2841 = vld [vmem:[%s2839 + $0x8] sm:$0xff]
      %v2842 = vld [vmem:[%s2839 + $0x10] sm:$0xff]
      %v2843 = vld [vmem:[%s2839 + $0x18] sm:$0xff]
      %v2844 = vld [vmem:[%s2839 + $0x20] sm:$0xff]
      %v2845 = vld [vmem:[%s2839 + $0x28] sm:$0xff]
      %v2846 = vld [vmem:[%s2839 + $0x30] sm:$0xff]
      %v2847 = vld [vmem:[%s2839 + $0x38] sm:$0xff]
      %v2848 = vld [vmem:[%s2839 + $0x40] sm:$0xff]
      %v2849 = vld [vmem:[%s2839 + $0x48] sm:$0xff]
      %v2850 = vld [vmem:[%s2839 + $0x50] sm:$0xff]
      %v2851 = vld [vmem:[%s2839 + $0x58] sm:$0xff]
      %v2852 = vld [vmem:[%s2839 + $0x60] sm:$0xff]
      %v2853 = vld [vmem:[%s2839 + $0x68] sm:$0xff]
      %v2854 = vld [vmem:[%s2839 + $0x70] sm:$0xff]
      %v2855 = vld [vmem:[%s2839 + $0x78] sm:$0xff]
      %2856 = vmatprep.subr.mxu0 0.0
      %2857 = vmatpush1.msra.mxu0 %v2855
      %2858 = vmatprep.subr.mxu0 0.0
      %2859 = vmatpush1.msra.mxu0 %v2854
      %2860 = vmatprep.subr.mxu0 0.0
      %2861 = vmatpush1.msra.mxu0 %v2853
      %2862 = vmatprep.subr.mxu0 0.0
      %2863 = vmatpush1.msra.mxu0 %v2852
      %2864 = vmatprep.subr.mxu0 0.0
      %2865 = vmatpush1.msra.mxu0 %v2851
      %2866 = vmatprep.subr.mxu0 0.0
      %2867 = vmatpush1.msra.mxu0 %v2850
      %2868 = vmatprep.subr.mxu0 0.0
      %2869 = vmatpush1.msra.mxu0 %v2849
      %2870 = vmatprep.subr.mxu0 0.0
      %2871 = vmatpush1.msra.mxu0 %v2848
      %2872 = vmatprep.subr.mxu0 0.0
      %2873 = vmatpush1.msra.mxu0 %v2847
      %2874 = vmatprep.subr.mxu0 0.0
      %2875 = vmatpush1.msra.mxu0 %v2846
      %2876 = vmatprep.subr.mxu0 0.0
      %2877 = vmatpush1.msra.mxu0 %v2845
      %2878 = vmatprep.subr.mxu0 0.0
      %2879 = vmatpush1.msra.mxu0 %v2844
      %2880 = vmatprep.subr.mxu0 0.0
      %2881 = vmatpush1.msra.mxu0 %v2843
      %2882 = vmatprep.subr.mxu0 0.0
      %2883 = vmatpush1.msra.mxu0 %v2842
      %2884 = vmatprep.subr.mxu0 0.0
      %2885 = vmatpush1.msra.mxu0 %v2841
      %2886 = vmatprep.subr.mxu0 0.0
      %2887 = vmatpush1.msra.mxu0 %v2840
      %2888 = vmatprep.subr.mxu0 0.0
      %2889 = vmatpush2.msra.mxu0 0.0
      %2890 = vmatprep.subr.mxu0 0.0
      %2891 = vmatpush2.msra.mxu0 0.0
      %2892 = vmatprep.subr.mxu0 0.0
      %2893 = vmatpush2.msra.mxu0 0.0
      %2894 = vmatprep.subr.mxu0 0.0
      %2895 = vmatpush2.msra.mxu0 0.0
      %2896 = vmatprep.subr.mxu0 0.0
      %2897 = vmatpush2.msra.mxu0 0.0
      %2898 = vmatprep.subr.mxu0 0.0
      %2899 = vmatpush2.msra.mxu0 0.0
      %2900 = vmatprep.subr.mxu0 0.0
      %2901 = vmatpush2.msra.mxu0 0.0
      %2902 = vmatprep.subr.mxu0 0.0
      %2903 = vmatpush2.msra.mxu0 0.0
      %2904 = vmatprep.subr.mxu0 0.0
      %2905 = vmatpush2.msra.mxu0 0.0
      %2906 = vmatprep.subr.mxu0 0.0
      %2907 = vmatpush2.msra.mxu0 0.0
      %2908 = vmatprep.subr.mxu0 0.0
      %2909 = vmatpush2.msra.mxu0 0.0
      %2910 = vmatprep.subr.mxu0 0.0
      %2911 = vmatpush2.msra.mxu0 0.0
      %2912 = vmatprep.subr.mxu0 0.0
      %2913 = vmatpush2.msra.mxu0 0.0
      %2914 = vmatprep.subr.mxu0 0.0
      %2915 = vmatpush2.msra.mxu0 0.0
      %2916 = vmatprep.subr.mxu0 0.0
      %2917 = vmatpush2.msra.mxu0 0.0
      %2918 = vmatprep.subr.mxu0 0.0
      %2919 = vmatpush2.msra.mxu0 0.0
      %2920 = vmatprep.mubr.f32.mxu0 0.0
      %2921 = vmatmul.mubr.f32.gmra.mxu0 %v2807
      %v2922 = vpop.f32.mrf.mxu0
      %v2923 = vadd.f32 0.0, %v2922
      %v2924 = vpop.f32.mrf.mxu0
      %2925 = vmatprep.mubr.f32.mxu0 0.0
      %2926 = vmatmul.mubr.f32.gmra.mxu0 %v2808
      %v2927 = vpop.f32.mrf.mxu0
      %v2928 = vadd.f32 0.0, %v2927
      %v2929 = vpop.f32.mrf.mxu0
      %2930 = vmatprep.mubr.f32.mxu0 0.0
      %2931 = vmatmul.mubr.f32.gmra.mxu0 %v2809
      %v2932 = vpop.f32.mrf.mxu0
      %v2933 = vadd.f32 0.0, %v2932
      %v2934 = vpop.f32.mrf.mxu0
      %2935 = vmatprep.mubr.f32.mxu0 0.0
      %2936 = vmatmul.mubr.f32.gmra.mxu0 %v2810
      %v2937 = vpop.f32.mrf.mxu0
      %v2938 = vadd.f32 0.0, %v2937
      %v2939 = vpop.f32.mrf.mxu0
      %2940 = vmatprep.mubr.f32.mxu0 0.0
      %2941 = vmatmul.mubr.f32.gmra.mxu0 %v2811
      %v2942 = vpop.f32.mrf.mxu0
      %v2943 = vadd.f32 0.0, %v2942
      %v2944 = vpop.f32.mrf.mxu0
      %2945 = vmatprep.mubr.f32.mxu0 0.0
      %2946 = vmatmul.mubr.f32.gmra.mxu0 %v2812
      %v2947 = vpop.f32.mrf.mxu0
      %v2948 = vadd.f32 0.0, %v2947
      %v2949 = vpop.f32.mrf.mxu0
      %2950 = vmatprep.mubr.f32.mxu0 0.0
      %2951 = vmatmul.mubr.f32.gmra.mxu0 %v2813
      %v2952 = vpop.f32.mrf.mxu0
      %v2953 = vadd.f32 0.0, %v2952
      %v2954 = vpop.f32.mrf.mxu0
      %2955 = vmatprep.mubr.f32.mxu0 0.0
      %2956 = vmatmul.mubr.f32.gmra.mxu0 %v2814
      %v2957 = vpop.f32.mrf.mxu0
      %v2958 = vadd.f32 0.0, %v2957
      %v2959 = vpop.f32.mrf.mxu0
      %2960 = vmatprep.mubr.f32.mxu0 0.0
      %2961 = vmatmul.mubr.f32.gmra.mxu0 %v2815
      %v2962 = vpop.f32.mrf.mxu0
      %v2963 = vadd.f32 0.0, %v2962
      %v2964 = vpop.f32.mrf.mxu0
      %2965 = vmatprep.mubr.f32.mxu0 0.0
      %2966 = vmatmul.mubr.f32.gmra.mxu0 %v2816
      %v2967 = vpop.f32.mrf.mxu0
      %v2968 = vadd.f32 0.0, %v2967
      %v2969 = vpop.f32.mrf.mxu0
      %2970 = vmatprep.mubr.f32.mxu0 0.0
      %2971 = vmatmul.mubr.f32.gmra.mxu0 %v2817
      %v2972 = vpop.f32.mrf.mxu0
      %v2973 = vadd.f32 0.0, %v2972
      %v2974 = vpop.f32.mrf.mxu0
      %2975 = vmatprep.mubr.f32.mxu0 0.0
      %2976 = vmatmul.mubr.f32.gmra.mxu0 %v2818
      %v2977 = vpop.f32.mrf.mxu0
      %v2978 = vadd.f32 0.0, %v2977
      %v2979 = vpop.f32.mrf.mxu0
      %2980 = vmatprep.mubr.f32.mxu0 0.0
      %2981 = vmatmul.mubr.f32.gmra.mxu0 %v2819
      %v2982 = vpop.f32.mrf.mxu0
      %v2983 = vadd.f32 0.0, %v2982
      %v2984 = vpop.f32.mrf.mxu0
      %2985 = vmatprep.mubr.f32.mxu0 0.0
      %2986 = vmatmul.mubr.f32.gmra.mxu0 %v2820
      %v2987 = vpop.f32.mrf.mxu0
      %v2988 = vadd.f32 0.0, %v2987
      %v2989 = vpop.f32.mrf.mxu0
      %2990 = vmatprep.mubr.f32.mxu0 0.0
      %2991 = vmatmul.mubr.f32.gmra.mxu0 %v2821
      %v2992 = vpop.f32.mrf.mxu0
      %v2993 = vadd.f32 0.0, %v2992
      %v2994 = vpop.f32.mrf.mxu0
      %2995 = vmatprep.mubr.f32.mxu0 0.0
      %2996 = vmatmul.mubr.f32.gmra.mxu0 %v2822
      %v2997 = vpop.f32.mrf.mxu0
      %v2998 = vadd.f32 0.0, %v2997
      %v2999 = vpop.f32.mrf.mxu0
      %3000 = vmatprep.mubr.f32.mxu0 0.0
      %3001 = vmatmul.mubr.f32.gmra.mxu0 %v2823
      %v3002 = vpop.f32.mrf.mxu0
      %v3003 = vadd.f32 0.0, %v3002
      %v3004 = vpop.f32.mrf.mxu0
      %3005 = vmatprep.mubr.f32.mxu0 0.0
      %3006 = vmatmul.mubr.f32.gmra.mxu0 %v2824
      %v3007 = vpop.f32.mrf.mxu0
      %v3008 = vadd.f32 0.0, %v3007
      %v3009 = vpop.f32.mrf.mxu0
      %3010 = vmatprep.mubr.f32.mxu0 0.0
      %3011 = vmatmul.mubr.f32.gmra.mxu0 %v2825
      %v3012 = vpop.f32.mrf.mxu0
      %v3013 = vadd.f32 0.0, %v3012
      %v3014 = vpop.f32.mrf.mxu0
      %3015 = vmatprep.mubr.f32.mxu0 0.0
      %3016 = vmatmul.mubr.f32.gmra.mxu0 %v2826
      %v3017 = vpop.f32.mrf.mxu0
      %v3018 = vadd.f32 0.0, %v3017
      %v3019 = vpop.f32.mrf.mxu0
      %3020 = vmatprep.mubr.f32.mxu0 0.0
      %3021 = vmatmul.mubr.f32.gmra.mxu0 %v2827
      %v3022 = vpop.f32.mrf.mxu0
      %v3023 = vadd.f32 0.0, %v3022
      %v3024 = vpop.f32.mrf.mxu0
      %3025 = vmatprep.mubr.f32.mxu0 0.0
      %3026 = vmatmul.mubr.f32.gmra.mxu0 %v2828
      %v3027 = vpop.f32.mrf.mxu0
      %v3028 = vadd.f32 0.0, %v3027
      %v3029 = vpop.f32.mrf.mxu0
      %3030 = vmatprep.mubr.f32.mxu0 0.0
      %3031 = vmatmul.mubr.f32.gmra.mxu0 %v2829
      %v3032 = vpop.f32.mrf.mxu0
      %v3033 = vadd.f32 0.0, %v3032
      %v3034 = vpop.f32.mrf.mxu0
      %3035 = vmatprep.mubr.f32.mxu0 0.0
      %3036 = vmatmul.mubr.f32.gmra.mxu0 %v2830
      %v3037 = vpop.f32.mrf.mxu0
      %v3038 = vadd.f32 0.0, %v3037
      %v3039 = vpop.f32.mrf.mxu0
      %3040 = vmatprep.mubr.f32.mxu0 0.0
      %3041 = vmatmul.mubr.f32.gmra.mxu0 %v2831
      %v3042 = vpop.f32.mrf.mxu0
      %v3043 = vadd.f32 0.0, %v3042
      %v3044 = vpop.f32.mrf.mxu0
      %3045 = vmatprep.mubr.f32.mxu0 0.0
      %3046 = vmatmul.mubr.f32.gmra.mxu0 %v2832
      %v3047 = vpop.f32.mrf.mxu0
      %v3048 = vadd.f32 0.0, %v3047
      %v3049 = vpop.f32.mrf.mxu0
      %3050 = vmatprep.mubr.f32.mxu0 0.0
      %3051 = vmatmul.mubr.f32.gmra.mxu0 %v2833
      %v3052 = vpop.f32.mrf.mxu0
      %v3053 = vadd.f32 0.0, %v3052
      %v3054 = vpop.f32.mrf.mxu0
      %3055 = vmatprep.mubr.f32.mxu0 0.0
      %3056 = vmatmul.mubr.f32.gmra.mxu0 %v2834
      %v3057 = vpop.f32.mrf.mxu0
      %v3058 = vadd.f32 0.0, %v3057
      %v3059 = vpop.f32.mrf.mxu0
      %3060 = vmatprep.mubr.f32.mxu0 0.0
      %3061 = vmatmul.mubr.f32.gmra.mxu0 %v2835
      %v3062 = vpop.f32.mrf.mxu0
      %v3063 = vadd.f32 0.0, %v3062
      %v3064 = vpop.f32.mrf.mxu0
      %3065 = vmatprep.mubr.f32.mxu0 0.0
      %3066 = vmatmul.mubr.f32.gmra.mxu0 %v2836
      %v3067 = vpop.f32.mrf.mxu0
      %v3068 = vadd.f32 0.0, %v3067
      %v3069 = vpop.f32.mrf.mxu0
      %3070 = vmatprep.mubr.f32.mxu0 0.0
      %3071 = vmatmul.mubr.f32.gmra.mxu0 %v2837
      %v3072 = vpop.f32.mrf.mxu0
      %v3073 = vadd.f32 0.0, %v3072
      %v3074 = vpop.f32.mrf.mxu0
      %3075 = vmatprep.mubr.f32.mxu0 0.0
      %3076 = vmatmul.mubr.f32.gmra.mxu0 %v2838
      %v3077 = vpop.f32.mrf.mxu0
      %v3078 = vadd.f32 0.0, %v3077
      %v3079 = vpop.f32.mrf.mxu0
      %3080 = vdwg.mxu0
      %v3081 = vadd.f32 %v2775, %v2923
      %v3082 = vadd.f32 %v2776, %v2928
      %v3083 = vadd.f32 %v2777, %v2933
      %v3084 = vadd.f32 %v2778, %v2938
      %v3085 = vadd.f32 %v2779, %v2943
      %v3086 = vadd.f32 %v2780, %v2948
      %v3087 = vadd.f32 %v2781, %v2953
      %v3088 = vadd.f32 %v2782, %v2958
      %v3089 = vadd.f32 %v2783, %v2963
      %v3090 = vadd.f32 %v2784, %v2968
      %v3091 = vadd.f32 %v2785, %v2973
      %v3092 = vadd.f32 %v2786, %v2978
      %v3093 = vadd.f32 %v2787, %v2983
      %v3094 = vadd.f32 %v2788, %v2988
      %v3095 = vadd.f32 %v2789, %v2993
      %v3096 = vadd.f32 %v2790, %v2998
      %v3097 = vadd.f32 %v2791, %v3003
      %v3098 = vadd.f32 %v2792, %v3008
      %v3099 = vadd.f32 %v2793, %v3013
      %v3100 = vadd.f32 %v2794, %v3018
      %v3101 = vadd.f32 %v2795, %v3023
      %v3102 = vadd.f32 %v2796, %v3028
      %v3103 = vadd.f32 %v2797, %v3033
      %v3104 = vadd.f32 %v2798, %v3038
      %v3105 = vadd.f32 %v2799, %v3043
      %v3106 = vadd.f32 %v2800, %v3048
      %v3107 = vadd.f32 %v2801, %v3053
      %v3108 = vadd.f32 %v2802, %v3058
      %v3109 = vadd.f32 %v2803, %v3063
      %v3110 = vadd.f32 %v2804, %v3068
      %v3111 = vadd.f32 %v2805, %v3073
      %v3112 = vadd.f32 %v2806, %v3078
      %v3113 = vld [vmem:[%s2] sm:$0x1]
      %v3115 = vlaneseq
      %v3116 = vshrl.u32 %v3115, 7
      %v3117 = vsub.s32 0, %v3116
      %v3118 = vrot.slane %v3113, %v3117
      %v3120 = vadd.f32 %v3081, %v3118
      %v3121 = vadd.f32 %v3082, %v3118
      %v3122 = vadd.f32 %v3083, %v3118
      %v3123 = vadd.f32 %v3084, %v3118
      %v3124 = vadd.f32 %v3085, %v3118
      %v3125 = vadd.f32 %v3086, %v3118
      %v3126 = vadd.f32 %v3087, %v3118
      %v3127 = vadd.f32 %v3088, %v3118
      %v3128 = vadd.f32 %v3089, %v3118
      %v3129 = vadd.f32 %v3090, %v3118
      %v3130 = vadd.f32 %v3091, %v3118
      %v3131 = vadd.f32 %v3092, %v3118
      %v3132 = vadd.f32 %v3093, %v3118
      %v3133 = vadd.f32 %v3094, %v3118
      %v3134 = vadd.f32 %v3095, %v3118
      %v3135 = vadd.f32 %v3096, %v3118
      %v3136 = vadd.f32 %v3097, %v3118
      %v3137 = vadd.f32 %v3098, %v3118
      %v3138 = vadd.f32 %v3099, %v3118
      %v3139 = vadd.f32 %v3100, %v3118
      %v3140 = vadd.f32 %v3101, %v3118
      %v3141 = vadd.f32 %v3102, %v3118
      %v3142 = vadd.f32 %v3103, %v3118
      %v3143 = vadd.f32 %v3104, %v3118
      %v3144 = vadd.f32 %v3105, %v3118
      %v3145 = vadd.f32 %v3106, %v3118
      %v3146 = vadd.f32 %v3107, %v3118
      %v3147 = vadd.f32 %v3108, %v3118
      %v3148 = vadd.f32 %v3109, %v3118
      %v3149 = vadd.f32 %v3110, %v3118
      %v3150 = vadd.f32 %v3111, %v3118
      %v3151 = vadd.f32 %v3112, %v3118
      %vm3152 = vcmp.ge.f32.partialorder %v3120, 0.0
      %vm3153 = vcmp.ge.f32.partialorder %v3121, 0.0
      %vm3154 = vcmp.ge.f32.partialorder %v3122, 0.0
      %vm3155 = vcmp.ge.f32.partialorder %v3123, 0.0
      %vm3156 = vcmp.ge.f32.partialorder %v3124, 0.0
      %vm3157 = vcmp.ge.f32.partialorder %v3125, 0.0
      %vm3158 = vcmp.ge.f32.partialorder %v3126, 0.0
      %vm3159 = vcmp.ge.f32.partialorder %v3127, 0.0
      %vm3160 = vcmp.ge.f32.partialorder %v3128, 0.0
      %vm3161 = vcmp.ge.f32.partialorder %v3129, 0.0
      %vm3162 = vcmp.ge.f32.partialorder %v3130, 0.0
      %vm3163 = vcmp.ge.f32.partialorder %v3131, 0.0
      %vm3164 = vcmp.ge.f32.partialorder %v3132, 0.0
      %vm3165 = vcmp.ge.f32.partialorder %v3133, 0.0
      %vm3166 = vcmp.ge.f32.partialorder %v3134, 0.0
      %vm3167 = vcmp.ge.f32.partialorder %v3135, 0.0
      %vm3168 = vcmp.ge.f32.partialorder %v3136, 0.0
      %vm3169 = vcmp.ge.f32.partialorder %v3137, 0.0
      %vm3170 = vcmp.ge.f32.partialorder %v3138, 0.0
      %vm3171 = vcmp.ge.f32.partialorder %v3139, 0.0
      %vm3172 = vcmp.ge.f32.partialorder %v3140, 0.0
      %vm3173 = vcmp.ge.f32.partialorder %v3141, 0.0
      %vm3174 = vcmp.ge.f32.partialorder %v3142, 0.0
      %vm3175 = vcmp.ge.f32.partialorder %v3143, 0.0
      %vm3176 = vcmp.ge.f32.partialorder %v3144, 0.0
      %vm3177 = vcmp.ge.f32.partialorder %v3145, 0.0
      %vm3178 = vcmp.ge.f32.partialorder %v3146, 0.0
      %vm3179 = vcmp.ge.f32.partialorder %v3147, 0.0
      %vm3180 = vcmp.ge.f32.partialorder %v3148, 0.0
      %vm3181 = vcmp.ge.f32.partialorder %v3149, 0.0
      %vm3182 = vcmp.ge.f32.partialorder %v3150, 0.0
      %vm3183 = vcmp.ge.f32.partialorder %v3151, 0.0
      %v3184 = vmul.f32 %v3120, 0.01
      %v3185 = vmul.f32 %v3121, 0.01
      %v3186 = vmul.f32 %v3122, 0.01
      %v3187 = vmul.f32 %v3123, 0.01
      %v3188 = vmul.f32 %v3124, 0.01
      %v3189 = vmul.f32 %v3125, 0.01
      %v3190 = vmul.f32 %v3126, 0.01
      %v3191 = vmul.f32 %v3127, 0.01
      %v3192 = vmul.f32 %v3128, 0.01
      %v3193 = vmul.f32 %v3129, 0.01
      %v3194 = vmul.f32 %v3130, 0.01
      %v3195 = vmul.f32 %v3131, 0.01
      %v3196 = vmul.f32 %v3132, 0.01
      %v3197 = vmul.f32 %v3133, 0.01
      %v3198 = vmul.f32 %v3134, 0.01
      %v3199 = vmul.f32 %v3135, 0.01
      %v3200 = vmul.f32 %v3136, 0.01
      %v3201 = vmul.f32 %v3137, 0.01
      %v3202 = vmul.f32 %v3138, 0.01
      %v3203 = vmul.f32 %v3139, 0.01
      %v3204 = vmul.f32 %v3140, 0.01
      %v3205 = vmul.f32 %v3141, 0.01
      %v3206 = vmul.f32 %v3142, 0.01
      %v3207 = vmul.f32 %v3143, 0.01
      %v3208 = vmul.f32 %v3144, 0.01
      %v3209 = vmul.f32 %v3145, 0.01
      %v3210 = vmul.f32 %v3146, 0.01
      %v3211 = vmul.f32 %v3147, 0.01
      %v3212 = vmul.f32 %v3148, 0.01
      %v3213 = vmul.f32 %v3149, 0.01
      %v3214 = vmul.f32 %v3150, 0.01
      %v3215 = vmul.f32 %v3151, 0.01
      %v3216 = vsel %vm3152, %v3120, %v3184
      %v3217 = vsel %vm3153, %v3121, %v3185
      %v3218 = vsel %vm3154, %v3122, %v3186
      %v3219 = vsel %vm3155, %v3123, %v3187
      %v3220 = vsel %vm3156, %v3124, %v3188
      %v3221 = vsel %vm3157, %v3125, %v3189
      %v3222 = vsel %vm3158, %v3126, %v3190
      %v3223 = vsel %vm3159, %v3127, %v3191
      %v3224 = vsel %vm3160, %v3128, %v3192
      %v3225 = vsel %vm3161, %v3129, %v3193
      %v3226 = vsel %vm3162, %v3130, %v3194
      %v3227 = vsel %vm3163, %v3131, %v3195
      %v3228 = vsel %vm3164, %v3132, %v3196
      %v3229 = vsel %vm3165, %v3133, %v3197
      %v3230 = vsel %vm3166, %v3134, %v3198
      %v3231 = vsel %vm3167, %v3135, %v3199
      %v3232 = vsel %vm3168, %v3136, %v3200
      %v3233 = vsel %vm3169, %v3137, %v3201
      %v3234 = vsel %vm3170, %v3138, %v3202
      %v3235 = vsel %vm3171, %v3139, %v3203
      %v3236 = vsel %vm3172, %v3140, %v3204
      %v3237 = vsel %vm3173, %v3141, %v3205
      %v3238 = vsel %vm3174, %v3142, %v3206
      %v3239 = vsel %vm3175, %v3143, %v3207
      %v3240 = vsel %vm3176, %v3144, %v3208
      %v3241 = vsel %vm3177, %v3145, %v3209
      %v3242 = vsel %vm3178, %v3146, %v3210
      %v3243 = vsel %vm3179, %v3147, %v3211
      %v3244 = vsel %vm3180, %v3148, %v3212
      %v3245 = vsel %vm3181, %v3149, %v3213
      %v3246 = vsel %vm3182, %v3150, %v3214
      %v3247 = vsel %vm3183, %v3151, %v3215
      %3248 = vst [vmem:[#allocation2] sm:$0xff] %v3216
      %3249 = vst [vmem:[#allocation2 + $0x8] sm:$0xff] %v3217
      %3250 = vst [vmem:[#allocation2 + $0x10] sm:$0xff] %v3218
      %3251 = vst [vmem:[#allocation2 + $0x18] sm:$0xff] %v3219
      %3252 = vst [vmem:[#allocation2 + $0x20] sm:$0xff] %v3220
      %3253 = vst [vmem:[#allocation2 + $0x28] sm:$0xff] %v3221
      %3254 = vst [vmem:[#allocation2 + $0x30] sm:$0xff] %v3222
      %3255 = vst [vmem:[#allocation2 + $0x38] sm:$0xff] %v3223
      %3256 = vst [vmem:[#allocation2 + $0x40] sm:$0xff] %v3224
      %3257 = vst [vmem:[#allocation2 + $0x48] sm:$0xff] %v3225
      %3258 = vst [vmem:[#allocation2 + $0x50] sm:$0xff] %v3226
      %3259 = vst [vmem:[#allocation2 + $0x58] sm:$0xff] %v3227
      %3260 = vst [vmem:[#allocation2 + $0x60] sm:$0xff] %v3228
      %3261 = vst [vmem:[#allocation2 + $0x68] sm:$0xff] %v3229
      %3262 = vst [vmem:[#allocation2 + $0x70] sm:$0xff] %v3230
      %3263 = vst [vmem:[#allocation2 + $0x78] sm:$0xff] %v3231
      %3264 = vst [vmem:[#allocation2 + $0x80] sm:$0xff] %v3232
      %3265 = vst [vmem:[#allocation2 + $0x88] sm:$0xff] %v3233
      %3266 = vst [vmem:[#allocation2 + $0x90] sm:$0xff] %v3234
      %3267 = vst [vmem:[#allocation2 + $0x98] sm:$0xff] %v3235
      %3268 = vst [vmem:[#allocation2 + $0xa0] sm:$0xff] %v3236
      %3269 = vst [vmem:[#allocation2 + $0xa8] sm:$0xff] %v3237
      %3270 = vst [vmem:[#allocation2 + $0xb0] sm:$0xff] %v3238
      %3271 = vst [vmem:[#allocation2 + $0xb8] sm:$0xff] %v3239
      %3272 = vst [vmem:[#allocation2 + $0xc0] sm:$0xff] %v3240
      %3273 = vst [vmem:[#allocation2 + $0xc8] sm:$0xff] %v3241
      %3274 = vst [vmem:[#allocation2 + $0xd0] sm:$0xff] %v3242
      %3275 = vst [vmem:[#allocation2 + $0xd8] sm:$0xff] %v3243
      %3276 = vst [vmem:[#allocation2 + $0xe0] sm:$0xff] %v3244
      %3277 = vst [vmem:[#allocation2 + $0xe8] sm:$0xff] %v3245
      %3278 = vst [vmem:[#allocation2 + $0xf0] sm:$0xff] %v3246
      %3279 = vst [vmem:[#allocation2 + $0xf8] sm:$0xff] %v3247
      %v3280 = vld [vmem:[#allocation2] sm:$0xff]
      %v3281 = vld [vmem:[#allocation2 + $0x8] sm:$0xff]
      %v3282 = vld [vmem:[#allocation2 + $0x10] sm:$0xff]
      %v3283 = vld [vmem:[#allocation2 + $0x18] sm:$0xff]
      %v3284 = vld [vmem:[#allocation2 + $0x20] sm:$0xff]
      %v3285 = vld [vmem:[#allocation2 + $0x28] sm:$0xff]
      %v3286 = vld [vmem:[#allocation2 + $0x30] sm:$0xff]
      %v3287 = vld [vmem:[#allocation2 + $0x38] sm:$0xff]
      %v3288 = vld [vmem:[#allocation2 + $0x40] sm:$0xff]
      %v3289 = vld [vmem:[#allocation2 + $0x48] sm:$0xff]
      %v3290 = vld [vmem:[#allocation2 + $0x50] sm:$0xff]
      %v3291 = vld [vmem:[#allocation2 + $0x58] sm:$0xff]
      %v3292 = vld [vmem:[#allocation2 + $0x60] sm:$0xff]
      %v3293 = vld [vmem:[#allocation2 + $0x68] sm:$0xff]
      %v3294 = vld [vmem:[#allocation2 + $0x70] sm:$0xff]
      %v3295 = vld [vmem:[#allocation2 + $0x78] sm:$0xff]
      %v3296 = vld [vmem:[#allocation2 + $0x80] sm:$0xff]
      %v3297 = vld [vmem:[#allocation2 + $0x88] sm:$0xff]
      %v3298 = vld [vmem:[#allocation2 + $0x90] sm:$0xff]
      %v3299 = vld [vmem:[#allocation2 + $0x98] sm:$0xff]
      %v3300 = vld [vmem:[#allocation2 + $0xa0] sm:$0xff]
      %v3301 = vld [vmem:[#allocation2 + $0xa8] sm:$0xff]
      %v3302 = vld [vmem:[#allocation2 + $0xb0] sm:$0xff]
      %v3303 = vld [vmem:[#allocation2 + $0xb8] sm:$0xff]
      %v3304 = vld [vmem:[#allocation2 + $0xc0] sm:$0xff]
      %v3305 = vld [vmem:[#allocation2 + $0xc8] sm:$0xff]
      %v3306 = vld [vmem:[#allocation2 + $0xd0] sm:$0xff]
      %v3307 = vld [vmem:[#allocation2 + $0xd8] sm:$0xff]
      %v3308 = vld [vmem:[#allocation2 + $0xe0] sm:$0xff]
      %v3309 = vld [vmem:[#allocation2 + $0xe8] sm:$0xff]
      %v3310 = vld [vmem:[#allocation2 + $0xf0] sm:$0xff]
      %v3311 = vld [vmem:[#allocation2 + $0xf8] sm:$0xff]
      %v3312 = vld [vmem:[%s3] sm:$0xff]
      %v3313 = vld [vmem:[%s3 + $0x8] sm:$0xff]
      %v3314 = vld [vmem:[%s3 + $0x10] sm:$0xff]
      %v3315 = vld [vmem:[%s3 + $0x18] sm:$0xff]
      %v3316 = vld [vmem:[%s3 + $0x20] sm:$0xff]
      %v3317 = vld [vmem:[%s3 + $0x28] sm:$0xff]
      %v3318 = vld [vmem:[%s3 + $0x30] sm:$0xff]
      %v3319 = vld [vmem:[%s3 + $0x38] sm:$0xff]
      %v3320 = vld [vmem:[%s3 + $0x40] sm:$0xff]
      %v3321 = vld [vmem:[%s3 + $0x48] sm:$0xff]
      %v3322 = vld [vmem:[%s3 + $0x50] sm:$0xff]
      %v3323 = vld [vmem:[%s3 + $0x58] sm:$0xff]
      %v3324 = vld [vmem:[%s3 + $0x60] sm:$0xff]
      %v3325 = vld [vmem:[%s3 + $0x68] sm:$0xff]
      %v3326 = vld [vmem:[%s3 + $0x70] sm:$0xff]
      %v3327 = vld [vmem:[%s3 + $0x78] sm:$0xff]
      %v3328 = vld [vmem:[#allocation2 + $0x1] sm:$0xff]
      %v3329 = vld [vmem:[#allocation2 + $0x9] sm:$0xff]
      %v3330 = vld [vmem:[#allocation2 + $0x11] sm:$0xff]
      %v3331 = vld [vmem:[#allocation2 + $0x19] sm:$0xff]
      %v3332 = vld [vmem:[#allocation2 + $0x21] sm:$0xff]
      %v3333 = vld [vmem:[#allocation2 + $0x29] sm:$0xff]
      %v3334 = vld [vmem:[#allocation2 + $0x31] sm:$0xff]
      %v3335 = vld [vmem:[#allocation2 + $0x39] sm:$0xff]
      %v3336 = vld [vmem:[#allocation2 + $0x41] sm:$0xff]
      %v3337 = vld [vmem:[#allocation2 + $0x49] sm:$0xff]
      %v3338 = vld [vmem:[#allocation2 + $0x51] sm:$0xff]
      %v3339 = vld [vmem:[#allocation2 + $0x59] sm:$0xff]
      %v3340 = vld [vmem:[#allocation2 + $0x61] sm:$0xff]
      %v3341 = vld [vmem:[#allocation2 + $0x69] sm:$0xff]
      %v3342 = vld [vmem:[#allocation2 + $0x71] sm:$0xff]
      %v3343 = vld [vmem:[#allocation2 + $0x79] sm:$0xff]
      %v3344 = vld [vmem:[#allocation2 + $0x81] sm:$0xff]
      %v3345 = vld [vmem:[#allocation2 + $0x89] sm:$0xff]
      %v3346 = vld [vmem:[#allocation2 + $0x91] sm:$0xff]
      %v3347 = vld [vmem:[#allocation2 + $0x99] sm:$0xff]
      %v3348 = vld [vmem:[#allocation2 + $0xa1] sm:$0xff]
      %v3349 = vld [vmem:[#allocation2 + $0xa9] sm:$0xff]
      %v3350 = vld [vmem:[#allocation2 + $0xb1] sm:$0xff]
      %v3351 = vld [vmem:[#allocation2 + $0xb9] sm:$0xff]
      %v3352 = vld [vmem:[#allocation2 + $0xc1] sm:$0xff]
      %v3353 = vld [vmem:[#allocation2 + $0xc9] sm:$0xff]
      %v3354 = vld [vmem:[#allocation2 + $0xd1] sm:$0xff]
      %v3355 = vld [vmem:[#allocation2 + $0xd9] sm:$0xff]
      %v3356 = vld [vmem:[#allocation2 + $0xe1] sm:$0xff]
      %v3357 = vld [vmem:[#allocation2 + $0xe9] sm:$0xff]
      %v3358 = vld [vmem:[#allocation2 + $0xf1] sm:$0xff]
      %v3359 = vld [vmem:[#allocation2 + $0xf9] sm:$0xff]
      %s3360 = scalar_lea.vmem %s3, 128
      %v3361 = vld [vmem:[%s3360] sm:$0xff]
      %v3362 = vld [vmem:[%s3360 + $0x8] sm:$0xff]
      %v3363 = vld [vmem:[%s3360 + $0x10] sm:$0xff]
      %v3364 = vld [vmem:[%s3360 + $0x18] sm:$0xff]
      %v3365 = vld [vmem:[%s3360 + $0x20] sm:$0xff]
      %v3366 = vld [vmem:[%s3360 + $0x28] sm:$0xff]
      %v3367 = vld [vmem:[%s3360 + $0x30] sm:$0xff]
      %v3368 = vld [vmem:[%s3360 + $0x38] sm:$0xff]
      %v3369 = vld [vmem:[%s3360 + $0x40] sm:$0xff]
      %v3370 = vld [vmem:[%s3360 + $0x48] sm:$0xff]
      %v3371 = vld [vmem:[%s3360 + $0x50] sm:$0xff]
      %v3372 = vld [vmem:[%s3360 + $0x58] sm:$0xff]
      %v3373 = vld [vmem:[%s3360 + $0x60] sm:$0xff]
      %v3374 = vld [vmem:[%s3360 + $0x68] sm:$0xff]
      %v3375 = vld [vmem:[%s3360 + $0x70] sm:$0xff]
      %v3376 = vld [vmem:[%s3360 + $0x78] sm:$0xff]
      %3377 = vmatprep.subr.mxu0 0.0
      %3378 = vmatpush1.msra.mxu0 %v3376
      %3379 = vmatprep.subr.mxu0 0.0
      %3380 = vmatpush1.msra.mxu0 %v3375
      %3381 = vmatprep.subr.mxu0 0.0
      %3382 = vmatpush1.msra.mxu0 %v3374
      %3383 = vmatprep.subr.mxu0 0.0
      %3384 = vmatpush1.msra.mxu0 %v3373
      %3385 = vmatprep.subr.mxu0 0.0
      %3386 = vmatpush1.msra.mxu0 %v3372
      %3387 = vmatprep.subr.mxu0 0.0
      %3388 = vmatpush1.msra.mxu0 %v3371
      %3389 = vmatprep.subr.mxu0 0.0
      %3390 = vmatpush1.msra.mxu0 %v3370
      %3391 = vmatprep.subr.mxu0 0.0
      %3392 = vmatpush1.msra.mxu0 %v3369
      %3393 = vmatprep.subr.mxu0 0.0
      %3394 = vmatpush1.msra.mxu0 %v3368
      %3395 = vmatprep.subr.mxu0 0.0
      %3396 = vmatpush1.msra.mxu0 %v3367
      %3397 = vmatprep.subr.mxu0 0.0
      %3398 = vmatpush1.msra.mxu0 %v3366
      %3399 = vmatprep.subr.mxu0 0.0
      %3400 = vmatpush1.msra.mxu0 %v3365
      %3401 = vmatprep.subr.mxu0 0.0
      %3402 = vmatpush1.msra.mxu0 %v3364
      %3403 = vmatprep.subr.mxu0 0.0
      %3404 = vmatpush1.msra.mxu0 %v3363
      %3405 = vmatprep.subr.mxu0 0.0
      %3406 = vmatpush1.msra.mxu0 %v3362
      %3407 = vmatprep.subr.mxu0 0.0
      %3408 = vmatpush1.msra.mxu0 %v3361
      %3409 = vmatprep.subr.mxu0 0.0
      %3410 = vmatpush2.msra.mxu0 0.0
      %3411 = vmatprep.subr.mxu0 0.0
      %3412 = vmatpush2.msra.mxu0 0.0
      %3413 = vmatprep.subr.mxu0 0.0
      %3414 = vmatpush2.msra.mxu0 0.0
      %3415 = vmatprep.subr.mxu0 0.0
      %3416 = vmatpush2.msra.mxu0 0.0
      %3417 = vmatprep.subr.mxu0 0.0
      %3418 = vmatpush2.msra.mxu0 0.0
      %3419 = vmatprep.subr.mxu0 0.0
      %3420 = vmatpush2.msra.mxu0 0.0
      %3421 = vmatprep.subr.mxu0 0.0
      %3422 = vmatpush2.msra.mxu0 0.0
      %3423 = vmatprep.subr.mxu0 0.0
      %3424 = vmatpush2.msra.mxu0 0.0
      %3425 = vmatprep.subr.mxu0 0.0
      %3426 = vmatpush2.msra.mxu0 0.0
      %3427 = vmatprep.subr.mxu0 0.0
      %3428 = vmatpush2.msra.mxu0 0.0
      %3429 = vmatprep.subr.mxu0 0.0
      %3430 = vmatpush2.msra.mxu0 0.0
      %3431 = vmatprep.subr.mxu0 0.0
      %3432 = vmatpush2.msra.mxu0 0.0
      %3433 = vmatprep.subr.mxu0 0.0
      %3434 = vmatpush2.msra.mxu0 0.0
      %3435 = vmatprep.subr.mxu0 0.0
      %3436 = vmatpush2.msra.mxu0 0.0
      %3437 = vmatprep.subr.mxu0 0.0
      %3438 = vmatpush2.msra.mxu0 0.0
      %3439 = vmatprep.subr.mxu0 0.0
      %3440 = vmatpush2.msra.mxu0 0.0
      %3441 = vmatprep.mubr.f32.mxu0 0.0
      %3442 = vmatmul.mubr.f32.gmra.mxu0 %v3328
      %v3443 = vpop.f32.mrf.mxu0
      %v3444 = vadd.f32 0.0, %v3443
      %v3445 = vpop.f32.mrf.mxu0
      %3446 = vmatprep.mubr.f32.mxu0 0.0
      %3447 = vmatmul.mubr.f32.gmra.mxu0 %v3329
      %v3448 = vpop.f32.mrf.mxu0
      %v3449 = vadd.f32 0.0, %v3448
      %v3450 = vpop.f32.mrf.mxu0
      %3451 = vmatprep.mubr.f32.mxu0 0.0
      %3452 = vmatmul.mubr.f32.gmra.mxu0 %v3330
      %v3453 = vpop.f32.mrf.mxu0
      %v3454 = vadd.f32 0.0, %v3453
      %v3455 = vpop.f32.mrf.mxu0
      %3456 = vmatprep.mubr.f32.mxu0 0.0
      %3457 = vmatmul.mubr.f32.gmra.mxu0 %v3331
      %v3458 = vpop.f32.mrf.mxu0
      %v3459 = vadd.f32 0.0, %v3458
      %v3460 = vpop.f32.mrf.mxu0
      %3461 = vmatprep.mubr.f32.mxu0 0.0
      %3462 = vmatmul.mubr.f32.gmra.mxu0 %v3332
      %v3463 = vpop.f32.mrf.mxu0
      %v3464 = vadd.f32 0.0, %v3463
      %v3465 = vpop.f32.mrf.mxu0
      %3466 = vmatprep.mubr.f32.mxu0 0.0
      %3467 = vmatmul.mubr.f32.gmra.mxu0 %v3333
      %v3468 = vpop.f32.mrf.mxu0
      %v3469 = vadd.f32 0.0, %v3468
      %v3470 = vpop.f32.mrf.mxu0
      %3471 = vmatprep.mubr.f32.mxu0 0.0
      %3472 = vmatmul.mubr.f32.gmra.mxu0 %v3334
      %v3473 = vpop.f32.mrf.mxu0
      %v3474 = vadd.f32 0.0, %v3473
      %v3475 = vpop.f32.mrf.mxu0
      %3476 = vmatprep.mubr.f32.mxu0 0.0
      %3477 = vmatmul.mubr.f32.gmra.mxu0 %v3335
      %v3478 = vpop.f32.mrf.mxu0
      %v3479 = vadd.f32 0.0, %v3478
      %v3480 = vpop.f32.mrf.mxu0
      %3481 = vmatprep.mubr.f32.mxu0 0.0
      %3482 = vmatmul.mubr.f32.gmra.mxu0 %v3336
      %v3483 = vpop.f32.mrf.mxu0
      %v3484 = vadd.f32 0.0, %v3483
      %v3485 = vpop.f32.mrf.mxu0
      %3486 = vmatprep.mubr.f32.mxu0 0.0
      %3487 = vmatmul.mubr.f32.gmra.mxu0 %v3337
      %v3488 = vpop.f32.mrf.mxu0
      %v3489 = vadd.f32 0.0, %v3488
      %v3490 = vpop.f32.mrf.mxu0
      %3491 = vmatprep.mubr.f32.mxu0 0.0
      %3492 = vmatmul.mubr.f32.gmra.mxu0 %v3338
      %v3493 = vpop.f32.mrf.mxu0
      %v3494 = vadd.f32 0.0, %v3493
      %v3495 = vpop.f32.mrf.mxu0
      %3496 = vmatprep.mubr.f32.mxu0 0.0
      %3497 = vmatmul.mubr.f32.gmra.mxu0 %v3339
      %v3498 = vpop.f32.mrf.mxu0
      %v3499 = vadd.f32 0.0, %v3498
      %v3500 = vpop.f32.mrf.mxu0
      %3501 = vmatprep.mubr.f32.mxu0 0.0
      %3502 = vmatmul.mubr.f32.gmra.mxu0 %v3340
      %v3503 = vpop.f32.mrf.mxu0
      %v3504 = vadd.f32 0.0, %v3503
      %v3505 = vpop.f32.mrf.mxu0
      %3506 = vmatprep.mubr.f32.mxu0 0.0
      %3507 = vmatmul.mubr.f32.gmra.mxu0 %v3341
      %v3508 = vpop.f32.mrf.mxu0
      %v3509 = vadd.f32 0.0, %v3508
      %v3510 = vpop.f32.mrf.mxu0
      %3511 = vmatprep.mubr.f32.mxu0 0.0
      %3512 = vmatmul.mubr.f32.gmra.mxu0 %v3342
      %v3513 = vpop.f32.mrf.mxu0
      %v3514 = vadd.f32 0.0, %v3513
      %v3515 = vpop.f32.mrf.mxu0
      %3516 = vmatprep.mubr.f32.mxu0 0.0
      %3517 = vmatmul.mubr.f32.gmra.mxu0 %v3343
      %v3518 = vpop.f32.mrf.mxu0
      %v3519 = vadd.f32 0.0, %v3518
      %v3520 = vpop.f32.mrf.mxu0
      %3521 = vmatprep.mubr.f32.mxu0 0.0
      %3522 = vmatmul.mubr.f32.gmra.mxu0 %v3344
      %v3523 = vpop.f32.mrf.mxu0
      %v3524 = vadd.f32 0.0, %v3523
      %v3525 = vpop.f32.mrf.mxu0
      %3526 = vmatprep.mubr.f32.mxu0 0.0
      %3527 = vmatmul.mubr.f32.gmra.mxu0 %v3345
      %v3528 = vpop.f32.mrf.mxu0
      %v3529 = vadd.f32 0.0, %v3528
      %v3530 = vpop.f32.mrf.mxu0
      %3531 = vmatprep.mubr.f32.mxu0 0.0
      %3532 = vmatmul.mubr.f32.gmra.mxu0 %v3346
      %v3533 = vpop.f32.mrf.mxu0
      %v3534 = vadd.f32 0.0, %v3533
      %v3535 = vpop.f32.mrf.mxu0
      %3536 = vmatprep.mubr.f32.mxu0 0.0
      %3537 = vmatmul.mubr.f32.gmra.mxu0 %v3347
      %v3538 = vpop.f32.mrf.mxu0
      %v3539 = vadd.f32 0.0, %v3538
      %v3540 = vpop.f32.mrf.mxu0
      %3541 = vmatprep.mubr.f32.mxu0 0.0
      %3542 = vmatmul.mubr.f32.gmra.mxu0 %v3348
      %v3543 = vpop.f32.mrf.mxu0
      %v3544 = vadd.f32 0.0, %v3543
      %v3545 = vpop.f32.mrf.mxu0
      %3546 = vmatprep.mubr.f32.mxu0 0.0
      %3547 = vmatmul.mubr.f32.gmra.mxu0 %v3349
      %v3548 = vpop.f32.mrf.mxu0
      %v3549 = vadd.f32 0.0, %v3548
      %v3550 = vpop.f32.mrf.mxu0
      %3551 = vmatprep.mubr.f32.mxu0 0.0
      %3552 = vmatmul.mubr.f32.gmra.mxu0 %v3350
      %v3553 = vpop.f32.mrf.mxu0
      %v3554 = vadd.f32 0.0, %v3553
      %v3555 = vpop.f32.mrf.mxu0
      %3556 = vmatprep.mubr.f32.mxu0 0.0
      %3557 = vmatmul.mubr.f32.gmra.mxu0 %v3351
      %v3558 = vpop.f32.mrf.mxu0
      %v3559 = vadd.f32 0.0, %v3558
      %v3560 = vpop.f32.mrf.mxu0
      %3561 = vmatprep.mubr.f32.mxu0 0.0
      %3562 = vmatmul.mubr.f32.gmra.mxu0 %v3352
      %v3563 = vpop.f32.mrf.mxu0
      %v3564 = vadd.f32 0.0, %v3563
      %v3565 = vpop.f32.mrf.mxu0
      %3566 = vmatprep.mubr.f32.mxu0 0.0
      %3567 = vmatmul.mubr.f32.gmra.mxu0 %v3353
      %v3568 = vpop.f32.mrf.mxu0
      %v3569 = vadd.f32 0.0, %v3568
      %v3570 = vpop.f32.mrf.mxu0
      %3571 = vmatprep.mubr.f32.mxu0 0.0
      %3572 = vmatmul.mubr.f32.gmra.mxu0 %v3354
      %v3573 = vpop.f32.mrf.mxu0
      %v3574 = vadd.f32 0.0, %v3573
      %v3575 = vpop.f32.mrf.mxu0
      %3576 = vmatprep.mubr.f32.mxu0 0.0
      %3577 = vmatmul.mubr.f32.gmra.mxu0 %v3355
      %v3578 = vpop.f32.mrf.mxu0
      %v3579 = vadd.f32 0.0, %v3578
      %v3580 = vpop.f32.mrf.mxu0
      %3581 = vmatprep.mubr.f32.mxu0 0.0
      %3582 = vmatmul.mubr.f32.gmra.mxu0 %v3356
      %v3583 = vpop.f32.mrf.mxu0
      %v3584 = vadd.f32 0.0, %v3583
      %v3585 = vpop.f32.mrf.mxu0
      %3586 = vmatprep.mubr.f32.mxu0 0.0
      %3587 = vmatmul.mubr.f32.gmra.mxu0 %v3357
      %v3588 = vpop.f32.mrf.mxu0
      %v3589 = vadd.f32 0.0, %v3588
      %v3590 = vpop.f32.mrf.mxu0
      %3591 = vmatprep.mubr.f32.mxu0 0.0
      %3592 = vmatmul.mubr.f32.gmra.mxu0 %v3358
      %v3593 = vpop.f32.mrf.mxu0
      %v3594 = vadd.f32 0.0, %v3593
      %v3595 = vpop.f32.mrf.mxu0
      %3596 = vmatprep.mubr.f32.mxu0 0.0
      %3597 = vmatmul.mubr.f32.gmra.mxu0 %v3359
      %v3598 = vpop.f32.mrf.mxu0
      %v3599 = vadd.f32 0.0, %v3598
      %v3600 = vpop.f32.mrf.mxu0
      %3601 = vdwg.mxu0
      %3602 = vmatprep.subr.mxu0 0.0
      %3603 = vmatpush1.msra.mxu0 %v3327
      %3604 = vmatprep.subr.mxu0 0.0
      %3605 = vmatpush1.msra.mxu0 %v3326
      %3606 = vmatprep.subr.mxu0 0.0
      %3607 = vmatpush1.msra.mxu0 %v3325
      %3608 = vmatprep.subr.mxu0 0.0
      %3609 = vmatpush1.msra.mxu0 %v3324
      %3610 = vmatprep.subr.mxu0 0.0
      %3611 = vmatpush1.msra.mxu0 %v3323
      %3612 = vmatprep.subr.mxu0 0.0
      %3613 = vmatpush1.msra.mxu0 %v3322
      %3614 = vmatprep.subr.mxu0 0.0
      %3615 = vmatpush1.msra.mxu0 %v3321
      %3616 = vmatprep.subr.mxu0 0.0
      %3617 = vmatpush1.msra.mxu0 %v3320
      %3618 = vmatprep.subr.mxu0 0.0
      %3619 = vmatpush1.msra.mxu0 %v3319
      %3620 = vmatprep.subr.mxu0 0.0
      %3621 = vmatpush1.msra.mxu0 %v3318
      %3622 = vmatprep.subr.mxu0 0.0
      %3623 = vmatpush1.msra.mxu0 %v3317
      %3624 = vmatprep.subr.mxu0 0.0
      %3625 = vmatpush1.msra.mxu0 %v3316
      %3626 = vmatprep.subr.mxu0 0.0
      %3627 = vmatpush1.msra.mxu0 %v3315
      %3628 = vmatprep.subr.mxu0 0.0
      %3629 = vmatpush1.msra.mxu0 %v3314
      %3630 = vmatprep.subr.mxu0 0.0
      %3631 = vmatpush1.msra.mxu0 %v3313
      %3632 = vmatprep.subr.mxu0 0.0
      %3633 = vmatpush1.msra.mxu0 %v3312
      %3634 = vmatprep.subr.mxu0 0.0
      %3635 = vmatpush2.msra.mxu0 0.0
      %3636 = vmatprep.subr.mxu0 0.0
      %3637 = vmatpush2.msra.mxu0 0.0
      %3638 = vmatprep.subr.mxu0 0.0
      %3639 = vmatpush2.msra.mxu0 0.0
      %3640 = vmatprep.subr.mxu0 0.0
      %3641 = vmatpush2.msra.mxu0 0.0
      %3642 = vmatprep.subr.mxu0 0.0
      %3643 = vmatpush2.msra.mxu0 0.0
      %3644 = vmatprep.subr.mxu0 0.0
      %3645 = vmatpush2.msra.mxu0 0.0
      %3646 = vmatprep.subr.mxu0 0.0
      %3647 = vmatpush2.msra.mxu0 0.0
      %3648 = vmatprep.subr.mxu0 0.0
      %3649 = vmatpush2.msra.mxu0 0.0
      %3650 = vmatprep.subr.mxu0 0.0
      %3651 = vmatpush2.msra.mxu0 0.0
      %3652 = vmatprep.subr.mxu0 0.0
      %3653 = vmatpush2.msra.mxu0 0.0
      %3654 = vmatprep.subr.mxu0 0.0
      %3655 = vmatpush2.msra.mxu0 0.0
      %3656 = vmatprep.subr.mxu0 0.0
      %3657 = vmatpush2.msra.mxu0 0.0
      %3658 = vmatprep.subr.mxu0 0.0
      %3659 = vmatpush2.msra.mxu0 0.0
      %3660 = vmatprep.subr.mxu0 0.0
      %3661 = vmatpush2.msra.mxu0 0.0
      %3662 = vmatprep.subr.mxu0 0.0
      %3663 = vmatpush2.msra.mxu0 0.0
      %3664 = vmatprep.subr.mxu0 0.0
      %3665 = vmatpush2.msra.mxu0 0.0
      %3666 = vmatprep.mubr.f32.mxu0 0.0
      %3667 = vmatmul.mubr.f32.gmra.mxu0 %v3280
      %v3668 = vpop.f32.mrf.mxu0
      %v3669 = vadd.f32 %v3444, %v3668
      %v3670 = vpop.f32.mrf.mxu0
      %3671 = vmatprep.mubr.f32.mxu0 0.0
      %3672 = vmatmul.mubr.f32.gmra.mxu0 %v3281
      %v3673 = vpop.f32.mrf.mxu0
      %v3674 = vadd.f32 %v3449, %v3673
      %v3675 = vpop.f32.mrf.mxu0
      %3676 = vmatprep.mubr.f32.mxu0 0.0
      %3677 = vmatmul.mubr.f32.gmra.mxu0 %v3282
      %v3678 = vpop.f32.mrf.mxu0
      %v3679 = vadd.f32 %v3454, %v3678
      %v3680 = vpop.f32.mrf.mxu0
      %3681 = vmatprep.mubr.f32.mxu0 0.0
      %3682 = vmatmul.mubr.f32.gmra.mxu0 %v3283
      %v3683 = vpop.f32.mrf.mxu0
      %v3684 = vadd.f32 %v3459, %v3683
      %v3685 = vpop.f32.mrf.mxu0
      %3686 = vmatprep.mubr.f32.mxu0 0.0
      %3687 = vmatmul.mubr.f32.gmra.mxu0 %v3284
      %v3688 = vpop.f32.mrf.mxu0
      %v3689 = vadd.f32 %v3464, %v3688
      %v3690 = vpop.f32.mrf.mxu0
      %3691 = vmatprep.mubr.f32.mxu0 0.0
      %3692 = vmatmul.mubr.f32.gmra.mxu0 %v3285
      %v3693 = vpop.f32.mrf.mxu0
      %v3694 = vadd.f32 %v3469, %v3693
      %v3695 = vpop.f32.mrf.mxu0
      %3696 = vmatprep.mubr.f32.mxu0 0.0
      %3697 = vmatmul.mubr.f32.gmra.mxu0 %v3286
      %v3698 = vpop.f32.mrf.mxu0
      %v3699 = vadd.f32 %v3474, %v3698
      %v3700 = vpop.f32.mrf.mxu0
      %3701 = vmatprep.mubr.f32.mxu0 0.0
      %3702 = vmatmul.mubr.f32.gmra.mxu0 %v3287
      %v3703 = vpop.f32.mrf.mxu0
      %v3704 = vadd.f32 %v3479, %v3703
      %v3705 = vpop.f32.mrf.mxu0
      %3706 = vmatprep.mubr.f32.mxu0 0.0
      %3707 = vmatmul.mubr.f32.gmra.mxu0 %v3288
      %v3708 = vpop.f32.mrf.mxu0
      %v3709 = vadd.f32 %v3484, %v3708
      %v3710 = vpop.f32.mrf.mxu0
      %3711 = vmatprep.mubr.f32.mxu0 0.0
      %3712 = vmatmul.mubr.f32.gmra.mxu0 %v3289
      %v3713 = vpop.f32.mrf.mxu0
      %v3714 = vadd.f32 %v3489, %v3713
      %v3715 = vpop.f32.mrf.mxu0
      %3716 = vmatprep.mubr.f32.mxu0 0.0
      %3717 = vmatmul.mubr.f32.gmra.mxu0 %v3290
      %v3718 = vpop.f32.mrf.mxu0
      %v3719 = vadd.f32 %v3494, %v3718
      %v3720 = vpop.f32.mrf.mxu0
      %3721 = vmatprep.mubr.f32.mxu0 0.0
      %3722 = vmatmul.mubr.f32.gmra.mxu0 %v3291
      %v3723 = vpop.f32.mrf.mxu0
      %v3724 = vadd.f32 %v3499, %v3723
      %v3725 = vpop.f32.mrf.mxu0
      %3726 = vmatprep.mubr.f32.mxu0 0.0
      %3727 = vmatmul.mubr.f32.gmra.mxu0 %v3292
      %v3728 = vpop.f32.mrf.mxu0
      %v3729 = vadd.f32 %v3504, %v3728
      %v3730 = vpop.f32.mrf.mxu0
      %3731 = vmatprep.mubr.f32.mxu0 0.0
      %3732 = vmatmul.mubr.f32.gmra.mxu0 %v3293
      %v3733 = vpop.f32.mrf.mxu0
      %v3734 = vadd.f32 %v3509, %v3733
      %v3735 = vpop.f32.mrf.mxu0
      %3736 = vmatprep.mubr.f32.mxu0 0.0
      %3737 = vmatmul.mubr.f32.gmra.mxu0 %v3294
      %v3738 = vpop.f32.mrf.mxu0
      %v3739 = vadd.f32 %v3514, %v3738
      %v3740 = vpop.f32.mrf.mxu0
      %3741 = vmatprep.mubr.f32.mxu0 0.0
      %3742 = vmatmul.mubr.f32.gmra.mxu0 %v3295
      %v3743 = vpop.f32.mrf.mxu0
      %v3744 = vadd.f32 %v3519, %v3743
      %v3745 = vpop.f32.mrf.mxu0
      %3746 = vmatprep.mubr.f32.mxu0 0.0
      %3747 = vmatmul.mubr.f32.gmra.mxu0 %v3296
      %v3748 = vpop.f32.mrf.mxu0
      %v3749 = vadd.f32 %v3524, %v3748
      %v3750 = vpop.f32.mrf.mxu0
      %3751 = vmatprep.mubr.f32.mxu0 0.0
      %3752 = vmatmul.mubr.f32.gmra.mxu0 %v3297
      %v3753 = vpop.f32.mrf.mxu0
      %v3754 = vadd.f32 %v3529, %v3753
      %v3755 = vpop.f32.mrf.mxu0
      %3756 = vmatprep.mubr.f32.mxu0 0.0
      %3757 = vmatmul.mubr.f32.gmra.mxu0 %v3298
      %v3758 = vpop.f32.mrf.mxu0
      %v3759 = vadd.f32 %v3534, %v3758
      %v3760 = vpop.f32.mrf.mxu0
      %3761 = vmatprep.mubr.f32.mxu0 0.0
      %3762 = vmatmul.mubr.f32.gmra.mxu0 %v3299
      %v3763 = vpop.f32.mrf.mxu0
      %v3764 = vadd.f32 %v3539, %v3763
      %v3765 = vpop.f32.mrf.mxu0
      %3766 = vmatprep.mubr.f32.mxu0 0.0
      %3767 = vmatmul.mubr.f32.gmra.mxu0 %v3300
      %v3768 = vpop.f32.mrf.mxu0
      %v3769 = vadd.f32 %v3544, %v3768
      %v3770 = vpop.f32.mrf.mxu0
      %3771 = vmatprep.mubr.f32.mxu0 0.0
      %3772 = vmatmul.mubr.f32.gmra.mxu0 %v3301
      %v3773 = vpop.f32.mrf.mxu0
      %v3774 = vadd.f32 %v3549, %v3773
      %v3775 = vpop.f32.mrf.mxu0
      %3776 = vmatprep.mubr.f32.mxu0 0.0
      %3777 = vmatmul.mubr.f32.gmra.mxu0 %v3302
      %v3778 = vpop.f32.mrf.mxu0
      %v3779 = vadd.f32 %v3554, %v3778
      %v3780 = vpop.f32.mrf.mxu0
      %3781 = vmatprep.mubr.f32.mxu0 0.0
      %3782 = vmatmul.mubr.f32.gmra.mxu0 %v3303
      %v3783 = vpop.f32.mrf.mxu0
      %v3784 = vadd.f32 %v3559, %v3783
      %v3785 = vpop.f32.mrf.mxu0
      %3786 = vmatprep.mubr.f32.mxu0 0.0
      %3787 = vmatmul.mubr.f32.gmra.mxu0 %v3304
      %v3788 = vpop.f32.mrf.mxu0
      %v3789 = vadd.f32 %v3564, %v3788
      %v3790 = vpop.f32.mrf.mxu0
      %3791 = vmatprep.mubr.f32.mxu0 0.0
      %3792 = vmatmul.mubr.f32.gmra.mxu0 %v3305
      %v3793 = vpop.f32.mrf.mxu0
      %v3794 = vadd.f32 %v3569, %v3793
      %v3795 = vpop.f32.mrf.mxu0
      %3796 = vmatprep.mubr.f32.mxu0 0.0
      %3797 = vmatmul.mubr.f32.gmra.mxu0 %v3306
      %v3798 = vpop.f32.mrf.mxu0
      %v3799 = vadd.f32 %v3574, %v3798
      %v3800 = vpop.f32.mrf.mxu0
      %3801 = vmatprep.mubr.f32.mxu0 0.0
      %3802 = vmatmul.mubr.f32.gmra.mxu0 %v3307
      %v3803 = vpop.f32.mrf.mxu0
      %v3804 = vadd.f32 %v3579, %v3803
      %v3805 = vpop.f32.mrf.mxu0
      %3806 = vmatprep.mubr.f32.mxu0 0.0
      %3807 = vmatmul.mubr.f32.gmra.mxu0 %v3308
      %v3808 = vpop.f32.mrf.mxu0
      %v3809 = vadd.f32 %v3584, %v3808
      %v3810 = vpop.f32.mrf.mxu0
      %3811 = vmatprep.mubr.f32.mxu0 0.0
      %3812 = vmatmul.mubr.f32.gmra.mxu0 %v3309
      %v3813 = vpop.f32.mrf.mxu0
      %v3814 = vadd.f32 %v3589, %v3813
      %v3815 = vpop.f32.mrf.mxu0
      %3816 = vmatprep.mubr.f32.mxu0 0.0
      %3817 = vmatmul.mubr.f32.gmra.mxu0 %v3310
      %v3818 = vpop.f32.mrf.mxu0
      %v3819 = vadd.f32 %v3594, %v3818
      %v3820 = vpop.f32.mrf.mxu0
      %3821 = vmatprep.mubr.f32.mxu0 0.0
      %3822 = vmatmul.mubr.f32.gmra.mxu0 %v3311
      %v3823 = vpop.f32.mrf.mxu0
      %v3824 = vadd.f32 %v3599, %v3823
      %v3825 = vpop.f32.mrf.mxu0
      %3826 = vdwg.mxu0
      %v3827 = vld [vmem:[#allocation2 + $0x2] sm:$0xff]
      %v3828 = vld [vmem:[#allocation2 + $0xa] sm:$0xff]
      %v3829 = vld [vmem:[#allocation2 + $0x12] sm:$0xff]
      %v3830 = vld [vmem:[#allocation2 + $0x1a] sm:$0xff]
      %v3831 = vld [vmem:[#allocation2 + $0x22] sm:$0xff]
      %v3832 = vld [vmem:[#allocation2 + $0x2a] sm:$0xff]
      %v3833 = vld [vmem:[#allocation2 + $0x32] sm:$0xff]
      %v3834 = vld [vmem:[#allocation2 + $0x3a] sm:$0xff]
      %v3835 = vld [vmem:[#allocation2 + $0x42] sm:$0xff]
      %v3836 = vld [vmem:[#allocation2 + $0x4a] sm:$0xff]
      %v3837 = vld [vmem:[#allocation2 + $0x52] sm:$0xff]
      %v3838 = vld [vmem:[#allocation2 + $0x5a] sm:$0xff]
      %v3839 = vld [vmem:[#allocation2 + $0x62] sm:$0xff]
      %v3840 = vld [vmem:[#allocation2 + $0x6a] sm:$0xff]
      %v3841 = vld [vmem:[#allocation2 + $0x72] sm:$0xff]
      %v3842 = vld [vmem:[#allocation2 + $0x7a] sm:$0xff]
      %v3843 = vld [vmem:[#allocation2 + $0x82] sm:$0xff]
      %v3844 = vld [vmem:[#allocation2 + $0x8a] sm:$0xff]
      %v3845 = vld [vmem:[#allocation2 + $0x92] sm:$0xff]
      %v3846 = vld [vmem:[#allocation2 + $0x9a] sm:$0xff]
      %v3847 = vld [vmem:[#allocation2 + $0xa2] sm:$0xff]
      %v3848 = vld [vmem:[#allocation2 + $0xaa] sm:$0xff]
      %v3849 = vld [vmem:[#allocation2 + $0xb2] sm:$0xff]
      %v3850 = vld [vmem:[#allocation2 + $0xba] sm:$0xff]
      %v3851 = vld [vmem:[#allocation2 + $0xc2] sm:$0xff]
      %v3852 = vld [vmem:[#allocation2 + $0xca] sm:$0xff]
      %v3853 = vld [vmem:[#allocation2 + $0xd2] sm:$0xff]
      %v3854 = vld [vmem:[#allocation2 + $0xda] sm:$0xff]
      %v3855 = vld [vmem:[#allocation2 + $0xe2] sm:$0xff]
      %v3856 = vld [vmem:[#allocation2 + $0xea] sm:$0xff]
      %v3857 = vld [vmem:[#allocation2 + $0xf2] sm:$0xff]
      %v3858 = vld [vmem:[#allocation2 + $0xfa] sm:$0xff]
      %s3859 = scalar_lea.vmem %s3, 256
      %v3860 = vld [vmem:[%s3859] sm:$0xff]
      %v3861 = vld [vmem:[%s3859 + $0x8] sm:$0xff]
      %v3862 = vld [vmem:[%s3859 + $0x10] sm:$0xff]
      %v3863 = vld [vmem:[%s3859 + $0x18] sm:$0xff]
      %v3864 = vld [vmem:[%s3859 + $0x20] sm:$0xff]
      %v3865 = vld [vmem:[%s3859 + $0x28] sm:$0xff]
      %v3866 = vld [vmem:[%s3859 + $0x30] sm:$0xff]
      %v3867 = vld [vmem:[%s3859 + $0x38] sm:$0xff]
      %v3868 = vld [vmem:[%s3859 + $0x40] sm:$0xff]
      %v3869 = vld [vmem:[%s3859 + $0x48] sm:$0xff]
      %v3870 = vld [vmem:[%s3859 + $0x50] sm:$0xff]
      %v3871 = vld [vmem:[%s3859 + $0x58] sm:$0xff]
      %v3872 = vld [vmem:[%s3859 + $0x60] sm:$0xff]
      %v3873 = vld [vmem:[%s3859 + $0x68] sm:$0xff]
      %v3874 = vld [vmem:[%s3859 + $0x70] sm:$0xff]
      %v3875 = vld [vmem:[%s3859 + $0x78] sm:$0xff]
      %3876 = vmatprep.subr.mxu0 0.0
      %3877 = vmatpush1.msra.mxu0 %v3875
      %3878 = vmatprep.subr.mxu0 0.0
      %3879 = vmatpush1.msra.mxu0 %v3874
      %3880 = vmatprep.subr.mxu0 0.0
      %3881 = vmatpush1.msra.mxu0 %v3873
      %3882 = vmatprep.subr.mxu0 0.0
      %3883 = vmatpush1.msra.mxu0 %v3872
      %3884 = vmatprep.subr.mxu0 0.0
      %3885 = vmatpush1.msra.mxu0 %v3871
      %3886 = vmatprep.subr.mxu0 0.0
      %3887 = vmatpush1.msra.mxu0 %v3870
      %3888 = vmatprep.subr.mxu0 0.0
      %3889 = vmatpush1.msra.mxu0 %v3869
      %3890 = vmatprep.subr.mxu0 0.0
      %3891 = vmatpush1.msra.mxu0 %v3868
      %3892 = vmatprep.subr.mxu0 0.0
      %3893 = vmatpush1.msra.mxu0 %v3867
      %3894 = vmatprep.subr.mxu0 0.0
      %3895 = vmatpush1.msra.mxu0 %v3866
      %3896 = vmatprep.subr.mxu0 0.0
      %3897 = vmatpush1.msra.mxu0 %v3865
      %3898 = vmatprep.subr.mxu0 0.0
      %3899 = vmatpush1.msra.mxu0 %v3864
      %3900 = vmatprep.subr.mxu0 0.0
      %3901 = vmatpush1.msra.mxu0 %v3863
      %3902 = vmatprep.subr.mxu0 0.0
      %3903 = vmatpush1.msra.mxu0 %v3862
      %3904 = vmatprep.subr.mxu0 0.0
      %3905 = vmatpush1.msra.mxu0 %v3861
      %3906 = vmatprep.subr.mxu0 0.0
      %3907 = vmatpush1.msra.mxu0 %v3860
      %3908 = vmatprep.subr.mxu0 0.0
      %3909 = vmatpush2.msra.mxu0 0.0
      %3910 = vmatprep.subr.mxu0 0.0
      %3911 = vmatpush2.msra.mxu0 0.0
      %3912 = vmatprep.subr.mxu0 0.0
      %3913 = vmatpush2.msra.mxu0 0.0
      %3914 = vmatprep.subr.mxu0 0.0
      %3915 = vmatpush2.msra.mxu0 0.0
      %3916 = vmatprep.subr.mxu0 0.0
      %3917 = vmatpush2.msra.mxu0 0.0
      %3918 = vmatprep.subr.mxu0 0.0
      %3919 = vmatpush2.msra.mxu0 0.0
      %3920 = vmatprep.subr.mxu0 0.0
      %3921 = vmatpush2.msra.mxu0 0.0
      %3922 = vmatprep.subr.mxu0 0.0
      %3923 = vmatpush2.msra.mxu0 0.0
      %3924 = vmatprep.subr.mxu0 0.0
      %3925 = vmatpush2.msra.mxu0 0.0
      %3926 = vmatprep.subr.mxu0 0.0
      %3927 = vmatpush2.msra.mxu0 0.0
      %3928 = vmatprep.subr.mxu0 0.0
      %3929 = vmatpush2.msra.mxu0 0.0
      %3930 = vmatprep.subr.mxu0 0.0
      %3931 = vmatpush2.msra.mxu0 0.0
      %3932 = vmatprep.subr.mxu0 0.0
      %3933 = vmatpush2.msra.mxu0 0.0
      %3934 = vmatprep.subr.mxu0 0.0
      %3935 = vmatpush2.msra.mxu0 0.0
      %3936 = vmatprep.subr.mxu0 0.0
      %3937 = vmatpush2.msra.mxu0 0.0
      %3938 = vmatprep.subr.mxu0 0.0
      %3939 = vmatpush2.msra.mxu0 0.0
      %3940 = vmatprep.mubr.f32.mxu0 0.0
      %3941 = vmatmul.mubr.f32.gmra.mxu0 %v3827
      %v3942 = vpop.f32.mrf.mxu0
      %v3943 = vadd.f32 0.0, %v3942
      %v3944 = vpop.f32.mrf.mxu0
      %3945 = vmatprep.mubr.f32.mxu0 0.0
      %3946 = vmatmul.mubr.f32.gmra.mxu0 %v3828
      %v3947 = vpop.f32.mrf.mxu0
      %v3948 = vadd.f32 0.0, %v3947
      %v3949 = vpop.f32.mrf.mxu0
      %3950 = vmatprep.mubr.f32.mxu0 0.0
      %3951 = vmatmul.mubr.f32.gmra.mxu0 %v3829
      %v3952 = vpop.f32.mrf.mxu0
      %v3953 = vadd.f32 0.0, %v3952
      %v3954 = vpop.f32.mrf.mxu0
      %3955 = vmatprep.mubr.f32.mxu0 0.0
      %3956 = vmatmul.mubr.f32.gmra.mxu0 %v3830
      %v3957 = vpop.f32.mrf.mxu0
      %v3958 = vadd.f32 0.0, %v3957
      %v3959 = vpop.f32.mrf.mxu0
      %3960 = vmatprep.mubr.f32.mxu0 0.0
      %3961 = vmatmul.mubr.f32.gmra.mxu0 %v3831
      %v3962 = vpop.f32.mrf.mxu0
      %v3963 = vadd.f32 0.0, %v3962
      %v3964 = vpop.f32.mrf.mxu0
      %3965 = vmatprep.mubr.f32.mxu0 0.0
      %3966 = vmatmul.mubr.f32.gmra.mxu0 %v3832
      %v3967 = vpop.f32.mrf.mxu0
      %v3968 = vadd.f32 0.0, %v3967
      %v3969 = vpop.f32.mrf.mxu0
      %3970 = vmatprep.mubr.f32.mxu0 0.0
      %3971 = vmatmul.mubr.f32.gmra.mxu0 %v3833
      %v3972 = vpop.f32.mrf.mxu0
      %v3973 = vadd.f32 0.0, %v3972
      %v3974 = vpop.f32.mrf.mxu0
      %3975 = vmatprep.mubr.f32.mxu0 0.0
      %3976 = vmatmul.mubr.f32.gmra.mxu0 %v3834
      %v3977 = vpop.f32.mrf.mxu0
      %v3978 = vadd.f32 0.0, %v3977
      %v3979 = vpop.f32.mrf.mxu0
      %3980 = vmatprep.mubr.f32.mxu0 0.0
      %3981 = vmatmul.mubr.f32.gmra.mxu0 %v3835
      %v3982 = vpop.f32.mrf.mxu0
      %v3983 = vadd.f32 0.0, %v3982
      %v3984 = vpop.f32.mrf.mxu0
      %3985 = vmatprep.mubr.f32.mxu0 0.0
      %3986 = vmatmul.mubr.f32.gmra.mxu0 %v3836
      %v3987 = vpop.f32.mrf.mxu0
      %v3988 = vadd.f32 0.0, %v3987
      %v3989 = vpop.f32.mrf.mxu0
      %3990 = vmatprep.mubr.f32.mxu0 0.0
      %3991 = vmatmul.mubr.f32.gmra.mxu0 %v3837
      %v3992 = vpop.f32.mrf.mxu0
      %v3993 = vadd.f32 0.0, %v3992
      %v3994 = vpop.f32.mrf.mxu0
      %3995 = vmatprep.mubr.f32.mxu0 0.0
      %3996 = vmatmul.mubr.f32.gmra.mxu0 %v3838
      %v3997 = vpop.f32.mrf.mxu0
      %v3998 = vadd.f32 0.0, %v3997
      %v3999 = vpop.f32.mrf.mxu0
      %4000 = vmatprep.mubr.f32.mxu0 0.0
      %4001 = vmatmul.mubr.f32.gmra.mxu0 %v3839
      %v4002 = vpop.f32.mrf.mxu0
      %v4003 = vadd.f32 0.0, %v4002
      %v4004 = vpop.f32.mrf.mxu0
      %4005 = vmatprep.mubr.f32.mxu0 0.0
      %4006 = vmatmul.mubr.f32.gmra.mxu0 %v3840
      %v4007 = vpop.f32.mrf.mxu0
      %v4008 = vadd.f32 0.0, %v4007
      %v4009 = vpop.f32.mrf.mxu0
      %4010 = vmatprep.mubr.f32.mxu0 0.0
      %4011 = vmatmul.mubr.f32.gmra.mxu0 %v3841
      %v4012 = vpop.f32.mrf.mxu0
      %v4013 = vadd.f32 0.0, %v4012
      %v4014 = vpop.f32.mrf.mxu0
      %4015 = vmatprep.mubr.f32.mxu0 0.0
      %4016 = vmatmul.mubr.f32.gmra.mxu0 %v3842
      %v4017 = vpop.f32.mrf.mxu0
      %v4018 = vadd.f32 0.0, %v4017
      %v4019 = vpop.f32.mrf.mxu0
      %4020 = vmatprep.mubr.f32.mxu0 0.0
      %4021 = vmatmul.mubr.f32.gmra.mxu0 %v3843
      %v4022 = vpop.f32.mrf.mxu0
      %v4023 = vadd.f32 0.0, %v4022
      %v4024 = vpop.f32.mrf.mxu0
      %4025 = vmatprep.mubr.f32.mxu0 0.0
      %4026 = vmatmul.mubr.f32.gmra.mxu0 %v3844
      %v4027 = vpop.f32.mrf.mxu0
      %v4028 = vadd.f32 0.0, %v4027
      %v4029 = vpop.f32.mrf.mxu0
      %4030 = vmatprep.mubr.f32.mxu0 0.0
      %4031 = vmatmul.mubr.f32.gmra.mxu0 %v3845
      %v4032 = vpop.f32.mrf.mxu0
      %v4033 = vadd.f32 0.0, %v4032
      %v4034 = vpop.f32.mrf.mxu0
      %4035 = vmatprep.mubr.f32.mxu0 0.0
      %4036 = vmatmul.mubr.f32.gmra.mxu0 %v3846
      %v4037 = vpop.f32.mrf.mxu0
      %v4038 = vadd.f32 0.0, %v4037
      %v4039 = vpop.f32.mrf.mxu0
      %4040 = vmatprep.mubr.f32.mxu0 0.0
      %4041 = vmatmul.mubr.f32.gmra.mxu0 %v3847
      %v4042 = vpop.f32.mrf.mxu0
      %v4043 = vadd.f32 0.0, %v4042
      %v4044 = vpop.f32.mrf.mxu0
      %4045 = vmatprep.mubr.f32.mxu0 0.0
      %4046 = vmatmul.mubr.f32.gmra.mxu0 %v3848
      %v4047 = vpop.f32.mrf.mxu0
      %v4048 = vadd.f32 0.0, %v4047
      %v4049 = vpop.f32.mrf.mxu0
      %4050 = vmatprep.mubr.f32.mxu0 0.0
      %4051 = vmatmul.mubr.f32.gmra.mxu0 %v3849
      %v4052 = vpop.f32.mrf.mxu0
      %v4053 = vadd.f32 0.0, %v4052
      %v4054 = vpop.f32.mrf.mxu0
      %4055 = vmatprep.mubr.f32.mxu0 0.0
      %4056 = vmatmul.mubr.f32.gmra.mxu0 %v3850
      %v4057 = vpop.f32.mrf.mxu0
      %v4058 = vadd.f32 0.0, %v4057
      %v4059 = vpop.f32.mrf.mxu0
      %4060 = vmatprep.mubr.f32.mxu0 0.0
      %4061 = vmatmul.mubr.f32.gmra.mxu0 %v3851
      %v4062 = vpop.f32.mrf.mxu0
      %v4063 = vadd.f32 0.0, %v4062
      %v4064 = vpop.f32.mrf.mxu0
      %4065 = vmatprep.mubr.f32.mxu0 0.0
      %4066 = vmatmul.mubr.f32.gmra.mxu0 %v3852
      %v4067 = vpop.f32.mrf.mxu0
      %v4068 = vadd.f32 0.0, %v4067
      %v4069 = vpop.f32.mrf.mxu0
      %4070 = vmatprep.mubr.f32.mxu0 0.0
      %4071 = vmatmul.mubr.f32.gmra.mxu0 %v3853
      %v4072 = vpop.f32.mrf.mxu0
      %v4073 = vadd.f32 0.0, %v4072
      %v4074 = vpop.f32.mrf.mxu0
      %4075 = vmatprep.mubr.f32.mxu0 0.0
      %4076 = vmatmul.mubr.f32.gmra.mxu0 %v3854
      %v4077 = vpop.f32.mrf.mxu0
      %v4078 = vadd.f32 0.0, %v4077
      %v4079 = vpop.f32.mrf.mxu0
      %4080 = vmatprep.mubr.f32.mxu0 0.0
      %4081 = vmatmul.mubr.f32.gmra.mxu0 %v3855
      %v4082 = vpop.f32.mrf.mxu0
      %v4083 = vadd.f32 0.0, %v4082
      %v4084 = vpop.f32.mrf.mxu0
      %4085 = vmatprep.mubr.f32.mxu0 0.0
      %4086 = vmatmul.mubr.f32.gmra.mxu0 %v3856
      %v4087 = vpop.f32.mrf.mxu0
      %v4088 = vadd.f32 0.0, %v4087
      %v4089 = vpop.f32.mrf.mxu0
      %4090 = vmatprep.mubr.f32.mxu0 0.0
      %4091 = vmatmul.mubr.f32.gmra.mxu0 %v3857
      %v4092 = vpop.f32.mrf.mxu0
      %v4093 = vadd.f32 0.0, %v4092
      %v4094 = vpop.f32.mrf.mxu0
      %4095 = vmatprep.mubr.f32.mxu0 0.0
      %4096 = vmatmul.mubr.f32.gmra.mxu0 %v3858
      %v4097 = vpop.f32.mrf.mxu0
      %v4098 = vadd.f32 0.0, %v4097
      %v4099 = vpop.f32.mrf.mxu0
      %4100 = vdwg.mxu0
      %v4101 = vadd.f32 %v3669, %v3943
      %v4102 = vadd.f32 %v3674, %v3948
      %v4103 = vadd.f32 %v3679, %v3953
      %v4104 = vadd.f32 %v3684, %v3958
      %v4105 = vadd.f32 %v3689, %v3963
      %v4106 = vadd.f32 %v3694, %v3968
      %v4107 = vadd.f32 %v3699, %v3973
      %v4108 = vadd.f32 %v3704, %v3978
      %v4109 = vadd.f32 %v3709, %v3983
      %v4110 = vadd.f32 %v3714, %v3988
      %v4111 = vadd.f32 %v3719, %v3993
      %v4112 = vadd.f32 %v3724, %v3998
      %v4113 = vadd.f32 %v3729, %v4003
      %v4114 = vadd.f32 %v3734, %v4008
      %v4115 = vadd.f32 %v3739, %v4013
      %v4116 = vadd.f32 %v3744, %v4018
      %v4117 = vadd.f32 %v3749, %v4023
      %v4118 = vadd.f32 %v3754, %v4028
      %v4119 = vadd.f32 %v3759, %v4033
      %v4120 = vadd.f32 %v3764, %v4038
      %v4121 = vadd.f32 %v3769, %v4043
      %v4122 = vadd.f32 %v3774, %v4048
      %v4123 = vadd.f32 %v3779, %v4053
      %v4124 = vadd.f32 %v3784, %v4058
      %v4125 = vadd.f32 %v3789, %v4063
      %v4126 = vadd.f32 %v3794, %v4068
      %v4127 = vadd.f32 %v3799, %v4073
      %v4128 = vadd.f32 %v3804, %v4078
      %v4129 = vadd.f32 %v3809, %v4083
      %v4130 = vadd.f32 %v3814, %v4088
      %v4131 = vadd.f32 %v3819, %v4093
      %v4132 = vadd.f32 %v3824, %v4098
      %v4133 = vld [vmem:[#allocation2 + $0x10] sm:$0xff]
      %v4134 = vld [vmem:[#allocation2 + $0x18] sm:$0xff]
      %v4135 = vld [vmem:[#allocation2 + $0x20] sm:$0xff]
      %v4136 = vld [vmem:[#allocation2 + $0x28] sm:$0xff]
      %v4137 = vld [vmem:[#allocation2 + $0x30] sm:$0xff]
      %v4138 = vld [vmem:[#allocation2 + $0x38] sm:$0xff]
      %v4139 = vld [vmem:[#allocation2 + $0x40] sm:$0xff]
      %v4140 = vld [vmem:[#allocation2 + $0x48] sm:$0xff]
      %v4141 = vld [vmem:[#allocation2 + $0x50] sm:$0xff]
      %v4142 = vld [vmem:[#allocation2 + $0x58] sm:$0xff]
      %v4143 = vld [vmem:[#allocation2 + $0x60] sm:$0xff]
      %v4144 = vld [vmem:[#allocation2 + $0x68] sm:$0xff]
      %v4145 = vld [vmem:[#allocation2 + $0x70] sm:$0xff]
      %v4146 = vld [vmem:[#allocation2 + $0x78] sm:$0xff]
      %v4147 = vld [vmem:[#allocation2 + $0x80] sm:$0xff]
      %v4148 = vld [vmem:[#allocation2 + $0x88] sm:$0xff]
      %v4149 = vld [vmem:[#allocation2 + $0x90] sm:$0xff]
      %v4150 = vld [vmem:[#allocation2 + $0x98] sm:$0xff]
      %v4151 = vld [vmem:[#allocation2 + $0xa0] sm:$0xff]
      %v4152 = vld [vmem:[#allocation2 + $0xa8] sm:$0xff]
      %v4153 = vld [vmem:[#allocation2 + $0xb0] sm:$0xff]
      %v4154 = vld [vmem:[#allocation2 + $0xb8] sm:$0xff]
      %v4155 = vld [vmem:[#allocation2 + $0xc0] sm:$0xff]
      %v4156 = vld [vmem:[#allocation2 + $0xc8] sm:$0xff]
      %v4157 = vld [vmem:[#allocation2 + $0xd0] sm:$0xff]
      %v4158 = vld [vmem:[#allocation2 + $0xd8] sm:$0xff]
      %v4159 = vld [vmem:[#allocation2 + $0xe0] sm:$0xff]
      %v4160 = vld [vmem:[#allocation2 + $0xe8] sm:$0xff]
      %v4161 = vld [vmem:[#allocation2 + $0xf0] sm:$0xff]
      %v4162 = vld [vmem:[#allocation2 + $0xf8] sm:$0xff]
      %v4163 = vld [vmem:[#allocation2 + $0x100] sm:$0xff]
      %v4164 = vld [vmem:[#allocation2 + $0x108] sm:$0xff]
      %s4165 = scalar_lea.vmem %s3, 384
      %v4166 = vld [vmem:[%s4165] sm:$0xff]
      %v4167 = vld [vmem:[%s4165 + $0x8] sm:$0xff]
      %v4168 = vld [vmem:[%s4165 + $0x10] sm:$0xff]
      %v4169 = vld [vmem:[%s4165 + $0x18] sm:$0xff]
      %v4170 = vld [vmem:[%s4165 + $0x20] sm:$0xff]
      %v4171 = vld [vmem:[%s4165 + $0x28] sm:$0xff]
      %v4172 = vld [vmem:[%s4165 + $0x30] sm:$0xff]
      %v4173 = vld [vmem:[%s4165 + $0x38] sm:$0xff]
      %v4174 = vld [vmem:[%s4165 + $0x40] sm:$0xff]
      %v4175 = vld [vmem:[%s4165 + $0x48] sm:$0xff]
      %v4176 = vld [vmem:[%s4165 + $0x50] sm:$0xff]
      %v4177 = vld [vmem:[%s4165 + $0x58] sm:$0xff]
      %v4178 = vld [vmem:[%s4165 + $0x60] sm:$0xff]
      %v4179 = vld [vmem:[%s4165 + $0x68] sm:$0xff]
      %v4180 = vld [vmem:[%s4165 + $0x70] sm:$0xff]
      %v4181 = vld [vmem:[%s4165 + $0x78] sm:$0xff]
      %4182 = vmatprep.subr.mxu0 0.0
      %4183 = vmatpush1.msra.mxu0 %v4181
      %4184 = vmatprep.subr.mxu0 0.0
      %4185 = vmatpush1.msra.mxu0 %v4180
      %4186 = vmatprep.subr.mxu0 0.0
      %4187 = vmatpush1.msra.mxu0 %v4179
      %4188 = vmatprep.subr.mxu0 0.0
      %4189 = vmatpush1.msra.mxu0 %v4178
      %4190 = vmatprep.subr.mxu0 0.0
      %4191 = vmatpush1.msra.mxu0 %v4177
      %4192 = vmatprep.subr.mxu0 0.0
      %4193 = vmatpush1.msra.mxu0 %v4176
      %4194 = vmatprep.subr.mxu0 0.0
      %4195 = vmatpush1.msra.mxu0 %v4175
      %4196 = vmatprep.subr.mxu0 0.0
      %4197 = vmatpush1.msra.mxu0 %v4174
      %4198 = vmatprep.subr.mxu0 0.0
      %4199 = vmatpush1.msra.mxu0 %v4173
      %4200 = vmatprep.subr.mxu0 0.0
      %4201 = vmatpush1.msra.mxu0 %v4172
      %4202 = vmatprep.subr.mxu0 0.0
      %4203 = vmatpush1.msra.mxu0 %v4171
      %4204 = vmatprep.subr.mxu0 0.0
      %4205 = vmatpush1.msra.mxu0 %v4170
      %4206 = vmatprep.subr.mxu0 0.0
      %4207 = vmatpush1.msra.mxu0 %v4169
      %4208 = vmatprep.subr.mxu0 0.0
      %4209 = vmatpush1.msra.mxu0 %v4168
      %4210 = vmatprep.subr.mxu0 0.0
      %4211 = vmatpush1.msra.mxu0 %v4167
      %4212 = vmatprep.subr.mxu0 0.0
      %4213 = vmatpush1.msra.mxu0 %v4166
      %4214 = vmatprep.subr.mxu0 0.0
      %4215 = vmatpush2.msra.mxu0 0.0
      %4216 = vmatprep.subr.mxu0 0.0
      %4217 = vmatpush2.msra.mxu0 0.0
      %4218 = vmatprep.subr.mxu0 0.0
      %4219 = vmatpush2.msra.mxu0 0.0
      %4220 = vmatprep.subr.mxu0 0.0
      %4221 = vmatpush2.msra.mxu0 0.0
      %4222 = vmatprep.subr.mxu0 0.0
      %4223 = vmatpush2.msra.mxu0 0.0
      %4224 = vmatprep.subr.mxu0 0.0
      %4225 = vmatpush2.msra.mxu0 0.0
      %4226 = vmatprep.subr.mxu0 0.0
      %4227 = vmatpush2.msra.mxu0 0.0
      %4228 = vmatprep.subr.mxu0 0.0
      %4229 = vmatpush2.msra.mxu0 0.0
      %4230 = vmatprep.subr.mxu0 0.0
      %4231 = vmatpush2.msra.mxu0 0.0
      %4232 = vmatprep.subr.mxu0 0.0
      %4233 = vmatpush2.msra.mxu0 0.0
      %4234 = vmatprep.subr.mxu0 0.0
      %4235 = vmatpush2.msra.mxu0 0.0
      %4236 = vmatprep.subr.mxu0 0.0
      %4237 = vmatpush2.msra.mxu0 0.0
      %4238 = vmatprep.subr.mxu0 0.0
      %4239 = vmatpush2.msra.mxu0 0.0
      %4240 = vmatprep.subr.mxu0 0.0
      %4241 = vmatpush2.msra.mxu0 0.0
      %4242 = vmatprep.subr.mxu0 0.0
      %4243 = vmatpush2.msra.mxu0 0.0
      %4244 = vmatprep.subr.mxu0 0.0
      %4245 = vmatpush2.msra.mxu0 0.0
      %4246 = vmatprep.mubr.f32.mxu0 0.0
      %4247 = vmatmul.mubr.f32.gmra.mxu0 %v4133
      %v4248 = vpop.f32.mrf.mxu0
      %v4249 = vadd.f32 0.0, %v4248
      %v4250 = vpop.f32.mrf.mxu0
      %4251 = vmatprep.mubr.f32.mxu0 0.0
      %4252 = vmatmul.mubr.f32.gmra.mxu0 %v4134
      %v4253 = vpop.f32.mrf.mxu0
      %v4254 = vadd.f32 0.0, %v4253
      %v4255 = vpop.f32.mrf.mxu0
      %4256 = vmatprep.mubr.f32.mxu0 0.0
      %4257 = vmatmul.mubr.f32.gmra.mxu0 %v4135
      %v4258 = vpop.f32.mrf.mxu0
      %v4259 = vadd.f32 0.0, %v4258
      %v4260 = vpop.f32.mrf.mxu0
      %4261 = vmatprep.mubr.f32.mxu0 0.0
      %4262 = vmatmul.mubr.f32.gmra.mxu0 %v4136
      %v4263 = vpop.f32.mrf.mxu0
      %v4264 = vadd.f32 0.0, %v4263
      %v4265 = vpop.f32.mrf.mxu0
      %4266 = vmatprep.mubr.f32.mxu0 0.0
      %4267 = vmatmul.mubr.f32.gmra.mxu0 %v4137
      %v4268 = vpop.f32.mrf.mxu0
      %v4269 = vadd.f32 0.0, %v4268
      %v4270 = vpop.f32.mrf.mxu0
      %4271 = vmatprep.mubr.f32.mxu0 0.0
      %4272 = vmatmul.mubr.f32.gmra.mxu0 %v4138
      %v4273 = vpop.f32.mrf.mxu0
      %v4274 = vadd.f32 0.0, %v4273
      %v4275 = vpop.f32.mrf.mxu0
      %4276 = vmatprep.mubr.f32.mxu0 0.0
      %4277 = vmatmul.mubr.f32.gmra.mxu0 %v4139
      %v4278 = vpop.f32.mrf.mxu0
      %v4279 = vadd.f32 0.0, %v4278
      %v4280 = vpop.f32.mrf.mxu0
      %4281 = vmatprep.mubr.f32.mxu0 0.0
      %4282 = vmatmul.mubr.f32.gmra.mxu0 %v4140
      %v4283 = vpop.f32.mrf.mxu0
      %v4284 = vadd.f32 0.0, %v4283
      %v4285 = vpop.f32.mrf.mxu0
      %4286 = vmatprep.mubr.f32.mxu0 0.0
      %4287 = vmatmul.mubr.f32.gmra.mxu0 %v4141
      %v4288 = vpop.f32.mrf.mxu0
      %v4289 = vadd.f32 0.0, %v4288
      %v4290 = vpop.f32.mrf.mxu0
      %4291 = vmatprep.mubr.f32.mxu0 0.0
      %4292 = vmatmul.mubr.f32.gmra.mxu0 %v4142
      %v4293 = vpop.f32.mrf.mxu0
      %v4294 = vadd.f32 0.0, %v4293
      %v4295 = vpop.f32.mrf.mxu0
      %4296 = vmatprep.mubr.f32.mxu0 0.0
      %4297 = vmatmul.mubr.f32.gmra.mxu0 %v4143
      %v4298 = vpop.f32.mrf.mxu0
      %v4299 = vadd.f32 0.0, %v4298
      %v4300 = vpop.f32.mrf.mxu0
      %4301 = vmatprep.mubr.f32.mxu0 0.0
      %4302 = vmatmul.mubr.f32.gmra.mxu0 %v4144
      %v4303 = vpop.f32.mrf.mxu0
      %v4304 = vadd.f32 0.0, %v4303
      %v4305 = vpop.f32.mrf.mxu0
      %4306 = vmatprep.mubr.f32.mxu0 0.0
      %4307 = vmatmul.mubr.f32.gmra.mxu0 %v4145
      %v4308 = vpop.f32.mrf.mxu0
      %v4309 = vadd.f32 0.0, %v4308
      %v4310 = vpop.f32.mrf.mxu0
      %4311 = vmatprep.mubr.f32.mxu0 0.0
      %4312 = vmatmul.mubr.f32.gmra.mxu0 %v4146
      %v4313 = vpop.f32.mrf.mxu0
      %v4314 = vadd.f32 0.0, %v4313
      %v4315 = vpop.f32.mrf.mxu0
      %4316 = vmatprep.mubr.f32.mxu0 0.0
      %4317 = vmatmul.mubr.f32.gmra.mxu0 %v4147
      %v4318 = vpop.f32.mrf.mxu0
      %v4319 = vadd.f32 0.0, %v4318
      %v4320 = vpop.f32.mrf.mxu0
      %4321 = vmatprep.mubr.f32.mxu0 0.0
      %4322 = vmatmul.mubr.f32.gmra.mxu0 %v4148
      %v4323 = vpop.f32.mrf.mxu0
      %v4324 = vadd.f32 0.0, %v4323
      %v4325 = vpop.f32.mrf.mxu0
      %4326 = vmatprep.mubr.f32.mxu0 0.0
      %4327 = vmatmul.mubr.f32.gmra.mxu0 %v4149
      %v4328 = vpop.f32.mrf.mxu0
      %v4329 = vadd.f32 0.0, %v4328
      %v4330 = vpop.f32.mrf.mxu0
      %4331 = vmatprep.mubr.f32.mxu0 0.0
      %4332 = vmatmul.mubr.f32.gmra.mxu0 %v4150
      %v4333 = vpop.f32.mrf.mxu0
      %v4334 = vadd.f32 0.0, %v4333
      %v4335 = vpop.f32.mrf.mxu0
      %4336 = vmatprep.mubr.f32.mxu0 0.0
      %4337 = vmatmul.mubr.f32.gmra.mxu0 %v4151
      %v4338 = vpop.f32.mrf.mxu0
      %v4339 = vadd.f32 0.0, %v4338
      %v4340 = vpop.f32.mrf.mxu0
      %4341 = vmatprep.mubr.f32.mxu0 0.0
      %4342 = vmatmul.mubr.f32.gmra.mxu0 %v4152
      %v4343 = vpop.f32.mrf.mxu0
      %v4344 = vadd.f32 0.0, %v4343
      %v4345 = vpop.f32.mrf.mxu0
      %4346 = vmatprep.mubr.f32.mxu0 0.0
      %4347 = vmatmul.mubr.f32.gmra.mxu0 %v4153
      %v4348 = vpop.f32.mrf.mxu0
      %v4349 = vadd.f32 0.0, %v4348
      %v4350 = vpop.f32.mrf.mxu0
      %4351 = vmatprep.mubr.f32.mxu0 0.0
      %4352 = vmatmul.mubr.f32.gmra.mxu0 %v4154
      %v4353 = vpop.f32.mrf.mxu0
      %v4354 = vadd.f32 0.0, %v4353
      %v4355 = vpop.f32.mrf.mxu0
      %4356 = vmatprep.mubr.f32.mxu0 0.0
      %4357 = vmatmul.mubr.f32.gmra.mxu0 %v4155
      %v4358 = vpop.f32.mrf.mxu0
      %v4359 = vadd.f32 0.0, %v4358
      %v4360 = vpop.f32.mrf.mxu0
      %4361 = vmatprep.mubr.f32.mxu0 0.0
      %4362 = vmatmul.mubr.f32.gmra.mxu0 %v4156
      %v4363 = vpop.f32.mrf.mxu0
      %v4364 = vadd.f32 0.0, %v4363
      %v4365 = vpop.f32.mrf.mxu0
      %4366 = vmatprep.mubr.f32.mxu0 0.0
      %4367 = vmatmul.mubr.f32.gmra.mxu0 %v4157
      %v4368 = vpop.f32.mrf.mxu0
      %v4369 = vadd.f32 0.0, %v4368
      %v4370 = vpop.f32.mrf.mxu0
      %4371 = vmatprep.mubr.f32.mxu0 0.0
      %4372 = vmatmul.mubr.f32.gmra.mxu0 %v4158
      %v4373 = vpop.f32.mrf.mxu0
      %v4374 = vadd.f32 0.0, %v4373
      %v4375 = vpop.f32.mrf.mxu0
      %4376 = vmatprep.mubr.f32.mxu0 0.0
      %4377 = vmatmul.mubr.f32.gmra.mxu0 %v4159
      %v4378 = vpop.f32.mrf.mxu0
      %v4379 = vadd.f32 0.0, %v4378
      %v4380 = vpop.f32.mrf.mxu0
      %4381 = vmatprep.mubr.f32.mxu0 0.0
      %4382 = vmatmul.mubr.f32.gmra.mxu0 %v4160
      %v4383 = vpop.f32.mrf.mxu0
      %v4384 = vadd.f32 0.0, %v4383
      %v4385 = vpop.f32.mrf.mxu0
      %4386 = vmatprep.mubr.f32.mxu0 0.0
      %4387 = vmatmul.mubr.f32.gmra.mxu0 %v4161
      %v4388 = vpop.f32.mrf.mxu0
      %v4389 = vadd.f32 0.0, %v4388
      %v4390 = vpop.f32.mrf.mxu0
      %4391 = vmatprep.mubr.f32.mxu0 0.0
      %4392 = vmatmul.mubr.f32.gmra.mxu0 %v4162
      %v4393 = vpop.f32.mrf.mxu0
      %v4394 = vadd.f32 0.0, %v4393
      %v4395 = vpop.f32.mrf.mxu0
      %4396 = vmatprep.mubr.f32.mxu0 0.0
      %4397 = vmatmul.mubr.f32.gmra.mxu0 %v4163
      %v4398 = vpop.f32.mrf.mxu0
      %v4399 = vadd.f32 0.0, %v4398
      %v4400 = vpop.f32.mrf.mxu0
      %4401 = vmatprep.mubr.f32.mxu0 0.0
      %4402 = vmatmul.mubr.f32.gmra.mxu0 %v4164
      %v4403 = vpop.f32.mrf.mxu0
      %v4404 = vadd.f32 0.0, %v4403
      %v4405 = vpop.f32.mrf.mxu0
      %4406 = vdwg.mxu0
      %v4407 = vadd.f32 %v4101, %v4249
      %v4408 = vadd.f32 %v4102, %v4254
      %v4409 = vadd.f32 %v4103, %v4259
      %v4410 = vadd.f32 %v4104, %v4264
      %v4411 = vadd.f32 %v4105, %v4269
      %v4412 = vadd.f32 %v4106, %v4274
      %v4413 = vadd.f32 %v4107, %v4279
      %v4414 = vadd.f32 %v4108, %v4284
      %v4415 = vadd.f32 %v4109, %v4289
      %v4416 = vadd.f32 %v4110, %v4294
      %v4417 = vadd.f32 %v4111, %v4299
      %v4418 = vadd.f32 %v4112, %v4304
      %v4419 = vadd.f32 %v4113, %v4309
      %v4420 = vadd.f32 %v4114, %v4314
      %v4421 = vadd.f32 %v4115, %v4319
      %v4422 = vadd.f32 %v4116, %v4324
      %v4423 = vadd.f32 %v4117, %v4329
      %v4424 = vadd.f32 %v4118, %v4334
      %v4425 = vadd.f32 %v4119, %v4339
      %v4426 = vadd.f32 %v4120, %v4344
      %v4427 = vadd.f32 %v4121, %v4349
      %v4428 = vadd.f32 %v4122, %v4354
      %v4429 = vadd.f32 %v4123, %v4359
      %v4430 = vadd.f32 %v4124, %v4364
      %v4431 = vadd.f32 %v4125, %v4369
      %v4432 = vadd.f32 %v4126, %v4374
      %v4433 = vadd.f32 %v4127, %v4379
      %v4434 = vadd.f32 %v4128, %v4384
      %v4435 = vadd.f32 %v4129, %v4389
      %v4436 = vadd.f32 %v4130, %v4394
      %v4437 = vadd.f32 %v4131, %v4399
      %v4438 = vadd.f32 %v4132, %v4404
      %v4439 = vld [vmem:[#allocation2 + $0x11] sm:$0xff]
      %v4440 = vld [vmem:[#allocation2 + $0x19] sm:$0xff]
      %v4441 = vld [vmem:[#allocation2 + $0x21] sm:$0xff]
      %v4442 = vld [vmem:[#allocation2 + $0x29] sm:$0xff]
      %v4443 = vld [vmem:[#allocation2 + $0x31] sm:$0xff]
      %v4444 = vld [vmem:[#allocation2 + $0x39] sm:$0xff]
      %v4445 = vld [vmem:[#allocation2 + $0x41] sm:$0xff]
      %v4446 = vld [vmem:[#allocation2 + $0x49] sm:$0xff]
      %v4447 = vld [vmem:[#allocation2 + $0x51] sm:$0xff]
      %v4448 = vld [vmem:[#allocation2 + $0x59] sm:$0xff]
      %v4449 = vld [vmem:[#allocation2 + $0x61] sm:$0xff]
      %v4450 = vld [vmem:[#allocation2 + $0x69] sm:$0xff]
      %v4451 = vld [vmem:[#allocation2 + $0x71] sm:$0xff]
      %v4452 = vld [vmem:[#allocation2 + $0x79] sm:$0xff]
      %v4453 = vld [vmem:[#allocation2 + $0x81] sm:$0xff]
      %v4454 = vld [vmem:[#allocation2 + $0x89] sm:$0xff]
      %v4455 = vld [vmem:[#allocation2 + $0x91] sm:$0xff]
      %v4456 = vld [vmem:[#allocation2 + $0x99] sm:$0xff]
      %v4457 = vld [vmem:[#allocation2 + $0xa1] sm:$0xff]
      %v4458 = vld [vmem:[#allocation2 + $0xa9] sm:$0xff]
      %v4459 = vld [vmem:[#allocation2 + $0xb1] sm:$0xff]
      %v4460 = vld [vmem:[#allocation2 + $0xb9] sm:$0xff]
      %v4461 = vld [vmem:[#allocation2 + $0xc1] sm:$0xff]
      %v4462 = vld [vmem:[#allocation2 + $0xc9] sm:$0xff]
      %v4463 = vld [vmem:[#allocation2 + $0xd1] sm:$0xff]
      %v4464 = vld [vmem:[#allocation2 + $0xd9] sm:$0xff]
      %v4465 = vld [vmem:[#allocation2 + $0xe1] sm:$0xff]
      %v4466 = vld [vmem:[#allocation2 + $0xe9] sm:$0xff]
      %v4467 = vld [vmem:[#allocation2 + $0xf1] sm:$0xff]
      %v4468 = vld [vmem:[#allocation2 + $0xf9] sm:$0xff]
      %v4469 = vld [vmem:[#allocation2 + $0x101] sm:$0xff]
      %v4470 = vld [vmem:[#allocation2 + $0x109] sm:$0xff]
      %s4471 = scalar_lea.vmem %s3, 512
      %v4472 = vld [vmem:[%s4471] sm:$0xff]
      %v4473 = vld [vmem:[%s4471 + $0x8] sm:$0xff]
      %v4474 = vld [vmem:[%s4471 + $0x10] sm:$0xff]
      %v4475 = vld [vmem:[%s4471 + $0x18] sm:$0xff]
      %v4476 = vld [vmem:[%s4471 + $0x20] sm:$0xff]
      %v4477 = vld [vmem:[%s4471 + $0x28] sm:$0xff]
      %v4478 = vld [vmem:[%s4471 + $0x30] sm:$0xff]
      %v4479 = vld [vmem:[%s4471 + $0x38] sm:$0xff]
      %v4480 = vld [vmem:[%s4471 + $0x40] sm:$0xff]
      %v4481 = vld [vmem:[%s4471 + $0x48] sm:$0xff]
      %v4482 = vld [vmem:[%s4471 + $0x50] sm:$0xff]
      %v4483 = vld [vmem:[%s4471 + $0x58] sm:$0xff]
      %v4484 = vld [vmem:[%s4471 + $0x60] sm:$0xff]
      %v4485 = vld [vmem:[%s4471 + $0x68] sm:$0xff]
      %v4486 = vld [vmem:[%s4471 + $0x70] sm:$0xff]
      %v4487 = vld [vmem:[%s4471 + $0x78] sm:$0xff]
      %4488 = vmatprep.subr.mxu0 0.0
      %4489 = vmatpush1.msra.mxu0 %v4487
      %4490 = vmatprep.subr.mxu0 0.0
      %4491 = vmatpush1.msra.mxu0 %v4486
      %4492 = vmatprep.subr.mxu0 0.0
      %4493 = vmatpush1.msra.mxu0 %v4485
      %4494 = vmatprep.subr.mxu0 0.0
      %4495 = vmatpush1.msra.mxu0 %v4484
      %4496 = vmatprep.subr.mxu0 0.0
      %4497 = vmatpush1.msra.mxu0 %v4483
      %4498 = vmatprep.subr.mxu0 0.0
      %4499 = vmatpush1.msra.mxu0 %v4482
      %4500 = vmatprep.subr.mxu0 0.0
      %4501 = vmatpush1.msra.mxu0 %v4481
      %4502 = vmatprep.subr.mxu0 0.0
      %4503 = vmatpush1.msra.mxu0 %v4480
      %4504 = vmatprep.subr.mxu0 0.0
      %4505 = vmatpush1.msra.mxu0 %v4479
      %4506 = vmatprep.subr.mxu0 0.0
      %4507 = vmatpush1.msra.mxu0 %v4478
      %4508 = vmatprep.subr.mxu0 0.0
      %4509 = vmatpush1.msra.mxu0 %v4477
      %4510 = vmatprep.subr.mxu0 0.0
      %4511 = vmatpush1.msra.mxu0 %v4476
      %4512 = vmatprep.subr.mxu0 0.0
      %4513 = vmatpush1.msra.mxu0 %v4475
      %4514 = vmatprep.subr.mxu0 0.0
      %4515 = vmatpush1.msra.mxu0 %v4474
      %4516 = vmatprep.subr.mxu0 0.0
      %4517 = vmatpush1.msra.mxu0 %v4473
      %4518 = vmatprep.subr.mxu0 0.0
      %4519 = vmatpush1.msra.mxu0 %v4472
      %4520 = vmatprep.subr.mxu0 0.0
      %4521 = vmatpush2.msra.mxu0 0.0
      %4522 = vmatprep.subr.mxu0 0.0
      %4523 = vmatpush2.msra.mxu0 0.0
      %4524 = vmatprep.subr.mxu0 0.0
      %4525 = vmatpush2.msra.mxu0 0.0
      %4526 = vmatprep.subr.mxu0 0.0
      %4527 = vmatpush2.msra.mxu0 0.0
      %4528 = vmatprep.subr.mxu0 0.0
      %4529 = vmatpush2.msra.mxu0 0.0
      %4530 = vmatprep.subr.mxu0 0.0
      %4531 = vmatpush2.msra.mxu0 0.0
      %4532 = vmatprep.subr.mxu0 0.0
      %4533 = vmatpush2.msra.mxu0 0.0
      %4534 = vmatprep.subr.mxu0 0.0
      %4535 = vmatpush2.msra.mxu0 0.0
      %4536 = vmatprep.subr.mxu0 0.0
      %4537 = vmatpush2.msra.mxu0 0.0
      %4538 = vmatprep.subr.mxu0 0.0
      %4539 = vmatpush2.msra.mxu0 0.0
      %4540 = vmatprep.subr.mxu0 0.0
      %4541 = vmatpush2.msra.mxu0 0.0
      %4542 = vmatprep.subr.mxu0 0.0
      %4543 = vmatpush2.msra.mxu0 0.0
      %4544 = vmatprep.subr.mxu0 0.0
      %4545 = vmatpush2.msra.mxu0 0.0
      %4546 = vmatprep.subr.mxu0 0.0
      %4547 = vmatpush2.msra.mxu0 0.0
      %4548 = vmatprep.subr.mxu0 0.0
      %4549 = vmatpush2.msra.mxu0 0.0
      %4550 = vmatprep.subr.mxu0 0.0
      %4551 = vmatpush2.msra.mxu0 0.0
      %4552 = vmatprep.mubr.f32.mxu0 0.0
      %4553 = vmatmul.mubr.f32.gmra.mxu0 %v4439
      %v4554 = vpop.f32.mrf.mxu0
      %v4555 = vadd.f32 0.0, %v4554
      %v4556 = vpop.f32.mrf.mxu0
      %4557 = vmatprep.mubr.f32.mxu0 0.0
      %4558 = vmatmul.mubr.f32.gmra.mxu0 %v4440
      %v4559 = vpop.f32.mrf.mxu0
      %v4560 = vadd.f32 0.0, %v4559
      %v4561 = vpop.f32.mrf.mxu0
      %4562 = vmatprep.mubr.f32.mxu0 0.0
      %4563 = vmatmul.mubr.f32.gmra.mxu0 %v4441
      %v4564 = vpop.f32.mrf.mxu0
      %v4565 = vadd.f32 0.0, %v4564
      %v4566 = vpop.f32.mrf.mxu0
      %4567 = vmatprep.mubr.f32.mxu0 0.0
      %4568 = vmatmul.mubr.f32.gmra.mxu0 %v4442
      %v4569 = vpop.f32.mrf.mxu0
      %v4570 = vadd.f32 0.0, %v4569
      %v4571 = vpop.f32.mrf.mxu0
      %4572 = vmatprep.mubr.f32.mxu0 0.0
      %4573 = vmatmul.mubr.f32.gmra.mxu0 %v4443
      %v4574 = vpop.f32.mrf.mxu0
      %v4575 = vadd.f32 0.0, %v4574
      %v4576 = vpop.f32.mrf.mxu0
      %4577 = vmatprep.mubr.f32.mxu0 0.0
      %4578 = vmatmul.mubr.f32.gmra.mxu0 %v4444
      %v4579 = vpop.f32.mrf.mxu0
      %v4580 = vadd.f32 0.0, %v4579
      %v4581 = vpop.f32.mrf.mxu0
      %4582 = vmatprep.mubr.f32.mxu0 0.0
      %4583 = vmatmul.mubr.f32.gmra.mxu0 %v4445
      %v4584 = vpop.f32.mrf.mxu0
      %v4585 = vadd.f32 0.0, %v4584
      %v4586 = vpop.f32.mrf.mxu0
      %4587 = vmatprep.mubr.f32.mxu0 0.0
      %4588 = vmatmul.mubr.f32.gmra.mxu0 %v4446
      %v4589 = vpop.f32.mrf.mxu0
      %v4590 = vadd.f32 0.0, %v4589
      %v4591 = vpop.f32.mrf.mxu0
      %4592 = vmatprep.mubr.f32.mxu0 0.0
      %4593 = vmatmul.mubr.f32.gmra.mxu0 %v4447
      %v4594 = vpop.f32.mrf.mxu0
      %v4595 = vadd.f32 0.0, %v4594
      %v4596 = vpop.f32.mrf.mxu0
      %4597 = vmatprep.mubr.f32.mxu0 0.0
      %4598 = vmatmul.mubr.f32.gmra.mxu0 %v4448
      %v4599 = vpop.f32.mrf.mxu0
      %v4600 = vadd.f32 0.0, %v4599
      %v4601 = vpop.f32.mrf.mxu0
      %4602 = vmatprep.mubr.f32.mxu0 0.0
      %4603 = vmatmul.mubr.f32.gmra.mxu0 %v4449
      %v4604 = vpop.f32.mrf.mxu0
      %v4605 = vadd.f32 0.0, %v4604
      %v4606 = vpop.f32.mrf.mxu0
      %4607 = vmatprep.mubr.f32.mxu0 0.0
      %4608 = vmatmul.mubr.f32.gmra.mxu0 %v4450
      %v4609 = vpop.f32.mrf.mxu0
      %v4610 = vadd.f32 0.0, %v4609
      %v4611 = vpop.f32.mrf.mxu0
      %4612 = vmatprep.mubr.f32.mxu0 0.0
      %4613 = vmatmul.mubr.f32.gmra.mxu0 %v4451
      %v4614 = vpop.f32.mrf.mxu0
      %v4615 = vadd.f32 0.0, %v4614
      %v4616 = vpop.f32.mrf.mxu0
      %4617 = vmatprep.mubr.f32.mxu0 0.0
      %4618 = vmatmul.mubr.f32.gmra.mxu0 %v4452
      %v4619 = vpop.f32.mrf.mxu0
      %v4620 = vadd.f32 0.0, %v4619
      %v4621 = vpop.f32.mrf.mxu0
      %4622 = vmatprep.mubr.f32.mxu0 0.0
      %4623 = vmatmul.mubr.f32.gmra.mxu0 %v4453
      %v4624 = vpop.f32.mrf.mxu0
      %v4625 = vadd.f32 0.0, %v4624
      %v4626 = vpop.f32.mrf.mxu0
      %4627 = vmatprep.mubr.f32.mxu0 0.0
      %4628 = vmatmul.mubr.f32.gmra.mxu0 %v4454
      %v4629 = vpop.f32.mrf.mxu0
      %v4630 = vadd.f32 0.0, %v4629
      %v4631 = vpop.f32.mrf.mxu0
      %4632 = vmatprep.mubr.f32.mxu0 0.0
      %4633 = vmatmul.mubr.f32.gmra.mxu0 %v4455
      %v4634 = vpop.f32.mrf.mxu0
      %v4635 = vadd.f32 0.0, %v4634
      %v4636 = vpop.f32.mrf.mxu0
      %4637 = vmatprep.mubr.f32.mxu0 0.0
      %4638 = vmatmul.mubr.f32.gmra.mxu0 %v4456
      %v4639 = vpop.f32.mrf.mxu0
      %v4640 = vadd.f32 0.0, %v4639
      %v4641 = vpop.f32.mrf.mxu0
      %4642 = vmatprep.mubr.f32.mxu0 0.0
      %4643 = vmatmul.mubr.f32.gmra.mxu0 %v4457
      %v4644 = vpop.f32.mrf.mxu0
      %v4645 = vadd.f32 0.0, %v4644
      %v4646 = vpop.f32.mrf.mxu0
      %4647 = vmatprep.mubr.f32.mxu0 0.0
      %4648 = vmatmul.mubr.f32.gmra.mxu0 %v4458
      %v4649 = vpop.f32.mrf.mxu0
      %v4650 = vadd.f32 0.0, %v4649
      %v4651 = vpop.f32.mrf.mxu0
      %4652 = vmatprep.mubr.f32.mxu0 0.0
      %4653 = vmatmul.mubr.f32.gmra.mxu0 %v4459
      %v4654 = vpop.f32.mrf.mxu0
      %v4655 = vadd.f32 0.0, %v4654
      %v4656 = vpop.f32.mrf.mxu0
      %4657 = vmatprep.mubr.f32.mxu0 0.0
      %4658 = vmatmul.mubr.f32.gmra.mxu0 %v4460
      %v4659 = vpop.f32.mrf.mxu0
      %v4660 = vadd.f32 0.0, %v4659
      %v4661 = vpop.f32.mrf.mxu0
      %4662 = vmatprep.mubr.f32.mxu0 0.0
      %4663 = vmatmul.mubr.f32.gmra.mxu0 %v4461
      %v4664 = vpop.f32.mrf.mxu0
      %v4665 = vadd.f32 0.0, %v4664
      %v4666 = vpop.f32.mrf.mxu0
      %4667 = vmatprep.mubr.f32.mxu0 0.0
      %4668 = vmatmul.mubr.f32.gmra.mxu0 %v4462
      %v4669 = vpop.f32.mrf.mxu0
      %v4670 = vadd.f32 0.0, %v4669
      %v4671 = vpop.f32.mrf.mxu0
      %4672 = vmatprep.mubr.f32.mxu0 0.0
      %4673 = vmatmul.mubr.f32.gmra.mxu0 %v4463
      %v4674 = vpop.f32.mrf.mxu0
      %v4675 = vadd.f32 0.0, %v4674
      %v4676 = vpop.f32.mrf.mxu0
      %4677 = vmatprep.mubr.f32.mxu0 0.0
      %4678 = vmatmul.mubr.f32.gmra.mxu0 %v4464
      %v4679 = vpop.f32.mrf.mxu0
      %v4680 = vadd.f32 0.0, %v4679
      %v4681 = vpop.f32.mrf.mxu0
      %4682 = vmatprep.mubr.f32.mxu0 0.0
      %4683 = vmatmul.mubr.f32.gmra.mxu0 %v4465
      %v4684 = vpop.f32.mrf.mxu0
      %v4685 = vadd.f32 0.0, %v4684
      %v4686 = vpop.f32.mrf.mxu0
      %4687 = vmatprep.mubr.f32.mxu0 0.0
      %4688 = vmatmul.mubr.f32.gmra.mxu0 %v4466
      %v4689 = vpop.f32.mrf.mxu0
      %v4690 = vadd.f32 0.0, %v4689
      %v4691 = vpop.f32.mrf.mxu0
      %4692 = vmatprep.mubr.f32.mxu0 0.0
      %4693 = vmatmul.mubr.f32.gmra.mxu0 %v4467
      %v4694 = vpop.f32.mrf.mxu0
      %v4695 = vadd.f32 0.0, %v4694
      %v4696 = vpop.f32.mrf.mxu0
      %4697 = vmatprep.mubr.f32.mxu0 0.0
      %4698 = vmatmul.mubr.f32.gmra.mxu0 %v4468
      %v4699 = vpop.f32.mrf.mxu0
      %v4700 = vadd.f32 0.0, %v4699
      %v4701 = vpop.f32.mrf.mxu0
      %4702 = vmatprep.mubr.f32.mxu0 0.0
      %4703 = vmatmul.mubr.f32.gmra.mxu0 %v4469
      %v4704 = vpop.f32.mrf.mxu0
      %v4705 = vadd.f32 0.0, %v4704
      %v4706 = vpop.f32.mrf.mxu0
      %4707 = vmatprep.mubr.f32.mxu0 0.0
      %4708 = vmatmul.mubr.f32.gmra.mxu0 %v4470
      %v4709 = vpop.f32.mrf.mxu0
      %v4710 = vadd.f32 0.0, %v4709
      %v4711 = vpop.f32.mrf.mxu0
      %4712 = vdwg.mxu0
      %v4713 = vadd.f32 %v4407, %v4555
      %v4714 = vadd.f32 %v4408, %v4560
      %v4715 = vadd.f32 %v4409, %v4565
      %v4716 = vadd.f32 %v4410, %v4570
      %v4717 = vadd.f32 %v4411, %v4575
      %v4718 = vadd.f32 %v4412, %v4580
      %v4719 = vadd.f32 %v4413, %v4585
      %v4720 = vadd.f32 %v4414, %v4590
      %v4721 = vadd.f32 %v4415, %v4595
      %v4722 = vadd.f32 %v4416, %v4600
      %v4723 = vadd.f32 %v4417, %v4605
      %v4724 = vadd.f32 %v4418, %v4610
      %v4725 = vadd.f32 %v4419, %v4615
      %v4726 = vadd.f32 %v4420, %v4620
      %v4727 = vadd.f32 %v4421, %v4625
      %v4728 = vadd.f32 %v4422, %v4630
      %v4729 = vadd.f32 %v4423, %v4635
      %v4730 = vadd.f32 %v4424, %v4640
      %v4731 = vadd.f32 %v4425, %v4645
      %v4732 = vadd.f32 %v4426, %v4650
      %v4733 = vadd.f32 %v4427, %v4655
      %v4734 = vadd.f32 %v4428, %v4660
      %v4735 = vadd.f32 %v4429, %v4665
      %v4736 = vadd.f32 %v4430, %v4670
      %v4737 = vadd.f32 %v4431, %v4675
      %v4738 = vadd.f32 %v4432, %v4680
      %v4739 = vadd.f32 %v4433, %v4685
      %v4740 = vadd.f32 %v4434, %v4690
      %v4741 = vadd.f32 %v4435, %v4695
      %v4742 = vadd.f32 %v4436, %v4700
      %v4743 = vadd.f32 %v4437, %v4705
      %v4744 = vadd.f32 %v4438, %v4710
      %v4745 = vld [vmem:[#allocation2 + $0x12] sm:$0xff]
      %v4746 = vld [vmem:[#allocation2 + $0x1a] sm:$0xff]
      %v4747 = vld [vmem:[#allocation2 + $0x22] sm:$0xff]
      %v4748 = vld [vmem:[#allocation2 + $0x2a] sm:$0xff]
      %v4749 = vld [vmem:[#allocation2 + $0x32] sm:$0xff]
      %v4750 = vld [vmem:[#allocation2 + $0x3a] sm:$0xff]
      %v4751 = vld [vmem:[#allocation2 + $0x42] sm:$0xff]
      %v4752 = vld [vmem:[#allocation2 + $0x4a] sm:$0xff]
      %v4753 = vld [vmem:[#allocation2 + $0x52] sm:$0xff]
      %v4754 = vld [vmem:[#allocation2 + $0x5a] sm:$0xff]
      %v4755 = vld [vmem:[#allocation2 + $0x62] sm:$0xff]
      %v4756 = vld [vmem:[#allocation2 + $0x6a] sm:$0xff]
      %v4757 = vld [vmem:[#allocation2 + $0x72] sm:$0xff]
      %v4758 = vld [vmem:[#allocation2 + $0x7a] sm:$0xff]
      %v4759 = vld [vmem:[#allocation2 + $0x82] sm:$0xff]
      %v4760 = vld [vmem:[#allocation2 + $0x8a] sm:$0xff]
      %v4761 = vld [vmem:[#allocation2 + $0x92] sm:$0xff]
      %v4762 = vld [vmem:[#allocation2 + $0x9a] sm:$0xff]
      %v4763 = vld [vmem:[#allocation2 + $0xa2] sm:$0xff]
      %v4764 = vld [vmem:[#allocation2 + $0xaa] sm:$0xff]
      %v4765 = vld [vmem:[#allocation2 + $0xb2] sm:$0xff]
      %v4766 = vld [vmem:[#allocation2 + $0xba] sm:$0xff]
      %v4767 = vld [vmem:[#allocation2 + $0xc2] sm:$0xff]
      %v4768 = vld [vmem:[#allocation2 + $0xca] sm:$0xff]
      %v4769 = vld [vmem:[#allocation2 + $0xd2] sm:$0xff]
      %v4770 = vld [vmem:[#allocation2 + $0xda] sm:$0xff]
      %v4771 = vld [vmem:[#allocation2 + $0xe2] sm:$0xff]
      %v4772 = vld [vmem:[#allocation2 + $0xea] sm:$0xff]
      %v4773 = vld [vmem:[#allocation2 + $0xf2] sm:$0xff]
      %v4774 = vld [vmem:[#allocation2 + $0xfa] sm:$0xff]
      %v4775 = vld [vmem:[#allocation2 + $0x102] sm:$0xff]
      %v4776 = vld [vmem:[#allocation2 + $0x10a] sm:$0xff]
      %s4777 = scalar_lea.vmem %s3, 640
      %v4778 = vld [vmem:[%s4777] sm:$0xff]
      %v4779 = vld [vmem:[%s4777 + $0x8] sm:$0xff]
      %v4780 = vld [vmem:[%s4777 + $0x10] sm:$0xff]
      %v4781 = vld [vmem:[%s4777 + $0x18] sm:$0xff]
      %v4782 = vld [vmem:[%s4777 + $0x20] sm:$0xff]
      %v4783 = vld [vmem:[%s4777 + $0x28] sm:$0xff]
      %v4784 = vld [vmem:[%s4777 + $0x30] sm:$0xff]
      %v4785 = vld [vmem:[%s4777 + $0x38] sm:$0xff]
      %v4786 = vld [vmem:[%s4777 + $0x40] sm:$0xff]
      %v4787 = vld [vmem:[%s4777 + $0x48] sm:$0xff]
      %v4788 = vld [vmem:[%s4777 + $0x50] sm:$0xff]
      %v4789 = vld [vmem:[%s4777 + $0x58] sm:$0xff]
      %v4790 = vld [vmem:[%s4777 + $0x60] sm:$0xff]
      %v4791 = vld [vmem:[%s4777 + $0x68] sm:$0xff]
      %v4792 = vld [vmem:[%s4777 + $0x70] sm:$0xff]
      %v4793 = vld [vmem:[%s4777 + $0x78] sm:$0xff]
      %4794 = vmatprep.subr.mxu0 0.0
      %4795 = vmatpush1.msra.mxu0 %v4793
      %4796 = vmatprep.subr.mxu0 0.0
      %4797 = vmatpush1.msra.mxu0 %v4792
      %4798 = vmatprep.subr.mxu0 0.0
      %4799 = vmatpush1.msra.mxu0 %v4791
      %4800 = vmatprep.subr.mxu0 0.0
      %4801 = vmatpush1.msra.mxu0 %v4790
      %4802 = vmatprep.subr.mxu0 0.0
      %4803 = vmatpush1.msra.mxu0 %v4789
      %4804 = vmatprep.subr.mxu0 0.0
      %4805 = vmatpush1.msra.mxu0 %v4788
      %4806 = vmatprep.subr.mxu0 0.0
      %4807 = vmatpush1.msra.mxu0 %v4787
      %4808 = vmatprep.subr.mxu0 0.0
      %4809 = vmatpush1.msra.mxu0 %v4786
      %4810 = vmatprep.subr.mxu0 0.0
      %4811 = vmatpush1.msra.mxu0 %v4785
      %4812 = vmatprep.subr.mxu0 0.0
      %4813 = vmatpush1.msra.mxu0 %v4784
      %4814 = vmatprep.subr.mxu0 0.0
      %4815 = vmatpush1.msra.mxu0 %v4783
      %4816 = vmatprep.subr.mxu0 0.0
      %4817 = vmatpush1.msra.mxu0 %v4782
      %4818 = vmatprep.subr.mxu0 0.0
      %4819 = vmatpush1.msra.mxu0 %v4781
      %4820 = vmatprep.subr.mxu0 0.0
      %4821 = vmatpush1.msra.mxu0 %v4780
      %4822 = vmatprep.subr.mxu0 0.0
      %4823 = vmatpush1.msra.mxu0 %v4779
      %4824 = vmatprep.subr.mxu0 0.0
      %4825 = vmatpush1.msra.mxu0 %v4778
      %4826 = vmatprep.subr.mxu0 0.0
      %4827 = vmatpush2.msra.mxu0 0.0
      %4828 = vmatprep.subr.mxu0 0.0
      %4829 = vmatpush2.msra.mxu0 0.0
      %4830 = vmatprep.subr.mxu0 0.0
      %4831 = vmatpush2.msra.mxu0 0.0
      %4832 = vmatprep.subr.mxu0 0.0
      %4833 = vmatpush2.msra.mxu0 0.0
      %4834 = vmatprep.subr.mxu0 0.0
      %4835 = vmatpush2.msra.mxu0 0.0
      %4836 = vmatprep.subr.mxu0 0.0
      %4837 = vmatpush2.msra.mxu0 0.0
      %4838 = vmatprep.subr.mxu0 0.0
      %4839 = vmatpush2.msra.mxu0 0.0
      %4840 = vmatprep.subr.mxu0 0.0
      %4841 = vmatpush2.msra.mxu0 0.0
      %4842 = vmatprep.subr.mxu0 0.0
      %4843 = vmatpush2.msra.mxu0 0.0
      %4844 = vmatprep.subr.mxu0 0.0
      %4845 = vmatpush2.msra.mxu0 0.0
      %4846 = vmatprep.subr.mxu0 0.0
      %4847 = vmatpush2.msra.mxu0 0.0
      %4848 = vmatprep.subr.mxu0 0.0
      %4849 = vmatpush2.msra.mxu0 0.0
      %4850 = vmatprep.subr.mxu0 0.0
      %4851 = vmatpush2.msra.mxu0 0.0
      %4852 = vmatprep.subr.mxu0 0.0
      %4853 = vmatpush2.msra.mxu0 0.0
      %4854 = vmatprep.subr.mxu0 0.0
      %4855 = vmatpush2.msra.mxu0 0.0
      %4856 = vmatprep.subr.mxu0 0.0
      %4857 = vmatpush2.msra.mxu0 0.0
      %4858 = vmatprep.mubr.f32.mxu0 0.0
      %4859 = vmatmul.mubr.f32.gmra.mxu0 %v4745
      %v4860 = vpop.f32.mrf.mxu0
      %v4861 = vadd.f32 0.0, %v4860
      %v4862 = vpop.f32.mrf.mxu0
      %4863 = vmatprep.mubr.f32.mxu0 0.0
      %4864 = vmatmul.mubr.f32.gmra.mxu0 %v4746
      %v4865 = vpop.f32.mrf.mxu0
      %v4866 = vadd.f32 0.0, %v4865
      %v4867 = vpop.f32.mrf.mxu0
      %4868 = vmatprep.mubr.f32.mxu0 0.0
      %4869 = vmatmul.mubr.f32.gmra.mxu0 %v4747
      %v4870 = vpop.f32.mrf.mxu0
      %v4871 = vadd.f32 0.0, %v4870
      %v4872 = vpop.f32.mrf.mxu0
      %4873 = vmatprep.mubr.f32.mxu0 0.0
      %4874 = vmatmul.mubr.f32.gmra.mxu0 %v4748
      %v4875 = vpop.f32.mrf.mxu0
      %v4876 = vadd.f32 0.0, %v4875
      %v4877 = vpop.f32.mrf.mxu0
      %4878 = vmatprep.mubr.f32.mxu0 0.0
      %4879 = vmatmul.mubr.f32.gmra.mxu0 %v4749
      %v4880 = vpop.f32.mrf.mxu0
      %v4881 = vadd.f32 0.0, %v4880
      %v4882 = vpop.f32.mrf.mxu0
      %4883 = vmatprep.mubr.f32.mxu0 0.0
      %4884 = vmatmul.mubr.f32.gmra.mxu0 %v4750
      %v4885 = vpop.f32.mrf.mxu0
      %v4886 = vadd.f32 0.0, %v4885
      %v4887 = vpop.f32.mrf.mxu0
      %4888 = vmatprep.mubr.f32.mxu0 0.0
      %4889 = vmatmul.mubr.f32.gmra.mxu0 %v4751
      %v4890 = vpop.f32.mrf.mxu0
      %v4891 = vadd.f32 0.0, %v4890
      %v4892 = vpop.f32.mrf.mxu0
      %4893 = vmatprep.mubr.f32.mxu0 0.0
      %4894 = vmatmul.mubr.f32.gmra.mxu0 %v4752
      %v4895 = vpop.f32.mrf.mxu0
      %v4896 = vadd.f32 0.0, %v4895
      %v4897 = vpop.f32.mrf.mxu0
      %4898 = vmatprep.mubr.f32.mxu0 0.0
      %4899 = vmatmul.mubr.f32.gmra.mxu0 %v4753
      %v4900 = vpop.f32.mrf.mxu0
      %v4901 = vadd.f32 0.0, %v4900
      %v4902 = vpop.f32.mrf.mxu0
      %4903 = vmatprep.mubr.f32.mxu0 0.0
      %4904 = vmatmul.mubr.f32.gmra.mxu0 %v4754
      %v4905 = vpop.f32.mrf.mxu0
      %v4906 = vadd.f32 0.0, %v4905
      %v4907 = vpop.f32.mrf.mxu0
      %4908 = vmatprep.mubr.f32.mxu0 0.0
      %4909 = vmatmul.mubr.f32.gmra.mxu0 %v4755
      %v4910 = vpop.f32.mrf.mxu0
      %v4911 = vadd.f32 0.0, %v4910
      %v4912 = vpop.f32.mrf.mxu0
      %4913 = vmatprep.mubr.f32.mxu0 0.0
      %4914 = vmatmul.mubr.f32.gmra.mxu0 %v4756
      %v4915 = vpop.f32.mrf.mxu0
      %v4916 = vadd.f32 0.0, %v4915
      %v4917 = vpop.f32.mrf.mxu0
      %4918 = vmatprep.mubr.f32.mxu0 0.0
      %4919 = vmatmul.mubr.f32.gmra.mxu0 %v4757
      %v4920 = vpop.f32.mrf.mxu0
      %v4921 = vadd.f32 0.0, %v4920
      %v4922 = vpop.f32.mrf.mxu0
      %4923 = vmatprep.mubr.f32.mxu0 0.0
      %4924 = vmatmul.mubr.f32.gmra.mxu0 %v4758
      %v4925 = vpop.f32.mrf.mxu0
      %v4926 = vadd.f32 0.0, %v4925
      %v4927 = vpop.f32.mrf.mxu0
      %4928 = vmatprep.mubr.f32.mxu0 0.0
      %4929 = vmatmul.mubr.f32.gmra.mxu0 %v4759
      %v4930 = vpop.f32.mrf.mxu0
      %v4931 = vadd.f32 0.0, %v4930
      %v4932 = vpop.f32.mrf.mxu0
      %4933 = vmatprep.mubr.f32.mxu0 0.0
      %4934 = vmatmul.mubr.f32.gmra.mxu0 %v4760
      %v4935 = vpop.f32.mrf.mxu0
      %v4936 = vadd.f32 0.0, %v4935
      %v4937 = vpop.f32.mrf.mxu0
      %4938 = vmatprep.mubr.f32.mxu0 0.0
      %4939 = vmatmul.mubr.f32.gmra.mxu0 %v4761
      %v4940 = vpop.f32.mrf.mxu0
      %v4941 = vadd.f32 0.0, %v4940
      %v4942 = vpop.f32.mrf.mxu0
      %4943 = vmatprep.mubr.f32.mxu0 0.0
      %4944 = vmatmul.mubr.f32.gmra.mxu0 %v4762
      %v4945 = vpop.f32.mrf.mxu0
      %v4946 = vadd.f32 0.0, %v4945
      %v4947 = vpop.f32.mrf.mxu0
      %4948 = vmatprep.mubr.f32.mxu0 0.0
      %4949 = vmatmul.mubr.f32.gmra.mxu0 %v4763
      %v4950 = vpop.f32.mrf.mxu0
      %v4951 = vadd.f32 0.0, %v4950
      %v4952 = vpop.f32.mrf.mxu0
      %4953 = vmatprep.mubr.f32.mxu0 0.0
      %4954 = vmatmul.mubr.f32.gmra.mxu0 %v4764
      %v4955 = vpop.f32.mrf.mxu0
      %v4956 = vadd.f32 0.0, %v4955
      %v4957 = vpop.f32.mrf.mxu0
      %4958 = vmatprep.mubr.f32.mxu0 0.0
      %4959 = vmatmul.mubr.f32.gmra.mxu0 %v4765
      %v4960 = vpop.f32.mrf.mxu0
      %v4961 = vadd.f32 0.0, %v4960
      %v4962 = vpop.f32.mrf.mxu0
      %4963 = vmatprep.mubr.f32.mxu0 0.0
      %4964 = vmatmul.mubr.f32.gmra.mxu0 %v4766
      %v4965 = vpop.f32.mrf.mxu0
      %v4966 = vadd.f32 0.0, %v4965
      %v4967 = vpop.f32.mrf.mxu0
      %4968 = vmatprep.mubr.f32.mxu0 0.0
      %4969 = vmatmul.mubr.f32.gmra.mxu0 %v4767
      %v4970 = vpop.f32.mrf.mxu0
      %v4971 = vadd.f32 0.0, %v4970
      %v4972 = vpop.f32.mrf.mxu0
      %4973 = vmatprep.mubr.f32.mxu0 0.0
      %4974 = vmatmul.mubr.f32.gmra.mxu0 %v4768
      %v4975 = vpop.f32.mrf.mxu0
      %v4976 = vadd.f32 0.0, %v4975
      %v4977 = vpop.f32.mrf.mxu0
      %4978 = vmatprep.mubr.f32.mxu0 0.0
      %4979 = vmatmul.mubr.f32.gmra.mxu0 %v4769
      %v4980 = vpop.f32.mrf.mxu0
      %v4981 = vadd.f32 0.0, %v4980
      %v4982 = vpop.f32.mrf.mxu0
      %4983 = vmatprep.mubr.f32.mxu0 0.0
      %4984 = vmatmul.mubr.f32.gmra.mxu0 %v4770
      %v4985 = vpop.f32.mrf.mxu0
      %v4986 = vadd.f32 0.0, %v4985
      %v4987 = vpop.f32.mrf.mxu0
      %4988 = vmatprep.mubr.f32.mxu0 0.0
      %4989 = vmatmul.mubr.f32.gmra.mxu0 %v4771
      %v4990 = vpop.f32.mrf.mxu0
      %v4991 = vadd.f32 0.0, %v4990
      %v4992 = vpop.f32.mrf.mxu0
      %4993 = vmatprep.mubr.f32.mxu0 0.0
      %4994 = vmatmul.mubr.f32.gmra.mxu0 %v4772
      %v4995 = vpop.f32.mrf.mxu0
      %v4996 = vadd.f32 0.0, %v4995
      %v4997 = vpop.f32.mrf.mxu0
      %4998 = vmatprep.mubr.f32.mxu0 0.0
      %4999 = vmatmul.mubr.f32.gmra.mxu0 %v4773
      %v5000 = vpop.f32.mrf.mxu0
      %v5001 = vadd.f32 0.0, %v5000
      %v5002 = vpop.f32.mrf.mxu0
      %5003 = vmatprep.mubr.f32.mxu0 0.0
      %5004 = vmatmul.mubr.f32.gmra.mxu0 %v4774
      %v5005 = vpop.f32.mrf.mxu0
      %v5006 = vadd.f32 0.0, %v5005
      %v5007 = vpop.f32.mrf.mxu0
      %5008 = vmatprep.mubr.f32.mxu0 0.0
      %5009 = vmatmul.mubr.f32.gmra.mxu0 %v4775
      %v5010 = vpop.f32.mrf.mxu0
      %v5011 = vadd.f32 0.0, %v5010
      %v5012 = vpop.f32.mrf.mxu0
      %5013 = vmatprep.mubr.f32.mxu0 0.0
      %5014 = vmatmul.mubr.f32.gmra.mxu0 %v4776
      %v5015 = vpop.f32.mrf.mxu0
      %v5016 = vadd.f32 0.0, %v5015
      %v5017 = vpop.f32.mrf.mxu0
      %5018 = vdwg.mxu0
      %v5019 = vadd.f32 %v4713, %v4861
      %v5020 = vadd.f32 %v4714, %v4866
      %v5021 = vadd.f32 %v4715, %v4871
      %v5022 = vadd.f32 %v4716, %v4876
      %v5023 = vadd.f32 %v4717, %v4881
      %v5024 = vadd.f32 %v4718, %v4886
      %v5025 = vadd.f32 %v4719, %v4891
      %v5026 = vadd.f32 %v4720, %v4896
      %v5027 = vadd.f32 %v4721, %v4901
      %v5028 = vadd.f32 %v4722, %v4906
      %v5029 = vadd.f32 %v4723, %v4911
      %v5030 = vadd.f32 %v4724, %v4916
      %v5031 = vadd.f32 %v4725, %v4921
      %v5032 = vadd.f32 %v4726, %v4926
      %v5033 = vadd.f32 %v4727, %v4931
      %v5034 = vadd.f32 %v4728, %v4936
      %v5035 = vadd.f32 %v4729, %v4941
      %v5036 = vadd.f32 %v4730, %v4946
      %v5037 = vadd.f32 %v4731, %v4951
      %v5038 = vadd.f32 %v4732, %v4956
      %v5039 = vadd.f32 %v4733, %v4961
      %v5040 = vadd.f32 %v4734, %v4966
      %v5041 = vadd.f32 %v4735, %v4971
      %v5042 = vadd.f32 %v4736, %v4976
      %v5043 = vadd.f32 %v4737, %v4981
      %v5044 = vadd.f32 %v4738, %v4986
      %v5045 = vadd.f32 %v4739, %v4991
      %v5046 = vadd.f32 %v4740, %v4996
      %v5047 = vadd.f32 %v4741, %v5001
      %v5048 = vadd.f32 %v4742, %v5006
      %v5049 = vadd.f32 %v4743, %v5011
      %v5050 = vadd.f32 %v4744, %v5016
      %v5051 = vld [vmem:[#allocation2 + $0x20] sm:$0xff]
      %v5052 = vld [vmem:[#allocation2 + $0x28] sm:$0xff]
      %v5053 = vld [vmem:[#allocation2 + $0x30] sm:$0xff]
      %v5054 = vld [vmem:[#allocation2 + $0x38] sm:$0xff]
      %v5055 = vld [vmem:[#allocation2 + $0x40] sm:$0xff]
      %v5056 = vld [vmem:[#allocation2 + $0x48] sm:$0xff]
      %v5057 = vld [vmem:[#allocation2 + $0x50] sm:$0xff]
      %v5058 = vld [vmem:[#allocation2 + $0x58] sm:$0xff]
      %v5059 = vld [vmem:[#allocation2 + $0x60] sm:$0xff]
      %v5060 = vld [vmem:[#allocation2 + $0x68] sm:$0xff]
      %v5061 = vld [vmem:[#allocation2 + $0x70] sm:$0xff]
      %v5062 = vld [vmem:[#allocation2 + $0x78] sm:$0xff]
      %v5063 = vld [vmem:[#allocation2 + $0x80] sm:$0xff]
      %v5064 = vld [vmem:[#allocation2 + $0x88] sm:$0xff]
      %v5065 = vld [vmem:[#allocation2 + $0x90] sm:$0xff]
      %v5066 = vld [vmem:[#allocation2 + $0x98] sm:$0xff]
      %v5067 = vld [vmem:[#allocation2 + $0xa0] sm:$0xff]
      %v5068 = vld [vmem:[#allocation2 + $0xa8] sm:$0xff]
      %v5069 = vld [vmem:[#allocation2 + $0xb0] sm:$0xff]
      %v5070 = vld [vmem:[#allocation2 + $0xb8] sm:$0xff]
      %v5071 = vld [vmem:[#allocation2 + $0xc0] sm:$0xff]
      %v5072 = vld [vmem:[#allocation2 + $0xc8] sm:$0xff]
      %v5073 = vld [vmem:[#allocation2 + $0xd0] sm:$0xff]
      %v5074 = vld [vmem:[#allocation2 + $0xd8] sm:$0xff]
      %v5075 = vld [vmem:[#allocation2 + $0xe0] sm:$0xff]
      %v5076 = vld [vmem:[#allocation2 + $0xe8] sm:$0xff]
      %v5077 = vld [vmem:[#allocation2 + $0xf0] sm:$0xff]
      %v5078 = vld [vmem:[#allocation2 + $0xf8] sm:$0xff]
      %v5079 = vld [vmem:[#allocation2 + $0x100] sm:$0xff]
      %v5080 = vld [vmem:[#allocation2 + $0x108] sm:$0xff]
      %v5081 = vld [vmem:[#allocation2 + $0x110] sm:$0xff]
      %v5082 = vld [vmem:[#allocation2 + $0x118] sm:$0xff]
      %s5083 = scalar_lea.vmem %s3, 768
      %v5084 = vld [vmem:[%s5083] sm:$0xff]
      %v5085 = vld [vmem:[%s5083 + $0x8] sm:$0xff]
      %v5086 = vld [vmem:[%s5083 + $0x10] sm:$0xff]
      %v5087 = vld [vmem:[%s5083 + $0x18] sm:$0xff]
      %v5088 = vld [vmem:[%s5083 + $0x20] sm:$0xff]
      %v5089 = vld [vmem:[%s5083 + $0x28] sm:$0xff]
      %v5090 = vld [vmem:[%s5083 + $0x30] sm:$0xff]
      %v5091 = vld [vmem:[%s5083 + $0x38] sm:$0xff]
      %v5092 = vld [vmem:[%s5083 + $0x40] sm:$0xff]
      %v5093 = vld [vmem:[%s5083 + $0x48] sm:$0xff]
      %v5094 = vld [vmem:[%s5083 + $0x50] sm:$0xff]
      %v5095 = vld [vmem:[%s5083 + $0x58] sm:$0xff]
      %v5096 = vld [vmem:[%s5083 + $0x60] sm:$0xff]
      %v5097 = vld [vmem:[%s5083 + $0x68] sm:$0xff]
      %v5098 = vld [vmem:[%s5083 + $0x70] sm:$0xff]
      %v5099 = vld [vmem:[%s5083 + $0x78] sm:$0xff]
      %5100 = vmatprep.subr.mxu0 0.0
      %5101 = vmatpush1.msra.mxu0 %v5099
      %5102 = vmatprep.subr.mxu0 0.0
      %5103 = vmatpush1.msra.mxu0 %v5098
      %5104 = vmatprep.subr.mxu0 0.0
      %5105 = vmatpush1.msra.mxu0 %v5097
      %5106 = vmatprep.subr.mxu0 0.0
      %5107 = vmatpush1.msra.mxu0 %v5096
      %5108 = vmatprep.subr.mxu0 0.0
      %5109 = vmatpush1.msra.mxu0 %v5095
      %5110 = vmatprep.subr.mxu0 0.0
      %5111 = vmatpush1.msra.mxu0 %v5094
      %5112 = vmatprep.subr.mxu0 0.0
      %5113 = vmatpush1.msra.mxu0 %v5093
      %5114 = vmatprep.subr.mxu0 0.0
      %5115 = vmatpush1.msra.mxu0 %v5092
      %5116 = vmatprep.subr.mxu0 0.0
      %5117 = vmatpush1.msra.mxu0 %v5091
      %5118 = vmatprep.subr.mxu0 0.0
      %5119 = vmatpush1.msra.mxu0 %v5090
      %5120 = vmatprep.subr.mxu0 0.0
      %5121 = vmatpush1.msra.mxu0 %v5089
      %5122 = vmatprep.subr.mxu0 0.0
      %5123 = vmatpush1.msra.mxu0 %v5088
      %5124 = vmatprep.subr.mxu0 0.0
      %5125 = vmatpush1.msra.mxu0 %v5087
      %5126 = vmatprep.subr.mxu0 0.0
      %5127 = vmatpush1.msra.mxu0 %v5086
      %5128 = vmatprep.subr.mxu0 0.0
      %5129 = vmatpush1.msra.mxu0 %v5085
      %5130 = vmatprep.subr.mxu0 0.0
      %5131 = vmatpush1.msra.mxu0 %v5084
      %5132 = vmatprep.subr.mxu0 0.0
      %5133 = vmatpush2.msra.mxu0 0.0
      %5134 = vmatprep.subr.mxu0 0.0
      %5135 = vmatpush2.msra.mxu0 0.0
      %5136 = vmatprep.subr.mxu0 0.0
      %5137 = vmatpush2.msra.mxu0 0.0
      %5138 = vmatprep.subr.mxu0 0.0
      %5139 = vmatpush2.msra.mxu0 0.0
      %5140 = vmatprep.subr.mxu0 0.0
      %5141 = vmatpush2.msra.mxu0 0.0
      %5142 = vmatprep.subr.mxu0 0.0
      %5143 = vmatpush2.msra.mxu0 0.0
      %5144 = vmatprep.subr.mxu0 0.0
      %5145 = vmatpush2.msra.mxu0 0.0
      %5146 = vmatprep.subr.mxu0 0.0
      %5147 = vmatpush2.msra.mxu0 0.0
      %5148 = vmatprep.subr.mxu0 0.0
      %5149 = vmatpush2.msra.mxu0 0.0
      %5150 = vmatprep.subr.mxu0 0.0
      %5151 = vmatpush2.msra.mxu0 0.0
      %5152 = vmatprep.subr.mxu0 0.0
      %5153 = vmatpush2.msra.mxu0 0.0
      %5154 = vmatprep.subr.mxu0 0.0
      %5155 = vmatpush2.msra.mxu0 0.0
      %5156 = vmatprep.subr.mxu0 0.0
      %5157 = vmatpush2.msra.mxu0 0.0
      %5158 = vmatprep.subr.mxu0 0.0
      %5159 = vmatpush2.msra.mxu0 0.0
      %5160 = vmatprep.subr.mxu0 0.0
      %5161 = vmatpush2.msra.mxu0 0.0
      %5162 = vmatprep.subr.mxu0 0.0
      %5163 = vmatpush2.msra.mxu0 0.0
      %5164 = vmatprep.mubr.f32.mxu0 0.0
      %5165 = vmatmul.mubr.f32.gmra.mxu0 %v5051
      %v5166 = vpop.f32.mrf.mxu0
      %v5167 = vadd.f32 0.0, %v5166
      %v5168 = vpop.f32.mrf.mxu0
      %5169 = vmatprep.mubr.f32.mxu0 0.0
      %5170 = vmatmul.mubr.f32.gmra.mxu0 %v5052
      %v5171 = vpop.f32.mrf.mxu0
      %v5172 = vadd.f32 0.0, %v5171
      %v5173 = vpop.f32.mrf.mxu0
      %5174 = vmatprep.mubr.f32.mxu0 0.0
      %5175 = vmatmul.mubr.f32.gmra.mxu0 %v5053
      %v5176 = vpop.f32.mrf.mxu0
      %v5177 = vadd.f32 0.0, %v5176
      %v5178 = vpop.f32.mrf.mxu0
      %5179 = vmatprep.mubr.f32.mxu0 0.0
      %5180 = vmatmul.mubr.f32.gmra.mxu0 %v5054
      %v5181 = vpop.f32.mrf.mxu0
      %v5182 = vadd.f32 0.0, %v5181
      %v5183 = vpop.f32.mrf.mxu0
      %5184 = vmatprep.mubr.f32.mxu0 0.0
      %5185 = vmatmul.mubr.f32.gmra.mxu0 %v5055
      %v5186 = vpop.f32.mrf.mxu0
      %v5187 = vadd.f32 0.0, %v5186
      %v5188 = vpop.f32.mrf.mxu0
      %5189 = vmatprep.mubr.f32.mxu0 0.0
      %5190 = vmatmul.mubr.f32.gmra.mxu0 %v5056
      %v5191 = vpop.f32.mrf.mxu0
      %v5192 = vadd.f32 0.0, %v5191
      %v5193 = vpop.f32.mrf.mxu0
      %5194 = vmatprep.mubr.f32.mxu0 0.0
      %5195 = vmatmul.mubr.f32.gmra.mxu0 %v5057
      %v5196 = vpop.f32.mrf.mxu0
      %v5197 = vadd.f32 0.0, %v5196
      %v5198 = vpop.f32.mrf.mxu0
      %5199 = vmatprep.mubr.f32.mxu0 0.0
      %5200 = vmatmul.mubr.f32.gmra.mxu0 %v5058
      %v5201 = vpop.f32.mrf.mxu0
      %v5202 = vadd.f32 0.0, %v5201
      %v5203 = vpop.f32.mrf.mxu0
      %5204 = vmatprep.mubr.f32.mxu0 0.0
      %5205 = vmatmul.mubr.f32.gmra.mxu0 %v5059
      %v5206 = vpop.f32.mrf.mxu0
      %v5207 = vadd.f32 0.0, %v5206
      %v5208 = vpop.f32.mrf.mxu0
      %5209 = vmatprep.mubr.f32.mxu0 0.0
      %5210 = vmatmul.mubr.f32.gmra.mxu0 %v5060
      %v5211 = vpop.f32.mrf.mxu0
      %v5212 = vadd.f32 0.0, %v5211
      %v5213 = vpop.f32.mrf.mxu0
      %5214 = vmatprep.mubr.f32.mxu0 0.0
      %5215 = vmatmul.mubr.f32.gmra.mxu0 %v5061
      %v5216 = vpop.f32.mrf.mxu0
      %v5217 = vadd.f32 0.0, %v5216
      %v5218 = vpop.f32.mrf.mxu0
      %5219 = vmatprep.mubr.f32.mxu0 0.0
      %5220 = vmatmul.mubr.f32.gmra.mxu0 %v5062
      %v5221 = vpop.f32.mrf.mxu0
      %v5222 = vadd.f32 0.0, %v5221
      %v5223 = vpop.f32.mrf.mxu0
      %5224 = vmatprep.mubr.f32.mxu0 0.0
      %5225 = vmatmul.mubr.f32.gmra.mxu0 %v5063
      %v5226 = vpop.f32.mrf.mxu0
      %v5227 = vadd.f32 0.0, %v5226
      %v5228 = vpop.f32.mrf.mxu0
      %5229 = vmatprep.mubr.f32.mxu0 0.0
      %5230 = vmatmul.mubr.f32.gmra.mxu0 %v5064
      %v5231 = vpop.f32.mrf.mxu0
      %v5232 = vadd.f32 0.0, %v5231
      %v5233 = vpop.f32.mrf.mxu0
      %5234 = vmatprep.mubr.f32.mxu0 0.0
      %5235 = vmatmul.mubr.f32.gmra.mxu0 %v5065
      %v5236 = vpop.f32.mrf.mxu0
      %v5237 = vadd.f32 0.0, %v5236
      %v5238 = vpop.f32.mrf.mxu0
      %5239 = vmatprep.mubr.f32.mxu0 0.0
      %5240 = vmatmul.mubr.f32.gmra.mxu0 %v5066
      %v5241 = vpop.f32.mrf.mxu0
      %v5242 = vadd.f32 0.0, %v5241
      %v5243 = vpop.f32.mrf.mxu0
      %5244 = vmatprep.mubr.f32.mxu0 0.0
      %5245 = vmatmul.mubr.f32.gmra.mxu0 %v5067
      %v5246 = vpop.f32.mrf.mxu0
      %v5247 = vadd.f32 0.0, %v5246
      %v5248 = vpop.f32.mrf.mxu0
      %5249 = vmatprep.mubr.f32.mxu0 0.0
      %5250 = vmatmul.mubr.f32.gmra.mxu0 %v5068
      %v5251 = vpop.f32.mrf.mxu0
      %v5252 = vadd.f32 0.0, %v5251
      %v5253 = vpop.f32.mrf.mxu0
      %5254 = vmatprep.mubr.f32.mxu0 0.0
      %5255 = vmatmul.mubr.f32.gmra.mxu0 %v5069
      %v5256 = vpop.f32.mrf.mxu0
      %v5257 = vadd.f32 0.0, %v5256
      %v5258 = vpop.f32.mrf.mxu0
      %5259 = vmatprep.mubr.f32.mxu0 0.0
      %5260 = vmatmul.mubr.f32.gmra.mxu0 %v5070
      %v5261 = vpop.f32.mrf.mxu0
      %v5262 = vadd.f32 0.0, %v5261
      %v5263 = vpop.f32.mrf.mxu0
      %5264 = vmatprep.mubr.f32.mxu0 0.0
      %5265 = vmatmul.mubr.f32.gmra.mxu0 %v5071
      %v5266 = vpop.f32.mrf.mxu0
      %v5267 = vadd.f32 0.0, %v5266
      %v5268 = vpop.f32.mrf.mxu0
      %5269 = vmatprep.mubr.f32.mxu0 0.0
      %5270 = vmatmul.mubr.f32.gmra.mxu0 %v5072
      %v5271 = vpop.f32.mrf.mxu0
      %v5272 = vadd.f32 0.0, %v5271
      %v5273 = vpop.f32.mrf.mxu0
      %5274 = vmatprep.mubr.f32.mxu0 0.0
      %5275 = vmatmul.mubr.f32.gmra.mxu0 %v5073
      %v5276 = vpop.f32.mrf.mxu0
      %v5277 = vadd.f32 0.0, %v5276
      %v5278 = vpop.f32.mrf.mxu0
      %5279 = vmatprep.mubr.f32.mxu0 0.0
      %5280 = vmatmul.mubr.f32.gmra.mxu0 %v5074
      %v5281 = vpop.f32.mrf.mxu0
      %v5282 = vadd.f32 0.0, %v5281
      %v5283 = vpop.f32.mrf.mxu0
      %5284 = vmatprep.mubr.f32.mxu0 0.0
      %5285 = vmatmul.mubr.f32.gmra.mxu0 %v5075
      %v5286 = vpop.f32.mrf.mxu0
      %v5287 = vadd.f32 0.0, %v5286
      %v5288 = vpop.f32.mrf.mxu0
      %5289 = vmatprep.mubr.f32.mxu0 0.0
      %5290 = vmatmul.mubr.f32.gmra.mxu0 %v5076
      %v5291 = vpop.f32.mrf.mxu0
      %v5292 = vadd.f32 0.0, %v5291
      %v5293 = vpop.f32.mrf.mxu0
      %5294 = vmatprep.mubr.f32.mxu0 0.0
      %5295 = vmatmul.mubr.f32.gmra.mxu0 %v5077
      %v5296 = vpop.f32.mrf.mxu0
      %v5297 = vadd.f32 0.0, %v5296
      %v5298 = vpop.f32.mrf.mxu0
      %5299 = vmatprep.mubr.f32.mxu0 0.0
      %5300 = vmatmul.mubr.f32.gmra.mxu0 %v5078
      %v5301 = vpop.f32.mrf.mxu0
      %v5302 = vadd.f32 0.0, %v5301
      %v5303 = vpop.f32.mrf.mxu0
      %5304 = vmatprep.mubr.f32.mxu0 0.0
      %5305 = vmatmul.mubr.f32.gmra.mxu0 %v5079
      %v5306 = vpop.f32.mrf.mxu0
      %v5307 = vadd.f32 0.0, %v5306
      %v5308 = vpop.f32.mrf.mxu0
      %5309 = vmatprep.mubr.f32.mxu0 0.0
      %5310 = vmatmul.mubr.f32.gmra.mxu0 %v5080
      %v5311 = vpop.f32.mrf.mxu0
      %v5312 = vadd.f32 0.0, %v5311
      %v5313 = vpop.f32.mrf.mxu0
      %5314 = vmatprep.mubr.f32.mxu0 0.0
      %5315 = vmatmul.mubr.f32.gmra.mxu0 %v5081
      %v5316 = vpop.f32.mrf.mxu0
      %v5317 = vadd.f32 0.0, %v5316
      %v5318 = vpop.f32.mrf.mxu0
      %5319 = vmatprep.mubr.f32.mxu0 0.0
      %5320 = vmatmul.mubr.f32.gmra.mxu0 %v5082
      %v5321 = vpop.f32.mrf.mxu0
      %v5322 = vadd.f32 0.0, %v5321
      %v5323 = vpop.f32.mrf.mxu0
      %5324 = vdwg.mxu0
      %v5325 = vadd.f32 %v5019, %v5167
      %v5326 = vadd.f32 %v5020, %v5172
      %v5327 = vadd.f32 %v5021, %v5177
      %v5328 = vadd.f32 %v5022, %v5182
      %v5329 = vadd.f32 %v5023, %v5187
      %v5330 = vadd.f32 %v5024, %v5192
      %v5331 = vadd.f32 %v5025, %v5197
      %v5332 = vadd.f32 %v5026, %v5202
      %v5333 = vadd.f32 %v5027, %v5207
      %v5334 = vadd.f32 %v5028, %v5212
      %v5335 = vadd.f32 %v5029, %v5217
      %v5336 = vadd.f32 %v5030, %v5222
      %v5337 = vadd.f32 %v5031, %v5227
      %v5338 = vadd.f32 %v5032, %v5232
      %v5339 = vadd.f32 %v5033, %v5237
      %v5340 = vadd.f32 %v5034, %v5242
      %v5341 = vadd.f32 %v5035, %v5247
      %v5342 = vadd.f32 %v5036, %v5252
      %v5343 = vadd.f32 %v5037, %v5257
      %v5344 = vadd.f32 %v5038, %v5262
      %v5345 = vadd.f32 %v5039, %v5267
      %v5346 = vadd.f32 %v5040, %v5272
      %v5347 = vadd.f32 %v5041, %v5277
      %v5348 = vadd.f32 %v5042, %v5282
      %v5349 = vadd.f32 %v5043, %v5287
      %v5350 = vadd.f32 %v5044, %v5292
      %v5351 = vadd.f32 %v5045, %v5297
      %v5352 = vadd.f32 %v5046, %v5302
      %v5353 = vadd.f32 %v5047, %v5307
      %v5354 = vadd.f32 %v5048, %v5312
      %v5355 = vadd.f32 %v5049, %v5317
      %v5356 = vadd.f32 %v5050, %v5322
      %v5357 = vld [vmem:[#allocation2 + $0x21] sm:$0xff]
      %v5358 = vld [vmem:[#allocation2 + $0x29] sm:$0xff]
      %v5359 = vld [vmem:[#allocation2 + $0x31] sm:$0xff]
      %v5360 = vld [vmem:[#allocation2 + $0x39] sm:$0xff]
      %v5361 = vld [vmem:[#allocation2 + $0x41] sm:$0xff]
      %v5362 = vld [vmem:[#allocation2 + $0x49] sm:$0xff]
      %v5363 = vld [vmem:[#allocation2 + $0x51] sm:$0xff]
      %v5364 = vld [vmem:[#allocation2 + $0x59] sm:$0xff]
      %v5365 = vld [vmem:[#allocation2 + $0x61] sm:$0xff]
      %v5366 = vld [vmem:[#allocation2 + $0x69] sm:$0xff]
      %v5367 = vld [vmem:[#allocation2 + $0x71] sm:$0xff]
      %v5368 = vld [vmem:[#allocation2 + $0x79] sm:$0xff]
      %v5369 = vld [vmem:[#allocation2 + $0x81] sm:$0xff]
      %v5370 = vld [vmem:[#allocation2 + $0x89] sm:$0xff]
      %v5371 = vld [vmem:[#allocation2 + $0x91] sm:$0xff]
      %v5372 = vld [vmem:[#allocation2 + $0x99] sm:$0xff]
      %v5373 = vld [vmem:[#allocation2 + $0xa1] sm:$0xff]
      %v5374 = vld [vmem:[#allocation2 + $0xa9] sm:$0xff]
      %v5375 = vld [vmem:[#allocation2 + $0xb1] sm:$0xff]
      %v5376 = vld [vmem:[#allocation2 + $0xb9] sm:$0xff]
      %v5377 = vld [vmem:[#allocation2 + $0xc1] sm:$0xff]
      %v5378 = vld [vmem:[#allocation2 + $0xc9] sm:$0xff]
      %v5379 = vld [vmem:[#allocation2 + $0xd1] sm:$0xff]
      %v5380 = vld [vmem:[#allocation2 + $0xd9] sm:$0xff]
      %v5381 = vld [vmem:[#allocation2 + $0xe1] sm:$0xff]
      %v5382 = vld [vmem:[#allocation2 + $0xe9] sm:$0xff]
      %v5383 = vld [vmem:[#allocation2 + $0xf1] sm:$0xff]
      %v5384 = vld [vmem:[#allocation2 + $0xf9] sm:$0xff]
      %v5385 = vld [vmem:[#allocation2 + $0x101] sm:$0xff]
      %v5386 = vld [vmem:[#allocation2 + $0x109] sm:$0xff]
      %v5387 = vld [vmem:[#allocation2 + $0x111] sm:$0xff]
      %v5388 = vld [vmem:[#allocation2 + $0x119] sm:$0xff]
      %s5389 = scalar_lea.vmem %s3, 896
      %v5390 = vld [vmem:[%s5389] sm:$0xff]
      %v5391 = vld [vmem:[%s5389 + $0x8] sm:$0xff]
      %v5392 = vld [vmem:[%s5389 + $0x10] sm:$0xff]
      %v5393 = vld [vmem:[%s5389 + $0x18] sm:$0xff]
      %v5394 = vld [vmem:[%s5389 + $0x20] sm:$0xff]
      %v5395 = vld [vmem:[%s5389 + $0x28] sm:$0xff]
      %v5396 = vld [vmem:[%s5389 + $0x30] sm:$0xff]
      %v5397 = vld [vmem:[%s5389 + $0x38] sm:$0xff]
      %v5398 = vld [vmem:[%s5389 + $0x40] sm:$0xff]
      %v5399 = vld [vmem:[%s5389 + $0x48] sm:$0xff]
      %v5400 = vld [vmem:[%s5389 + $0x50] sm:$0xff]
      %v5401 = vld [vmem:[%s5389 + $0x58] sm:$0xff]
      %v5402 = vld [vmem:[%s5389 + $0x60] sm:$0xff]
      %v5403 = vld [vmem:[%s5389 + $0x68] sm:$0xff]
      %v5404 = vld [vmem:[%s5389 + $0x70] sm:$0xff]
      %v5405 = vld [vmem:[%s5389 + $0x78] sm:$0xff]
      %5406 = vmatprep.subr.mxu0 0.0
      %5407 = vmatpush1.msra.mxu0 %v5405
      %5408 = vmatprep.subr.mxu0 0.0
      %5409 = vmatpush1.msra.mxu0 %v5404
      %5410 = vmatprep.subr.mxu0 0.0
      %5411 = vmatpush1.msra.mxu0 %v5403
      %5412 = vmatprep.subr.mxu0 0.0
      %5413 = vmatpush1.msra.mxu0 %v5402
      %5414 = vmatprep.subr.mxu0 0.0
      %5415 = vmatpush1.msra.mxu0 %v5401
      %5416 = vmatprep.subr.mxu0 0.0
      %5417 = vmatpush1.msra.mxu0 %v5400
      %5418 = vmatprep.subr.mxu0 0.0
      %5419 = vmatpush1.msra.mxu0 %v5399
      %5420 = vmatprep.subr.mxu0 0.0
      %5421 = vmatpush1.msra.mxu0 %v5398
      %5422 = vmatprep.subr.mxu0 0.0
      %5423 = vmatpush1.msra.mxu0 %v5397
      %5424 = vmatprep.subr.mxu0 0.0
      %5425 = vmatpush1.msra.mxu0 %v5396
      %5426 = vmatprep.subr.mxu0 0.0
      %5427 = vmatpush1.msra.mxu0 %v5395
      %5428 = vmatprep.subr.mxu0 0.0
      %5429 = vmatpush1.msra.mxu0 %v5394
      %5430 = vmatprep.subr.mxu0 0.0
      %5431 = vmatpush1.msra.mxu0 %v5393
      %5432 = vmatprep.subr.mxu0 0.0
      %5433 = vmatpush1.msra.mxu0 %v5392
      %5434 = vmatprep.subr.mxu0 0.0
      %5435 = vmatpush1.msra.mxu0 %v5391
      %5436 = vmatprep.subr.mxu0 0.0
      %5437 = vmatpush1.msra.mxu0 %v5390
      %5438 = vmatprep.subr.mxu0 0.0
      %5439 = vmatpush2.msra.mxu0 0.0
      %5440 = vmatprep.subr.mxu0 0.0
      %5441 = vmatpush2.msra.mxu0 0.0
      %5442 = vmatprep.subr.mxu0 0.0
      %5443 = vmatpush2.msra.mxu0 0.0
      %5444 = vmatprep.subr.mxu0 0.0
      %5445 = vmatpush2.msra.mxu0 0.0
      %5446 = vmatprep.subr.mxu0 0.0
      %5447 = vmatpush2.msra.mxu0 0.0
      %5448 = vmatprep.subr.mxu0 0.0
      %5449 = vmatpush2.msra.mxu0 0.0
      %5450 = vmatprep.subr.mxu0 0.0
      %5451 = vmatpush2.msra.mxu0 0.0
      %5452 = vmatprep.subr.mxu0 0.0
      %5453 = vmatpush2.msra.mxu0 0.0
      %5454 = vmatprep.subr.mxu0 0.0
      %5455 = vmatpush2.msra.mxu0 0.0
      %5456 = vmatprep.subr.mxu0 0.0
      %5457 = vmatpush2.msra.mxu0 0.0
      %5458 = vmatprep.subr.mxu0 0.0
      %5459 = vmatpush2.msra.mxu0 0.0
      %5460 = vmatprep.subr.mxu0 0.0
      %5461 = vmatpush2.msra.mxu0 0.0
      %5462 = vmatprep.subr.mxu0 0.0
      %5463 = vmatpush2.msra.mxu0 0.0
      %5464 = vmatprep.subr.mxu0 0.0
      %5465 = vmatpush2.msra.mxu0 0.0
      %5466 = vmatprep.subr.mxu0 0.0
      %5467 = vmatpush2.msra.mxu0 0.0
      %5468 = vmatprep.subr.mxu0 0.0
      %5469 = vmatpush2.msra.mxu0 0.0
      %5470 = vmatprep.mubr.f32.mxu0 0.0
      %5471 = vmatmul.mubr.f32.gmra.mxu0 %v5357
      %v5472 = vpop.f32.mrf.mxu0
      %v5473 = vadd.f32 0.0, %v5472
      %v5474 = vpop.f32.mrf.mxu0
      %5475 = vmatprep.mubr.f32.mxu0 0.0
      %5476 = vmatmul.mubr.f32.gmra.mxu0 %v5358
      %v5477 = vpop.f32.mrf.mxu0
      %v5478 = vadd.f32 0.0, %v5477
      %v5479 = vpop.f32.mrf.mxu0
      %5480 = vmatprep.mubr.f32.mxu0 0.0
      %5481 = vmatmul.mubr.f32.gmra.mxu0 %v5359
      %v5482 = vpop.f32.mrf.mxu0
      %v5483 = vadd.f32 0.0, %v5482
      %v5484 = vpop.f32.mrf.mxu0
      %5485 = vmatprep.mubr.f32.mxu0 0.0
      %5486 = vmatmul.mubr.f32.gmra.mxu0 %v5360
      %v5487 = vpop.f32.mrf.mxu0
      %v5488 = vadd.f32 0.0, %v5487
      %v5489 = vpop.f32.mrf.mxu0
      %5490 = vmatprep.mubr.f32.mxu0 0.0
      %5491 = vmatmul.mubr.f32.gmra.mxu0 %v5361
      %v5492 = vpop.f32.mrf.mxu0
      %v5493 = vadd.f32 0.0, %v5492
      %v5494 = vpop.f32.mrf.mxu0
      %5495 = vmatprep.mubr.f32.mxu0 0.0
      %5496 = vmatmul.mubr.f32.gmra.mxu0 %v5362
      %v5497 = vpop.f32.mrf.mxu0
      %v5498 = vadd.f32 0.0, %v5497
      %v5499 = vpop.f32.mrf.mxu0
      %5500 = vmatprep.mubr.f32.mxu0 0.0
      %5501 = vmatmul.mubr.f32.gmra.mxu0 %v5363
      %v5502 = vpop.f32.mrf.mxu0
      %v5503 = vadd.f32 0.0, %v5502
      %v5504 = vpop.f32.mrf.mxu0
      %5505 = vmatprep.mubr.f32.mxu0 0.0
      %5506 = vmatmul.mubr.f32.gmra.mxu0 %v5364
      %v5507 = vpop.f32.mrf.mxu0
      %v5508 = vadd.f32 0.0, %v5507
      %v5509 = vpop.f32.mrf.mxu0
      %5510 = vmatprep.mubr.f32.mxu0 0.0
      %5511 = vmatmul.mubr.f32.gmra.mxu0 %v5365
      %v5512 = vpop.f32.mrf.mxu0
      %v5513 = vadd.f32 0.0, %v5512
      %v5514 = vpop.f32.mrf.mxu0
      %5515 = vmatprep.mubr.f32.mxu0 0.0
      %5516 = vmatmul.mubr.f32.gmra.mxu0 %v5366
      %v5517 = vpop.f32.mrf.mxu0
      %v5518 = vadd.f32 0.0, %v5517
      %v5519 = vpop.f32.mrf.mxu0
      %5520 = vmatprep.mubr.f32.mxu0 0.0
      %5521 = vmatmul.mubr.f32.gmra.mxu0 %v5367
      %v5522 = vpop.f32.mrf.mxu0
      %v5523 = vadd.f32 0.0, %v5522
      %v5524 = vpop.f32.mrf.mxu0
      %5525 = vmatprep.mubr.f32.mxu0 0.0
      %5526 = vmatmul.mubr.f32.gmra.mxu0 %v5368
      %v5527 = vpop.f32.mrf.mxu0
      %v5528 = vadd.f32 0.0, %v5527
      %v5529 = vpop.f32.mrf.mxu0
      %5530 = vmatprep.mubr.f32.mxu0 0.0
      %5531 = vmatmul.mubr.f32.gmra.mxu0 %v5369
      %v5532 = vpop.f32.mrf.mxu0
      %v5533 = vadd.f32 0.0, %v5532
      %v5534 = vpop.f32.mrf.mxu0
      %5535 = vmatprep.mubr.f32.mxu0 0.0
      %5536 = vmatmul.mubr.f32.gmra.mxu0 %v5370
      %v5537 = vpop.f32.mrf.mxu0
      %v5538 = vadd.f32 0.0, %v5537
      %v5539 = vpop.f32.mrf.mxu0
      %5540 = vmatprep.mubr.f32.mxu0 0.0
      %5541 = vmatmul.mubr.f32.gmra.mxu0 %v5371
      %v5542 = vpop.f32.mrf.mxu0
      %v5543 = vadd.f32 0.0, %v5542
      %v5544 = vpop.f32.mrf.mxu0
      %5545 = vmatprep.mubr.f32.mxu0 0.0
      %5546 = vmatmul.mubr.f32.gmra.mxu0 %v5372
      %v5547 = vpop.f32.mrf.mxu0
      %v5548 = vadd.f32 0.0, %v5547
      %v5549 = vpop.f32.mrf.mxu0
      %5550 = vmatprep.mubr.f32.mxu0 0.0
      %5551 = vmatmul.mubr.f32.gmra.mxu0 %v5373
      %v5552 = vpop.f32.mrf.mxu0
      %v5553 = vadd.f32 0.0, %v5552
      %v5554 = vpop.f32.mrf.mxu0
      %5555 = vmatprep.mubr.f32.mxu0 0.0
      %5556 = vmatmul.mubr.f32.gmra.mxu0 %v5374
      %v5557 = vpop.f32.mrf.mxu0
      %v5558 = vadd.f32 0.0, %v5557
      %v5559 = vpop.f32.mrf.mxu0
      %5560 = vmatprep.mubr.f32.mxu0 0.0
      %5561 = vmatmul.mubr.f32.gmra.mxu0 %v5375
      %v5562 = vpop.f32.mrf.mxu0
      %v5563 = vadd.f32 0.0, %v5562
      %v5564 = vpop.f32.mrf.mxu0
      %5565 = vmatprep.mubr.f32.mxu0 0.0
      %5566 = vmatmul.mubr.f32.gmra.mxu0 %v5376
      %v5567 = vpop.f32.mrf.mxu0
      %v5568 = vadd.f32 0.0, %v5567
      %v5569 = vpop.f32.mrf.mxu0
      %5570 = vmatprep.mubr.f32.mxu0 0.0
      %5571 = vmatmul.mubr.f32.gmra.mxu0 %v5377
      %v5572 = vpop.f32.mrf.mxu0
      %v5573 = vadd.f32 0.0, %v5572
      %v5574 = vpop.f32.mrf.mxu0
      %5575 = vmatprep.mubr.f32.mxu0 0.0
      %5576 = vmatmul.mubr.f32.gmra.mxu0 %v5378
      %v5577 = vpop.f32.mrf.mxu0
      %v5578 = vadd.f32 0.0, %v5577
      %v5579 = vpop.f32.mrf.mxu0
      %5580 = vmatprep.mubr.f32.mxu0 0.0
      %5581 = vmatmul.mubr.f32.gmra.mxu0 %v5379
      %v5582 = vpop.f32.mrf.mxu0
      %v5583 = vadd.f32 0.0, %v5582
      %v5584 = vpop.f32.mrf.mxu0
      %5585 = vmatprep.mubr.f32.mxu0 0.0
      %5586 = vmatmul.mubr.f32.gmra.mxu0 %v5380
      %v5587 = vpop.f32.mrf.mxu0
      %v5588 = vadd.f32 0.0, %v5587
      %v5589 = vpop.f32.mrf.mxu0
      %5590 = vmatprep.mubr.f32.mxu0 0.0
      %5591 = vmatmul.mubr.f32.gmra.mxu0 %v5381
      %v5592 = vpop.f32.mrf.mxu0
      %v5593 = vadd.f32 0.0, %v5592
      %v5594 = vpop.f32.mrf.mxu0
      %5595 = vmatprep.mubr.f32.mxu0 0.0
      %5596 = vmatmul.mubr.f32.gmra.mxu0 %v5382
      %v5597 = vpop.f32.mrf.mxu0
      %v5598 = vadd.f32 0.0, %v5597
      %v5599 = vpop.f32.mrf.mxu0
      %5600 = vmatprep.mubr.f32.mxu0 0.0
      %5601 = vmatmul.mubr.f32.gmra.mxu0 %v5383
      %v5602 = vpop.f32.mrf.mxu0
      %v5603 = vadd.f32 0.0, %v5602
      %v5604 = vpop.f32.mrf.mxu0
      %5605 = vmatprep.mubr.f32.mxu0 0.0
      %5606 = vmatmul.mubr.f32.gmra.mxu0 %v5384
      %v5607 = vpop.f32.mrf.mxu0
      %v5608 = vadd.f32 0.0, %v5607
      %v5609 = vpop.f32.mrf.mxu0
      %5610 = vmatprep.mubr.f32.mxu0 0.0
      %5611 = vmatmul.mubr.f32.gmra.mxu0 %v5385
      %v5612 = vpop.f32.mrf.mxu0
      %v5613 = vadd.f32 0.0, %v5612
      %v5614 = vpop.f32.mrf.mxu0
      %5615 = vmatprep.mubr.f32.mxu0 0.0
      %5616 = vmatmul.mubr.f32.gmra.mxu0 %v5386
      %v5617 = vpop.f32.mrf.mxu0
      %v5618 = vadd.f32 0.0, %v5617
      %v5619 = vpop.f32.mrf.mxu0
      %5620 = vmatprep.mubr.f32.mxu0 0.0
      %5621 = vmatmul.mubr.f32.gmra.mxu0 %v5387
      %v5622 = vpop.f32.mrf.mxu0
      %v5623 = vadd.f32 0.0, %v5622
      %v5624 = vpop.f32.mrf.mxu0
      %5625 = vmatprep.mubr.f32.mxu0 0.0
      %5626 = vmatmul.mubr.f32.gmra.mxu0 %v5388
      %v5627 = vpop.f32.mrf.mxu0
      %v5628 = vadd.f32 0.0, %v5627
      %v5629 = vpop.f32.mrf.mxu0
      %5630 = vdwg.mxu0
      %v5631 = vadd.f32 %v5325, %v5473
      %v5632 = vadd.f32 %v5326, %v5478
      %v5633 = vadd.f32 %v5327, %v5483
      %v5634 = vadd.f32 %v5328, %v5488
      %v5635 = vadd.f32 %v5329, %v5493
      %v5636 = vadd.f32 %v5330, %v5498
      %v5637 = vadd.f32 %v5331, %v5503
      %v5638 = vadd.f32 %v5332, %v5508
      %v5639 = vadd.f32 %v5333, %v5513
      %v5640 = vadd.f32 %v5334, %v5518
      %v5641 = vadd.f32 %v5335, %v5523
      %v5642 = vadd.f32 %v5336, %v5528
      %v5643 = vadd.f32 %v5337, %v5533
      %v5644 = vadd.f32 %v5338, %v5538
      %v5645 = vadd.f32 %v5339, %v5543
      %v5646 = vadd.f32 %v5340, %v5548
      %v5647 = vadd.f32 %v5341, %v5553
      %v5648 = vadd.f32 %v5342, %v5558
      %v5649 = vadd.f32 %v5343, %v5563
      %v5650 = vadd.f32 %v5344, %v5568
      %v5651 = vadd.f32 %v5345, %v5573
      %v5652 = vadd.f32 %v5346, %v5578
      %v5653 = vadd.f32 %v5347, %v5583
      %v5654 = vadd.f32 %v5348, %v5588
      %v5655 = vadd.f32 %v5349, %v5593
      %v5656 = vadd.f32 %v5350, %v5598
      %v5657 = vadd.f32 %v5351, %v5603
      %v5658 = vadd.f32 %v5352, %v5608
      %v5659 = vadd.f32 %v5353, %v5613
      %v5660 = vadd.f32 %v5354, %v5618
      %v5661 = vadd.f32 %v5355, %v5623
      %v5662 = vadd.f32 %v5356, %v5628
      %v5663 = vld [vmem:[#allocation2 + $0x22] sm:$0xff]
      %v5664 = vld [vmem:[#allocation2 + $0x2a] sm:$0xff]
      %v5665 = vld [vmem:[#allocation2 + $0x32] sm:$0xff]
      %v5666 = vld [vmem:[#allocation2 + $0x3a] sm:$0xff]
      %v5667 = vld [vmem:[#allocation2 + $0x42] sm:$0xff]
      %v5668 = vld [vmem:[#allocation2 + $0x4a] sm:$0xff]
      %v5669 = vld [vmem:[#allocation2 + $0x52] sm:$0xff]
      %v5670 = vld [vmem:[#allocation2 + $0x5a] sm:$0xff]
      %v5671 = vld [vmem:[#allocation2 + $0x62] sm:$0xff]
      %v5672 = vld [vmem:[#allocation2 + $0x6a] sm:$0xff]
      %v5673 = vld [vmem:[#allocation2 + $0x72] sm:$0xff]
      %v5674 = vld [vmem:[#allocation2 + $0x7a] sm:$0xff]
      %v5675 = vld [vmem:[#allocation2 + $0x82] sm:$0xff]
      %v5676 = vld [vmem:[#allocation2 + $0x8a] sm:$0xff]
      %v5677 = vld [vmem:[#allocation2 + $0x92] sm:$0xff]
      %v5678 = vld [vmem:[#allocation2 + $0x9a] sm:$0xff]
      %v5679 = vld [vmem:[#allocation2 + $0xa2] sm:$0xff]
      %v5680 = vld [vmem:[#allocation2 + $0xaa] sm:$0xff]
      %v5681 = vld [vmem:[#allocation2 + $0xb2] sm:$0xff]
      %v5682 = vld [vmem:[#allocation2 + $0xba] sm:$0xff]
      %v5683 = vld [vmem:[#allocation2 + $0xc2] sm:$0xff]
      %v5684 = vld [vmem:[#allocation2 + $0xca] sm:$0xff]
      %v5685 = vld [vmem:[#allocation2 + $0xd2] sm:$0xff]
      %v5686 = vld [vmem:[#allocation2 + $0xda] sm:$0xff]
      %v5687 = vld [vmem:[#allocation2 + $0xe2] sm:$0xff]
      %v5688 = vld [vmem:[#allocation2 + $0xea] sm:$0xff]
      %v5689 = vld [vmem:[#allocation2 + $0xf2] sm:$0xff]
      %v5690 = vld [vmem:[#allocation2 + $0xfa] sm:$0xff]
      %v5691 = vld [vmem:[#allocation2 + $0x102] sm:$0xff]
      %v5692 = vld [vmem:[#allocation2 + $0x10a] sm:$0xff]
      %v5693 = vld [vmem:[#allocation2 + $0x112] sm:$0xff]
      %v5694 = vld [vmem:[#allocation2 + $0x11a] sm:$0xff]
      %s5695 = scalar_lea.vmem %s3, 1024
      %v5696 = vld [vmem:[%s5695] sm:$0xff]
      %v5697 = vld [vmem:[%s5695 + $0x8] sm:$0xff]
      %v5698 = vld [vmem:[%s5695 + $0x10] sm:$0xff]
      %v5699 = vld [vmem:[%s5695 + $0x18] sm:$0xff]
      %v5700 = vld [vmem:[%s5695 + $0x20] sm:$0xff]
      %v5701 = vld [vmem:[%s5695 + $0x28] sm:$0xff]
      %v5702 = vld [vmem:[%s5695 + $0x30] sm:$0xff]
      %v5703 = vld [vmem:[%s5695 + $0x38] sm:$0xff]
      %v5704 = vld [vmem:[%s5695 + $0x40] sm:$0xff]
      %v5705 = vld [vmem:[%s5695 + $0x48] sm:$0xff]
      %v5706 = vld [vmem:[%s5695 + $0x50] sm:$0xff]
      %v5707 = vld [vmem:[%s5695 + $0x58] sm:$0xff]
      %v5708 = vld [vmem:[%s5695 + $0x60] sm:$0xff]
      %v5709 = vld [vmem:[%s5695 + $0x68] sm:$0xff]
      %v5710 = vld [vmem:[%s5695 + $0x70] sm:$0xff]
      %v5711 = vld [vmem:[%s5695 + $0x78] sm:$0xff]
      %5712 = vmatprep.subr.mxu0 0.0
      %5713 = vmatpush1.msra.mxu0 %v5711
      %5714 = vmatprep.subr.mxu0 0.0
      %5715 = vmatpush1.msra.mxu0 %v5710
      %5716 = vmatprep.subr.mxu0 0.0
      %5717 = vmatpush1.msra.mxu0 %v5709
      %5718 = vmatprep.subr.mxu0 0.0
      %5719 = vmatpush1.msra.mxu0 %v5708
      %5720 = vmatprep.subr.mxu0 0.0
      %5721 = vmatpush1.msra.mxu0 %v5707
      %5722 = vmatprep.subr.mxu0 0.0
      %5723 = vmatpush1.msra.mxu0 %v5706
      %5724 = vmatprep.subr.mxu0 0.0
      %5725 = vmatpush1.msra.mxu0 %v5705
      %5726 = vmatprep.subr.mxu0 0.0
      %5727 = vmatpush1.msra.mxu0 %v5704
      %5728 = vmatprep.subr.mxu0 0.0
      %5729 = vmatpush1.msra.mxu0 %v5703
      %5730 = vmatprep.subr.mxu0 0.0
      %5731 = vmatpush1.msra.mxu0 %v5702
      %5732 = vmatprep.subr.mxu0 0.0
      %5733 = vmatpush1.msra.mxu0 %v5701
      %5734 = vmatprep.subr.mxu0 0.0
      %5735 = vmatpush1.msra.mxu0 %v5700
      %5736 = vmatprep.subr.mxu0 0.0
      %5737 = vmatpush1.msra.mxu0 %v5699
      %5738 = vmatprep.subr.mxu0 0.0
      %5739 = vmatpush1.msra.mxu0 %v5698
      %5740 = vmatprep.subr.mxu0 0.0
      %5741 = vmatpush1.msra.mxu0 %v5697
      %5742 = vmatprep.subr.mxu0 0.0
      %5743 = vmatpush1.msra.mxu0 %v5696
      %5744 = vmatprep.subr.mxu0 0.0
      %5745 = vmatpush2.msra.mxu0 0.0
      %5746 = vmatprep.subr.mxu0 0.0
      %5747 = vmatpush2.msra.mxu0 0.0
      %5748 = vmatprep.subr.mxu0 0.0
      %5749 = vmatpush2.msra.mxu0 0.0
      %5750 = vmatprep.subr.mxu0 0.0
      %5751 = vmatpush2.msra.mxu0 0.0
      %5752 = vmatprep.subr.mxu0 0.0
      %5753 = vmatpush2.msra.mxu0 0.0
      %5754 = vmatprep.subr.mxu0 0.0
      %5755 = vmatpush2.msra.mxu0 0.0
      %5756 = vmatprep.subr.mxu0 0.0
      %5757 = vmatpush2.msra.mxu0 0.0
      %5758 = vmatprep.subr.mxu0 0.0
      %5759 = vmatpush2.msra.mxu0 0.0
      %5760 = vmatprep.subr.mxu0 0.0
      %5761 = vmatpush2.msra.mxu0 0.0
      %5762 = vmatprep.subr.mxu0 0.0
      %5763 = vmatpush2.msra.mxu0 0.0
      %5764 = vmatprep.subr.mxu0 0.0
      %5765 = vmatpush2.msra.mxu0 0.0
      %5766 = vmatprep.subr.mxu0 0.0
      %5767 = vmatpush2.msra.mxu0 0.0
      %5768 = vmatprep.subr.mxu0 0.0
      %5769 = vmatpush2.msra.mxu0 0.0
      %5770 = vmatprep.subr.mxu0 0.0
      %5771 = vmatpush2.msra.mxu0 0.0
      %5772 = vmatprep.subr.mxu0 0.0
      %5773 = vmatpush2.msra.mxu0 0.0
      %5774 = vmatprep.subr.mxu0 0.0
      %5775 = vmatpush2.msra.mxu0 0.0
      %5776 = vmatprep.mubr.f32.mxu0 0.0
      %5777 = vmatmul.mubr.f32.gmra.mxu0 %v5663
      %v5778 = vpop.f32.mrf.mxu0
      %v5779 = vadd.f32 0.0, %v5778
      %v5780 = vpop.f32.mrf.mxu0
      %5781 = vmatprep.mubr.f32.mxu0 0.0
      %5782 = vmatmul.mubr.f32.gmra.mxu0 %v5664
      %v5783 = vpop.f32.mrf.mxu0
      %v5784 = vadd.f32 0.0, %v5783
      %v5785 = vpop.f32.mrf.mxu0
      %5786 = vmatprep.mubr.f32.mxu0 0.0
      %5787 = vmatmul.mubr.f32.gmra.mxu0 %v5665
      %v5788 = vpop.f32.mrf.mxu0
      %v5789 = vadd.f32 0.0, %v5788
      %v5790 = vpop.f32.mrf.mxu0
      %5791 = vmatprep.mubr.f32.mxu0 0.0
      %5792 = vmatmul.mubr.f32.gmra.mxu0 %v5666
      %v5793 = vpop.f32.mrf.mxu0
      %v5794 = vadd.f32 0.0, %v5793
      %v5795 = vpop.f32.mrf.mxu0
      %5796 = vmatprep.mubr.f32.mxu0 0.0
      %5797 = vmatmul.mubr.f32.gmra.mxu0 %v5667
      %v5798 = vpop.f32.mrf.mxu0
      %v5799 = vadd.f32 0.0, %v5798
      %v5800 = vpop.f32.mrf.mxu0
      %5801 = vmatprep.mubr.f32.mxu0 0.0
      %5802 = vmatmul.mubr.f32.gmra.mxu0 %v5668
      %v5803 = vpop.f32.mrf.mxu0
      %v5804 = vadd.f32 0.0, %v5803
      %v5805 = vpop.f32.mrf.mxu0
      %5806 = vmatprep.mubr.f32.mxu0 0.0
      %5807 = vmatmul.mubr.f32.gmra.mxu0 %v5669
      %v5808 = vpop.f32.mrf.mxu0
      %v5809 = vadd.f32 0.0, %v5808
      %v5810 = vpop.f32.mrf.mxu0
      %5811 = vmatprep.mubr.f32.mxu0 0.0
      %5812 = vmatmul.mubr.f32.gmra.mxu0 %v5670
      %v5813 = vpop.f32.mrf.mxu0
      %v5814 = vadd.f32 0.0, %v5813
      %v5815 = vpop.f32.mrf.mxu0
      %5816 = vmatprep.mubr.f32.mxu0 0.0
      %5817 = vmatmul.mubr.f32.gmra.mxu0 %v5671
      %v5818 = vpop.f32.mrf.mxu0
      %v5819 = vadd.f32 0.0, %v5818
      %v5820 = vpop.f32.mrf.mxu0
      %5821 = vmatprep.mubr.f32.mxu0 0.0
      %5822 = vmatmul.mubr.f32.gmra.mxu0 %v5672
      %v5823 = vpop.f32.mrf.mxu0
      %v5824 = vadd.f32 0.0, %v5823
      %v5825 = vpop.f32.mrf.mxu0
      %5826 = vmatprep.mubr.f32.mxu0 0.0
      %5827 = vmatmul.mubr.f32.gmra.mxu0 %v5673
      %v5828 = vpop.f32.mrf.mxu0
      %v5829 = vadd.f32 0.0, %v5828
      %v5830 = vpop.f32.mrf.mxu0
      %5831 = vmatprep.mubr.f32.mxu0 0.0
      %5832 = vmatmul.mubr.f32.gmra.mxu0 %v5674
      %v5833 = vpop.f32.mrf.mxu0
      %v5834 = vadd.f32 0.0, %v5833
      %v5835 = vpop.f32.mrf.mxu0
      %5836 = vmatprep.mubr.f32.mxu0 0.0
      %5837 = vmatmul.mubr.f32.gmra.mxu0 %v5675
      %v5838 = vpop.f32.mrf.mxu0
      %v5839 = vadd.f32 0.0, %v5838
      %v5840 = vpop.f32.mrf.mxu0
      %5841 = vmatprep.mubr.f32.mxu0 0.0
      %5842 = vmatmul.mubr.f32.gmra.mxu0 %v5676
      %v5843 = vpop.f32.mrf.mxu0
      %v5844 = vadd.f32 0.0, %v5843
      %v5845 = vpop.f32.mrf.mxu0
      %5846 = vmatprep.mubr.f32.mxu0 0.0
      %5847 = vmatmul.mubr.f32.gmra.mxu0 %v5677
      %v5848 = vpop.f32.mrf.mxu0
      %v5849 = vadd.f32 0.0, %v5848
      %v5850 = vpop.f32.mrf.mxu0
      %5851 = vmatprep.mubr.f32.mxu0 0.0
      %5852 = vmatmul.mubr.f32.gmra.mxu0 %v5678
      %v5853 = vpop.f32.mrf.mxu0
      %v5854 = vadd.f32 0.0, %v5853
      %v5855 = vpop.f32.mrf.mxu0
      %5856 = vmatprep.mubr.f32.mxu0 0.0
      %5857 = vmatmul.mubr.f32.gmra.mxu0 %v5679
      %v5858 = vpop.f32.mrf.mxu0
      %v5859 = vadd.f32 0.0, %v5858
      %v5860 = vpop.f32.mrf.mxu0
      %5861 = vmatprep.mubr.f32.mxu0 0.0
      %5862 = vmatmul.mubr.f32.gmra.mxu0 %v5680
      %v5863 = vpop.f32.mrf.mxu0
      %v5864 = vadd.f32 0.0, %v5863
      %v5865 = vpop.f32.mrf.mxu0
      %5866 = vmatprep.mubr.f32.mxu0 0.0
      %5867 = vmatmul.mubr.f32.gmra.mxu0 %v5681
      %v5868 = vpop.f32.mrf.mxu0
      %v5869 = vadd.f32 0.0, %v5868
      %v5870 = vpop.f32.mrf.mxu0
      %5871 = vmatprep.mubr.f32.mxu0 0.0
      %5872 = vmatmul.mubr.f32.gmra.mxu0 %v5682
      %v5873 = vpop.f32.mrf.mxu0
      %v5874 = vadd.f32 0.0, %v5873
      %v5875 = vpop.f32.mrf.mxu0
      %5876 = vmatprep.mubr.f32.mxu0 0.0
      %5877 = vmatmul.mubr.f32.gmra.mxu0 %v5683
      %v5878 = vpop.f32.mrf.mxu0
      %v5879 = vadd.f32 0.0, %v5878
      %v5880 = vpop.f32.mrf.mxu0
      %5881 = vmatprep.mubr.f32.mxu0 0.0
      %5882 = vmatmul.mubr.f32.gmra.mxu0 %v5684
      %v5883 = vpop.f32.mrf.mxu0
      %v5884 = vadd.f32 0.0, %v5883
      %v5885 = vpop.f32.mrf.mxu0
      %5886 = vmatprep.mubr.f32.mxu0 0.0
      %5887 = vmatmul.mubr.f32.gmra.mxu0 %v5685
      %v5888 = vpop.f32.mrf.mxu0
      %v5889 = vadd.f32 0.0, %v5888
      %v5890 = vpop.f32.mrf.mxu0
      %5891 = vmatprep.mubr.f32.mxu0 0.0
      %5892 = vmatmul.mubr.f32.gmra.mxu0 %v5686
      %v5893 = vpop.f32.mrf.mxu0
      %v5894 = vadd.f32 0.0, %v5893
      %v5895 = vpop.f32.mrf.mxu0
      %5896 = vmatprep.mubr.f32.mxu0 0.0
      %5897 = vmatmul.mubr.f32.gmra.mxu0 %v5687
      %v5898 = vpop.f32.mrf.mxu0
      %v5899 = vadd.f32 0.0, %v5898
      %v5900 = vpop.f32.mrf.mxu0
      %5901 = vmatprep.mubr.f32.mxu0 0.0
      %5902 = vmatmul.mubr.f32.gmra.mxu0 %v5688
      %v5903 = vpop.f32.mrf.mxu0
      %v5904 = vadd.f32 0.0, %v5903
      %v5905 = vpop.f32.mrf.mxu0
      %5906 = vmatprep.mubr.f32.mxu0 0.0
      %5907 = vmatmul.mubr.f32.gmra.mxu0 %v5689
      %v5908 = vpop.f32.mrf.mxu0
      %v5909 = vadd.f32 0.0, %v5908
      %v5910 = vpop.f32.mrf.mxu0
      %5911 = vmatprep.mubr.f32.mxu0 0.0
      %5912 = vmatmul.mubr.f32.gmra.mxu0 %v5690
      %v5913 = vpop.f32.mrf.mxu0
      %v5914 = vadd.f32 0.0, %v5913
      %v5915 = vpop.f32.mrf.mxu0
      %5916 = vmatprep.mubr.f32.mxu0 0.0
      %5917 = vmatmul.mubr.f32.gmra.mxu0 %v5691
      %v5918 = vpop.f32.mrf.mxu0
      %v5919 = vadd.f32 0.0, %v5918
      %v5920 = vpop.f32.mrf.mxu0
      %5921 = vmatprep.mubr.f32.mxu0 0.0
      %5922 = vmatmul.mubr.f32.gmra.mxu0 %v5692
      %v5923 = vpop.f32.mrf.mxu0
      %v5924 = vadd.f32 0.0, %v5923
      %v5925 = vpop.f32.mrf.mxu0
      %5926 = vmatprep.mubr.f32.mxu0 0.0
      %5927 = vmatmul.mubr.f32.gmra.mxu0 %v5693
      %v5928 = vpop.f32.mrf.mxu0
      %v5929 = vadd.f32 0.0, %v5928
      %v5930 = vpop.f32.mrf.mxu0
      %5931 = vmatprep.mubr.f32.mxu0 0.0
      %5932 = vmatmul.mubr.f32.gmra.mxu0 %v5694
      %v5933 = vpop.f32.mrf.mxu0
      %v5934 = vadd.f32 0.0, %v5933
      %v5935 = vpop.f32.mrf.mxu0
      %5936 = vdwg.mxu0
      %v5937 = vadd.f32 %v5631, %v5779
      %v5938 = vadd.f32 %v5632, %v5784
      %v5939 = vadd.f32 %v5633, %v5789
      %v5940 = vadd.f32 %v5634, %v5794
      %v5941 = vadd.f32 %v5635, %v5799
      %v5942 = vadd.f32 %v5636, %v5804
      %v5943 = vadd.f32 %v5637, %v5809
      %v5944 = vadd.f32 %v5638, %v5814
      %v5945 = vadd.f32 %v5639, %v5819
      %v5946 = vadd.f32 %v5640, %v5824
      %v5947 = vadd.f32 %v5641, %v5829
      %v5948 = vadd.f32 %v5642, %v5834
      %v5949 = vadd.f32 %v5643, %v5839
      %v5950 = vadd.f32 %v5644, %v5844
      %v5951 = vadd.f32 %v5645, %v5849
      %v5952 = vadd.f32 %v5646, %v5854
      %v5953 = vadd.f32 %v5647, %v5859
      %v5954 = vadd.f32 %v5648, %v5864
      %v5955 = vadd.f32 %v5649, %v5869
      %v5956 = vadd.f32 %v5650, %v5874
      %v5957 = vadd.f32 %v5651, %v5879
      %v5958 = vadd.f32 %v5652, %v5884
      %v5959 = vadd.f32 %v5653, %v5889
      %v5960 = vadd.f32 %v5654, %v5894
      %v5961 = vadd.f32 %v5655, %v5899
      %v5962 = vadd.f32 %v5656, %v5904
      %v5963 = vadd.f32 %v5657, %v5909
      %v5964 = vadd.f32 %v5658, %v5914
      %v5965 = vadd.f32 %v5659, %v5919
      %v5966 = vadd.f32 %v5660, %v5924
      %v5967 = vadd.f32 %v5661, %v5929
      %v5968 = vadd.f32 %v5662, %v5934
      %v5969 = vld [vmem:[%s4] sm:$0x1]
      %v5971 = vlaneseq
      %v5972 = vshrl.u32 %v5971, 7
      %v5973 = vsub.s32 0, %v5972
      %v5974 = vrot.slane %v5969, %v5973
      %v5976 = vadd.f32 %v5937, %v5974
      %v5977 = vadd.f32 %v5938, %v5974
      %v5978 = vadd.f32 %v5939, %v5974
      %v5979 = vadd.f32 %v5940, %v5974
      %v5980 = vadd.f32 %v5941, %v5974
      %v5981 = vadd.f32 %v5942, %v5974
      %v5982 = vadd.f32 %v5943, %v5974
      %v5983 = vadd.f32 %v5944, %v5974
      %v5984 = vadd.f32 %v5945, %v5974
      %v5985 = vadd.f32 %v5946, %v5974
      %v5986 = vadd.f32 %v5947, %v5974
      %v5987 = vadd.f32 %v5948, %v5974
      %v5988 = vadd.f32 %v5949, %v5974
      %v5989 = vadd.f32 %v5950, %v5974
      %v5990 = vadd.f32 %v5951, %v5974
      %v5991 = vadd.f32 %v5952, %v5974
      %v5992 = vadd.f32 %v5953, %v5974
      %v5993 = vadd.f32 %v5954, %v5974
      %v5994 = vadd.f32 %v5955, %v5974
      %v5995 = vadd.f32 %v5956, %v5974
      %v5996 = vadd.f32 %v5957, %v5974
      %v5997 = vadd.f32 %v5958, %v5974
      %v5998 = vadd.f32 %v5959, %v5974
      %v5999 = vadd.f32 %v5960, %v5974
      %v6000 = vadd.f32 %v5961, %v5974
      %v6001 = vadd.f32 %v5962, %v5974
      %v6002 = vadd.f32 %v5963, %v5974
      %v6003 = vadd.f32 %v5964, %v5974
      %v6004 = vadd.f32 %v5965, %v5974
      %v6005 = vadd.f32 %v5966, %v5974
      %v6006 = vadd.f32 %v5967, %v5974
      %v6007 = vadd.f32 %v5968, %v5974
      %vm6008 = vcmp.ge.f32.partialorder %v5976, 0.0
      %vm6009 = vcmp.ge.f32.partialorder %v5977, 0.0
      %vm6010 = vcmp.ge.f32.partialorder %v5978, 0.0
      %vm6011 = vcmp.ge.f32.partialorder %v5979, 0.0
      %vm6012 = vcmp.ge.f32.partialorder %v5980, 0.0
      %vm6013 = vcmp.ge.f32.partialorder %v5981, 0.0
      %vm6014 = vcmp.ge.f32.partialorder %v5982, 0.0
      %vm6015 = vcmp.ge.f32.partialorder %v5983, 0.0
      %vm6016 = vcmp.ge.f32.partialorder %v5984, 0.0
      %vm6017 = vcmp.ge.f32.partialorder %v5985, 0.0
      %vm6018 = vcmp.ge.f32.partialorder %v5986, 0.0
      %vm6019 = vcmp.ge.f32.partialorder %v5987, 0.0
      %vm6020 = vcmp.ge.f32.partialorder %v5988, 0.0
      %vm6021 = vcmp.ge.f32.partialorder %v5989, 0.0
      %vm6022 = vcmp.ge.f32.partialorder %v5990, 0.0
      %vm6023 = vcmp.ge.f32.partialorder %v5991, 0.0
      %vm6024 = vcmp.ge.f32.partialorder %v5992, 0.0
      %vm6025 = vcmp.ge.f32.partialorder %v5993, 0.0
      %vm6026 = vcmp.ge.f32.partialorder %v5994, 0.0
      %vm6027 = vcmp.ge.f32.partialorder %v5995, 0.0
      %vm6028 = vcmp.ge.f32.partialorder %v5996, 0.0
      %vm6029 = vcmp.ge.f32.partialorder %v5997, 0.0
      %vm6030 = vcmp.ge.f32.partialorder %v5998, 0.0
      %vm6031 = vcmp.ge.f32.partialorder %v5999, 0.0
      %vm6032 = vcmp.ge.f32.partialorder %v6000, 0.0
      %vm6033 = vcmp.ge.f32.partialorder %v6001, 0.0
      %vm6034 = vcmp.ge.f32.partialorder %v6002, 0.0
      %vm6035 = vcmp.ge.f32.partialorder %v6003, 0.0
      %vm6036 = vcmp.ge.f32.partialorder %v6004, 0.0
      %vm6037 = vcmp.ge.f32.partialorder %v6005, 0.0
      %vm6038 = vcmp.ge.f32.partialorder %v6006, 0.0
      %vm6039 = vcmp.ge.f32.partialorder %v6007, 0.0
      %v6040 = vmul.f32 %v5976, 0.01
      %v6041 = vmul.f32 %v5977, 0.01
      %v6042 = vmul.f32 %v5978, 0.01
      %v6043 = vmul.f32 %v5979, 0.01
      %v6044 = vmul.f32 %v5980, 0.01
      %v6045 = vmul.f32 %v5981, 0.01
      %v6046 = vmul.f32 %v5982, 0.01
      %v6047 = vmul.f32 %v5983, 0.01
      %v6048 = vmul.f32 %v5984, 0.01
      %v6049 = vmul.f32 %v5985, 0.01
      %v6050 = vmul.f32 %v5986, 0.01
      %v6051 = vmul.f32 %v5987, 0.01
      %v6052 = vmul.f32 %v5988, 0.01
      %v6053 = vmul.f32 %v5989, 0.01
      %v6054 = vmul.f32 %v5990, 0.01
      %v6055 = vmul.f32 %v5991, 0.01
      %v6056 = vmul.f32 %v5992, 0.01
      %v6057 = vmul.f32 %v5993, 0.01
      %v6058 = vmul.f32 %v5994, 0.01
      %v6059 = vmul.f32 %v5995, 0.01
      %v6060 = vmul.f32 %v5996, 0.01
      %v6061 = vmul.f32 %v5997, 0.01
      %v6062 = vmul.f32 %v5998, 0.01
      %v6063 = vmul.f32 %v5999, 0.01
      %v6064 = vmul.f32 %v6000, 0.01
      %v6065 = vmul.f32 %v6001, 0.01
      %v6066 = vmul.f32 %v6002, 0.01
      %v6067 = vmul.f32 %v6003, 0.01
      %v6068 = vmul.f32 %v6004, 0.01
      %v6069 = vmul.f32 %v6005, 0.01
      %v6070 = vmul.f32 %v6006, 0.01
      %v6071 = vmul.f32 %v6007, 0.01
      %v6072 = vsel %vm6008, %v5976, %v6040
      %v6073 = vsel %vm6009, %v5977, %v6041
      %v6074 = vsel %vm6010, %v5978, %v6042
      %v6075 = vsel %vm6011, %v5979, %v6043
      %v6076 = vsel %vm6012, %v5980, %v6044
      %v6077 = vsel %vm6013, %v5981, %v6045
      %v6078 = vsel %vm6014, %v5982, %v6046
      %v6079 = vsel %vm6015, %v5983, %v6047
      %v6080 = vsel %vm6016, %v5984, %v6048
      %v6081 = vsel %vm6017, %v5985, %v6049
      %v6082 = vsel %vm6018, %v5986, %v6050
      %v6083 = vsel %vm6019, %v5987, %v6051
      %v6084 = vsel %vm6020, %v5988, %v6052
      %v6085 = vsel %vm6021, %v5989, %v6053
      %v6086 = vsel %vm6022, %v5990, %v6054
      %v6087 = vsel %vm6023, %v5991, %v6055
      %v6088 = vsel %vm6024, %v5992, %v6056
      %v6089 = vsel %vm6025, %v5993, %v6057
      %v6090 = vsel %vm6026, %v5994, %v6058
      %v6091 = vsel %vm6027, %v5995, %v6059
      %v6092 = vsel %vm6028, %v5996, %v6060
      %v6093 = vsel %vm6029, %v5997, %v6061
      %v6094 = vsel %vm6030, %v5998, %v6062
      %v6095 = vsel %vm6031, %v5999, %v6063
      %v6096 = vsel %vm6032, %v6000, %v6064
      %v6097 = vsel %vm6033, %v6001, %v6065
      %v6098 = vsel %vm6034, %v6002, %v6066
      %v6099 = vsel %vm6035, %v6003, %v6067
      %v6100 = vsel %vm6036, %v6004, %v6068
      %v6101 = vsel %vm6037, %v6005, %v6069
      %v6102 = vsel %vm6038, %v6006, %v6070
      %v6103 = vsel %vm6039, %v6007, %v6071
      %6104 = vst [vmem:[#allocation3] sm:$0xff] %v6072
      %6105 = vst [vmem:[#allocation3 + $0x8] sm:$0xff] %v6073
      %6106 = vst [vmem:[#allocation3 + $0x10] sm:$0xff] %v6074
      %6107 = vst [vmem:[#allocation3 + $0x18] sm:$0xff] %v6075
      %6108 = vst [vmem:[#allocation3 + $0x20] sm:$0xff] %v6076
      %6109 = vst [vmem:[#allocation3 + $0x28] sm:$0xff] %v6077
      %6110 = vst [vmem:[#allocation3 + $0x30] sm:$0xff] %v6078
      %6111 = vst [vmem:[#allocation3 + $0x38] sm:$0xff] %v6079
      %6112 = vst [vmem:[#allocation3 + $0x40] sm:$0xff] %v6080
      %6113 = vst [vmem:[#allocation3 + $0x48] sm:$0xff] %v6081
      %6114 = vst [vmem:[#allocation3 + $0x50] sm:$0xff] %v6082
      %6115 = vst [vmem:[#allocation3 + $0x58] sm:$0xff] %v6083
      %6116 = vst [vmem:[#allocation3 + $0x60] sm:$0xff] %v6084
      %6117 = vst [vmem:[#allocation3 + $0x68] sm:$0xff] %v6085
      %6118 = vst [vmem:[#allocation3 + $0x70] sm:$0xff] %v6086
      %6119 = vst [vmem:[#allocation3 + $0x78] sm:$0xff] %v6087
      %6120 = vst [vmem:[#allocation3 + $0x80] sm:$0xff] %v6088
      %6121 = vst [vmem:[#allocation3 + $0x88] sm:$0xff] %v6089
      %6122 = vst [vmem:[#allocation3 + $0x90] sm:$0xff] %v6090
      %6123 = vst [vmem:[#allocation3 + $0x98] sm:$0xff] %v6091
      %6124 = vst [vmem:[#allocation3 + $0xa0] sm:$0xff] %v6092
      %6125 = vst [vmem:[#allocation3 + $0xa8] sm:$0xff] %v6093
      %6126 = vst [vmem:[#allocation3 + $0xb0] sm:$0xff] %v6094
      %6127 = vst [vmem:[#allocation3 + $0xb8] sm:$0xff] %v6095
      %6128 = vst [vmem:[#allocation3 + $0xc0] sm:$0xff] %v6096
      %6129 = vst [vmem:[#allocation3 + $0xc8] sm:$0xff] %v6097
      %6130 = vst [vmem:[#allocation3 + $0xd0] sm:$0xff] %v6098
      %6131 = vst [vmem:[#allocation3 + $0xd8] sm:$0xff] %v6099
      %6132 = vst [vmem:[#allocation3 + $0xe0] sm:$0xff] %v6100
      %6133 = vst [vmem:[#allocation3 + $0xe8] sm:$0xff] %v6101
      %6134 = vst [vmem:[#allocation3 + $0xf0] sm:$0xff] %v6102
      %6135 = vst [vmem:[#allocation3 + $0xf8] sm:$0xff] %v6103
      %v6136 = vld [vmem:[#allocation3] sm:$0xff]
      %v6137 = vld [vmem:[#allocation3 + $0x8] sm:$0xff]
      %v6138 = vld [vmem:[#allocation3 + $0x10] sm:$0xff]
      %v6139 = vld [vmem:[#allocation3 + $0x18] sm:$0xff]
      %v6140 = vld [vmem:[#allocation3 + $0x20] sm:$0xff]
      %v6141 = vld [vmem:[#allocation3 + $0x28] sm:$0xff]
      %v6142 = vld [vmem:[#allocation3 + $0x30] sm:$0xff]
      %v6143 = vld [vmem:[#allocation3 + $0x38] sm:$0xff]
      %v6144 = vld [vmem:[#allocation3 + $0x40] sm:$0xff]
      %v6145 = vld [vmem:[#allocation3 + $0x48] sm:$0xff]
      %v6146 = vld [vmem:[#allocation3 + $0x50] sm:$0xff]
      %v6147 = vld [vmem:[#allocation3 + $0x58] sm:$0xff]
      %v6148 = vld [vmem:[#allocation3 + $0x60] sm:$0xff]
      %v6149 = vld [vmem:[#allocation3 + $0x68] sm:$0xff]
      %v6150 = vld [vmem:[#allocation3 + $0x70] sm:$0xff]
      %v6151 = vld [vmem:[#allocation3 + $0x78] sm:$0xff]
      %v6152 = vld [vmem:[#allocation3 + $0x80] sm:$0xff]
      %v6153 = vld [vmem:[#allocation3 + $0x88] sm:$0xff]
      %v6154 = vld [vmem:[#allocation3 + $0x90] sm:$0xff]
      %v6155 = vld [vmem:[#allocation3 + $0x98] sm:$0xff]
      %v6156 = vld [vmem:[#allocation3 + $0xa0] sm:$0xff]
      %v6157 = vld [vmem:[#allocation3 + $0xa8] sm:$0xff]
      %v6158 = vld [vmem:[#allocation3 + $0xb0] sm:$0xff]
      %v6159 = vld [vmem:[#allocation3 + $0xb8] sm:$0xff]
      %v6160 = vld [vmem:[#allocation3 + $0xc0] sm:$0xff]
      %v6161 = vld [vmem:[#allocation3 + $0xc8] sm:$0xff]
      %v6162 = vld [vmem:[#allocation3 + $0xd0] sm:$0xff]
      %v6163 = vld [vmem:[#allocation3 + $0xd8] sm:$0xff]
      %v6164 = vld [vmem:[#allocation3 + $0xe0] sm:$0xff]
      %v6165 = vld [vmem:[#allocation3 + $0xe8] sm:$0xff]
      %v6166 = vld [vmem:[#allocation3 + $0xf0] sm:$0xff]
      %v6167 = vld [vmem:[#allocation3 + $0xf8] sm:$0xff]
      %v6168 = vld [vmem:[%s5] sm:$0xff]
      %v6169 = vld [vmem:[%s5 + $0x8] sm:$0xff]
      %v6170 = vld [vmem:[%s5 + $0x10] sm:$0xff]
      %v6171 = vld [vmem:[%s5 + $0x18] sm:$0xff]
      %v6172 = vld [vmem:[%s5 + $0x20] sm:$0xff]
      %v6173 = vld [vmem:[%s5 + $0x28] sm:$0xff]
      %v6174 = vld [vmem:[%s5 + $0x30] sm:$0xff]
      %v6175 = vld [vmem:[%s5 + $0x38] sm:$0xff]
      %v6176 = vld [vmem:[%s5 + $0x40] sm:$0xff]
      %v6177 = vld [vmem:[%s5 + $0x48] sm:$0xff]
      %v6178 = vld [vmem:[%s5 + $0x50] sm:$0xff]
      %v6179 = vld [vmem:[%s5 + $0x58] sm:$0xff]
      %v6180 = vld [vmem:[%s5 + $0x60] sm:$0xff]
      %v6181 = vld [vmem:[%s5 + $0x68] sm:$0xff]
      %v6182 = vld [vmem:[%s5 + $0x70] sm:$0xff]
      %v6183 = vld [vmem:[%s5 + $0x78] sm:$0xff]
      %v6184 = vld [vmem:[#allocation3 + $0x1] sm:$0xff]
      %v6185 = vld [vmem:[#allocation3 + $0x9] sm:$0xff]
      %v6186 = vld [vmem:[#allocation3 + $0x11] sm:$0xff]
      %v6187 = vld [vmem:[#allocation3 + $0x19] sm:$0xff]
      %v6188 = vld [vmem:[#allocation3 + $0x21] sm:$0xff]
      %v6189 = vld [vmem:[#allocation3 + $0x29] sm:$0xff]
      %v6190 = vld [vmem:[#allocation3 + $0x31] sm:$0xff]
      %v6191 = vld [vmem:[#allocation3 + $0x39] sm:$0xff]
      %v6192 = vld [vmem:[#allocation3 + $0x41] sm:$0xff]
      %v6193 = vld [vmem:[#allocation3 + $0x49] sm:$0xff]
      %v6194 = vld [vmem:[#allocation3 + $0x51] sm:$0xff]
      %v6195 = vld [vmem:[#allocation3 + $0x59] sm:$0xff]
      %v6196 = vld [vmem:[#allocation3 + $0x61] sm:$0xff]
      %v6197 = vld [vmem:[#allocation3 + $0x69] sm:$0xff]
      %v6198 = vld [vmem:[#allocation3 + $0x71] sm:$0xff]
      %v6199 = vld [vmem:[#allocation3 + $0x79] sm:$0xff]
      %v6200 = vld [vmem:[#allocation3 + $0x81] sm:$0xff]
      %v6201 = vld [vmem:[#allocation3 + $0x89] sm:$0xff]
      %v6202 = vld [vmem:[#allocation3 + $0x91] sm:$0xff]
      %v6203 = vld [vmem:[#allocation3 + $0x99] sm:$0xff]
      %v6204 = vld [vmem:[#allocation3 + $0xa1] sm:$0xff]
      %v6205 = vld [vmem:[#allocation3 + $0xa9] sm:$0xff]
      %v6206 = vld [vmem:[#allocation3 + $0xb1] sm:$0xff]
      %v6207 = vld [vmem:[#allocation3 + $0xb9] sm:$0xff]
      %v6208 = vld [vmem:[#allocation3 + $0xc1] sm:$0xff]
      %v6209 = vld [vmem:[#allocation3 + $0xc9] sm:$0xff]
      %v6210 = vld [vmem:[#allocation3 + $0xd1] sm:$0xff]
      %v6211 = vld [vmem:[#allocation3 + $0xd9] sm:$0xff]
      %v6212 = vld [vmem:[#allocation3 + $0xe1] sm:$0xff]
      %v6213 = vld [vmem:[#allocation3 + $0xe9] sm:$0xff]
      %v6214 = vld [vmem:[#allocation3 + $0xf1] sm:$0xff]
      %v6215 = vld [vmem:[#allocation3 + $0xf9] sm:$0xff]
      %s6216 = scalar_lea.vmem %s5, 128
      %v6217 = vld [vmem:[%s6216] sm:$0xff]
      %v6218 = vld [vmem:[%s6216 + $0x8] sm:$0xff]
      %v6219 = vld [vmem:[%s6216 + $0x10] sm:$0xff]
      %v6220 = vld [vmem:[%s6216 + $0x18] sm:$0xff]
      %v6221 = vld [vmem:[%s6216 + $0x20] sm:$0xff]
      %v6222 = vld [vmem:[%s6216 + $0x28] sm:$0xff]
      %v6223 = vld [vmem:[%s6216 + $0x30] sm:$0xff]
      %v6224 = vld [vmem:[%s6216 + $0x38] sm:$0xff]
      %v6225 = vld [vmem:[%s6216 + $0x40] sm:$0xff]
      %v6226 = vld [vmem:[%s6216 + $0x48] sm:$0xff]
      %v6227 = vld [vmem:[%s6216 + $0x50] sm:$0xff]
      %v6228 = vld [vmem:[%s6216 + $0x58] sm:$0xff]
      %v6229 = vld [vmem:[%s6216 + $0x60] sm:$0xff]
      %v6230 = vld [vmem:[%s6216 + $0x68] sm:$0xff]
      %v6231 = vld [vmem:[%s6216 + $0x70] sm:$0xff]
      %v6232 = vld [vmem:[%s6216 + $0x78] sm:$0xff]
      %6233 = vmatprep.subr.mxu0 0.0
      %6234 = vmatpush1.msra.mxu0 %v6232
      %6235 = vmatprep.subr.mxu0 0.0
      %6236 = vmatpush1.msra.mxu0 %v6231
      %6237 = vmatprep.subr.mxu0 0.0
      %6238 = vmatpush1.msra.mxu0 %v6230
      %6239 = vmatprep.subr.mxu0 0.0
      %6240 = vmatpush1.msra.mxu0 %v6229
      %6241 = vmatprep.subr.mxu0 0.0
      %6242 = vmatpush1.msra.mxu0 %v6228
      %6243 = vmatprep.subr.mxu0 0.0
      %6244 = vmatpush1.msra.mxu0 %v6227
      %6245 = vmatprep.subr.mxu0 0.0
      %6246 = vmatpush1.msra.mxu0 %v6226
      %6247 = vmatprep.subr.mxu0 0.0
      %6248 = vmatpush1.msra.mxu0 %v6225
      %6249 = vmatprep.subr.mxu0 0.0
      %6250 = vmatpush1.msra.mxu0 %v6224
      %6251 = vmatprep.subr.mxu0 0.0
      %6252 = vmatpush1.msra.mxu0 %v6223
      %6253 = vmatprep.subr.mxu0 0.0
      %6254 = vmatpush1.msra.mxu0 %v6222
      %6255 = vmatprep.subr.mxu0 0.0
      %6256 = vmatpush1.msra.mxu0 %v6221
      %6257 = vmatprep.subr.mxu0 0.0
      %6258 = vmatpush1.msra.mxu0 %v6220
      %6259 = vmatprep.subr.mxu0 0.0
      %6260 = vmatpush1.msra.mxu0 %v6219
      %6261 = vmatprep.subr.mxu0 0.0
      %6262 = vmatpush1.msra.mxu0 %v6218
      %6263 = vmatprep.subr.mxu0 0.0
      %6264 = vmatpush1.msra.mxu0 %v6217
      %6265 = vmatprep.subr.mxu0 0.0
      %6266 = vmatpush2.msra.mxu0 0.0
      %6267 = vmatprep.subr.mxu0 0.0
      %6268 = vmatpush2.msra.mxu0 0.0
      %6269 = vmatprep.subr.mxu0 0.0
      %6270 = vmatpush2.msra.mxu0 0.0
      %6271 = vmatprep.subr.mxu0 0.0
      %6272 = vmatpush2.msra.mxu0 0.0
      %6273 = vmatprep.subr.mxu0 0.0
      %6274 = vmatpush2.msra.mxu0 0.0
      %6275 = vmatprep.subr.mxu0 0.0
      %6276 = vmatpush2.msra.mxu0 0.0
      %6277 = vmatprep.subr.mxu0 0.0
      %6278 = vmatpush2.msra.mxu0 0.0
      %6279 = vmatprep.subr.mxu0 0.0
      %6280 = vmatpush2.msra.mxu0 0.0
      %6281 = vmatprep.subr.mxu0 0.0
      %6282 = vmatpush2.msra.mxu0 0.0
      %6283 = vmatprep.subr.mxu0 0.0
      %6284 = vmatpush2.msra.mxu0 0.0
      %6285 = vmatprep.subr.mxu0 0.0
      %6286 = vmatpush2.msra.mxu0 0.0
      %6287 = vmatprep.subr.mxu0 0.0
      %6288 = vmatpush2.msra.mxu0 0.0
      %6289 = vmatprep.subr.mxu0 0.0
      %6290 = vmatpush2.msra.mxu0 0.0
      %6291 = vmatprep.subr.mxu0 0.0
      %6292 = vmatpush2.msra.mxu0 0.0
      %6293 = vmatprep.subr.mxu0 0.0
      %6294 = vmatpush2.msra.mxu0 0.0
      %6295 = vmatprep.subr.mxu0 0.0
      %6296 = vmatpush2.msra.mxu0 0.0
      %6297 = vmatprep.mubr.f32.mxu0 0.0
      %6298 = vmatmul.mubr.f32.gmra.mxu0 %v6184
      %v6299 = vpop.f32.mrf.mxu0
      %v6300 = vadd.f32 0.0, %v6299
      %v6301 = vpop.f32.mrf.mxu0
      %6302 = vmatprep.mubr.f32.mxu0 0.0
      %6303 = vmatmul.mubr.f32.gmra.mxu0 %v6185
      %v6304 = vpop.f32.mrf.mxu0
      %v6305 = vadd.f32 0.0, %v6304
      %v6306 = vpop.f32.mrf.mxu0
      %6307 = vmatprep.mubr.f32.mxu0 0.0
      %6308 = vmatmul.mubr.f32.gmra.mxu0 %v6186
      %v6309 = vpop.f32.mrf.mxu0
      %v6310 = vadd.f32 0.0, %v6309
      %v6311 = vpop.f32.mrf.mxu0
      %6312 = vmatprep.mubr.f32.mxu0 0.0
      %6313 = vmatmul.mubr.f32.gmra.mxu0 %v6187
      %v6314 = vpop.f32.mrf.mxu0
      %v6315 = vadd.f32 0.0, %v6314
      %v6316 = vpop.f32.mrf.mxu0
      %6317 = vmatprep.mubr.f32.mxu0 0.0
      %6318 = vmatmul.mubr.f32.gmra.mxu0 %v6188
      %v6319 = vpop.f32.mrf.mxu0
      %v6320 = vadd.f32 0.0, %v6319
      %v6321 = vpop.f32.mrf.mxu0
      %6322 = vmatprep.mubr.f32.mxu0 0.0
      %6323 = vmatmul.mubr.f32.gmra.mxu0 %v6189
      %v6324 = vpop.f32.mrf.mxu0
      %v6325 = vadd.f32 0.0, %v6324
      %v6326 = vpop.f32.mrf.mxu0
      %6327 = vmatprep.mubr.f32.mxu0 0.0
      %6328 = vmatmul.mubr.f32.gmra.mxu0 %v6190
      %v6329 = vpop.f32.mrf.mxu0
      %v6330 = vadd.f32 0.0, %v6329
      %v6331 = vpop.f32.mrf.mxu0
      %6332 = vmatprep.mubr.f32.mxu0 0.0
      %6333 = vmatmul.mubr.f32.gmra.mxu0 %v6191
      %v6334 = vpop.f32.mrf.mxu0
      %v6335 = vadd.f32 0.0, %v6334
      %v6336 = vpop.f32.mrf.mxu0
      %6337 = vmatprep.mubr.f32.mxu0 0.0
      %6338 = vmatmul.mubr.f32.gmra.mxu0 %v6192
      %v6339 = vpop.f32.mrf.mxu0
      %v6340 = vadd.f32 0.0, %v6339
      %v6341 = vpop.f32.mrf.mxu0
      %6342 = vmatprep.mubr.f32.mxu0 0.0
      %6343 = vmatmul.mubr.f32.gmra.mxu0 %v6193
      %v6344 = vpop.f32.mrf.mxu0
      %v6345 = vadd.f32 0.0, %v6344
      %v6346 = vpop.f32.mrf.mxu0
      %6347 = vmatprep.mubr.f32.mxu0 0.0
      %6348 = vmatmul.mubr.f32.gmra.mxu0 %v6194
      %v6349 = vpop.f32.mrf.mxu0
      %v6350 = vadd.f32 0.0, %v6349
      %v6351 = vpop.f32.mrf.mxu0
      %6352 = vmatprep.mubr.f32.mxu0 0.0
      %6353 = vmatmul.mubr.f32.gmra.mxu0 %v6195
      %v6354 = vpop.f32.mrf.mxu0
      %v6355 = vadd.f32 0.0, %v6354
      %v6356 = vpop.f32.mrf.mxu0
      %6357 = vmatprep.mubr.f32.mxu0 0.0
      %6358 = vmatmul.mubr.f32.gmra.mxu0 %v6196
      %v6359 = vpop.f32.mrf.mxu0
      %v6360 = vadd.f32 0.0, %v6359
      %v6361 = vpop.f32.mrf.mxu0
      %6362 = vmatprep.mubr.f32.mxu0 0.0
      %6363 = vmatmul.mubr.f32.gmra.mxu0 %v6197
      %v6364 = vpop.f32.mrf.mxu0
      %v6365 = vadd.f32 0.0, %v6364
      %v6366 = vpop.f32.mrf.mxu0
      %6367 = vmatprep.mubr.f32.mxu0 0.0
      %6368 = vmatmul.mubr.f32.gmra.mxu0 %v6198
      %v6369 = vpop.f32.mrf.mxu0
      %v6370 = vadd.f32 0.0, %v6369
      %v6371 = vpop.f32.mrf.mxu0
      %6372 = vmatprep.mubr.f32.mxu0 0.0
      %6373 = vmatmul.mubr.f32.gmra.mxu0 %v6199
      %v6374 = vpop.f32.mrf.mxu0
      %v6375 = vadd.f32 0.0, %v6374
      %v6376 = vpop.f32.mrf.mxu0
      %6377 = vmatprep.mubr.f32.mxu0 0.0
      %6378 = vmatmul.mubr.f32.gmra.mxu0 %v6200
      %v6379 = vpop.f32.mrf.mxu0
      %v6380 = vadd.f32 0.0, %v6379
      %v6381 = vpop.f32.mrf.mxu0
      %6382 = vmatprep.mubr.f32.mxu0 0.0
      %6383 = vmatmul.mubr.f32.gmra.mxu0 %v6201
      %v6384 = vpop.f32.mrf.mxu0
      %v6385 = vadd.f32 0.0, %v6384
      %v6386 = vpop.f32.mrf.mxu0
      %6387 = vmatprep.mubr.f32.mxu0 0.0
      %6388 = vmatmul.mubr.f32.gmra.mxu0 %v6202
      %v6389 = vpop.f32.mrf.mxu0
      %v6390 = vadd.f32 0.0, %v6389
      %v6391 = vpop.f32.mrf.mxu0
      %6392 = vmatprep.mubr.f32.mxu0 0.0
      %6393 = vmatmul.mubr.f32.gmra.mxu0 %v6203
      %v6394 = vpop.f32.mrf.mxu0
      %v6395 = vadd.f32 0.0, %v6394
      %v6396 = vpop.f32.mrf.mxu0
      %6397 = vmatprep.mubr.f32.mxu0 0.0
      %6398 = vmatmul.mubr.f32.gmra.mxu0 %v6204
      %v6399 = vpop.f32.mrf.mxu0
      %v6400 = vadd.f32 0.0, %v6399
      %v6401 = vpop.f32.mrf.mxu0
      %6402 = vmatprep.mubr.f32.mxu0 0.0
      %6403 = vmatmul.mubr.f32.gmra.mxu0 %v6205
      %v6404 = vpop.f32.mrf.mxu0
      %v6405 = vadd.f32 0.0, %v6404
      %v6406 = vpop.f32.mrf.mxu0
      %6407 = vmatprep.mubr.f32.mxu0 0.0
      %6408 = vmatmul.mubr.f32.gmra.mxu0 %v6206
      %v6409 = vpop.f32.mrf.mxu0
      %v6410 = vadd.f32 0.0, %v6409
      %v6411 = vpop.f32.mrf.mxu0
      %6412 = vmatprep.mubr.f32.mxu0 0.0
      %6413 = vmatmul.mubr.f32.gmra.mxu0 %v6207
      %v6414 = vpop.f32.mrf.mxu0
      %v6415 = vadd.f32 0.0, %v6414
      %v6416 = vpop.f32.mrf.mxu0
      %6417 = vmatprep.mubr.f32.mxu0 0.0
      %6418 = vmatmul.mubr.f32.gmra.mxu0 %v6208
      %v6419 = vpop.f32.mrf.mxu0
      %v6420 = vadd.f32 0.0, %v6419
      %v6421 = vpop.f32.mrf.mxu0
      %6422 = vmatprep.mubr.f32.mxu0 0.0
      %6423 = vmatmul.mubr.f32.gmra.mxu0 %v6209
      %v6424 = vpop.f32.mrf.mxu0
      %v6425 = vadd.f32 0.0, %v6424
      %v6426 = vpop.f32.mrf.mxu0
      %6427 = vmatprep.mubr.f32.mxu0 0.0
      %6428 = vmatmul.mubr.f32.gmra.mxu0 %v6210
      %v6429 = vpop.f32.mrf.mxu0
      %v6430 = vadd.f32 0.0, %v6429
      %v6431 = vpop.f32.mrf.mxu0
      %6432 = vmatprep.mubr.f32.mxu0 0.0
      %6433 = vmatmul.mubr.f32.gmra.mxu0 %v6211
      %v6434 = vpop.f32.mrf.mxu0
      %v6435 = vadd.f32 0.0, %v6434
      %v6436 = vpop.f32.mrf.mxu0
      %6437 = vmatprep.mubr.f32.mxu0 0.0
      %6438 = vmatmul.mubr.f32.gmra.mxu0 %v6212
      %v6439 = vpop.f32.mrf.mxu0
      %v6440 = vadd.f32 0.0, %v6439
      %v6441 = vpop.f32.mrf.mxu0
      %6442 = vmatprep.mubr.f32.mxu0 0.0
      %6443 = vmatmul.mubr.f32.gmra.mxu0 %v6213
      %v6444 = vpop.f32.mrf.mxu0
      %v6445 = vadd.f32 0.0, %v6444
      %v6446 = vpop.f32.mrf.mxu0
      %6447 = vmatprep.mubr.f32.mxu0 0.0
      %6448 = vmatmul.mubr.f32.gmra.mxu0 %v6214
      %v6449 = vpop.f32.mrf.mxu0
      %v6450 = vadd.f32 0.0, %v6449
      %v6451 = vpop.f32.mrf.mxu0
      %6452 = vmatprep.mubr.f32.mxu0 0.0
      %6453 = vmatmul.mubr.f32.gmra.mxu0 %v6215
      %v6454 = vpop.f32.mrf.mxu0
      %v6455 = vadd.f32 0.0, %v6454
      %v6456 = vpop.f32.mrf.mxu0
      %6457 = vdwg.mxu0
      %6458 = vmatprep.subr.mxu0 0.0
      %6459 = vmatpush1.msra.mxu0 %v6183
      %6460 = vmatprep.subr.mxu0 0.0
      %6461 = vmatpush1.msra.mxu0 %v6182
      %6462 = vmatprep.subr.mxu0 0.0
      %6463 = vmatpush1.msra.mxu0 %v6181
      %6464 = vmatprep.subr.mxu0 0.0
      %6465 = vmatpush1.msra.mxu0 %v6180
      %6466 = vmatprep.subr.mxu0 0.0
      %6467 = vmatpush1.msra.mxu0 %v6179
      %6468 = vmatprep.subr.mxu0 0.0
      %6469 = vmatpush1.msra.mxu0 %v6178
      %6470 = vmatprep.subr.mxu0 0.0
      %6471 = vmatpush1.msra.mxu0 %v6177
      %6472 = vmatprep.subr.mxu0 0.0
      %6473 = vmatpush1.msra.mxu0 %v6176
      %6474 = vmatprep.subr.mxu0 0.0
      %6475 = vmatpush1.msra.mxu0 %v6175
      %6476 = vmatprep.subr.mxu0 0.0
      %6477 = vmatpush1.msra.mxu0 %v6174
      %6478 = vmatprep.subr.mxu0 0.0
      %6479 = vmatpush1.msra.mxu0 %v6173
      %6480 = vmatprep.subr.mxu0 0.0
      %6481 = vmatpush1.msra.mxu0 %v6172
      %6482 = vmatprep.subr.mxu0 0.0
      %6483 = vmatpush1.msra.mxu0 %v6171
      %6484 = vmatprep.subr.mxu0 0.0
      %6485 = vmatpush1.msra.mxu0 %v6170
      %6486 = vmatprep.subr.mxu0 0.0
      %6487 = vmatpush1.msra.mxu0 %v6169
      %6488 = vmatprep.subr.mxu0 0.0
      %6489 = vmatpush1.msra.mxu0 %v6168
      %6490 = vmatprep.subr.mxu0 0.0
      %6491 = vmatpush2.msra.mxu0 0.0
      %6492 = vmatprep.subr.mxu0 0.0
      %6493 = vmatpush2.msra.mxu0 0.0
      %6494 = vmatprep.subr.mxu0 0.0
      %6495 = vmatpush2.msra.mxu0 0.0
      %6496 = vmatprep.subr.mxu0 0.0
      %6497 = vmatpush2.msra.mxu0 0.0
      %6498 = vmatprep.subr.mxu0 0.0
      %6499 = vmatpush2.msra.mxu0 0.0
      %6500 = vmatprep.subr.mxu0 0.0
      %6501 = vmatpush2.msra.mxu0 0.0
      %6502 = vmatprep.subr.mxu0 0.0
      %6503 = vmatpush2.msra.mxu0 0.0
      %6504 = vmatprep.subr.mxu0 0.0
      %6505 = vmatpush2.msra.mxu0 0.0
      %6506 = vmatprep.subr.mxu0 0.0
      %6507 = vmatpush2.msra.mxu0 0.0
      %6508 = vmatprep.subr.mxu0 0.0
      %6509 = vmatpush2.msra.mxu0 0.0
      %6510 = vmatprep.subr.mxu0 0.0
      %6511 = vmatpush2.msra.mxu0 0.0
      %6512 = vmatprep.subr.mxu0 0.0
      %6513 = vmatpush2.msra.mxu0 0.0
      %6514 = vmatprep.subr.mxu0 0.0
      %6515 = vmatpush2.msra.mxu0 0.0
      %6516 = vmatprep.subr.mxu0 0.0
      %6517 = vmatpush2.msra.mxu0 0.0
      %6518 = vmatprep.subr.mxu0 0.0
      %6519 = vmatpush2.msra.mxu0 0.0
      %6520 = vmatprep.subr.mxu0 0.0
      %6521 = vmatpush2.msra.mxu0 0.0
      %6522 = vmatprep.mubr.f32.mxu0 0.0
      %6523 = vmatmul.mubr.f32.gmra.mxu0 %v6136
      %v6524 = vpop.f32.mrf.mxu0
      %v6525 = vadd.f32 %v6300, %v6524
      %v6526 = vpop.f32.mrf.mxu0
      %6527 = vmatprep.mubr.f32.mxu0 0.0
      %6528 = vmatmul.mubr.f32.gmra.mxu0 %v6137
      %v6529 = vpop.f32.mrf.mxu0
      %v6530 = vadd.f32 %v6305, %v6529
      %v6531 = vpop.f32.mrf.mxu0
      %6532 = vmatprep.mubr.f32.mxu0 0.0
      %6533 = vmatmul.mubr.f32.gmra.mxu0 %v6138
      %v6534 = vpop.f32.mrf.mxu0
      %v6535 = vadd.f32 %v6310, %v6534
      %v6536 = vpop.f32.mrf.mxu0
      %6537 = vmatprep.mubr.f32.mxu0 0.0
      %6538 = vmatmul.mubr.f32.gmra.mxu0 %v6139
      %v6539 = vpop.f32.mrf.mxu0
      %v6540 = vadd.f32 %v6315, %v6539
      %v6541 = vpop.f32.mrf.mxu0
      %6542 = vmatprep.mubr.f32.mxu0 0.0
      %6543 = vmatmul.mubr.f32.gmra.mxu0 %v6140
      %v6544 = vpop.f32.mrf.mxu0
      %v6545 = vadd.f32 %v6320, %v6544
      %v6546 = vpop.f32.mrf.mxu0
      %6547 = vmatprep.mubr.f32.mxu0 0.0
      %6548 = vmatmul.mubr.f32.gmra.mxu0 %v6141
      %v6549 = vpop.f32.mrf.mxu0
      %v6550 = vadd.f32 %v6325, %v6549
      %v6551 = vpop.f32.mrf.mxu0
      %6552 = vmatprep.mubr.f32.mxu0 0.0
      %6553 = vmatmul.mubr.f32.gmra.mxu0 %v6142
      %v6554 = vpop.f32.mrf.mxu0
      %v6555 = vadd.f32 %v6330, %v6554
      %v6556 = vpop.f32.mrf.mxu0
      %6557 = vmatprep.mubr.f32.mxu0 0.0
      %6558 = vmatmul.mubr.f32.gmra.mxu0 %v6143
      %v6559 = vpop.f32.mrf.mxu0
      %v6560 = vadd.f32 %v6335, %v6559
      %v6561 = vpop.f32.mrf.mxu0
      %6562 = vmatprep.mubr.f32.mxu0 0.0
      %6563 = vmatmul.mubr.f32.gmra.mxu0 %v6144
      %v6564 = vpop.f32.mrf.mxu0
      %v6565 = vadd.f32 %v6340, %v6564
      %v6566 = vpop.f32.mrf.mxu0
      %6567 = vmatprep.mubr.f32.mxu0 0.0
      %6568 = vmatmul.mubr.f32.gmra.mxu0 %v6145
      %v6569 = vpop.f32.mrf.mxu0
      %v6570 = vadd.f32 %v6345, %v6569
      %v6571 = vpop.f32.mrf.mxu0
      %6572 = vmatprep.mubr.f32.mxu0 0.0
      %6573 = vmatmul.mubr.f32.gmra.mxu0 %v6146
      %v6574 = vpop.f32.mrf.mxu0
      %v6575 = vadd.f32 %v6350, %v6574
      %v6576 = vpop.f32.mrf.mxu0
      %6577 = vmatprep.mubr.f32.mxu0 0.0
      %6578 = vmatmul.mubr.f32.gmra.mxu0 %v6147
      %v6579 = vpop.f32.mrf.mxu0
      %v6580 = vadd.f32 %v6355, %v6579
      %v6581 = vpop.f32.mrf.mxu0
      %6582 = vmatprep.mubr.f32.mxu0 0.0
      %6583 = vmatmul.mubr.f32.gmra.mxu0 %v6148
      %v6584 = vpop.f32.mrf.mxu0
      %v6585 = vadd.f32 %v6360, %v6584
      %v6586 = vpop.f32.mrf.mxu0
      %6587 = vmatprep.mubr.f32.mxu0 0.0
      %6588 = vmatmul.mubr.f32.gmra.mxu0 %v6149
      %v6589 = vpop.f32.mrf.mxu0
      %v6590 = vadd.f32 %v6365, %v6589
      %v6591 = vpop.f32.mrf.mxu0
      %6592 = vmatprep.mubr.f32.mxu0 0.0
      %6593 = vmatmul.mubr.f32.gmra.mxu0 %v6150
      %v6594 = vpop.f32.mrf.mxu0
      %v6595 = vadd.f32 %v6370, %v6594
      %v6596 = vpop.f32.mrf.mxu0
      %6597 = vmatprep.mubr.f32.mxu0 0.0
      %6598 = vmatmul.mubr.f32.gmra.mxu0 %v6151
      %v6599 = vpop.f32.mrf.mxu0
      %v6600 = vadd.f32 %v6375, %v6599
      %v6601 = vpop.f32.mrf.mxu0
      %6602 = vmatprep.mubr.f32.mxu0 0.0
      %6603 = vmatmul.mubr.f32.gmra.mxu0 %v6152
      %v6604 = vpop.f32.mrf.mxu0
      %v6605 = vadd.f32 %v6380, %v6604
      %v6606 = vpop.f32.mrf.mxu0
      %6607 = vmatprep.mubr.f32.mxu0 0.0
      %6608 = vmatmul.mubr.f32.gmra.mxu0 %v6153
      %v6609 = vpop.f32.mrf.mxu0
      %v6610 = vadd.f32 %v6385, %v6609
      %v6611 = vpop.f32.mrf.mxu0
      %6612 = vmatprep.mubr.f32.mxu0 0.0
      %6613 = vmatmul.mubr.f32.gmra.mxu0 %v6154
      %v6614 = vpop.f32.mrf.mxu0
      %v6615 = vadd.f32 %v6390, %v6614
      %v6616 = vpop.f32.mrf.mxu0
      %6617 = vmatprep.mubr.f32.mxu0 0.0
      %6618 = vmatmul.mubr.f32.gmra.mxu0 %v6155
      %v6619 = vpop.f32.mrf.mxu0
      %v6620 = vadd.f32 %v6395, %v6619
      %v6621 = vpop.f32.mrf.mxu0
      %6622 = vmatprep.mubr.f32.mxu0 0.0
      %6623 = vmatmul.mubr.f32.gmra.mxu0 %v6156
      %v6624 = vpop.f32.mrf.mxu0
      %v6625 = vadd.f32 %v6400, %v6624
      %v6626 = vpop.f32.mrf.mxu0
      %6627 = vmatprep.mubr.f32.mxu0 0.0
      %6628 = vmatmul.mubr.f32.gmra.mxu0 %v6157
      %v6629 = vpop.f32.mrf.mxu0
      %v6630 = vadd.f32 %v6405, %v6629
      %v6631 = vpop.f32.mrf.mxu0
      %6632 = vmatprep.mubr.f32.mxu0 0.0
      %6633 = vmatmul.mubr.f32.gmra.mxu0 %v6158
      %v6634 = vpop.f32.mrf.mxu0
      %v6635 = vadd.f32 %v6410, %v6634
      %v6636 = vpop.f32.mrf.mxu0
      %6637 = vmatprep.mubr.f32.mxu0 0.0
      %6638 = vmatmul.mubr.f32.gmra.mxu0 %v6159
      %v6639 = vpop.f32.mrf.mxu0
      %v6640 = vadd.f32 %v6415, %v6639
      %v6641 = vpop.f32.mrf.mxu0
      %6642 = vmatprep.mubr.f32.mxu0 0.0
      %6643 = vmatmul.mubr.f32.gmra.mxu0 %v6160
      %v6644 = vpop.f32.mrf.mxu0
      %v6645 = vadd.f32 %v6420, %v6644
      %v6646 = vpop.f32.mrf.mxu0
      %6647 = vmatprep.mubr.f32.mxu0 0.0
      %6648 = vmatmul.mubr.f32.gmra.mxu0 %v6161
      %v6649 = vpop.f32.mrf.mxu0
      %v6650 = vadd.f32 %v6425, %v6649
      %v6651 = vpop.f32.mrf.mxu0
      %6652 = vmatprep.mubr.f32.mxu0 0.0
      %6653 = vmatmul.mubr.f32.gmra.mxu0 %v6162
      %v6654 = vpop.f32.mrf.mxu0
      %v6655 = vadd.f32 %v6430, %v6654
      %v6656 = vpop.f32.mrf.mxu0
      %6657 = vmatprep.mubr.f32.mxu0 0.0
      %6658 = vmatmul.mubr.f32.gmra.mxu0 %v6163
      %v6659 = vpop.f32.mrf.mxu0
      %v6660 = vadd.f32 %v6435, %v6659
      %v6661 = vpop.f32.mrf.mxu0
      %6662 = vmatprep.mubr.f32.mxu0 0.0
      %6663 = vmatmul.mubr.f32.gmra.mxu0 %v6164
      %v6664 = vpop.f32.mrf.mxu0
      %v6665 = vadd.f32 %v6440, %v6664
      %v6666 = vpop.f32.mrf.mxu0
      %6667 = vmatprep.mubr.f32.mxu0 0.0
      %6668 = vmatmul.mubr.f32.gmra.mxu0 %v6165
      %v6669 = vpop.f32.mrf.mxu0
      %v6670 = vadd.f32 %v6445, %v6669
      %v6671 = vpop.f32.mrf.mxu0
      %6672 = vmatprep.mubr.f32.mxu0 0.0
      %6673 = vmatmul.mubr.f32.gmra.mxu0 %v6166
      %v6674 = vpop.f32.mrf.mxu0
      %v6675 = vadd.f32 %v6450, %v6674
      %v6676 = vpop.f32.mrf.mxu0
      %6677 = vmatprep.mubr.f32.mxu0 0.0
      %6678 = vmatmul.mubr.f32.gmra.mxu0 %v6167
      %v6679 = vpop.f32.mrf.mxu0
      %v6680 = vadd.f32 %v6455, %v6679
      %v6681 = vpop.f32.mrf.mxu0
      %6682 = vdwg.mxu0
      %v6683 = vld [vmem:[#allocation3 + $0x2] sm:$0xff]
      %v6684 = vld [vmem:[#allocation3 + $0xa] sm:$0xff]
      %v6685 = vld [vmem:[#allocation3 + $0x12] sm:$0xff]
      %v6686 = vld [vmem:[#allocation3 + $0x1a] sm:$0xff]
      %v6687 = vld [vmem:[#allocation3 + $0x22] sm:$0xff]
      %v6688 = vld [vmem:[#allocation3 + $0x2a] sm:$0xff]
      %v6689 = vld [vmem:[#allocation3 + $0x32] sm:$0xff]
      %v6690 = vld [vmem:[#allocation3 + $0x3a] sm:$0xff]
      %v6691 = vld [vmem:[#allocation3 + $0x42] sm:$0xff]
      %v6692 = vld [vmem:[#allocation3 + $0x4a] sm:$0xff]
      %v6693 = vld [vmem:[#allocation3 + $0x52] sm:$0xff]
      %v6694 = vld [vmem:[#allocation3 + $0x5a] sm:$0xff]
      %v6695 = vld [vmem:[#allocation3 + $0x62] sm:$0xff]
      %v6696 = vld [vmem:[#allocation3 + $0x6a] sm:$0xff]
      %v6697 = vld [vmem:[#allocation3 + $0x72] sm:$0xff]
      %v6698 = vld [vmem:[#allocation3 + $0x7a] sm:$0xff]
      %v6699 = vld [vmem:[#allocation3 + $0x82] sm:$0xff]
      %v6700 = vld [vmem:[#allocation3 + $0x8a] sm:$0xff]
      %v6701 = vld [vmem:[#allocation3 + $0x92] sm:$0xff]
      %v6702 = vld [vmem:[#allocation3 + $0x9a] sm:$0xff]
      %v6703 = vld [vmem:[#allocation3 + $0xa2] sm:$0xff]
      %v6704 = vld [vmem:[#allocation3 + $0xaa] sm:$0xff]
      %v6705 = vld [vmem:[#allocation3 + $0xb2] sm:$0xff]
      %v6706 = vld [vmem:[#allocation3 + $0xba] sm:$0xff]
      %v6707 = vld [vmem:[#allocation3 + $0xc2] sm:$0xff]
      %v6708 = vld [vmem:[#allocation3 + $0xca] sm:$0xff]
      %v6709 = vld [vmem:[#allocation3 + $0xd2] sm:$0xff]
      %v6710 = vld [vmem:[#allocation3 + $0xda] sm:$0xff]
      %v6711 = vld [vmem:[#allocation3 + $0xe2] sm:$0xff]
      %v6712 = vld [vmem:[#allocation3 + $0xea] sm:$0xff]
      %v6713 = vld [vmem:[#allocation3 + $0xf2] sm:$0xff]
      %v6714 = vld [vmem:[#allocation3 + $0xfa] sm:$0xff]
      %s6715 = scalar_lea.vmem %s5, 256
      %v6716 = vld [vmem:[%s6715] sm:$0xff]
      %v6717 = vld [vmem:[%s6715 + $0x8] sm:$0xff]
      %v6718 = vld [vmem:[%s6715 + $0x10] sm:$0xff]
      %v6719 = vld [vmem:[%s6715 + $0x18] sm:$0xff]
      %v6720 = vld [vmem:[%s6715 + $0x20] sm:$0xff]
      %v6721 = vld [vmem:[%s6715 + $0x28] sm:$0xff]
      %v6722 = vld [vmem:[%s6715 + $0x30] sm:$0xff]
      %v6723 = vld [vmem:[%s6715 + $0x38] sm:$0xff]
      %v6724 = vld [vmem:[%s6715 + $0x40] sm:$0xff]
      %v6725 = vld [vmem:[%s6715 + $0x48] sm:$0xff]
      %v6726 = vld [vmem:[%s6715 + $0x50] sm:$0xff]
      %v6727 = vld [vmem:[%s6715 + $0x58] sm:$0xff]
      %v6728 = vld [vmem:[%s6715 + $0x60] sm:$0xff]
      %v6729 = vld [vmem:[%s6715 + $0x68] sm:$0xff]
      %v6730 = vld [vmem:[%s6715 + $0x70] sm:$0xff]
      %v6731 = vld [vmem:[%s6715 + $0x78] sm:$0xff]
      %6732 = vmatprep.subr.mxu0 0.0
      %6733 = vmatpush1.msra.mxu0 %v6731
      %6734 = vmatprep.subr.mxu0 0.0
      %6735 = vmatpush1.msra.mxu0 %v6730
      %6736 = vmatprep.subr.mxu0 0.0
      %6737 = vmatpush1.msra.mxu0 %v6729
      %6738 = vmatprep.subr.mxu0 0.0
      %6739 = vmatpush1.msra.mxu0 %v6728
      %6740 = vmatprep.subr.mxu0 0.0
      %6741 = vmatpush1.msra.mxu0 %v6727
      %6742 = vmatprep.subr.mxu0 0.0
      %6743 = vmatpush1.msra.mxu0 %v6726
      %6744 = vmatprep.subr.mxu0 0.0
      %6745 = vmatpush1.msra.mxu0 %v6725
      %6746 = vmatprep.subr.mxu0 0.0
      %6747 = vmatpush1.msra.mxu0 %v6724
      %6748 = vmatprep.subr.mxu0 0.0
      %6749 = vmatpush1.msra.mxu0 %v6723
      %6750 = vmatprep.subr.mxu0 0.0
      %6751 = vmatpush1.msra.mxu0 %v6722
      %6752 = vmatprep.subr.mxu0 0.0
      %6753 = vmatpush1.msra.mxu0 %v6721
      %6754 = vmatprep.subr.mxu0 0.0
      %6755 = vmatpush1.msra.mxu0 %v6720
      %6756 = vmatprep.subr.mxu0 0.0
      %6757 = vmatpush1.msra.mxu0 %v6719
      %6758 = vmatprep.subr.mxu0 0.0
      %6759 = vmatpush1.msra.mxu0 %v6718
      %6760 = vmatprep.subr.mxu0 0.0
      %6761 = vmatpush1.msra.mxu0 %v6717
      %6762 = vmatprep.subr.mxu0 0.0
      %6763 = vmatpush1.msra.mxu0 %v6716
      %6764 = vmatprep.subr.mxu0 0.0
      %6765 = vmatpush2.msra.mxu0 0.0
      %6766 = vmatprep.subr.mxu0 0.0
      %6767 = vmatpush2.msra.mxu0 0.0
      %6768 = vmatprep.subr.mxu0 0.0
      %6769 = vmatpush2.msra.mxu0 0.0
      %6770 = vmatprep.subr.mxu0 0.0
      %6771 = vmatpush2.msra.mxu0 0.0
      %6772 = vmatprep.subr.mxu0 0.0
      %6773 = vmatpush2.msra.mxu0 0.0
      %6774 = vmatprep.subr.mxu0 0.0
      %6775 = vmatpush2.msra.mxu0 0.0
      %6776 = vmatprep.subr.mxu0 0.0
      %6777 = vmatpush2.msra.mxu0 0.0
      %6778 = vmatprep.subr.mxu0 0.0
      %6779 = vmatpush2.msra.mxu0 0.0
      %6780 = vmatprep.subr.mxu0 0.0
      %6781 = vmatpush2.msra.mxu0 0.0
      %6782 = vmatprep.subr.mxu0 0.0
      %6783 = vmatpush2.msra.mxu0 0.0
      %6784 = vmatprep.subr.mxu0 0.0
      %6785 = vmatpush2.msra.mxu0 0.0
      %6786 = vmatprep.subr.mxu0 0.0
      %6787 = vmatpush2.msra.mxu0 0.0
      %6788 = vmatprep.subr.mxu0 0.0
      %6789 = vmatpush2.msra.mxu0 0.0
      %6790 = vmatprep.subr.mxu0 0.0
      %6791 = vmatpush2.msra.mxu0 0.0
      %6792 = vmatprep.subr.mxu0 0.0
      %6793 = vmatpush2.msra.mxu0 0.0
      %6794 = vmatprep.subr.mxu0 0.0
      %6795 = vmatpush2.msra.mxu0 0.0
      %6796 = vmatprep.mubr.f32.mxu0 0.0
      %6797 = vmatmul.mubr.f32.gmra.mxu0 %v6683
      %v6798 = vpop.f32.mrf.mxu0
      %v6799 = vadd.f32 0.0, %v6798
      %v6800 = vpop.f32.mrf.mxu0
      %6801 = vmatprep.mubr.f32.mxu0 0.0
      %6802 = vmatmul.mubr.f32.gmra.mxu0 %v6684
      %v6803 = vpop.f32.mrf.mxu0
      %v6804 = vadd.f32 0.0, %v6803
      %v6805 = vpop.f32.mrf.mxu0
      %6806 = vmatprep.mubr.f32.mxu0 0.0
      %6807 = vmatmul.mubr.f32.gmra.mxu0 %v6685
      %v6808 = vpop.f32.mrf.mxu0
      %v6809 = vadd.f32 0.0, %v6808
      %v6810 = vpop.f32.mrf.mxu0
      %6811 = vmatprep.mubr.f32.mxu0 0.0
      %6812 = vmatmul.mubr.f32.gmra.mxu0 %v6686
      %v6813 = vpop.f32.mrf.mxu0
      %v6814 = vadd.f32 0.0, %v6813
      %v6815 = vpop.f32.mrf.mxu0
      %6816 = vmatprep.mubr.f32.mxu0 0.0
      %6817 = vmatmul.mubr.f32.gmra.mxu0 %v6687
      %v6818 = vpop.f32.mrf.mxu0
      %v6819 = vadd.f32 0.0, %v6818
      %v6820 = vpop.f32.mrf.mxu0
      %6821 = vmatprep.mubr.f32.mxu0 0.0
      %6822 = vmatmul.mubr.f32.gmra.mxu0 %v6688
      %v6823 = vpop.f32.mrf.mxu0
      %v6824 = vadd.f32 0.0, %v6823
      %v6825 = vpop.f32.mrf.mxu0
      %6826 = vmatprep.mubr.f32.mxu0 0.0
      %6827 = vmatmul.mubr.f32.gmra.mxu0 %v6689
      %v6828 = vpop.f32.mrf.mxu0
      %v6829 = vadd.f32 0.0, %v6828
      %v6830 = vpop.f32.mrf.mxu0
      %6831 = vmatprep.mubr.f32.mxu0 0.0
      %6832 = vmatmul.mubr.f32.gmra.mxu0 %v6690
      %v6833 = vpop.f32.mrf.mxu0
      %v6834 = vadd.f32 0.0, %v6833
      %v6835 = vpop.f32.mrf.mxu0
      %6836 = vmatprep.mubr.f32.mxu0 0.0
      %6837 = vmatmul.mubr.f32.gmra.mxu0 %v6691
      %v6838 = vpop.f32.mrf.mxu0
      %v6839 = vadd.f32 0.0, %v6838
      %v6840 = vpop.f32.mrf.mxu0
      %6841 = vmatprep.mubr.f32.mxu0 0.0
      %6842 = vmatmul.mubr.f32.gmra.mxu0 %v6692
      %v6843 = vpop.f32.mrf.mxu0
      %v6844 = vadd.f32 0.0, %v6843
      %v6845 = vpop.f32.mrf.mxu0
      %6846 = vmatprep.mubr.f32.mxu0 0.0
      %6847 = vmatmul.mubr.f32.gmra.mxu0 %v6693
      %v6848 = vpop.f32.mrf.mxu0
      %v6849 = vadd.f32 0.0, %v6848
      %v6850 = vpop.f32.mrf.mxu0
      %6851 = vmatprep.mubr.f32.mxu0 0.0
      %6852 = vmatmul.mubr.f32.gmra.mxu0 %v6694
      %v6853 = vpop.f32.mrf.mxu0
      %v6854 = vadd.f32 0.0, %v6853
      %v6855 = vpop.f32.mrf.mxu0
      %6856 = vmatprep.mubr.f32.mxu0 0.0
      %6857 = vmatmul.mubr.f32.gmra.mxu0 %v6695
      %v6858 = vpop.f32.mrf.mxu0
      %v6859 = vadd.f32 0.0, %v6858
      %v6860 = vpop.f32.mrf.mxu0
      %6861 = vmatprep.mubr.f32.mxu0 0.0
      %6862 = vmatmul.mubr.f32.gmra.mxu0 %v6696
      %v6863 = vpop.f32.mrf.mxu0
      %v6864 = vadd.f32 0.0, %v6863
      %v6865 = vpop.f32.mrf.mxu0
      %6866 = vmatprep.mubr.f32.mxu0 0.0
      %6867 = vmatmul.mubr.f32.gmra.mxu0 %v6697
      %v6868 = vpop.f32.mrf.mxu0
      %v6869 = vadd.f32 0.0, %v6868
      %v6870 = vpop.f32.mrf.mxu0
      %6871 = vmatprep.mubr.f32.mxu0 0.0
      %6872 = vmatmul.mubr.f32.gmra.mxu0 %v6698
      %v6873 = vpop.f32.mrf.mxu0
      %v6874 = vadd.f32 0.0, %v6873
      %v6875 = vpop.f32.mrf.mxu0
      %6876 = vmatprep.mubr.f32.mxu0 0.0
      %6877 = vmatmul.mubr.f32.gmra.mxu0 %v6699
      %v6878 = vpop.f32.mrf.mxu0
      %v6879 = vadd.f32 0.0, %v6878
      %v6880 = vpop.f32.mrf.mxu0
      %6881 = vmatprep.mubr.f32.mxu0 0.0
      %6882 = vmatmul.mubr.f32.gmra.mxu0 %v6700
      %v6883 = vpop.f32.mrf.mxu0
      %v6884 = vadd.f32 0.0, %v6883
      %v6885 = vpop.f32.mrf.mxu0
      %6886 = vmatprep.mubr.f32.mxu0 0.0
      %6887 = vmatmul.mubr.f32.gmra.mxu0 %v6701
      %v6888 = vpop.f32.mrf.mxu0
      %v6889 = vadd.f32 0.0, %v6888
      %v6890 = vpop.f32.mrf.mxu0
      %6891 = vmatprep.mubr.f32.mxu0 0.0
      %6892 = vmatmul.mubr.f32.gmra.mxu0 %v6702
      %v6893 = vpop.f32.mrf.mxu0
      %v6894 = vadd.f32 0.0, %v6893
      %v6895 = vpop.f32.mrf.mxu0
      %6896 = vmatprep.mubr.f32.mxu0 0.0
      %6897 = vmatmul.mubr.f32.gmra.mxu0 %v6703
      %v6898 = vpop.f32.mrf.mxu0
      %v6899 = vadd.f32 0.0, %v6898
      %v6900 = vpop.f32.mrf.mxu0
      %6901 = vmatprep.mubr.f32.mxu0 0.0
      %6902 = vmatmul.mubr.f32.gmra.mxu0 %v6704
      %v6903 = vpop.f32.mrf.mxu0
      %v6904 = vadd.f32 0.0, %v6903
      %v6905 = vpop.f32.mrf.mxu0
      %6906 = vmatprep.mubr.f32.mxu0 0.0
      %6907 = vmatmul.mubr.f32.gmra.mxu0 %v6705
      %v6908 = vpop.f32.mrf.mxu0
      %v6909 = vadd.f32 0.0, %v6908
      %v6910 = vpop.f32.mrf.mxu0
      %6911 = vmatprep.mubr.f32.mxu0 0.0
      %6912 = vmatmul.mubr.f32.gmra.mxu0 %v6706
      %v6913 = vpop.f32.mrf.mxu0
      %v6914 = vadd.f32 0.0, %v6913
      %v6915 = vpop.f32.mrf.mxu0
      %6916 = vmatprep.mubr.f32.mxu0 0.0
      %6917 = vmatmul.mubr.f32.gmra.mxu0 %v6707
      %v6918 = vpop.f32.mrf.mxu0
      %v6919 = vadd.f32 0.0, %v6918
      %v6920 = vpop.f32.mrf.mxu0
      %6921 = vmatprep.mubr.f32.mxu0 0.0
      %6922 = vmatmul.mubr.f32.gmra.mxu0 %v6708
      %v6923 = vpop.f32.mrf.mxu0
      %v6924 = vadd.f32 0.0, %v6923
      %v6925 = vpop.f32.mrf.mxu0
      %6926 = vmatprep.mubr.f32.mxu0 0.0
      %6927 = vmatmul.mubr.f32.gmra.mxu0 %v6709
      %v6928 = vpop.f32.mrf.mxu0
      %v6929 = vadd.f32 0.0, %v6928
      %v6930 = vpop.f32.mrf.mxu0
      %6931 = vmatprep.mubr.f32.mxu0 0.0
      %6932 = vmatmul.mubr.f32.gmra.mxu0 %v6710
      %v6933 = vpop.f32.mrf.mxu0
      %v6934 = vadd.f32 0.0, %v6933
      %v6935 = vpop.f32.mrf.mxu0
      %6936 = vmatprep.mubr.f32.mxu0 0.0
      %6937 = vmatmul.mubr.f32.gmra.mxu0 %v6711
      %v6938 = vpop.f32.mrf.mxu0
      %v6939 = vadd.f32 0.0, %v6938
      %v6940 = vpop.f32.mrf.mxu0
      %6941 = vmatprep.mubr.f32.mxu0 0.0
      %6942 = vmatmul.mubr.f32.gmra.mxu0 %v6712
      %v6943 = vpop.f32.mrf.mxu0
      %v6944 = vadd.f32 0.0, %v6943
      %v6945 = vpop.f32.mrf.mxu0
      %6946 = vmatprep.mubr.f32.mxu0 0.0
      %6947 = vmatmul.mubr.f32.gmra.mxu0 %v6713
      %v6948 = vpop.f32.mrf.mxu0
      %v6949 = vadd.f32 0.0, %v6948
      %v6950 = vpop.f32.mrf.mxu0
      %6951 = vmatprep.mubr.f32.mxu0 0.0
      %6952 = vmatmul.mubr.f32.gmra.mxu0 %v6714
      %v6953 = vpop.f32.mrf.mxu0
      %v6954 = vadd.f32 0.0, %v6953
      %v6955 = vpop.f32.mrf.mxu0
      %6956 = vdwg.mxu0
      %v6957 = vadd.f32 %v6525, %v6799
      %v6958 = vadd.f32 %v6530, %v6804
      %v6959 = vadd.f32 %v6535, %v6809
      %v6960 = vadd.f32 %v6540, %v6814
      %v6961 = vadd.f32 %v6545, %v6819
      %v6962 = vadd.f32 %v6550, %v6824
      %v6963 = vadd.f32 %v6555, %v6829
      %v6964 = vadd.f32 %v6560, %v6834
      %v6965 = vadd.f32 %v6565, %v6839
      %v6966 = vadd.f32 %v6570, %v6844
      %v6967 = vadd.f32 %v6575, %v6849
      %v6968 = vadd.f32 %v6580, %v6854
      %v6969 = vadd.f32 %v6585, %v6859
      %v6970 = vadd.f32 %v6590, %v6864
      %v6971 = vadd.f32 %v6595, %v6869
      %v6972 = vadd.f32 %v6600, %v6874
      %v6973 = vadd.f32 %v6605, %v6879
      %v6974 = vadd.f32 %v6610, %v6884
      %v6975 = vadd.f32 %v6615, %v6889
      %v6976 = vadd.f32 %v6620, %v6894
      %v6977 = vadd.f32 %v6625, %v6899
      %v6978 = vadd.f32 %v6630, %v6904
      %v6979 = vadd.f32 %v6635, %v6909
      %v6980 = vadd.f32 %v6640, %v6914
      %v6981 = vadd.f32 %v6645, %v6919
      %v6982 = vadd.f32 %v6650, %v6924
      %v6983 = vadd.f32 %v6655, %v6929
      %v6984 = vadd.f32 %v6660, %v6934
      %v6985 = vadd.f32 %v6665, %v6939
      %v6986 = vadd.f32 %v6670, %v6944
      %v6987 = vadd.f32 %v6675, %v6949
      %v6988 = vadd.f32 %v6680, %v6954
      %v6989 = vld [vmem:[#allocation3 + $0x10] sm:$0xff]
      %v6990 = vld [vmem:[#allocation3 + $0x18] sm:$0xff]
      %v6991 = vld [vmem:[#allocation3 + $0x20] sm:$0xff]
      %v6992 = vld [vmem:[#allocation3 + $0x28] sm:$0xff]
      %v6993 = vld [vmem:[#allocation3 + $0x30] sm:$0xff]
      %v6994 = vld [vmem:[#allocation3 + $0x38] sm:$0xff]
      %v6995 = vld [vmem:[#allocation3 + $0x40] sm:$0xff]
      %v6996 = vld [vmem:[#allocation3 + $0x48] sm:$0xff]
      %v6997 = vld [vmem:[#allocation3 + $0x50] sm:$0xff]
      %v6998 = vld [vmem:[#allocation3 + $0x58] sm:$0xff]
      %v6999 = vld [vmem:[#allocation3 + $0x60] sm:$0xff]
      %v7000 = vld [vmem:[#allocation3 + $0x68] sm:$0xff]
      %v7001 = vld [vmem:[#allocation3 + $0x70] sm:$0xff]
      %v7002 = vld [vmem:[#allocation3 + $0x78] sm:$0xff]
      %v7003 = vld [vmem:[#allocation3 + $0x80] sm:$0xff]
      %v7004 = vld [vmem:[#allocation3 + $0x88] sm:$0xff]
      %v7005 = vld [vmem:[#allocation3 + $0x90] sm:$0xff]
      %v7006 = vld [vmem:[#allocation3 + $0x98] sm:$0xff]
      %v7007 = vld [vmem:[#allocation3 + $0xa0] sm:$0xff]
      %v7008 = vld [vmem:[#allocation3 + $0xa8] sm:$0xff]
      %v7009 = vld [vmem:[#allocation3 + $0xb0] sm:$0xff]
      %v7010 = vld [vmem:[#allocation3 + $0xb8] sm:$0xff]
      %v7011 = vld [vmem:[#allocation3 + $0xc0] sm:$0xff]
      %v7012 = vld [vmem:[#allocation3 + $0xc8] sm:$0xff]
      %v7013 = vld [vmem:[#allocation3 + $0xd0] sm:$0xff]
      %v7014 = vld [vmem:[#allocation3 + $0xd8] sm:$0xff]
      %v7015 = vld [vmem:[#allocation3 + $0xe0] sm:$0xff]
      %v7016 = vld [vmem:[#allocation3 + $0xe8] sm:$0xff]
      %v7017 = vld [vmem:[#allocation3 + $0xf0] sm:$0xff]
      %v7018 = vld [vmem:[#allocation3 + $0xf8] sm:$0xff]
      %v7019 = vld [vmem:[#allocation3 + $0x100] sm:$0xff]
      %v7020 = vld [vmem:[#allocation3 + $0x108] sm:$0xff]
      %s7021 = scalar_lea.vmem %s5, 384
      %v7022 = vld [vmem:[%s7021] sm:$0xff]
      %v7023 = vld [vmem:[%s7021 + $0x8] sm:$0xff]
      %v7024 = vld [vmem:[%s7021 + $0x10] sm:$0xff]
      %v7025 = vld [vmem:[%s7021 + $0x18] sm:$0xff]
      %v7026 = vld [vmem:[%s7021 + $0x20] sm:$0xff]
      %v7027 = vld [vmem:[%s7021 + $0x28] sm:$0xff]
      %v7028 = vld [vmem:[%s7021 + $0x30] sm:$0xff]
      %v7029 = vld [vmem:[%s7021 + $0x38] sm:$0xff]
      %v7030 = vld [vmem:[%s7021 + $0x40] sm:$0xff]
      %v7031 = vld [vmem:[%s7021 + $0x48] sm:$0xff]
      %v7032 = vld [vmem:[%s7021 + $0x50] sm:$0xff]
      %v7033 = vld [vmem:[%s7021 + $0x58] sm:$0xff]
      %v7034 = vld [vmem:[%s7021 + $0x60] sm:$0xff]
      %v7035 = vld [vmem:[%s7021 + $0x68] sm:$0xff]
      %v7036 = vld [vmem:[%s7021 + $0x70] sm:$0xff]
      %v7037 = vld [vmem:[%s7021 + $0x78] sm:$0xff]
      %7038 = vmatprep.subr.mxu0 0.0
      %7039 = vmatpush1.msra.mxu0 %v7037
      %7040 = vmatprep.subr.mxu0 0.0
      %7041 = vmatpush1.msra.mxu0 %v7036
      %7042 = vmatprep.subr.mxu0 0.0
      %7043 = vmatpush1.msra.mxu0 %v7035
      %7044 = vmatprep.subr.mxu0 0.0
      %7045 = vmatpush1.msra.mxu0 %v7034
      %7046 = vmatprep.subr.mxu0 0.0
      %7047 = vmatpush1.msra.mxu0 %v7033
      %7048 = vmatprep.subr.mxu0 0.0
      %7049 = vmatpush1.msra.mxu0 %v7032
      %7050 = vmatprep.subr.mxu0 0.0
      %7051 = vmatpush1.msra.mxu0 %v7031
      %7052 = vmatprep.subr.mxu0 0.0
      %7053 = vmatpush1.msra.mxu0 %v7030
      %7054 = vmatprep.subr.mxu0 0.0
      %7055 = vmatpush1.msra.mxu0 %v7029
      %7056 = vmatprep.subr.mxu0 0.0
      %7057 = vmatpush1.msra.mxu0 %v7028
      %7058 = vmatprep.subr.mxu0 0.0
      %7059 = vmatpush1.msra.mxu0 %v7027
      %7060 = vmatprep.subr.mxu0 0.0
      %7061 = vmatpush1.msra.mxu0 %v7026
      %7062 = vmatprep.subr.mxu0 0.0
      %7063 = vmatpush1.msra.mxu0 %v7025
      %7064 = vmatprep.subr.mxu0 0.0
      %7065 = vmatpush1.msra.mxu0 %v7024
      %7066 = vmatprep.subr.mxu0 0.0
      %7067 = vmatpush1.msra.mxu0 %v7023
      %7068 = vmatprep.subr.mxu0 0.0
      %7069 = vmatpush1.msra.mxu0 %v7022
      %7070 = vmatprep.subr.mxu0 0.0
      %7071 = vmatpush2.msra.mxu0 0.0
      %7072 = vmatprep.subr.mxu0 0.0
      %7073 = vmatpush2.msra.mxu0 0.0
      %7074 = vmatprep.subr.mxu0 0.0
      %7075 = vmatpush2.msra.mxu0 0.0
      %7076 = vmatprep.subr.mxu0 0.0
      %7077 = vmatpush2.msra.mxu0 0.0
      %7078 = vmatprep.subr.mxu0 0.0
      %7079 = vmatpush2.msra.mxu0 0.0
      %7080 = vmatprep.subr.mxu0 0.0
      %7081 = vmatpush2.msra.mxu0 0.0
      %7082 = vmatprep.subr.mxu0 0.0
      %7083 = vmatpush2.msra.mxu0 0.0
      %7084 = vmatprep.subr.mxu0 0.0
      %7085 = vmatpush2.msra.mxu0 0.0
      %7086 = vmatprep.subr.mxu0 0.0
      %7087 = vmatpush2.msra.mxu0 0.0
      %7088 = vmatprep.subr.mxu0 0.0
      %7089 = vmatpush2.msra.mxu0 0.0
      %7090 = vmatprep.subr.mxu0 0.0
      %7091 = vmatpush2.msra.mxu0 0.0
      %7092 = vmatprep.subr.mxu0 0.0
      %7093 = vmatpush2.msra.mxu0 0.0
      %7094 = vmatprep.subr.mxu0 0.0
      %7095 = vmatpush2.msra.mxu0 0.0
      %7096 = vmatprep.subr.mxu0 0.0
      %7097 = vmatpush2.msra.mxu0 0.0
      %7098 = vmatprep.subr.mxu0 0.0
      %7099 = vmatpush2.msra.mxu0 0.0
      %7100 = vmatprep.subr.mxu0 0.0
      %7101 = vmatpush2.msra.mxu0 0.0
      %7102 = vmatprep.mubr.f32.mxu0 0.0
      %7103 = vmatmul.mubr.f32.gmra.mxu0 %v6989
      %v7104 = vpop.f32.mrf.mxu0
      %v7105 = vadd.f32 0.0, %v7104
      %v7106 = vpop.f32.mrf.mxu0
      %7107 = vmatprep.mubr.f32.mxu0 0.0
      %7108 = vmatmul.mubr.f32.gmra.mxu0 %v6990
      %v7109 = vpop.f32.mrf.mxu0
      %v7110 = vadd.f32 0.0, %v7109
      %v7111 = vpop.f32.mrf.mxu0
      %7112 = vmatprep.mubr.f32.mxu0 0.0
      %7113 = vmatmul.mubr.f32.gmra.mxu0 %v6991
      %v7114 = vpop.f32.mrf.mxu0
      %v7115 = vadd.f32 0.0, %v7114
      %v7116 = vpop.f32.mrf.mxu0
      %7117 = vmatprep.mubr.f32.mxu0 0.0
      %7118 = vmatmul.mubr.f32.gmra.mxu0 %v6992
      %v7119 = vpop.f32.mrf.mxu0
      %v7120 = vadd.f32 0.0, %v7119
      %v7121 = vpop.f32.mrf.mxu0
      %7122 = vmatprep.mubr.f32.mxu0 0.0
      %7123 = vmatmul.mubr.f32.gmra.mxu0 %v6993
      %v7124 = vpop.f32.mrf.mxu0
      %v7125 = vadd.f32 0.0, %v7124
      %v7126 = vpop.f32.mrf.mxu0
      %7127 = vmatprep.mubr.f32.mxu0 0.0
      %7128 = vmatmul.mubr.f32.gmra.mxu0 %v6994
      %v7129 = vpop.f32.mrf.mxu0
      %v7130 = vadd.f32 0.0, %v7129
      %v7131 = vpop.f32.mrf.mxu0
      %7132 = vmatprep.mubr.f32.mxu0 0.0
      %7133 = vmatmul.mubr.f32.gmra.mxu0 %v6995
      %v7134 = vpop.f32.mrf.mxu0
      %v7135 = vadd.f32 0.0, %v7134
      %v7136 = vpop.f32.mrf.mxu0
      %7137 = vmatprep.mubr.f32.mxu0 0.0
      %7138 = vmatmul.mubr.f32.gmra.mxu0 %v6996
      %v7139 = vpop.f32.mrf.mxu0
      %v7140 = vadd.f32 0.0, %v7139
      %v7141 = vpop.f32.mrf.mxu0
      %7142 = vmatprep.mubr.f32.mxu0 0.0
      %7143 = vmatmul.mubr.f32.gmra.mxu0 %v6997
      %v7144 = vpop.f32.mrf.mxu0
      %v7145 = vadd.f32 0.0, %v7144
      %v7146 = vpop.f32.mrf.mxu0
      %7147 = vmatprep.mubr.f32.mxu0 0.0
      %7148 = vmatmul.mubr.f32.gmra.mxu0 %v6998
      %v7149 = vpop.f32.mrf.mxu0
      %v7150 = vadd.f32 0.0, %v7149
      %v7151 = vpop.f32.mrf.mxu0
      %7152 = vmatprep.mubr.f32.mxu0 0.0
      %7153 = vmatmul.mubr.f32.gmra.mxu0 %v6999
      %v7154 = vpop.f32.mrf.mxu0
      %v7155 = vadd.f32 0.0, %v7154
      %v7156 = vpop.f32.mrf.mxu0
      %7157 = vmatprep.mubr.f32.mxu0 0.0
      %7158 = vmatmul.mubr.f32.gmra.mxu0 %v7000
      %v7159 = vpop.f32.mrf.mxu0
      %v7160 = vadd.f32 0.0, %v7159
      %v7161 = vpop.f32.mrf.mxu0
      %7162 = vmatprep.mubr.f32.mxu0 0.0
      %7163 = vmatmul.mubr.f32.gmra.mxu0 %v7001
      %v7164 = vpop.f32.mrf.mxu0
      %v7165 = vadd.f32 0.0, %v7164
      %v7166 = vpop.f32.mrf.mxu0
      %7167 = vmatprep.mubr.f32.mxu0 0.0
      %7168 = vmatmul.mubr.f32.gmra.mxu0 %v7002
      %v7169 = vpop.f32.mrf.mxu0
      %v7170 = vadd.f32 0.0, %v7169
      %v7171 = vpop.f32.mrf.mxu0
      %7172 = vmatprep.mubr.f32.mxu0 0.0
      %7173 = vmatmul.mubr.f32.gmra.mxu0 %v7003
      %v7174 = vpop.f32.mrf.mxu0
      %v7175 = vadd.f32 0.0, %v7174
      %v7176 = vpop.f32.mrf.mxu0
      %7177 = vmatprep.mubr.f32.mxu0 0.0
      %7178 = vmatmul.mubr.f32.gmra.mxu0 %v7004
      %v7179 = vpop.f32.mrf.mxu0
      %v7180 = vadd.f32 0.0, %v7179
      %v7181 = vpop.f32.mrf.mxu0
      %7182 = vmatprep.mubr.f32.mxu0 0.0
      %7183 = vmatmul.mubr.f32.gmra.mxu0 %v7005
      %v7184 = vpop.f32.mrf.mxu0
      %v7185 = vadd.f32 0.0, %v7184
      %v7186 = vpop.f32.mrf.mxu0
      %7187 = vmatprep.mubr.f32.mxu0 0.0
      %7188 = vmatmul.mubr.f32.gmra.mxu0 %v7006
      %v7189 = vpop.f32.mrf.mxu0
      %v7190 = vadd.f32 0.0, %v7189
      %v7191 = vpop.f32.mrf.mxu0
      %7192 = vmatprep.mubr.f32.mxu0 0.0
      %7193 = vmatmul.mubr.f32.gmra.mxu0 %v7007
      %v7194 = vpop.f32.mrf.mxu0
      %v7195 = vadd.f32 0.0, %v7194
      %v7196 = vpop.f32.mrf.mxu0
      %7197 = vmatprep.mubr.f32.mxu0 0.0
      %7198 = vmatmul.mubr.f32.gmra.mxu0 %v7008
      %v7199 = vpop.f32.mrf.mxu0
      %v7200 = vadd.f32 0.0, %v7199
      %v7201 = vpop.f32.mrf.mxu0
      %7202 = vmatprep.mubr.f32.mxu0 0.0
      %7203 = vmatmul.mubr.f32.gmra.mxu0 %v7009
      %v7204 = vpop.f32.mrf.mxu0
      %v7205 = vadd.f32 0.0, %v7204
      %v7206 = vpop.f32.mrf.mxu0
      %7207 = vmatprep.mubr.f32.mxu0 0.0
      %7208 = vmatmul.mubr.f32.gmra.mxu0 %v7010
      %v7209 = vpop.f32.mrf.mxu0
      %v7210 = vadd.f32 0.0, %v7209
      %v7211 = vpop.f32.mrf.mxu0
      %7212 = vmatprep.mubr.f32.mxu0 0.0
      %7213 = vmatmul.mubr.f32.gmra.mxu0 %v7011
      %v7214 = vpop.f32.mrf.mxu0
      %v7215 = vadd.f32 0.0, %v7214
      %v7216 = vpop.f32.mrf.mxu0
      %7217 = vmatprep.mubr.f32.mxu0 0.0
      %7218 = vmatmul.mubr.f32.gmra.mxu0 %v7012
      %v7219 = vpop.f32.mrf.mxu0
      %v7220 = vadd.f32 0.0, %v7219
      %v7221 = vpop.f32.mrf.mxu0
      %7222 = vmatprep.mubr.f32.mxu0 0.0
      %7223 = vmatmul.mubr.f32.gmra.mxu0 %v7013
      %v7224 = vpop.f32.mrf.mxu0
      %v7225 = vadd.f32 0.0, %v7224
      %v7226 = vpop.f32.mrf.mxu0
      %7227 = vmatprep.mubr.f32.mxu0 0.0
      %7228 = vmatmul.mubr.f32.gmra.mxu0 %v7014
      %v7229 = vpop.f32.mrf.mxu0
      %v7230 = vadd.f32 0.0, %v7229
      %v7231 = vpop.f32.mrf.mxu0
      %7232 = vmatprep.mubr.f32.mxu0 0.0
      %7233 = vmatmul.mubr.f32.gmra.mxu0 %v7015
      %v7234 = vpop.f32.mrf.mxu0
      %v7235 = vadd.f32 0.0, %v7234
      %v7236 = vpop.f32.mrf.mxu0
      %7237 = vmatprep.mubr.f32.mxu0 0.0
      %7238 = vmatmul.mubr.f32.gmra.mxu0 %v7016
      %v7239 = vpop.f32.mrf.mxu0
      %v7240 = vadd.f32 0.0, %v7239
      %v7241 = vpop.f32.mrf.mxu0
      %7242 = vmatprep.mubr.f32.mxu0 0.0
      %7243 = vmatmul.mubr.f32.gmra.mxu0 %v7017
      %v7244 = vpop.f32.mrf.mxu0
      %v7245 = vadd.f32 0.0, %v7244
      %v7246 = vpop.f32.mrf.mxu0
      %7247 = vmatprep.mubr.f32.mxu0 0.0
      %7248 = vmatmul.mubr.f32.gmra.mxu0 %v7018
      %v7249 = vpop.f32.mrf.mxu0
      %v7250 = vadd.f32 0.0, %v7249
      %v7251 = vpop.f32.mrf.mxu0
      %7252 = vmatprep.mubr.f32.mxu0 0.0
      %7253 = vmatmul.mubr.f32.gmra.mxu0 %v7019
      %v7254 = vpop.f32.mrf.mxu0
      %v7255 = vadd.f32 0.0, %v7254
      %v7256 = vpop.f32.mrf.mxu0
      %7257 = vmatprep.mubr.f32.mxu0 0.0
      %7258 = vmatmul.mubr.f32.gmra.mxu0 %v7020
      %v7259 = vpop.f32.mrf.mxu0
      %v7260 = vadd.f32 0.0, %v7259
      %v7261 = vpop.f32.mrf.mxu0
      %7262 = vdwg.mxu0
      %v7263 = vadd.f32 %v6957, %v7105
      %v7264 = vadd.f32 %v6958, %v7110
      %v7265 = vadd.f32 %v6959, %v7115
      %v7266 = vadd.f32 %v6960, %v7120
      %v7267 = vadd.f32 %v6961, %v7125
      %v7268 = vadd.f32 %v6962, %v7130
      %v7269 = vadd.f32 %v6963, %v7135
      %v7270 = vadd.f32 %v6964, %v7140
      %v7271 = vadd.f32 %v6965, %v7145
      %v7272 = vadd.f32 %v6966, %v7150
      %v7273 = vadd.f32 %v6967, %v7155
      %v7274 = vadd.f32 %v6968, %v7160
      %v7275 = vadd.f32 %v6969, %v7165
      %v7276 = vadd.f32 %v6970, %v7170
      %v7277 = vadd.f32 %v6971, %v7175
      %v7278 = vadd.f32 %v6972, %v7180
      %v7279 = vadd.f32 %v6973, %v7185
      %v7280 = vadd.f32 %v6974, %v7190
      %v7281 = vadd.f32 %v6975, %v7195
      %v7282 = vadd.f32 %v6976, %v7200
      %v7283 = vadd.f32 %v6977, %v7205
      %v7284 = vadd.f32 %v6978, %v7210
      %v7285 = vadd.f32 %v6979, %v7215
      %v7286 = vadd.f32 %v6980, %v7220
      %v7287 = vadd.f32 %v6981, %v7225
      %v7288 = vadd.f32 %v6982, %v7230
      %v7289 = vadd.f32 %v6983, %v7235
      %v7290 = vadd.f32 %v6984, %v7240
      %v7291 = vadd.f32 %v6985, %v7245
      %v7292 = vadd.f32 %v6986, %v7250
      %v7293 = vadd.f32 %v6987, %v7255
      %v7294 = vadd.f32 %v6988, %v7260
      %v7295 = vld [vmem:[#allocation3 + $0x11] sm:$0xff]
      %v7296 = vld [vmem:[#allocation3 + $0x19] sm:$0xff]
      %v7297 = vld [vmem:[#allocation3 + $0x21] sm:$0xff]
      %v7298 = vld [vmem:[#allocation3 + $0x29] sm:$0xff]
      %v7299 = vld [vmem:[#allocation3 + $0x31] sm:$0xff]
      %v7300 = vld [vmem:[#allocation3 + $0x39] sm:$0xff]
      %v7301 = vld [vmem:[#allocation3 + $0x41] sm:$0xff]
      %v7302 = vld [vmem:[#allocation3 + $0x49] sm:$0xff]
      %v7303 = vld [vmem:[#allocation3 + $0x51] sm:$0xff]
      %v7304 = vld [vmem:[#allocation3 + $0x59] sm:$0xff]
      %v7305 = vld [vmem:[#allocation3 + $0x61] sm:$0xff]
      %v7306 = vld [vmem:[#allocation3 + $0x69] sm:$0xff]
      %v7307 = vld [vmem:[#allocation3 + $0x71] sm:$0xff]
      %v7308 = vld [vmem:[#allocation3 + $0x79] sm:$0xff]
      %v7309 = vld [vmem:[#allocation3 + $0x81] sm:$0xff]
      %v7310 = vld [vmem:[#allocation3 + $0x89] sm:$0xff]
      %v7311 = vld [vmem:[#allocation3 + $0x91] sm:$0xff]
      %v7312 = vld [vmem:[#allocation3 + $0x99] sm:$0xff]
      %v7313 = vld [vmem:[#allocation3 + $0xa1] sm:$0xff]
      %v7314 = vld [vmem:[#allocation3 + $0xa9] sm:$0xff]
      %v7315 = vld [vmem:[#allocation3 + $0xb1] sm:$0xff]
      %v7316 = vld [vmem:[#allocation3 + $0xb9] sm:$0xff]
      %v7317 = vld [vmem:[#allocation3 + $0xc1] sm:$0xff]
      %v7318 = vld [vmem:[#allocation3 + $0xc9] sm:$0xff]
      %v7319 = vld [vmem:[#allocation3 + $0xd1] sm:$0xff]
      %v7320 = vld [vmem:[#allocation3 + $0xd9] sm:$0xff]
      %v7321 = vld [vmem:[#allocation3 + $0xe1] sm:$0xff]
      %v7322 = vld [vmem:[#allocation3 + $0xe9] sm:$0xff]
      %v7323 = vld [vmem:[#allocation3 + $0xf1] sm:$0xff]
      %v7324 = vld [vmem:[#allocation3 + $0xf9] sm:$0xff]
      %v7325 = vld [vmem:[#allocation3 + $0x101] sm:$0xff]
      %v7326 = vld [vmem:[#allocation3 + $0x109] sm:$0xff]
      %s7327 = scalar_lea.vmem %s5, 512
      %v7328 = vld [vmem:[%s7327] sm:$0xff]
      %v7329 = vld [vmem:[%s7327 + $0x8] sm:$0xff]
      %v7330 = vld [vmem:[%s7327 + $0x10] sm:$0xff]
      %v7331 = vld [vmem:[%s7327 + $0x18] sm:$0xff]
      %v7332 = vld [vmem:[%s7327 + $0x20] sm:$0xff]
      %v7333 = vld [vmem:[%s7327 + $0x28] sm:$0xff]
      %v7334 = vld [vmem:[%s7327 + $0x30] sm:$0xff]
      %v7335 = vld [vmem:[%s7327 + $0x38] sm:$0xff]
      %v7336 = vld [vmem:[%s7327 + $0x40] sm:$0xff]
      %v7337 = vld [vmem:[%s7327 + $0x48] sm:$0xff]
      %v7338 = vld [vmem:[%s7327 + $0x50] sm:$0xff]
      %v7339 = vld [vmem:[%s7327 + $0x58] sm:$0xff]
      %v7340 = vld [vmem:[%s7327 + $0x60] sm:$0xff]
      %v7341 = vld [vmem:[%s7327 + $0x68] sm:$0xff]
      %v7342 = vld [vmem:[%s7327 + $0x70] sm:$0xff]
      %v7343 = vld [vmem:[%s7327 + $0x78] sm:$0xff]
      %7344 = vmatprep.subr.mxu0 0.0
      %7345 = vmatpush1.msra.mxu0 %v7343
      %7346 = vmatprep.subr.mxu0 0.0
      %7347 = vmatpush1.msra.mxu0 %v7342
      %7348 = vmatprep.subr.mxu0 0.0
      %7349 = vmatpush1.msra.mxu0 %v7341
      %7350 = vmatprep.subr.mxu0 0.0
      %7351 = vmatpush1.msra.mxu0 %v7340
      %7352 = vmatprep.subr.mxu0 0.0
      %7353 = vmatpush1.msra.mxu0 %v7339
      %7354 = vmatprep.subr.mxu0 0.0
      %7355 = vmatpush1.msra.mxu0 %v7338
      %7356 = vmatprep.subr.mxu0 0.0
      %7357 = vmatpush1.msra.mxu0 %v7337
      %7358 = vmatprep.subr.mxu0 0.0
      %7359 = vmatpush1.msra.mxu0 %v7336
      %7360 = vmatprep.subr.mxu0 0.0
      %7361 = vmatpush1.msra.mxu0 %v7335
      %7362 = vmatprep.subr.mxu0 0.0
      %7363 = vmatpush1.msra.mxu0 %v7334
      %7364 = vmatprep.subr.mxu0 0.0
      %7365 = vmatpush1.msra.mxu0 %v7333
      %7366 = vmatprep.subr.mxu0 0.0
      %7367 = vmatpush1.msra.mxu0 %v7332
      %7368 = vmatprep.subr.mxu0 0.0
      %7369 = vmatpush1.msra.mxu0 %v7331
      %7370 = vmatprep.subr.mxu0 0.0
      %7371 = vmatpush1.msra.mxu0 %v7330
      %7372 = vmatprep.subr.mxu0 0.0
      %7373 = vmatpush1.msra.mxu0 %v7329
      %7374 = vmatprep.subr.mxu0 0.0
      %7375 = vmatpush1.msra.mxu0 %v7328
      %7376 = vmatprep.subr.mxu0 0.0
      %7377 = vmatpush2.msra.mxu0 0.0
      %7378 = vmatprep.subr.mxu0 0.0
      %7379 = vmatpush2.msra.mxu0 0.0
      %7380 = vmatprep.subr.mxu0 0.0
      %7381 = vmatpush2.msra.mxu0 0.0
      %7382 = vmatprep.subr.mxu0 0.0
      %7383 = vmatpush2.msra.mxu0 0.0
      %7384 = vmatprep.subr.mxu0 0.0
      %7385 = vmatpush2.msra.mxu0 0.0
      %7386 = vmatprep.subr.mxu0 0.0
      %7387 = vmatpush2.msra.mxu0 0.0
      %7388 = vmatprep.subr.mxu0 0.0
      %7389 = vmatpush2.msra.mxu0 0.0
      %7390 = vmatprep.subr.mxu0 0.0
      %7391 = vmatpush2.msra.mxu0 0.0
      %7392 = vmatprep.subr.mxu0 0.0
      %7393 = vmatpush2.msra.mxu0 0.0
      %7394 = vmatprep.subr.mxu0 0.0
      %7395 = vmatpush2.msra.mxu0 0.0
      %7396 = vmatprep.subr.mxu0 0.0
      %7397 = vmatpush2.msra.mxu0 0.0
      %7398 = vmatprep.subr.mxu0 0.0
      %7399 = vmatpush2.msra.mxu0 0.0
      %7400 = vmatprep.subr.mxu0 0.0
      %7401 = vmatpush2.msra.mxu0 0.0
      %7402 = vmatprep.subr.mxu0 0.0
      %7403 = vmatpush2.msra.mxu0 0.0
      %7404 = vmatprep.subr.mxu0 0.0
      %7405 = vmatpush2.msra.mxu0 0.0
      %7406 = vmatprep.subr.mxu0 0.0
      %7407 = vmatpush2.msra.mxu0 0.0
      %7408 = vmatprep.mubr.f32.mxu0 0.0
      %7409 = vmatmul.mubr.f32.gmra.mxu0 %v7295
      %v7410 = vpop.f32.mrf.mxu0
      %v7411 = vadd.f32 0.0, %v7410
      %v7412 = vpop.f32.mrf.mxu0
      %7413 = vmatprep.mubr.f32.mxu0 0.0
      %7414 = vmatmul.mubr.f32.gmra.mxu0 %v7296
      %v7415 = vpop.f32.mrf.mxu0
      %v7416 = vadd.f32 0.0, %v7415
      %v7417 = vpop.f32.mrf.mxu0
      %7418 = vmatprep.mubr.f32.mxu0 0.0
      %7419 = vmatmul.mubr.f32.gmra.mxu0 %v7297
      %v7420 = vpop.f32.mrf.mxu0
      %v7421 = vadd.f32 0.0, %v7420
      %v7422 = vpop.f32.mrf.mxu0
      %7423 = vmatprep.mubr.f32.mxu0 0.0
      %7424 = vmatmul.mubr.f32.gmra.mxu0 %v7298
      %v7425 = vpop.f32.mrf.mxu0
      %v7426 = vadd.f32 0.0, %v7425
      %v7427 = vpop.f32.mrf.mxu0
      %7428 = vmatprep.mubr.f32.mxu0 0.0
      %7429 = vmatmul.mubr.f32.gmra.mxu0 %v7299
      %v7430 = vpop.f32.mrf.mxu0
      %v7431 = vadd.f32 0.0, %v7430
      %v7432 = vpop.f32.mrf.mxu0
      %7433 = vmatprep.mubr.f32.mxu0 0.0
      %7434 = vmatmul.mubr.f32.gmra.mxu0 %v7300
      %v7435 = vpop.f32.mrf.mxu0
      %v7436 = vadd.f32 0.0, %v7435
      %v7437 = vpop.f32.mrf.mxu0
      %7438 = vmatprep.mubr.f32.mxu0 0.0
      %7439 = vmatmul.mubr.f32.gmra.mxu0 %v7301
      %v7440 = vpop.f32.mrf.mxu0
      %v7441 = vadd.f32 0.0, %v7440
      %v7442 = vpop.f32.mrf.mxu0
      %7443 = vmatprep.mubr.f32.mxu0 0.0
      %7444 = vmatmul.mubr.f32.gmra.mxu0 %v7302
      %v7445 = vpop.f32.mrf.mxu0
      %v7446 = vadd.f32 0.0, %v7445
      %v7447 = vpop.f32.mrf.mxu0
      %7448 = vmatprep.mubr.f32.mxu0 0.0
      %7449 = vmatmul.mubr.f32.gmra.mxu0 %v7303
      %v7450 = vpop.f32.mrf.mxu0
      %v7451 = vadd.f32 0.0, %v7450
      %v7452 = vpop.f32.mrf.mxu0
      %7453 = vmatprep.mubr.f32.mxu0 0.0
      %7454 = vmatmul.mubr.f32.gmra.mxu0 %v7304
      %v7455 = vpop.f32.mrf.mxu0
      %v7456 = vadd.f32 0.0, %v7455
      %v7457 = vpop.f32.mrf.mxu0
      %7458 = vmatprep.mubr.f32.mxu0 0.0
      %7459 = vmatmul.mubr.f32.gmra.mxu0 %v7305
      %v7460 = vpop.f32.mrf.mxu0
      %v7461 = vadd.f32 0.0, %v7460
      %v7462 = vpop.f32.mrf.mxu0
      %7463 = vmatprep.mubr.f32.mxu0 0.0
      %7464 = vmatmul.mubr.f32.gmra.mxu0 %v7306
      %v7465 = vpop.f32.mrf.mxu0
      %v7466 = vadd.f32 0.0, %v7465
      %v7467 = vpop.f32.mrf.mxu0
      %7468 = vmatprep.mubr.f32.mxu0 0.0
      %7469 = vmatmul.mubr.f32.gmra.mxu0 %v7307
      %v7470 = vpop.f32.mrf.mxu0
      %v7471 = vadd.f32 0.0, %v7470
      %v7472 = vpop.f32.mrf.mxu0
      %7473 = vmatprep.mubr.f32.mxu0 0.0
      %7474 = vmatmul.mubr.f32.gmra.mxu0 %v7308
      %v7475 = vpop.f32.mrf.mxu0
      %v7476 = vadd.f32 0.0, %v7475
      %v7477 = vpop.f32.mrf.mxu0
      %7478 = vmatprep.mubr.f32.mxu0 0.0
      %7479 = vmatmul.mubr.f32.gmra.mxu0 %v7309
      %v7480 = vpop.f32.mrf.mxu0
      %v7481 = vadd.f32 0.0, %v7480
      %v7482 = vpop.f32.mrf.mxu0
      %7483 = vmatprep.mubr.f32.mxu0 0.0
      %7484 = vmatmul.mubr.f32.gmra.mxu0 %v7310
      %v7485 = vpop.f32.mrf.mxu0
      %v7486 = vadd.f32 0.0, %v7485
      %v7487 = vpop.f32.mrf.mxu0
      %7488 = vmatprep.mubr.f32.mxu0 0.0
      %7489 = vmatmul.mubr.f32.gmra.mxu0 %v7311
      %v7490 = vpop.f32.mrf.mxu0
      %v7491 = vadd.f32 0.0, %v7490
      %v7492 = vpop.f32.mrf.mxu0
      %7493 = vmatprep.mubr.f32.mxu0 0.0
      %7494 = vmatmul.mubr.f32.gmra.mxu0 %v7312
      %v7495 = vpop.f32.mrf.mxu0
      %v7496 = vadd.f32 0.0, %v7495
      %v7497 = vpop.f32.mrf.mxu0
      %7498 = vmatprep.mubr.f32.mxu0 0.0
      %7499 = vmatmul.mubr.f32.gmra.mxu0 %v7313
      %v7500 = vpop.f32.mrf.mxu0
      %v7501 = vadd.f32 0.0, %v7500
      %v7502 = vpop.f32.mrf.mxu0
      %7503 = vmatprep.mubr.f32.mxu0 0.0
      %7504 = vmatmul.mubr.f32.gmra.mxu0 %v7314
      %v7505 = vpop.f32.mrf.mxu0
      %v7506 = vadd.f32 0.0, %v7505
      %v7507 = vpop.f32.mrf.mxu0
      %7508 = vmatprep.mubr.f32.mxu0 0.0
      %7509 = vmatmul.mubr.f32.gmra.mxu0 %v7315
      %v7510 = vpop.f32.mrf.mxu0
      %v7511 = vadd.f32 0.0, %v7510
      %v7512 = vpop.f32.mrf.mxu0
      %7513 = vmatprep.mubr.f32.mxu0 0.0
      %7514 = vmatmul.mubr.f32.gmra.mxu0 %v7316
      %v7515 = vpop.f32.mrf.mxu0
      %v7516 = vadd.f32 0.0, %v7515
      %v7517 = vpop.f32.mrf.mxu0
      %7518 = vmatprep.mubr.f32.mxu0 0.0
      %7519 = vmatmul.mubr.f32.gmra.mxu0 %v7317
      %v7520 = vpop.f32.mrf.mxu0
      %v7521 = vadd.f32 0.0, %v7520
      %v7522 = vpop.f32.mrf.mxu0
      %7523 = vmatprep.mubr.f32.mxu0 0.0
      %7524 = vmatmul.mubr.f32.gmra.mxu0 %v7318
      %v7525 = vpop.f32.mrf.mxu0
      %v7526 = vadd.f32 0.0, %v7525
      %v7527 = vpop.f32.mrf.mxu0
      %7528 = vmatprep.mubr.f32.mxu0 0.0
      %7529 = vmatmul.mubr.f32.gmra.mxu0 %v7319
      %v7530 = vpop.f32.mrf.mxu0
      %v7531 = vadd.f32 0.0, %v7530
      %v7532 = vpop.f32.mrf.mxu0
      %7533 = vmatprep.mubr.f32.mxu0 0.0
      %7534 = vmatmul.mubr.f32.gmra.mxu0 %v7320
      %v7535 = vpop.f32.mrf.mxu0
      %v7536 = vadd.f32 0.0, %v7535
      %v7537 = vpop.f32.mrf.mxu0
      %7538 = vmatprep.mubr.f32.mxu0 0.0
      %7539 = vmatmul.mubr.f32.gmra.mxu0 %v7321
      %v7540 = vpop.f32.mrf.mxu0
      %v7541 = vadd.f32 0.0, %v7540
      %v7542 = vpop.f32.mrf.mxu0
      %7543 = vmatprep.mubr.f32.mxu0 0.0
      %7544 = vmatmul.mubr.f32.gmra.mxu0 %v7322
      %v7545 = vpop.f32.mrf.mxu0
      %v7546 = vadd.f32 0.0, %v7545
      %v7547 = vpop.f32.mrf.mxu0
      %7548 = vmatprep.mubr.f32.mxu0 0.0
      %7549 = vmatmul.mubr.f32.gmra.mxu0 %v7323
      %v7550 = vpop.f32.mrf.mxu0
      %v7551 = vadd.f32 0.0, %v7550
      %v7552 = vpop.f32.mrf.mxu0
      %7553 = vmatprep.mubr.f32.mxu0 0.0
      %7554 = vmatmul.mubr.f32.gmra.mxu0 %v7324
      %v7555 = vpop.f32.mrf.mxu0
      %v7556 = vadd.f32 0.0, %v7555
      %v7557 = vpop.f32.mrf.mxu0
      %7558 = vmatprep.mubr.f32.mxu0 0.0
      %7559 = vmatmul.mubr.f32.gmra.mxu0 %v7325
      %v7560 = vpop.f32.mrf.mxu0
      %v7561 = vadd.f32 0.0, %v7560
      %v7562 = vpop.f32.mrf.mxu0
      %7563 = vmatprep.mubr.f32.mxu0 0.0
      %7564 = vmatmul.mubr.f32.gmra.mxu0 %v7326
      %v7565 = vpop.f32.mrf.mxu0
      %v7566 = vadd.f32 0.0, %v7565
      %v7567 = vpop.f32.mrf.mxu0
      %7568 = vdwg.mxu0
      %v7569 = vadd.f32 %v7263, %v7411
      %v7570 = vadd.f32 %v7264, %v7416
      %v7571 = vadd.f32 %v7265, %v7421
      %v7572 = vadd.f32 %v7266, %v7426
      %v7573 = vadd.f32 %v7267, %v7431
      %v7574 = vadd.f32 %v7268, %v7436
      %v7575 = vadd.f32 %v7269, %v7441
      %v7576 = vadd.f32 %v7270, %v7446
      %v7577 = vadd.f32 %v7271, %v7451
      %v7578 = vadd.f32 %v7272, %v7456
      %v7579 = vadd.f32 %v7273, %v7461
      %v7580 = vadd.f32 %v7274, %v7466
      %v7581 = vadd.f32 %v7275, %v7471
      %v7582 = vadd.f32 %v7276, %v7476
      %v7583 = vadd.f32 %v7277, %v7481
      %v7584 = vadd.f32 %v7278, %v7486
      %v7585 = vadd.f32 %v7279, %v7491
      %v7586 = vadd.f32 %v7280, %v7496
      %v7587 = vadd.f32 %v7281, %v7501
      %v7588 = vadd.f32 %v7282, %v7506
      %v7589 = vadd.f32 %v7283, %v7511
      %v7590 = vadd.f32 %v7284, %v7516
      %v7591 = vadd.f32 %v7285, %v7521
      %v7592 = vadd.f32 %v7286, %v7526
      %v7593 = vadd.f32 %v7287, %v7531
      %v7594 = vadd.f32 %v7288, %v7536
      %v7595 = vadd.f32 %v7289, %v7541
      %v7596 = vadd.f32 %v7290, %v7546
      %v7597 = vadd.f32 %v7291, %v7551
      %v7598 = vadd.f32 %v7292, %v7556
      %v7599 = vadd.f32 %v7293, %v7561
      %v7600 = vadd.f32 %v7294, %v7566
      %v7601 = vld [vmem:[#allocation3 + $0x12] sm:$0xff]
      %v7602 = vld [vmem:[#allocation3 + $0x1a] sm:$0xff]
      %v7603 = vld [vmem:[#allocation3 + $0x22] sm:$0xff]
      %v7604 = vld [vmem:[#allocation3 + $0x2a] sm:$0xff]
      %v7605 = vld [vmem:[#allocation3 + $0x32] sm:$0xff]
      %v7606 = vld [vmem:[#allocation3 + $0x3a] sm:$0xff]
      %v7607 = vld [vmem:[#allocation3 + $0x42] sm:$0xff]
      %v7608 = vld [vmem:[#allocation3 + $0x4a] sm:$0xff]
      %v7609 = vld [vmem:[#allocation3 + $0x52] sm:$0xff]
      %v7610 = vld [vmem:[#allocation3 + $0x5a] sm:$0xff]
      %v7611 = vld [vmem:[#allocation3 + $0x62] sm:$0xff]
      %v7612 = vld [vmem:[#allocation3 + $0x6a] sm:$0xff]
      %v7613 = vld [vmem:[#allocation3 + $0x72] sm:$0xff]
      %v7614 = vld [vmem:[#allocation3 + $0x7a] sm:$0xff]
      %v7615 = vld [vmem:[#allocation3 + $0x82] sm:$0xff]
      %v7616 = vld [vmem:[#allocation3 + $0x8a] sm:$0xff]
      %v7617 = vld [vmem:[#allocation3 + $0x92] sm:$0xff]
      %v7618 = vld [vmem:[#allocation3 + $0x9a] sm:$0xff]
      %v7619 = vld [vmem:[#allocation3 + $0xa2] sm:$0xff]
      %v7620 = vld [vmem:[#allocation3 + $0xaa] sm:$0xff]
      %v7621 = vld [vmem:[#allocation3 + $0xb2] sm:$0xff]
      %v7622 = vld [vmem:[#allocation3 + $0xba] sm:$0xff]
      %v7623 = vld [vmem:[#allocation3 + $0xc2] sm:$0xff]
      %v7624 = vld [vmem:[#allocation3 + $0xca] sm:$0xff]
      %v7625 = vld [vmem:[#allocation3 + $0xd2] sm:$0xff]
      %v7626 = vld [vmem:[#allocation3 + $0xda] sm:$0xff]
      %v7627 = vld [vmem:[#allocation3 + $0xe2] sm:$0xff]
      %v7628 = vld [vmem:[#allocation3 + $0xea] sm:$0xff]
      %v7629 = vld [vmem:[#allocation3 + $0xf2] sm:$0xff]
      %v7630 = vld [vmem:[#allocation3 + $0xfa] sm:$0xff]
      %v7631 = vld [vmem:[#allocation3 + $0x102] sm:$0xff]
      %v7632 = vld [vmem:[#allocation3 + $0x10a] sm:$0xff]
      %s7633 = scalar_lea.vmem %s5, 640
      %v7634 = vld [vmem:[%s7633] sm:$0xff]
      %v7635 = vld [vmem:[%s7633 + $0x8] sm:$0xff]
      %v7636 = vld [vmem:[%s7633 + $0x10] sm:$0xff]
      %v7637 = vld [vmem:[%s7633 + $0x18] sm:$0xff]
      %v7638 = vld [vmem:[%s7633 + $0x20] sm:$0xff]
      %v7639 = vld [vmem:[%s7633 + $0x28] sm:$0xff]
      %v7640 = vld [vmem:[%s7633 + $0x30] sm:$0xff]
      %v7641 = vld [vmem:[%s7633 + $0x38] sm:$0xff]
      %v7642 = vld [vmem:[%s7633 + $0x40] sm:$0xff]
      %v7643 = vld [vmem:[%s7633 + $0x48] sm:$0xff]
      %v7644 = vld [vmem:[%s7633 + $0x50] sm:$0xff]
      %v7645 = vld [vmem:[%s7633 + $0x58] sm:$0xff]
      %v7646 = vld [vmem:[%s7633 + $0x60] sm:$0xff]
      %v7647 = vld [vmem:[%s7633 + $0x68] sm:$0xff]
      %v7648 = vld [vmem:[%s7633 + $0x70] sm:$0xff]
      %v7649 = vld [vmem:[%s7633 + $0x78] sm:$0xff]
      %7650 = vmatprep.subr.mxu0 0.0
      %7651 = vmatpush1.msra.mxu0 %v7649
      %7652 = vmatprep.subr.mxu0 0.0
      %7653 = vmatpush1.msra.mxu0 %v7648
      %7654 = vmatprep.subr.mxu0 0.0
      %7655 = vmatpush1.msra.mxu0 %v7647
      %7656 = vmatprep.subr.mxu0 0.0
      %7657 = vmatpush1.msra.mxu0 %v7646
      %7658 = vmatprep.subr.mxu0 0.0
      %7659 = vmatpush1.msra.mxu0 %v7645
      %7660 = vmatprep.subr.mxu0 0.0
      %7661 = vmatpush1.msra.mxu0 %v7644
      %7662 = vmatprep.subr.mxu0 0.0
      %7663 = vmatpush1.msra.mxu0 %v7643
      %7664 = vmatprep.subr.mxu0 0.0
      %7665 = vmatpush1.msra.mxu0 %v7642
      %7666 = vmatprep.subr.mxu0 0.0
      %7667 = vmatpush1.msra.mxu0 %v7641
      %7668 = vmatprep.subr.mxu0 0.0
      %7669 = vmatpush1.msra.mxu0 %v7640
      %7670 = vmatprep.subr.mxu0 0.0
      %7671 = vmatpush1.msra.mxu0 %v7639
      %7672 = vmatprep.subr.mxu0 0.0
      %7673 = vmatpush1.msra.mxu0 %v7638
      %7674 = vmatprep.subr.mxu0 0.0
      %7675 = vmatpush1.msra.mxu0 %v7637
      %7676 = vmatprep.subr.mxu0 0.0
      %7677 = vmatpush1.msra.mxu0 %v7636
      %7678 = vmatprep.subr.mxu0 0.0
      %7679 = vmatpush1.msra.mxu0 %v7635
      %7680 = vmatprep.subr.mxu0 0.0
      %7681 = vmatpush1.msra.mxu0 %v7634
      %7682 = vmatprep.subr.mxu0 0.0
      %7683 = vmatpush2.msra.mxu0 0.0
      %7684 = vmatprep.subr.mxu0 0.0
      %7685 = vmatpush2.msra.mxu0 0.0
      %7686 = vmatprep.subr.mxu0 0.0
      %7687 = vmatpush2.msra.mxu0 0.0
      %7688 = vmatprep.subr.mxu0 0.0
      %7689 = vmatpush2.msra.mxu0 0.0
      %7690 = vmatprep.subr.mxu0 0.0
      %7691 = vmatpush2.msra.mxu0 0.0
      %7692 = vmatprep.subr.mxu0 0.0
      %7693 = vmatpush2.msra.mxu0 0.0
      %7694 = vmatprep.subr.mxu0 0.0
      %7695 = vmatpush2.msra.mxu0 0.0
      %7696 = vmatprep.subr.mxu0 0.0
      %7697 = vmatpush2.msra.mxu0 0.0
      %7698 = vmatprep.subr.mxu0 0.0
      %7699 = vmatpush2.msra.mxu0 0.0
      %7700 = vmatprep.subr.mxu0 0.0
      %7701 = vmatpush2.msra.mxu0 0.0
      %7702 = vmatprep.subr.mxu0 0.0
      %7703 = vmatpush2.msra.mxu0 0.0
      %7704 = vmatprep.subr.mxu0 0.0
      %7705 = vmatpush2.msra.mxu0 0.0
      %7706 = vmatprep.subr.mxu0 0.0
      %7707 = vmatpush2.msra.mxu0 0.0
      %7708 = vmatprep.subr.mxu0 0.0
      %7709 = vmatpush2.msra.mxu0 0.0
      %7710 = vmatprep.subr.mxu0 0.0
      %7711 = vmatpush2.msra.mxu0 0.0
      %7712 = vmatprep.subr.mxu0 0.0
      %7713 = vmatpush2.msra.mxu0 0.0
      %7714 = vmatprep.mubr.f32.mxu0 0.0
      %7715 = vmatmul.mubr.f32.gmra.mxu0 %v7601
      %v7716 = vpop.f32.mrf.mxu0
      %v7717 = vadd.f32 0.0, %v7716
      %v7718 = vpop.f32.mrf.mxu0
      %7719 = vmatprep.mubr.f32.mxu0 0.0
      %7720 = vmatmul.mubr.f32.gmra.mxu0 %v7602
      %v7721 = vpop.f32.mrf.mxu0
      %v7722 = vadd.f32 0.0, %v7721
      %v7723 = vpop.f32.mrf.mxu0
      %7724 = vmatprep.mubr.f32.mxu0 0.0
      %7725 = vmatmul.mubr.f32.gmra.mxu0 %v7603
      %v7726 = vpop.f32.mrf.mxu0
      %v7727 = vadd.f32 0.0, %v7726
      %v7728 = vpop.f32.mrf.mxu0
      %7729 = vmatprep.mubr.f32.mxu0 0.0
      %7730 = vmatmul.mubr.f32.gmra.mxu0 %v7604
      %v7731 = vpop.f32.mrf.mxu0
      %v7732 = vadd.f32 0.0, %v7731
      %v7733 = vpop.f32.mrf.mxu0
      %7734 = vmatprep.mubr.f32.mxu0 0.0
      %7735 = vmatmul.mubr.f32.gmra.mxu0 %v7605
      %v7736 = vpop.f32.mrf.mxu0
      %v7737 = vadd.f32 0.0, %v7736
      %v7738 = vpop.f32.mrf.mxu0
      %7739 = vmatprep.mubr.f32.mxu0 0.0
      %7740 = vmatmul.mubr.f32.gmra.mxu0 %v7606
      %v7741 = vpop.f32.mrf.mxu0
      %v7742 = vadd.f32 0.0, %v7741
      %v7743 = vpop.f32.mrf.mxu0
      %7744 = vmatprep.mubr.f32.mxu0 0.0
      %7745 = vmatmul.mubr.f32.gmra.mxu0 %v7607
      %v7746 = vpop.f32.mrf.mxu0
      %v7747 = vadd.f32 0.0, %v7746
      %v7748 = vpop.f32.mrf.mxu0
      %7749 = vmatprep.mubr.f32.mxu0 0.0
      %7750 = vmatmul.mubr.f32.gmra.mxu0 %v7608
      %v7751 = vpop.f32.mrf.mxu0
      %v7752 = vadd.f32 0.0, %v7751
      %v7753 = vpop.f32.mrf.mxu0
      %7754 = vmatprep.mubr.f32.mxu0 0.0
      %7755 = vmatmul.mubr.f32.gmra.mxu0 %v7609
      %v7756 = vpop.f32.mrf.mxu0
      %v7757 = vadd.f32 0.0, %v7756
      %v7758 = vpop.f32.mrf.mxu0
      %7759 = vmatprep.mubr.f32.mxu0 0.0
      %7760 = vmatmul.mubr.f32.gmra.mxu0 %v7610
      %v7761 = vpop.f32.mrf.mxu0
      %v7762 = vadd.f32 0.0, %v7761
      %v7763 = vpop.f32.mrf.mxu0
      %7764 = vmatprep.mubr.f32.mxu0 0.0
      %7765 = vmatmul.mubr.f32.gmra.mxu0 %v7611
      %v7766 = vpop.f32.mrf.mxu0
      %v7767 = vadd.f32 0.0, %v7766
      %v7768 = vpop.f32.mrf.mxu0
      %7769 = vmatprep.mubr.f32.mxu0 0.0
      %7770 = vmatmul.mubr.f32.gmra.mxu0 %v7612
      %v7771 = vpop.f32.mrf.mxu0
      %v7772 = vadd.f32 0.0, %v7771
      %v7773 = vpop.f32.mrf.mxu0
      %7774 = vmatprep.mubr.f32.mxu0 0.0
      %7775 = vmatmul.mubr.f32.gmra.mxu0 %v7613
      %v7776 = vpop.f32.mrf.mxu0
      %v7777 = vadd.f32 0.0, %v7776
      %v7778 = vpop.f32.mrf.mxu0
      %7779 = vmatprep.mubr.f32.mxu0 0.0
      %7780 = vmatmul.mubr.f32.gmra.mxu0 %v7614
      %v7781 = vpop.f32.mrf.mxu0
      %v7782 = vadd.f32 0.0, %v7781
      %v7783 = vpop.f32.mrf.mxu0
      %7784 = vmatprep.mubr.f32.mxu0 0.0
      %7785 = vmatmul.mubr.f32.gmra.mxu0 %v7615
      %v7786 = vpop.f32.mrf.mxu0
      %v7787 = vadd.f32 0.0, %v7786
      %v7788 = vpop.f32.mrf.mxu0
      %7789 = vmatprep.mubr.f32.mxu0 0.0
      %7790 = vmatmul.mubr.f32.gmra.mxu0 %v7616
      %v7791 = vpop.f32.mrf.mxu0
      %v7792 = vadd.f32 0.0, %v7791
      %v7793 = vpop.f32.mrf.mxu0
      %7794 = vmatprep.mubr.f32.mxu0 0.0
      %7795 = vmatmul.mubr.f32.gmra.mxu0 %v7617
      %v7796 = vpop.f32.mrf.mxu0
      %v7797 = vadd.f32 0.0, %v7796
      %v7798 = vpop.f32.mrf.mxu0
      %7799 = vmatprep.mubr.f32.mxu0 0.0
      %7800 = vmatmul.mubr.f32.gmra.mxu0 %v7618
      %v7801 = vpop.f32.mrf.mxu0
      %v7802 = vadd.f32 0.0, %v7801
      %v7803 = vpop.f32.mrf.mxu0
      %7804 = vmatprep.mubr.f32.mxu0 0.0
      %7805 = vmatmul.mubr.f32.gmra.mxu0 %v7619
      %v7806 = vpop.f32.mrf.mxu0
      %v7807 = vadd.f32 0.0, %v7806
      %v7808 = vpop.f32.mrf.mxu0
      %7809 = vmatprep.mubr.f32.mxu0 0.0
      %7810 = vmatmul.mubr.f32.gmra.mxu0 %v7620
      %v7811 = vpop.f32.mrf.mxu0
      %v7812 = vadd.f32 0.0, %v7811
      %v7813 = vpop.f32.mrf.mxu0
      %7814 = vmatprep.mubr.f32.mxu0 0.0
      %7815 = vmatmul.mubr.f32.gmra.mxu0 %v7621
      %v7816 = vpop.f32.mrf.mxu0
      %v7817 = vadd.f32 0.0, %v7816
      %v7818 = vpop.f32.mrf.mxu0
      %7819 = vmatprep.mubr.f32.mxu0 0.0
      %7820 = vmatmul.mubr.f32.gmra.mxu0 %v7622
      %v7821 = vpop.f32.mrf.mxu0
      %v7822 = vadd.f32 0.0, %v7821
      %v7823 = vpop.f32.mrf.mxu0
      %7824 = vmatprep.mubr.f32.mxu0 0.0
      %7825 = vmatmul.mubr.f32.gmra.mxu0 %v7623
      %v7826 = vpop.f32.mrf.mxu0
      %v7827 = vadd.f32 0.0, %v7826
      %v7828 = vpop.f32.mrf.mxu0
      %7829 = vmatprep.mubr.f32.mxu0 0.0
      %7830 = vmatmul.mubr.f32.gmra.mxu0 %v7624
      %v7831 = vpop.f32.mrf.mxu0
      %v7832 = vadd.f32 0.0, %v7831
      %v7833 = vpop.f32.mrf.mxu0
      %7834 = vmatprep.mubr.f32.mxu0 0.0
      %7835 = vmatmul.mubr.f32.gmra.mxu0 %v7625
      %v7836 = vpop.f32.mrf.mxu0
      %v7837 = vadd.f32 0.0, %v7836
      %v7838 = vpop.f32.mrf.mxu0
      %7839 = vmatprep.mubr.f32.mxu0 0.0
      %7840 = vmatmul.mubr.f32.gmra.mxu0 %v7626
      %v7841 = vpop.f32.mrf.mxu0
      %v7842 = vadd.f32 0.0, %v7841
      %v7843 = vpop.f32.mrf.mxu0
      %7844 = vmatprep.mubr.f32.mxu0 0.0
      %7845 = vmatmul.mubr.f32.gmra.mxu0 %v7627
      %v7846 = vpop.f32.mrf.mxu0
      %v7847 = vadd.f32 0.0, %v7846
      %v7848 = vpop.f32.mrf.mxu0
      %7849 = vmatprep.mubr.f32.mxu0 0.0
      %7850 = vmatmul.mubr.f32.gmra.mxu0 %v7628
      %v7851 = vpop.f32.mrf.mxu0
      %v7852 = vadd.f32 0.0, %v7851
      %v7853 = vpop.f32.mrf.mxu0
      %7854 = vmatprep.mubr.f32.mxu0 0.0
      %7855 = vmatmul.mubr.f32.gmra.mxu0 %v7629
      %v7856 = vpop.f32.mrf.mxu0
      %v7857 = vadd.f32 0.0, %v7856
      %v7858 = vpop.f32.mrf.mxu0
      %7859 = vmatprep.mubr.f32.mxu0 0.0
      %7860 = vmatmul.mubr.f32.gmra.mxu0 %v7630
      %v7861 = vpop.f32.mrf.mxu0
      %v7862 = vadd.f32 0.0, %v7861
      %v7863 = vpop.f32.mrf.mxu0
      %7864 = vmatprep.mubr.f32.mxu0 0.0
      %7865 = vmatmul.mubr.f32.gmra.mxu0 %v7631
      %v7866 = vpop.f32.mrf.mxu0
      %v7867 = vadd.f32 0.0, %v7866
      %v7868 = vpop.f32.mrf.mxu0
      %7869 = vmatprep.mubr.f32.mxu0 0.0
      %7870 = vmatmul.mubr.f32.gmra.mxu0 %v7632
      %v7871 = vpop.f32.mrf.mxu0
      %v7872 = vadd.f32 0.0, %v7871
      %v7873 = vpop.f32.mrf.mxu0
      %7874 = vdwg.mxu0
      %v7875 = vadd.f32 %v7569, %v7717
      %v7876 = vadd.f32 %v7570, %v7722
      %v7877 = vadd.f32 %v7571, %v7727
      %v7878 = vadd.f32 %v7572, %v7732
      %v7879 = vadd.f32 %v7573, %v7737
      %v7880 = vadd.f32 %v7574, %v7742
      %v7881 = vadd.f32 %v7575, %v7747
      %v7882 = vadd.f32 %v7576, %v7752
      %v7883 = vadd.f32 %v7577, %v7757
      %v7884 = vadd.f32 %v7578, %v7762
      %v7885 = vadd.f32 %v7579, %v7767
      %v7886 = vadd.f32 %v7580, %v7772
      %v7887 = vadd.f32 %v7581, %v7777
      %v7888 = vadd.f32 %v7582, %v7782
      %v7889 = vadd.f32 %v7583, %v7787
      %v7890 = vadd.f32 %v7584, %v7792
      %v7891 = vadd.f32 %v7585, %v7797
      %v7892 = vadd.f32 %v7586, %v7802
      %v7893 = vadd.f32 %v7587, %v7807
      %v7894 = vadd.f32 %v7588, %v7812
      %v7895 = vadd.f32 %v7589, %v7817
      %v7896 = vadd.f32 %v7590, %v7822
      %v7897 = vadd.f32 %v7591, %v7827
      %v7898 = vadd.f32 %v7592, %v7832
      %v7899 = vadd.f32 %v7593, %v7837
      %v7900 = vadd.f32 %v7594, %v7842
      %v7901 = vadd.f32 %v7595, %v7847
      %v7902 = vadd.f32 %v7596, %v7852
      %v7903 = vadd.f32 %v7597, %v7857
      %v7904 = vadd.f32 %v7598, %v7862
      %v7905 = vadd.f32 %v7599, %v7867
      %v7906 = vadd.f32 %v7600, %v7872
      %v7907 = vld [vmem:[#allocation3 + $0x20] sm:$0xff]
      %v7908 = vld [vmem:[#allocation3 + $0x28] sm:$0xff]
      %v7909 = vld [vmem:[#allocation3 + $0x30] sm:$0xff]
      %v7910 = vld [vmem:[#allocation3 + $0x38] sm:$0xff]
      %v7911 = vld [vmem:[#allocation3 + $0x40] sm:$0xff]
      %v7912 = vld [vmem:[#allocation3 + $0x48] sm:$0xff]
      %v7913 = vld [vmem:[#allocation3 + $0x50] sm:$0xff]
      %v7914 = vld [vmem:[#allocation3 + $0x58] sm:$0xff]
      %v7915 = vld [vmem:[#allocation3 + $0x60] sm:$0xff]
      %v7916 = vld [vmem:[#allocation3 + $0x68] sm:$0xff]
      %v7917 = vld [vmem:[#allocation3 + $0x70] sm:$0xff]
      %v7918 = vld [vmem:[#allocation3 + $0x78] sm:$0xff]
      %v7919 = vld [vmem:[#allocation3 + $0x80] sm:$0xff]
      %v7920 = vld [vmem:[#allocation3 + $0x88] sm:$0xff]
      %v7921 = vld [vmem:[#allocation3 + $0x90] sm:$0xff]
      %v7922 = vld [vmem:[#allocation3 + $0x98] sm:$0xff]
      %v7923 = vld [vmem:[#allocation3 + $0xa0] sm:$0xff]
      %v7924 = vld [vmem:[#allocation3 + $0xa8] sm:$0xff]
      %v7925 = vld [vmem:[#allocation3 + $0xb0] sm:$0xff]
      %v7926 = vld [vmem:[#allocation3 + $0xb8] sm:$0xff]
      %v7927 = vld [vmem:[#allocation3 + $0xc0] sm:$0xff]
      %v7928 = vld [vmem:[#allocation3 + $0xc8] sm:$0xff]
      %v7929 = vld [vmem:[#allocation3 + $0xd0] sm:$0xff]
      %v7930 = vld [vmem:[#allocation3 + $0xd8] sm:$0xff]
      %v7931 = vld [vmem:[#allocation3 + $0xe0] sm:$0xff]
      %v7932 = vld [vmem:[#allocation3 + $0xe8] sm:$0xff]
      %v7933 = vld [vmem:[#allocation3 + $0xf0] sm:$0xff]
      %v7934 = vld [vmem:[#allocation3 + $0xf8] sm:$0xff]
      %v7935 = vld [vmem:[#allocation3 + $0x100] sm:$0xff]
      %v7936 = vld [vmem:[#allocation3 + $0x108] sm:$0xff]
      %v7937 = vld [vmem:[#allocation3 + $0x110] sm:$0xff]
      %v7938 = vld [vmem:[#allocation3 + $0x118] sm:$0xff]
      %s7939 = scalar_lea.vmem %s5, 768
      %v7940 = vld [vmem:[%s7939] sm:$0xff]
      %v7941 = vld [vmem:[%s7939 + $0x8] sm:$0xff]
      %v7942 = vld [vmem:[%s7939 + $0x10] sm:$0xff]
      %v7943 = vld [vmem:[%s7939 + $0x18] sm:$0xff]
      %v7944 = vld [vmem:[%s7939 + $0x20] sm:$0xff]
      %v7945 = vld [vmem:[%s7939 + $0x28] sm:$0xff]
      %v7946 = vld [vmem:[%s7939 + $0x30] sm:$0xff]
      %v7947 = vld [vmem:[%s7939 + $0x38] sm:$0xff]
      %v7948 = vld [vmem:[%s7939 + $0x40] sm:$0xff]
      %v7949 = vld [vmem:[%s7939 + $0x48] sm:$0xff]
      %v7950 = vld [vmem:[%s7939 + $0x50] sm:$0xff]
      %v7951 = vld [vmem:[%s7939 + $0x58] sm:$0xff]
      %v7952 = vld [vmem:[%s7939 + $0x60] sm:$0xff]
      %v7953 = vld [vmem:[%s7939 + $0x68] sm:$0xff]
      %v7954 = vld [vmem:[%s7939 + $0x70] sm:$0xff]
      %v7955 = vld [vmem:[%s7939 + $0x78] sm:$0xff]
      %7956 = vmatprep.subr.mxu0 0.0
      %7957 = vmatpush1.msra.mxu0 %v7955
      %7958 = vmatprep.subr.mxu0 0.0
      %7959 = vmatpush1.msra.mxu0 %v7954
      %7960 = vmatprep.subr.mxu0 0.0
      %7961 = vmatpush1.msra.mxu0 %v7953
      %7962 = vmatprep.subr.mxu0 0.0
      %7963 = vmatpush1.msra.mxu0 %v7952
      %7964 = vmatprep.subr.mxu0 0.0
      %7965 = vmatpush1.msra.mxu0 %v7951
      %7966 = vmatprep.subr.mxu0 0.0
      %7967 = vmatpush1.msra.mxu0 %v7950
      %7968 = vmatprep.subr.mxu0 0.0
      %7969 = vmatpush1.msra.mxu0 %v7949
      %7970 = vmatprep.subr.mxu0 0.0
      %7971 = vmatpush1.msra.mxu0 %v7948
      %7972 = vmatprep.subr.mxu0 0.0
      %7973 = vmatpush1.msra.mxu0 %v7947
      %7974 = vmatprep.subr.mxu0 0.0
      %7975 = vmatpush1.msra.mxu0 %v7946
      %7976 = vmatprep.subr.mxu0 0.0
      %7977 = vmatpush1.msra.mxu0 %v7945
      %7978 = vmatprep.subr.mxu0 0.0
      %7979 = vmatpush1.msra.mxu0 %v7944
      %7980 = vmatprep.subr.mxu0 0.0
      %7981 = vmatpush1.msra.mxu0 %v7943
      %7982 = vmatprep.subr.mxu0 0.0
      %7983 = vmatpush1.msra.mxu0 %v7942
      %7984 = vmatprep.subr.mxu0 0.0
      %7985 = vmatpush1.msra.mxu0 %v7941
      %7986 = vmatprep.subr.mxu0 0.0
      %7987 = vmatpush1.msra.mxu0 %v7940
      %7988 = vmatprep.subr.mxu0 0.0
      %7989 = vmatpush2.msra.mxu0 0.0
      %7990 = vmatprep.subr.mxu0 0.0
      %7991 = vmatpush2.msra.mxu0 0.0
      %7992 = vmatprep.subr.mxu0 0.0
      %7993 = vmatpush2.msra.mxu0 0.0
      %7994 = vmatprep.subr.mxu0 0.0
      %7995 = vmatpush2.msra.mxu0 0.0
      %7996 = vmatprep.subr.mxu0 0.0
      %7997 = vmatpush2.msra.mxu0 0.0
      %7998 = vmatprep.subr.mxu0 0.0
      %7999 = vmatpush2.msra.mxu0 0.0
      %8000 = vmatprep.subr.mxu0 0.0
      %8001 = vmatpush2.msra.mxu0 0.0
      %8002 = vmatprep.subr.mxu0 0.0
      %8003 = vmatpush2.msra.mxu0 0.0
      %8004 = vmatprep.subr.mxu0 0.0
      %8005 = vmatpush2.msra.mxu0 0.0
      %8006 = vmatprep.subr.mxu0 0.0
      %8007 = vmatpush2.msra.mxu0 0.0
      %8008 = vmatprep.subr.mxu0 0.0
      %8009 = vmatpush2.msra.mxu0 0.0
      %8010 = vmatprep.subr.mxu0 0.0
      %8011 = vmatpush2.msra.mxu0 0.0
      %8012 = vmatprep.subr.mxu0 0.0
      %8013 = vmatpush2.msra.mxu0 0.0
      %8014 = vmatprep.subr.mxu0 0.0
      %8015 = vmatpush2.msra.mxu0 0.0
      %8016 = vmatprep.subr.mxu0 0.0
      %8017 = vmatpush2.msra.mxu0 0.0
      %8018 = vmatprep.subr.mxu0 0.0
      %8019 = vmatpush2.msra.mxu0 0.0
      %8020 = vmatprep.mubr.f32.mxu0 0.0
      %8021 = vmatmul.mubr.f32.gmra.mxu0 %v7907
      %v8022 = vpop.f32.mrf.mxu0
      %v8023 = vadd.f32 0.0, %v8022
      %v8024 = vpop.f32.mrf.mxu0
      %8025 = vmatprep.mubr.f32.mxu0 0.0
      %8026 = vmatmul.mubr.f32.gmra.mxu0 %v7908
      %v8027 = vpop.f32.mrf.mxu0
      %v8028 = vadd.f32 0.0, %v8027
      %v8029 = vpop.f32.mrf.mxu0
      %8030 = vmatprep.mubr.f32.mxu0 0.0
      %8031 = vmatmul.mubr.f32.gmra.mxu0 %v7909
      %v8032 = vpop.f32.mrf.mxu0
      %v8033 = vadd.f32 0.0, %v8032
      %v8034 = vpop.f32.mrf.mxu0
      %8035 = vmatprep.mubr.f32.mxu0 0.0
      %8036 = vmatmul.mubr.f32.gmra.mxu0 %v7910
      %v8037 = vpop.f32.mrf.mxu0
      %v8038 = vadd.f32 0.0, %v8037
      %v8039 = vpop.f32.mrf.mxu0
      %8040 = vmatprep.mubr.f32.mxu0 0.0
      %8041 = vmatmul.mubr.f32.gmra.mxu0 %v7911
      %v8042 = vpop.f32.mrf.mxu0
      %v8043 = vadd.f32 0.0, %v8042
      %v8044 = vpop.f32.mrf.mxu0
      %8045 = vmatprep.mubr.f32.mxu0 0.0
      %8046 = vmatmul.mubr.f32.gmra.mxu0 %v7912
      %v8047 = vpop.f32.mrf.mxu0
      %v8048 = vadd.f32 0.0, %v8047
      %v8049 = vpop.f32.mrf.mxu0
      %8050 = vmatprep.mubr.f32.mxu0 0.0
      %8051 = vmatmul.mubr.f32.gmra.mxu0 %v7913
      %v8052 = vpop.f32.mrf.mxu0
      %v8053 = vadd.f32 0.0, %v8052
      %v8054 = vpop.f32.mrf.mxu0
      %8055 = vmatprep.mubr.f32.mxu0 0.0
      %8056 = vmatmul.mubr.f32.gmra.mxu0 %v7914
      %v8057 = vpop.f32.mrf.mxu0
      %v8058 = vadd.f32 0.0, %v8057
      %v8059 = vpop.f32.mrf.mxu0
      %8060 = vmatprep.mubr.f32.mxu0 0.0
      %8061 = vmatmul.mubr.f32.gmra.mxu0 %v7915
      %v8062 = vpop.f32.mrf.mxu0
      %v8063 = vadd.f32 0.0, %v8062
      %v8064 = vpop.f32.mrf.mxu0
      %8065 = vmatprep.mubr.f32.mxu0 0.0
      %8066 = vmatmul.mubr.f32.gmra.mxu0 %v7916
      %v8067 = vpop.f32.mrf.mxu0
      %v8068 = vadd.f32 0.0, %v8067
      %v8069 = vpop.f32.mrf.mxu0
      %8070 = vmatprep.mubr.f32.mxu0 0.0
      %8071 = vmatmul.mubr.f32.gmra.mxu0 %v7917
      %v8072 = vpop.f32.mrf.mxu0
      %v8073 = vadd.f32 0.0, %v8072
      %v8074 = vpop.f32.mrf.mxu0
      %8075 = vmatprep.mubr.f32.mxu0 0.0
      %8076 = vmatmul.mubr.f32.gmra.mxu0 %v7918
      %v8077 = vpop.f32.mrf.mxu0
      %v8078 = vadd.f32 0.0, %v8077
      %v8079 = vpop.f32.mrf.mxu0
      %8080 = vmatprep.mubr.f32.mxu0 0.0
      %8081 = vmatmul.mubr.f32.gmra.mxu0 %v7919
      %v8082 = vpop.f32.mrf.mxu0
      %v8083 = vadd.f32 0.0, %v8082
      %v8084 = vpop.f32.mrf.mxu0
      %8085 = vmatprep.mubr.f32.mxu0 0.0
      %8086 = vmatmul.mubr.f32.gmra.mxu0 %v7920
      %v8087 = vpop.f32.mrf.mxu0
      %v8088 = vadd.f32 0.0, %v8087
      %v8089 = vpop.f32.mrf.mxu0
      %8090 = vmatprep.mubr.f32.mxu0 0.0
      %8091 = vmatmul.mubr.f32.gmra.mxu0 %v7921
      %v8092 = vpop.f32.mrf.mxu0
      %v8093 = vadd.f32 0.0, %v8092
      %v8094 = vpop.f32.mrf.mxu0
      %8095 = vmatprep.mubr.f32.mxu0 0.0
      %8096 = vmatmul.mubr.f32.gmra.mxu0 %v7922
      %v8097 = vpop.f32.mrf.mxu0
      %v8098 = vadd.f32 0.0, %v8097
      %v8099 = vpop.f32.mrf.mxu0
      %8100 = vmatprep.mubr.f32.mxu0 0.0
      %8101 = vmatmul.mubr.f32.gmra.mxu0 %v7923
      %v8102 = vpop.f32.mrf.mxu0
      %v8103 = vadd.f32 0.0, %v8102
      %v8104 = vpop.f32.mrf.mxu0
      %8105 = vmatprep.mubr.f32.mxu0 0.0
      %8106 = vmatmul.mubr.f32.gmra.mxu0 %v7924
      %v8107 = vpop.f32.mrf.mxu0
      %v8108 = vadd.f32 0.0, %v8107
      %v8109 = vpop.f32.mrf.mxu0
      %8110 = vmatprep.mubr.f32.mxu0 0.0
      %8111 = vmatmul.mubr.f32.gmra.mxu0 %v7925
      %v8112 = vpop.f32.mrf.mxu0
      %v8113 = vadd.f32 0.0, %v8112
      %v8114 = vpop.f32.mrf.mxu0
      %8115 = vmatprep.mubr.f32.mxu0 0.0
      %8116 = vmatmul.mubr.f32.gmra.mxu0 %v7926
      %v8117 = vpop.f32.mrf.mxu0
      %v8118 = vadd.f32 0.0, %v8117
      %v8119 = vpop.f32.mrf.mxu0
      %8120 = vmatprep.mubr.f32.mxu0 0.0
      %8121 = vmatmul.mubr.f32.gmra.mxu0 %v7927
      %v8122 = vpop.f32.mrf.mxu0
      %v8123 = vadd.f32 0.0, %v8122
      %v8124 = vpop.f32.mrf.mxu0
      %8125 = vmatprep.mubr.f32.mxu0 0.0
      %8126 = vmatmul.mubr.f32.gmra.mxu0 %v7928
      %v8127 = vpop.f32.mrf.mxu0
      %v8128 = vadd.f32 0.0, %v8127
      %v8129 = vpop.f32.mrf.mxu0
      %8130 = vmatprep.mubr.f32.mxu0 0.0
      %8131 = vmatmul.mubr.f32.gmra.mxu0 %v7929
      %v8132 = vpop.f32.mrf.mxu0
      %v8133 = vadd.f32 0.0, %v8132
      %v8134 = vpop.f32.mrf.mxu0
      %8135 = vmatprep.mubr.f32.mxu0 0.0
      %8136 = vmatmul.mubr.f32.gmra.mxu0 %v7930
      %v8137 = vpop.f32.mrf.mxu0
      %v8138 = vadd.f32 0.0, %v8137
      %v8139 = vpop.f32.mrf.mxu0
      %8140 = vmatprep.mubr.f32.mxu0 0.0
      %8141 = vmatmul.mubr.f32.gmra.mxu0 %v7931
      %v8142 = vpop.f32.mrf.mxu0
      %v8143 = vadd.f32 0.0, %v8142
      %v8144 = vpop.f32.mrf.mxu0
      %8145 = vmatprep.mubr.f32.mxu0 0.0
      %8146 = vmatmul.mubr.f32.gmra.mxu0 %v7932
      %v8147 = vpop.f32.mrf.mxu0
      %v8148 = vadd.f32 0.0, %v8147
      %v8149 = vpop.f32.mrf.mxu0
      %8150 = vmatprep.mubr.f32.mxu0 0.0
      %8151 = vmatmul.mubr.f32.gmra.mxu0 %v7933
      %v8152 = vpop.f32.mrf.mxu0
      %v8153 = vadd.f32 0.0, %v8152
      %v8154 = vpop.f32.mrf.mxu0
      %8155 = vmatprep.mubr.f32.mxu0 0.0
      %8156 = vmatmul.mubr.f32.gmra.mxu0 %v7934
      %v8157 = vpop.f32.mrf.mxu0
      %v8158 = vadd.f32 0.0, %v8157
      %v8159 = vpop.f32.mrf.mxu0
      %8160 = vmatprep.mubr.f32.mxu0 0.0
      %8161 = vmatmul.mubr.f32.gmra.mxu0 %v7935
      %v8162 = vpop.f32.mrf.mxu0
      %v8163 = vadd.f32 0.0, %v8162
      %v8164 = vpop.f32.mrf.mxu0
      %8165 = vmatprep.mubr.f32.mxu0 0.0
      %8166 = vmatmul.mubr.f32.gmra.mxu0 %v7936
      %v8167 = vpop.f32.mrf.mxu0
      %v8168 = vadd.f32 0.0, %v8167
      %v8169 = vpop.f32.mrf.mxu0
      %8170 = vmatprep.mubr.f32.mxu0 0.0
      %8171 = vmatmul.mubr.f32.gmra.mxu0 %v7937
      %v8172 = vpop.f32.mrf.mxu0
      %v8173 = vadd.f32 0.0, %v8172
      %v8174 = vpop.f32.mrf.mxu0
      %8175 = vmatprep.mubr.f32.mxu0 0.0
      %8176 = vmatmul.mubr.f32.gmra.mxu0 %v7938
      %v8177 = vpop.f32.mrf.mxu0
      %v8178 = vadd.f32 0.0, %v8177
      %v8179 = vpop.f32.mrf.mxu0
      %8180 = vdwg.mxu0
      %v8181 = vadd.f32 %v7875, %v8023
      %v8182 = vadd.f32 %v7876, %v8028
      %v8183 = vadd.f32 %v7877, %v8033
      %v8184 = vadd.f32 %v7878, %v8038
      %v8185 = vadd.f32 %v7879, %v8043
      %v8186 = vadd.f32 %v7880, %v8048
      %v8187 = vadd.f32 %v7881, %v8053
      %v8188 = vadd.f32 %v7882, %v8058
      %v8189 = vadd.f32 %v7883, %v8063
      %v8190 = vadd.f32 %v7884, %v8068
      %v8191 = vadd.f32 %v7885, %v8073
      %v8192 = vadd.f32 %v7886, %v8078
      %v8193 = vadd.f32 %v7887, %v8083
      %v8194 = vadd.f32 %v7888, %v8088
      %v8195 = vadd.f32 %v7889, %v8093
      %v8196 = vadd.f32 %v7890, %v8098
      %v8197 = vadd.f32 %v7891, %v8103
      %v8198 = vadd.f32 %v7892, %v8108
      %v8199 = vadd.f32 %v7893, %v8113
      %v8200 = vadd.f32 %v7894, %v8118
      %v8201 = vadd.f32 %v7895, %v8123
      %v8202 = vadd.f32 %v7896, %v8128
      %v8203 = vadd.f32 %v7897, %v8133
      %v8204 = vadd.f32 %v7898, %v8138
      %v8205 = vadd.f32 %v7899, %v8143
      %v8206 = vadd.f32 %v7900, %v8148
      %v8207 = vadd.f32 %v7901, %v8153
      %v8208 = vadd.f32 %v7902, %v8158
      %v8209 = vadd.f32 %v7903, %v8163
      %v8210 = vadd.f32 %v7904, %v8168
      %v8211 = vadd.f32 %v7905, %v8173
      %v8212 = vadd.f32 %v7906, %v8178
      %v8213 = vld [vmem:[#allocation3 + $0x21] sm:$0xff]
      %v8214 = vld [vmem:[#allocation3 + $0x29] sm:$0xff]
      %v8215 = vld [vmem:[#allocation3 + $0x31] sm:$0xff]
      %v8216 = vld [vmem:[#allocation3 + $0x39] sm:$0xff]
      %v8217 = vld [vmem:[#allocation3 + $0x41] sm:$0xff]
      %v8218 = vld [vmem:[#allocation3 + $0x49] sm:$0xff]
      %v8219 = vld [vmem:[#allocation3 + $0x51] sm:$0xff]
      %v8220 = vld [vmem:[#allocation3 + $0x59] sm:$0xff]
      %v8221 = vld [vmem:[#allocation3 + $0x61] sm:$0xff]
      %v8222 = vld [vmem:[#allocation3 + $0x69] sm:$0xff]
      %v8223 = vld [vmem:[#allocation3 + $0x71] sm:$0xff]
      %v8224 = vld [vmem:[#allocation3 + $0x79] sm:$0xff]
      %v8225 = vld [vmem:[#allocation3 + $0x81] sm:$0xff]
      %v8226 = vld [vmem:[#allocation3 + $0x89] sm:$0xff]
      %v8227 = vld [vmem:[#allocation3 + $0x91] sm:$0xff]
      %v8228 = vld [vmem:[#allocation3 + $0x99] sm:$0xff]
      %v8229 = vld [vmem:[#allocation3 + $0xa1] sm:$0xff]
      %v8230 = vld [vmem:[#allocation3 + $0xa9] sm:$0xff]
      %v8231 = vld [vmem:[#allocation3 + $0xb1] sm:$0xff]
      %v8232 = vld [vmem:[#allocation3 + $0xb9] sm:$0xff]
      %v8233 = vld [vmem:[#allocation3 + $0xc1] sm:$0xff]
      %v8234 = vld [vmem:[#allocation3 + $0xc9] sm:$0xff]
      %v8235 = vld [vmem:[#allocation3 + $0xd1] sm:$0xff]
      %v8236 = vld [vmem:[#allocation3 + $0xd9] sm:$0xff]
      %v8237 = vld [vmem:[#allocation3 + $0xe1] sm:$0xff]
      %v8238 = vld [vmem:[#allocation3 + $0xe9] sm:$0xff]
      %v8239 = vld [vmem:[#allocation3 + $0xf1] sm:$0xff]
      %v8240 = vld [vmem:[#allocation3 + $0xf9] sm:$0xff]
      %v8241 = vld [vmem:[#allocation3 + $0x101] sm:$0xff]
      %v8242 = vld [vmem:[#allocation3 + $0x109] sm:$0xff]
      %v8243 = vld [vmem:[#allocation3 + $0x111] sm:$0xff]
      %v8244 = vld [vmem:[#allocation3 + $0x119] sm:$0xff]
      %s8245 = scalar_lea.vmem %s5, 896
      %v8246 = vld [vmem:[%s8245] sm:$0xff]
      %v8247 = vld [vmem:[%s8245 + $0x8] sm:$0xff]
      %v8248 = vld [vmem:[%s8245 + $0x10] sm:$0xff]
      %v8249 = vld [vmem:[%s8245 + $0x18] sm:$0xff]
      %v8250 = vld [vmem:[%s8245 + $0x20] sm:$0xff]
      %v8251 = vld [vmem:[%s8245 + $0x28] sm:$0xff]
      %v8252 = vld [vmem:[%s8245 + $0x30] sm:$0xff]
      %v8253 = vld [vmem:[%s8245 + $0x38] sm:$0xff]
      %v8254 = vld [vmem:[%s8245 + $0x40] sm:$0xff]
      %v8255 = vld [vmem:[%s8245 + $0x48] sm:$0xff]
      %v8256 = vld [vmem:[%s8245 + $0x50] sm:$0xff]
      %v8257 = vld [vmem:[%s8245 + $0x58] sm:$0xff]
      %v8258 = vld [vmem:[%s8245 + $0x60] sm:$0xff]
      %v8259 = vld [vmem:[%s8245 + $0x68] sm:$0xff]
      %v8260 = vld [vmem:[%s8245 + $0x70] sm:$0xff]
      %v8261 = vld [vmem:[%s8245 + $0x78] sm:$0xff]
      %8262 = vmatprep.subr.mxu0 0.0
      %8263 = vmatpush1.msra.mxu0 %v8261
      %8264 = vmatprep.subr.mxu0 0.0
      %8265 = vmatpush1.msra.mxu0 %v8260
      %8266 = vmatprep.subr.mxu0 0.0
      %8267 = vmatpush1.msra.mxu0 %v8259
      %8268 = vmatprep.subr.mxu0 0.0
      %8269 = vmatpush1.msra.mxu0 %v8258
      %8270 = vmatprep.subr.mxu0 0.0
      %8271 = vmatpush1.msra.mxu0 %v8257
      %8272 = vmatprep.subr.mxu0 0.0
      %8273 = vmatpush1.msra.mxu0 %v8256
      %8274 = vmatprep.subr.mxu0 0.0
      %8275 = vmatpush1.msra.mxu0 %v8255
      %8276 = vmatprep.subr.mxu0 0.0
      %8277 = vmatpush1.msra.mxu0 %v8254
      %8278 = vmatprep.subr.mxu0 0.0
      %8279 = vmatpush1.msra.mxu0 %v8253
      %8280 = vmatprep.subr.mxu0 0.0
      %8281 = vmatpush1.msra.mxu0 %v8252
      %8282 = vmatprep.subr.mxu0 0.0
      %8283 = vmatpush1.msra.mxu0 %v8251
      %8284 = vmatprep.subr.mxu0 0.0
      %8285 = vmatpush1.msra.mxu0 %v8250
      %8286 = vmatprep.subr.mxu0 0.0
      %8287 = vmatpush1.msra.mxu0 %v8249
      %8288 = vmatprep.subr.mxu0 0.0
      %8289 = vmatpush1.msra.mxu0 %v8248
      %8290 = vmatprep.subr.mxu0 0.0
      %8291 = vmatpush1.msra.mxu0 %v8247
      %8292 = vmatprep.subr.mxu0 0.0
      %8293 = vmatpush1.msra.mxu0 %v8246
      %8294 = vmatprep.subr.mxu0 0.0
      %8295 = vmatpush2.msra.mxu0 0.0
      %8296 = vmatprep.subr.mxu0 0.0
      %8297 = vmatpush2.msra.mxu0 0.0
      %8298 = vmatprep.subr.mxu0 0.0
      %8299 = vmatpush2.msra.mxu0 0.0
      %8300 = vmatprep.subr.mxu0 0.0
      %8301 = vmatpush2.msra.mxu0 0.0
      %8302 = vmatprep.subr.mxu0 0.0
      %8303 = vmatpush2.msra.mxu0 0.0
      %8304 = vmatprep.subr.mxu0 0.0
      %8305 = vmatpush2.msra.mxu0 0.0
      %8306 = vmatprep.subr.mxu0 0.0
      %8307 = vmatpush2.msra.mxu0 0.0
      %8308 = vmatprep.subr.mxu0 0.0
      %8309 = vmatpush2.msra.mxu0 0.0
      %8310 = vmatprep.subr.mxu0 0.0
      %8311 = vmatpush2.msra.mxu0 0.0
      %8312 = vmatprep.subr.mxu0 0.0
      %8313 = vmatpush2.msra.mxu0 0.0
      %8314 = vmatprep.subr.mxu0 0.0
      %8315 = vmatpush2.msra.mxu0 0.0
      %8316 = vmatprep.subr.mxu0 0.0
      %8317 = vmatpush2.msra.mxu0 0.0
      %8318 = vmatprep.subr.mxu0 0.0
      %8319 = vmatpush2.msra.mxu0 0.0
      %8320 = vmatprep.subr.mxu0 0.0
      %8321 = vmatpush2.msra.mxu0 0.0
      %8322 = vmatprep.subr.mxu0 0.0
      %8323 = vmatpush2.msra.mxu0 0.0
      %8324 = vmatprep.subr.mxu0 0.0
      %8325 = vmatpush2.msra.mxu0 0.0
      %8326 = vmatprep.mubr.f32.mxu0 0.0
      %8327 = vmatmul.mubr.f32.gmra.mxu0 %v8213
      %v8328 = vpop.f32.mrf.mxu0
      %v8329 = vadd.f32 0.0, %v8328
      %v8330 = vpop.f32.mrf.mxu0
      %8331 = vmatprep.mubr.f32.mxu0 0.0
      %8332 = vmatmul.mubr.f32.gmra.mxu0 %v8214
      %v8333 = vpop.f32.mrf.mxu0
      %v8334 = vadd.f32 0.0, %v8333
      %v8335 = vpop.f32.mrf.mxu0
      %8336 = vmatprep.mubr.f32.mxu0 0.0
      %8337 = vmatmul.mubr.f32.gmra.mxu0 %v8215
      %v8338 = vpop.f32.mrf.mxu0
      %v8339 = vadd.f32 0.0, %v8338
      %v8340 = vpop.f32.mrf.mxu0
      %8341 = vmatprep.mubr.f32.mxu0 0.0
      %8342 = vmatmul.mubr.f32.gmra.mxu0 %v8216
      %v8343 = vpop.f32.mrf.mxu0
      %v8344 = vadd.f32 0.0, %v8343
      %v8345 = vpop.f32.mrf.mxu0
      %8346 = vmatprep.mubr.f32.mxu0 0.0
      %8347 = vmatmul.mubr.f32.gmra.mxu0 %v8217
      %v8348 = vpop.f32.mrf.mxu0
      %v8349 = vadd.f32 0.0, %v8348
      %v8350 = vpop.f32.mrf.mxu0
      %8351 = vmatprep.mubr.f32.mxu0 0.0
      %8352 = vmatmul.mubr.f32.gmra.mxu0 %v8218
      %v8353 = vpop.f32.mrf.mxu0
      %v8354 = vadd.f32 0.0, %v8353
      %v8355 = vpop.f32.mrf.mxu0
      %8356 = vmatprep.mubr.f32.mxu0 0.0
      %8357 = vmatmul.mubr.f32.gmra.mxu0 %v8219
      %v8358 = vpop.f32.mrf.mxu0
      %v8359 = vadd.f32 0.0, %v8358
      %v8360 = vpop.f32.mrf.mxu0
      %8361 = vmatprep.mubr.f32.mxu0 0.0
      %8362 = vmatmul.mubr.f32.gmra.mxu0 %v8220
      %v8363 = vpop.f32.mrf.mxu0
      %v8364 = vadd.f32 0.0, %v8363
      %v8365 = vpop.f32.mrf.mxu0
      %8366 = vmatprep.mubr.f32.mxu0 0.0
      %8367 = vmatmul.mubr.f32.gmra.mxu0 %v8221
      %v8368 = vpop.f32.mrf.mxu0
      %v8369 = vadd.f32 0.0, %v8368
      %v8370 = vpop.f32.mrf.mxu0
      %8371 = vmatprep.mubr.f32.mxu0 0.0
      %8372 = vmatmul.mubr.f32.gmra.mxu0 %v8222
      %v8373 = vpop.f32.mrf.mxu0
      %v8374 = vadd.f32 0.0, %v8373
      %v8375 = vpop.f32.mrf.mxu0
      %8376 = vmatprep.mubr.f32.mxu0 0.0
      %8377 = vmatmul.mubr.f32.gmra.mxu0 %v8223
      %v8378 = vpop.f32.mrf.mxu0
      %v8379 = vadd.f32 0.0, %v8378
      %v8380 = vpop.f32.mrf.mxu0
      %8381 = vmatprep.mubr.f32.mxu0 0.0
      %8382 = vmatmul.mubr.f32.gmra.mxu0 %v8224
      %v8383 = vpop.f32.mrf.mxu0
      %v8384 = vadd.f32 0.0, %v8383
      %v8385 = vpop.f32.mrf.mxu0
      %8386 = vmatprep.mubr.f32.mxu0 0.0
      %8387 = vmatmul.mubr.f32.gmra.mxu0 %v8225
      %v8388 = vpop.f32.mrf.mxu0
      %v8389 = vadd.f32 0.0, %v8388
      %v8390 = vpop.f32.mrf.mxu0
      %8391 = vmatprep.mubr.f32.mxu0 0.0
      %8392 = vmatmul.mubr.f32.gmra.mxu0 %v8226
      %v8393 = vpop.f32.mrf.mxu0
      %v8394 = vadd.f32 0.0, %v8393
      %v8395 = vpop.f32.mrf.mxu0
      %8396 = vmatprep.mubr.f32.mxu0 0.0
      %8397 = vmatmul.mubr.f32.gmra.mxu0 %v8227
      %v8398 = vpop.f32.mrf.mxu0
      %v8399 = vadd.f32 0.0, %v8398
      %v8400 = vpop.f32.mrf.mxu0
      %8401 = vmatprep.mubr.f32.mxu0 0.0
      %8402 = vmatmul.mubr.f32.gmra.mxu0 %v8228
      %v8403 = vpop.f32.mrf.mxu0
      %v8404 = vadd.f32 0.0, %v8403
      %v8405 = vpop.f32.mrf.mxu0
      %8406 = vmatprep.mubr.f32.mxu0 0.0
      %8407 = vmatmul.mubr.f32.gmra.mxu0 %v8229
      %v8408 = vpop.f32.mrf.mxu0
      %v8409 = vadd.f32 0.0, %v8408
      %v8410 = vpop.f32.mrf.mxu0
      %8411 = vmatprep.mubr.f32.mxu0 0.0
      %8412 = vmatmul.mubr.f32.gmra.mxu0 %v8230
      %v8413 = vpop.f32.mrf.mxu0
      %v8414 = vadd.f32 0.0, %v8413
      %v8415 = vpop.f32.mrf.mxu0
      %8416 = vmatprep.mubr.f32.mxu0 0.0
      %8417 = vmatmul.mubr.f32.gmra.mxu0 %v8231
      %v8418 = vpop.f32.mrf.mxu0
      %v8419 = vadd.f32 0.0, %v8418
      %v8420 = vpop.f32.mrf.mxu0
      %8421 = vmatprep.mubr.f32.mxu0 0.0
      %8422 = vmatmul.mubr.f32.gmra.mxu0 %v8232
      %v8423 = vpop.f32.mrf.mxu0
      %v8424 = vadd.f32 0.0, %v8423
      %v8425 = vpop.f32.mrf.mxu0
      %8426 = vmatprep.mubr.f32.mxu0 0.0
      %8427 = vmatmul.mubr.f32.gmra.mxu0 %v8233
      %v8428 = vpop.f32.mrf.mxu0
      %v8429 = vadd.f32 0.0, %v8428
      %v8430 = vpop.f32.mrf.mxu0
      %8431 = vmatprep.mubr.f32.mxu0 0.0
      %8432 = vmatmul.mubr.f32.gmra.mxu0 %v8234
      %v8433 = vpop.f32.mrf.mxu0
      %v8434 = vadd.f32 0.0, %v8433
      %v8435 = vpop.f32.mrf.mxu0
      %8436 = vmatprep.mubr.f32.mxu0 0.0
      %8437 = vmatmul.mubr.f32.gmra.mxu0 %v8235
      %v8438 = vpop.f32.mrf.mxu0
      %v8439 = vadd.f32 0.0, %v8438
      %v8440 = vpop.f32.mrf.mxu0
      %8441 = vmatprep.mubr.f32.mxu0 0.0
      %8442 = vmatmul.mubr.f32.gmra.mxu0 %v8236
      %v8443 = vpop.f32.mrf.mxu0
      %v8444 = vadd.f32 0.0, %v8443
      %v8445 = vpop.f32.mrf.mxu0
      %8446 = vmatprep.mubr.f32.mxu0 0.0
      %8447 = vmatmul.mubr.f32.gmra.mxu0 %v8237
      %v8448 = vpop.f32.mrf.mxu0
      %v8449 = vadd.f32 0.0, %v8448
      %v8450 = vpop.f32.mrf.mxu0
      %8451 = vmatprep.mubr.f32.mxu0 0.0
      %8452 = vmatmul.mubr.f32.gmra.mxu0 %v8238
      %v8453 = vpop.f32.mrf.mxu0
      %v8454 = vadd.f32 0.0, %v8453
      %v8455 = vpop.f32.mrf.mxu0
      %8456 = vmatprep.mubr.f32.mxu0 0.0
      %8457 = vmatmul.mubr.f32.gmra.mxu0 %v8239
      %v8458 = vpop.f32.mrf.mxu0
      %v8459 = vadd.f32 0.0, %v8458
      %v8460 = vpop.f32.mrf.mxu0
      %8461 = vmatprep.mubr.f32.mxu0 0.0
      %8462 = vmatmul.mubr.f32.gmra.mxu0 %v8240
      %v8463 = vpop.f32.mrf.mxu0
      %v8464 = vadd.f32 0.0, %v8463
      %v8465 = vpop.f32.mrf.mxu0
      %8466 = vmatprep.mubr.f32.mxu0 0.0
      %8467 = vmatmul.mubr.f32.gmra.mxu0 %v8241
      %v8468 = vpop.f32.mrf.mxu0
      %v8469 = vadd.f32 0.0, %v8468
      %v8470 = vpop.f32.mrf.mxu0
      %8471 = vmatprep.mubr.f32.mxu0 0.0
      %8472 = vmatmul.mubr.f32.gmra.mxu0 %v8242
      %v8473 = vpop.f32.mrf.mxu0
      %v8474 = vadd.f32 0.0, %v8473
      %v8475 = vpop.f32.mrf.mxu0
      %8476 = vmatprep.mubr.f32.mxu0 0.0
      %8477 = vmatmul.mubr.f32.gmra.mxu0 %v8243
      %v8478 = vpop.f32.mrf.mxu0
      %v8479 = vadd.f32 0.0, %v8478
      %v8480 = vpop.f32.mrf.mxu0
      %8481 = vmatprep.mubr.f32.mxu0 0.0
      %8482 = vmatmul.mubr.f32.gmra.mxu0 %v8244
      %v8483 = vpop.f32.mrf.mxu0
      %v8484 = vadd.f32 0.0, %v8483
      %v8485 = vpop.f32.mrf.mxu0
      %8486 = vdwg.mxu0
      %v8487 = vadd.f32 %v8181, %v8329
      %v8488 = vadd.f32 %v8182, %v8334
      %v8489 = vadd.f32 %v8183, %v8339
      %v8490 = vadd.f32 %v8184, %v8344
      %v8491 = vadd.f32 %v8185, %v8349
      %v8492 = vadd.f32 %v8186, %v8354
      %v8493 = vadd.f32 %v8187, %v8359
      %v8494 = vadd.f32 %v8188, %v8364
      %v8495 = vadd.f32 %v8189, %v8369
      %v8496 = vadd.f32 %v8190, %v8374
      %v8497 = vadd.f32 %v8191, %v8379
      %v8498 = vadd.f32 %v8192, %v8384
      %v8499 = vadd.f32 %v8193, %v8389
      %v8500 = vadd.f32 %v8194, %v8394
      %v8501 = vadd.f32 %v8195, %v8399
      %v8502 = vadd.f32 %v8196, %v8404
      %v8503 = vadd.f32 %v8197, %v8409
      %v8504 = vadd.f32 %v8198, %v8414
      %v8505 = vadd.f32 %v8199, %v8419
      %v8506 = vadd.f32 %v8200, %v8424
      %v8507 = vadd.f32 %v8201, %v8429
      %v8508 = vadd.f32 %v8202, %v8434
      %v8509 = vadd.f32 %v8203, %v8439
      %v8510 = vadd.f32 %v8204, %v8444
      %v8511 = vadd.f32 %v8205, %v8449
      %v8512 = vadd.f32 %v8206, %v8454
      %v8513 = vadd.f32 %v8207, %v8459
      %v8514 = vadd.f32 %v8208, %v8464
      %v8515 = vadd.f32 %v8209, %v8469
      %v8516 = vadd.f32 %v8210, %v8474
      %v8517 = vadd.f32 %v8211, %v8479
      %v8518 = vadd.f32 %v8212, %v8484
      %v8519 = vld [vmem:[#allocation3 + $0x22] sm:$0xff]
      %v8520 = vld [vmem:[#allocation3 + $0x2a] sm:$0xff]
      %v8521 = vld [vmem:[#allocation3 + $0x32] sm:$0xff]
      %v8522 = vld [vmem:[#allocation3 + $0x3a] sm:$0xff]
      %v8523 = vld [vmem:[#allocation3 + $0x42] sm:$0xff]
      %v8524 = vld [vmem:[#allocation3 + $0x4a] sm:$0xff]
      %v8525 = vld [vmem:[#allocation3 + $0x52] sm:$0xff]
      %v8526 = vld [vmem:[#allocation3 + $0x5a] sm:$0xff]
      %v8527 = vld [vmem:[#allocation3 + $0x62] sm:$0xff]
      %v8528 = vld [vmem:[#allocation3 + $0x6a] sm:$0xff]
      %v8529 = vld [vmem:[#allocation3 + $0x72] sm:$0xff]
      %v8530 = vld [vmem:[#allocation3 + $0x7a] sm:$0xff]
      %v8531 = vld [vmem:[#allocation3 + $0x82] sm:$0xff]
      %v8532 = vld [vmem:[#allocation3 + $0x8a] sm:$0xff]
      %v8533 = vld [vmem:[#allocation3 + $0x92] sm:$0xff]
      %v8534 = vld [vmem:[#allocation3 + $0x9a] sm:$0xff]
      %v8535 = vld [vmem:[#allocation3 + $0xa2] sm:$0xff]
      %v8536 = vld [vmem:[#allocation3 + $0xaa] sm:$0xff]
      %v8537 = vld [vmem:[#allocation3 + $0xb2] sm:$0xff]
      %v8538 = vld [vmem:[#allocation3 + $0xba] sm:$0xff]
      %v8539 = vld [vmem:[#allocation3 + $0xc2] sm:$0xff]
      %v8540 = vld [vmem:[#allocation3 + $0xca] sm:$0xff]
      %v8541 = vld [vmem:[#allocation3 + $0xd2] sm:$0xff]
      %v8542 = vld [vmem:[#allocation3 + $0xda] sm:$0xff]
      %v8543 = vld [vmem:[#allocation3 + $0xe2] sm:$0xff]
      %v8544 = vld [vmem:[#allocation3 + $0xea] sm:$0xff]
      %v8545 = vld [vmem:[#allocation3 + $0xf2] sm:$0xff]
      %v8546 = vld [vmem:[#allocation3 + $0xfa] sm:$0xff]
      %v8547 = vld [vmem:[#allocation3 + $0x102] sm:$0xff]
      %v8548 = vld [vmem:[#allocation3 + $0x10a] sm:$0xff]
      %v8549 = vld [vmem:[#allocation3 + $0x112] sm:$0xff]
      %v8550 = vld [vmem:[#allocation3 + $0x11a] sm:$0xff]
      %s8551 = scalar_lea.vmem %s5, 1024
      %v8552 = vld [vmem:[%s8551] sm:$0xff]
      %v8553 = vld [vmem:[%s8551 + $0x8] sm:$0xff]
      %v8554 = vld [vmem:[%s8551 + $0x10] sm:$0xff]
      %v8555 = vld [vmem:[%s8551 + $0x18] sm:$0xff]
      %v8556 = vld [vmem:[%s8551 + $0x20] sm:$0xff]
      %v8557 = vld [vmem:[%s8551 + $0x28] sm:$0xff]
      %v8558 = vld [vmem:[%s8551 + $0x30] sm:$0xff]
      %v8559 = vld [vmem:[%s8551 + $0x38] sm:$0xff]
      %v8560 = vld [vmem:[%s8551 + $0x40] sm:$0xff]
      %v8561 = vld [vmem:[%s8551 + $0x48] sm:$0xff]
      %v8562 = vld [vmem:[%s8551 + $0x50] sm:$0xff]
      %v8563 = vld [vmem:[%s8551 + $0x58] sm:$0xff]
      %v8564 = vld [vmem:[%s8551 + $0x60] sm:$0xff]
      %v8565 = vld [vmem:[%s8551 + $0x68] sm:$0xff]
      %v8566 = vld [vmem:[%s8551 + $0x70] sm:$0xff]
      %v8567 = vld [vmem:[%s8551 + $0x78] sm:$0xff]
      %8568 = vmatprep.subr.mxu0 0.0
      %8569 = vmatpush1.msra.mxu0 %v8567
      %8570 = vmatprep.subr.mxu0 0.0
      %8571 = vmatpush1.msra.mxu0 %v8566
      %8572 = vmatprep.subr.mxu0 0.0
      %8573 = vmatpush1.msra.mxu0 %v8565
      %8574 = vmatprep.subr.mxu0 0.0
      %8575 = vmatpush1.msra.mxu0 %v8564
      %8576 = vmatprep.subr.mxu0 0.0
      %8577 = vmatpush1.msra.mxu0 %v8563
      %8578 = vmatprep.subr.mxu0 0.0
      %8579 = vmatpush1.msra.mxu0 %v8562
      %8580 = vmatprep.subr.mxu0 0.0
      %8581 = vmatpush1.msra.mxu0 %v8561
      %8582 = vmatprep.subr.mxu0 0.0
      %8583 = vmatpush1.msra.mxu0 %v8560
      %8584 = vmatprep.subr.mxu0 0.0
      %8585 = vmatpush1.msra.mxu0 %v8559
      %8586 = vmatprep.subr.mxu0 0.0
      %8587 = vmatpush1.msra.mxu0 %v8558
      %8588 = vmatprep.subr.mxu0 0.0
      %8589 = vmatpush1.msra.mxu0 %v8557
      %8590 = vmatprep.subr.mxu0 0.0
      %8591 = vmatpush1.msra.mxu0 %v8556
      %8592 = vmatprep.subr.mxu0 0.0
      %8593 = vmatpush1.msra.mxu0 %v8555
      %8594 = vmatprep.subr.mxu0 0.0
      %8595 = vmatpush1.msra.mxu0 %v8554
      %8596 = vmatprep.subr.mxu0 0.0
      %8597 = vmatpush1.msra.mxu0 %v8553
      %8598 = vmatprep.subr.mxu0 0.0
      %8599 = vmatpush1.msra.mxu0 %v8552
      %8600 = vmatprep.subr.mxu0 0.0
      %8601 = vmatpush2.msra.mxu0 0.0
      %8602 = vmatprep.subr.mxu0 0.0
      %8603 = vmatpush2.msra.mxu0 0.0
      %8604 = vmatprep.subr.mxu0 0.0
      %8605 = vmatpush2.msra.mxu0 0.0
      %8606 = vmatprep.subr.mxu0 0.0
      %8607 = vmatpush2.msra.mxu0 0.0
      %8608 = vmatprep.subr.mxu0 0.0
      %8609 = vmatpush2.msra.mxu0 0.0
      %8610 = vmatprep.subr.mxu0 0.0
      %8611 = vmatpush2.msra.mxu0 0.0
      %8612 = vmatprep.subr.mxu0 0.0
      %8613 = vmatpush2.msra.mxu0 0.0
      %8614 = vmatprep.subr.mxu0 0.0
      %8615 = vmatpush2.msra.mxu0 0.0
      %8616 = vmatprep.subr.mxu0 0.0
      %8617 = vmatpush2.msra.mxu0 0.0
      %8618 = vmatprep.subr.mxu0 0.0
      %8619 = vmatpush2.msra.mxu0 0.0
      %8620 = vmatprep.subr.mxu0 0.0
      %8621 = vmatpush2.msra.mxu0 0.0
      %8622 = vmatprep.subr.mxu0 0.0
      %8623 = vmatpush2.msra.mxu0 0.0
      %8624 = vmatprep.subr.mxu0 0.0
      %8625 = vmatpush2.msra.mxu0 0.0
      %8626 = vmatprep.subr.mxu0 0.0
      %8627 = vmatpush2.msra.mxu0 0.0
      %8628 = vmatprep.subr.mxu0 0.0
      %8629 = vmatpush2.msra.mxu0 0.0
      %8630 = vmatprep.subr.mxu0 0.0
      %8631 = vmatpush2.msra.mxu0 0.0
      %8632 = vmatprep.mubr.f32.mxu0 0.0
      %8633 = vmatmul.mubr.f32.gmra.mxu0 %v8519
      %v8634 = vpop.f32.mrf.mxu0
      %v8635 = vadd.f32 0.0, %v8634
      %v8636 = vpop.f32.mrf.mxu0
      %8637 = vmatprep.mubr.f32.mxu0 0.0
      %8638 = vmatmul.mubr.f32.gmra.mxu0 %v8520
      %v8639 = vpop.f32.mrf.mxu0
      %v8640 = vadd.f32 0.0, %v8639
      %v8641 = vpop.f32.mrf.mxu0
      %8642 = vmatprep.mubr.f32.mxu0 0.0
      %8643 = vmatmul.mubr.f32.gmra.mxu0 %v8521
      %v8644 = vpop.f32.mrf.mxu0
      %v8645 = vadd.f32 0.0, %v8644
      %v8646 = vpop.f32.mrf.mxu0
      %8647 = vmatprep.mubr.f32.mxu0 0.0
      %8648 = vmatmul.mubr.f32.gmra.mxu0 %v8522
      %v8649 = vpop.f32.mrf.mxu0
      %v8650 = vadd.f32 0.0, %v8649
      %v8651 = vpop.f32.mrf.mxu0
      %8652 = vmatprep.mubr.f32.mxu0 0.0
      %8653 = vmatmul.mubr.f32.gmra.mxu0 %v8523
      %v8654 = vpop.f32.mrf.mxu0
      %v8655 = vadd.f32 0.0, %v8654
      %v8656 = vpop.f32.mrf.mxu0
      %8657 = vmatprep.mubr.f32.mxu0 0.0
      %8658 = vmatmul.mubr.f32.gmra.mxu0 %v8524
      %v8659 = vpop.f32.mrf.mxu0
      %v8660 = vadd.f32 0.0, %v8659
      %v8661 = vpop.f32.mrf.mxu0
      %8662 = vmatprep.mubr.f32.mxu0 0.0
      %8663 = vmatmul.mubr.f32.gmra.mxu0 %v8525
      %v8664 = vpop.f32.mrf.mxu0
      %v8665 = vadd.f32 0.0, %v8664
      %v8666 = vpop.f32.mrf.mxu0
      %8667 = vmatprep.mubr.f32.mxu0 0.0
      %8668 = vmatmul.mubr.f32.gmra.mxu0 %v8526
      %v8669 = vpop.f32.mrf.mxu0
      %v8670 = vadd.f32 0.0, %v8669
      %v8671 = vpop.f32.mrf.mxu0
      %8672 = vmatprep.mubr.f32.mxu0 0.0
      %8673 = vmatmul.mubr.f32.gmra.mxu0 %v8527
      %v8674 = vpop.f32.mrf.mxu0
      %v8675 = vadd.f32 0.0, %v8674
      %v8676 = vpop.f32.mrf.mxu0
      %8677 = vmatprep.mubr.f32.mxu0 0.0
      %8678 = vmatmul.mubr.f32.gmra.mxu0 %v8528
      %v8679 = vpop.f32.mrf.mxu0
      %v8680 = vadd.f32 0.0, %v8679
      %v8681 = vpop.f32.mrf.mxu0
      %8682 = vmatprep.mubr.f32.mxu0 0.0
      %8683 = vmatmul.mubr.f32.gmra.mxu0 %v8529
      %v8684 = vpop.f32.mrf.mxu0
      %v8685 = vadd.f32 0.0, %v8684
      %v8686 = vpop.f32.mrf.mxu0
      %8687 = vmatprep.mubr.f32.mxu0 0.0
      %8688 = vmatmul.mubr.f32.gmra.mxu0 %v8530
      %v8689 = vpop.f32.mrf.mxu0
      %v8690 = vadd.f32 0.0, %v8689
      %v8691 = vpop.f32.mrf.mxu0
      %8692 = vmatprep.mubr.f32.mxu0 0.0
      %8693 = vmatmul.mubr.f32.gmra.mxu0 %v8531
      %v8694 = vpop.f32.mrf.mxu0
      %v8695 = vadd.f32 0.0, %v8694
      %v8696 = vpop.f32.mrf.mxu0
      %8697 = vmatprep.mubr.f32.mxu0 0.0
      %8698 = vmatmul.mubr.f32.gmra.mxu0 %v8532
      %v8699 = vpop.f32.mrf.mxu0
      %v8700 = vadd.f32 0.0, %v8699
      %v8701 = vpop.f32.mrf.mxu0
      %8702 = vmatprep.mubr.f32.mxu0 0.0
      %8703 = vmatmul.mubr.f32.gmra.mxu0 %v8533
      %v8704 = vpop.f32.mrf.mxu0
      %v8705 = vadd.f32 0.0, %v8704
      %v8706 = vpop.f32.mrf.mxu0
      %8707 = vmatprep.mubr.f32.mxu0 0.0
      %8708 = vmatmul.mubr.f32.gmra.mxu0 %v8534
      %v8709 = vpop.f32.mrf.mxu0
      %v8710 = vadd.f32 0.0, %v8709
      %v8711 = vpop.f32.mrf.mxu0
      %8712 = vmatprep.mubr.f32.mxu0 0.0
      %8713 = vmatmul.mubr.f32.gmra.mxu0 %v8535
      %v8714 = vpop.f32.mrf.mxu0
      %v8715 = vadd.f32 0.0, %v8714
      %v8716 = vpop.f32.mrf.mxu0
      %8717 = vmatprep.mubr.f32.mxu0 0.0
      %8718 = vmatmul.mubr.f32.gmra.mxu0 %v8536
      %v8719 = vpop.f32.mrf.mxu0
      %v8720 = vadd.f32 0.0, %v8719
      %v8721 = vpop.f32.mrf.mxu0
      %8722 = vmatprep.mubr.f32.mxu0 0.0
      %8723 = vmatmul.mubr.f32.gmra.mxu0 %v8537
      %v8724 = vpop.f32.mrf.mxu0
      %v8725 = vadd.f32 0.0, %v8724
      %v8726 = vpop.f32.mrf.mxu0
      %8727 = vmatprep.mubr.f32.mxu0 0.0
      %8728 = vmatmul.mubr.f32.gmra.mxu0 %v8538
      %v8729 = vpop.f32.mrf.mxu0
      %v8730 = vadd.f32 0.0, %v8729
      %v8731 = vpop.f32.mrf.mxu0
      %8732 = vmatprep.mubr.f32.mxu0 0.0
      %8733 = vmatmul.mubr.f32.gmra.mxu0 %v8539
      %v8734 = vpop.f32.mrf.mxu0
      %v8735 = vadd.f32 0.0, %v8734
      %v8736 = vpop.f32.mrf.mxu0
      %8737 = vmatprep.mubr.f32.mxu0 0.0
      %8738 = vmatmul.mubr.f32.gmra.mxu0 %v8540
      %v8739 = vpop.f32.mrf.mxu0
      %v8740 = vadd.f32 0.0, %v8739
      %v8741 = vpop.f32.mrf.mxu0
      %8742 = vmatprep.mubr.f32.mxu0 0.0
      %8743 = vmatmul.mubr.f32.gmra.mxu0 %v8541
      %v8744 = vpop.f32.mrf.mxu0
      %v8745 = vadd.f32 0.0, %v8744
      %v8746 = vpop.f32.mrf.mxu0
      %8747 = vmatprep.mubr.f32.mxu0 0.0
      %8748 = vmatmul.mubr.f32.gmra.mxu0 %v8542
      %v8749 = vpop.f32.mrf.mxu0
      %v8750 = vadd.f32 0.0, %v8749
      %v8751 = vpop.f32.mrf.mxu0
      %8752 = vmatprep.mubr.f32.mxu0 0.0
      %8753 = vmatmul.mubr.f32.gmra.mxu0 %v8543
      %v8754 = vpop.f32.mrf.mxu0
      %v8755 = vadd.f32 0.0, %v8754
      %v8756 = vpop.f32.mrf.mxu0
      %8757 = vmatprep.mubr.f32.mxu0 0.0
      %8758 = vmatmul.mubr.f32.gmra.mxu0 %v8544
      %v8759 = vpop.f32.mrf.mxu0
      %v8760 = vadd.f32 0.0, %v8759
      %v8761 = vpop.f32.mrf.mxu0
      %8762 = vmatprep.mubr.f32.mxu0 0.0
      %8763 = vmatmul.mubr.f32.gmra.mxu0 %v8545
      %v8764 = vpop.f32.mrf.mxu0
      %v8765 = vadd.f32 0.0, %v8764
      %v8766 = vpop.f32.mrf.mxu0
      %8767 = vmatprep.mubr.f32.mxu0 0.0
      %8768 = vmatmul.mubr.f32.gmra.mxu0 %v8546
      %v8769 = vpop.f32.mrf.mxu0
      %v8770 = vadd.f32 0.0, %v8769
      %v8771 = vpop.f32.mrf.mxu0
      %8772 = vmatprep.mubr.f32.mxu0 0.0
      %8773 = vmatmul.mubr.f32.gmra.mxu0 %v8547
      %v8774 = vpop.f32.mrf.mxu0
      %v8775 = vadd.f32 0.0, %v8774
      %v8776 = vpop.f32.mrf.mxu0
      %8777 = vmatprep.mubr.f32.mxu0 0.0
      %8778 = vmatmul.mubr.f32.gmra.mxu0 %v8548
      %v8779 = vpop.f32.mrf.mxu0
      %v8780 = vadd.f32 0.0, %v8779
      %v8781 = vpop.f32.mrf.mxu0
      %8782 = vmatprep.mubr.f32.mxu0 0.0
      %8783 = vmatmul.mubr.f32.gmra.mxu0 %v8549
      %v8784 = vpop.f32.mrf.mxu0
      %v8785 = vadd.f32 0.0, %v8784
      %v8786 = vpop.f32.mrf.mxu0
      %8787 = vmatprep.mubr.f32.mxu0 0.0
      %8788 = vmatmul.mubr.f32.gmra.mxu0 %v8550
      %v8789 = vpop.f32.mrf.mxu0
      %v8790 = vadd.f32 0.0, %v8789
      %v8791 = vpop.f32.mrf.mxu0
      %8792 = vdwg.mxu0
      %v8793 = vadd.f32 %v8487, %v8635
      %v8794 = vadd.f32 %v8488, %v8640
      %v8795 = vadd.f32 %v8489, %v8645
      %v8796 = vadd.f32 %v8490, %v8650
      %v8797 = vadd.f32 %v8491, %v8655
      %v8798 = vadd.f32 %v8492, %v8660
      %v8799 = vadd.f32 %v8493, %v8665
      %v8800 = vadd.f32 %v8494, %v8670
      %v8801 = vadd.f32 %v8495, %v8675
      %v8802 = vadd.f32 %v8496, %v8680
      %v8803 = vadd.f32 %v8497, %v8685
      %v8804 = vadd.f32 %v8498, %v8690
      %v8805 = vadd.f32 %v8499, %v8695
      %v8806 = vadd.f32 %v8500, %v8700
      %v8807 = vadd.f32 %v8501, %v8705
      %v8808 = vadd.f32 %v8502, %v8710
      %v8809 = vadd.f32 %v8503, %v8715
      %v8810 = vadd.f32 %v8504, %v8720
      %v8811 = vadd.f32 %v8505, %v8725
      %v8812 = vadd.f32 %v8506, %v8730
      %v8813 = vadd.f32 %v8507, %v8735
      %v8814 = vadd.f32 %v8508, %v8740
      %v8815 = vadd.f32 %v8509, %v8745
      %v8816 = vadd.f32 %v8510, %v8750
      %v8817 = vadd.f32 %v8511, %v8755
      %v8818 = vadd.f32 %v8512, %v8760
      %v8819 = vadd.f32 %v8513, %v8765
      %v8820 = vadd.f32 %v8514, %v8770
      %v8821 = vadd.f32 %v8515, %v8775
      %v8822 = vadd.f32 %v8516, %v8780
      %v8823 = vadd.f32 %v8517, %v8785
      %v8824 = vadd.f32 %v8518, %v8790
      %v8825 = vld [vmem:[%s6] sm:$0x1]
      %v8827 = vlaneseq
      %v8828 = vshrl.u32 %v8827, 7
      %v8829 = vsub.s32 0, %v8828
      %v8830 = vrot.slane %v8825, %v8829
      %v8832 = vadd.f32 %v8793, %v8830
      %v8833 = vadd.f32 %v8794, %v8830
      %v8834 = vadd.f32 %v8795, %v8830
      %v8835 = vadd.f32 %v8796, %v8830
      %v8836 = vadd.f32 %v8797, %v8830
      %v8837 = vadd.f32 %v8798, %v8830
      %v8838 = vadd.f32 %v8799, %v8830
      %v8839 = vadd.f32 %v8800, %v8830
      %v8840 = vadd.f32 %v8801, %v8830
      %v8841 = vadd.f32 %v8802, %v8830
      %v8842 = vadd.f32 %v8803, %v8830
      %v8843 = vadd.f32 %v8804, %v8830
      %v8844 = vadd.f32 %v8805, %v8830
      %v8845 = vadd.f32 %v8806, %v8830
      %v8846 = vadd.f32 %v8807, %v8830
      %v8847 = vadd.f32 %v8808, %v8830
      %v8848 = vadd.f32 %v8809, %v8830
      %v8849 = vadd.f32 %v8810, %v8830
      %v8850 = vadd.f32 %v8811, %v8830
      %v8851 = vadd.f32 %v8812, %v8830
      %v8852 = vadd.f32 %v8813, %v8830
      %v8853 = vadd.f32 %v8814, %v8830
      %v8854 = vadd.f32 %v8815, %v8830
      %v8855 = vadd.f32 %v8816, %v8830
      %v8856 = vadd.f32 %v8817, %v8830
      %v8857 = vadd.f32 %v8818, %v8830
      %v8858 = vadd.f32 %v8819, %v8830
      %v8859 = vadd.f32 %v8820, %v8830
      %v8860 = vadd.f32 %v8821, %v8830
      %v8861 = vadd.f32 %v8822, %v8830
      %v8862 = vadd.f32 %v8823, %v8830
      %v8863 = vadd.f32 %v8824, %v8830
      %vm8864 = vcmp.ge.f32.partialorder %v8832, 0.0
      %vm8865 = vcmp.ge.f32.partialorder %v8833, 0.0
      %vm8866 = vcmp.ge.f32.partialorder %v8834, 0.0
      %vm8867 = vcmp.ge.f32.partialorder %v8835, 0.0
      %vm8868 = vcmp.ge.f32.partialorder %v8836, 0.0
      %vm8869 = vcmp.ge.f32.partialorder %v8837, 0.0
      %vm8870 = vcmp.ge.f32.partialorder %v8838, 0.0
      %vm8871 = vcmp.ge.f32.partialorder %v8839, 0.0
      %vm8872 = vcmp.ge.f32.partialorder %v8840, 0.0
      %vm8873 = vcmp.ge.f32.partialorder %v8841, 0.0
      %vm8874 = vcmp.ge.f32.partialorder %v8842, 0.0
      %vm8875 = vcmp.ge.f32.partialorder %v8843, 0.0
      %vm8876 = vcmp.ge.f32.partialorder %v8844, 0.0
      %vm8877 = vcmp.ge.f32.partialorder %v8845, 0.0
      %vm8878 = vcmp.ge.f32.partialorder %v8846, 0.0
      %vm8879 = vcmp.ge.f32.partialorder %v8847, 0.0
      %vm8880 = vcmp.ge.f32.partialorder %v8848, 0.0
      %vm8881 = vcmp.ge.f32.partialorder %v8849, 0.0
      %vm8882 = vcmp.ge.f32.partialorder %v8850, 0.0
      %vm8883 = vcmp.ge.f32.partialorder %v8851, 0.0
      %vm8884 = vcmp.ge.f32.partialorder %v8852, 0.0
      %vm8885 = vcmp.ge.f32.partialorder %v8853, 0.0
      %vm8886 = vcmp.ge.f32.partialorder %v8854, 0.0
      %vm8887 = vcmp.ge.f32.partialorder %v8855, 0.0
      %vm8888 = vcmp.ge.f32.partialorder %v8856, 0.0
      %vm8889 = vcmp.ge.f32.partialorder %v8857, 0.0
      %vm8890 = vcmp.ge.f32.partialorder %v8858, 0.0
      %vm8891 = vcmp.ge.f32.partialorder %v8859, 0.0
      %vm8892 = vcmp.ge.f32.partialorder %v8860, 0.0
      %vm8893 = vcmp.ge.f32.partialorder %v8861, 0.0
      %vm8894 = vcmp.ge.f32.partialorder %v8862, 0.0
      %vm8895 = vcmp.ge.f32.partialorder %v8863, 0.0
      %v8896 = vmul.f32 %v8832, 0.01
      %v8897 = vmul.f32 %v8833, 0.01
      %v8898 = vmul.f32 %v8834, 0.01
      %v8899 = vmul.f32 %v8835, 0.01
      %v8900 = vmul.f32 %v8836, 0.01
      %v8901 = vmul.f32 %v8837, 0.01
      %v8902 = vmul.f32 %v8838, 0.01
      %v8903 = vmul.f32 %v8839, 0.01
      %v8904 = vmul.f32 %v8840, 0.01
      %v8905 = vmul.f32 %v8841, 0.01
      %v8906 = vmul.f32 %v8842, 0.01
      %v8907 = vmul.f32 %v8843, 0.01
      %v8908 = vmul.f32 %v8844, 0.01
      %v8909 = vmul.f32 %v8845, 0.01
      %v8910 = vmul.f32 %v8846, 0.01
      %v8911 = vmul.f32 %v8847, 0.01
      %v8912 = vmul.f32 %v8848, 0.01
      %v8913 = vmul.f32 %v8849, 0.01
      %v8914 = vmul.f32 %v8850, 0.01
      %v8915 = vmul.f32 %v8851, 0.01
      %v8916 = vmul.f32 %v8852, 0.01
      %v8917 = vmul.f32 %v8853, 0.01
      %v8918 = vmul.f32 %v8854, 0.01
      %v8919 = vmul.f32 %v8855, 0.01
      %v8920 = vmul.f32 %v8856, 0.01
      %v8921 = vmul.f32 %v8857, 0.01
      %v8922 = vmul.f32 %v8858, 0.01
      %v8923 = vmul.f32 %v8859, 0.01
      %v8924 = vmul.f32 %v8860, 0.01
      %v8925 = vmul.f32 %v8861, 0.01
      %v8926 = vmul.f32 %v8862, 0.01
      %v8927 = vmul.f32 %v8863, 0.01
      %v8928 = vsel %vm8864, %v8832, %v8896
      %v8929 = vsel %vm8865, %v8833, %v8897
      %v8930 = vsel %vm8866, %v8834, %v8898
      %v8931 = vsel %vm8867, %v8835, %v8899
      %v8932 = vsel %vm8868, %v8836, %v8900
      %v8933 = vsel %vm8869, %v8837, %v8901
      %v8934 = vsel %vm8870, %v8838, %v8902
      %v8935 = vsel %vm8871, %v8839, %v8903
      %v8936 = vsel %vm8872, %v8840, %v8904
      %v8937 = vsel %vm8873, %v8841, %v8905
      %v8938 = vsel %vm8874, %v8842, %v8906
      %v8939 = vsel %vm8875, %v8843, %v8907
      %v8940 = vsel %vm8876, %v8844, %v8908
      %v8941 = vsel %vm8877, %v8845, %v8909
      %v8942 = vsel %vm8878, %v8846, %v8910
      %v8943 = vsel %vm8879, %v8847, %v8911
      %v8944 = vsel %vm8880, %v8848, %v8912
      %v8945 = vsel %vm8881, %v8849, %v8913
      %v8946 = vsel %vm8882, %v8850, %v8914
      %v8947 = vsel %vm8883, %v8851, %v8915
      %v8948 = vsel %vm8884, %v8852, %v8916
      %v8949 = vsel %vm8885, %v8853, %v8917
      %v8950 = vsel %vm8886, %v8854, %v8918
      %v8951 = vsel %vm8887, %v8855, %v8919
      %v8952 = vsel %vm8888, %v8856, %v8920
      %v8953 = vsel %vm8889, %v8857, %v8921
      %v8954 = vsel %vm8890, %v8858, %v8922
      %v8955 = vsel %vm8891, %v8859, %v8923
      %v8956 = vsel %vm8892, %v8860, %v8924
      %v8957 = vsel %vm8893, %v8861, %v8925
      %v8958 = vsel %vm8894, %v8862, %v8926
      %v8959 = vsel %vm8895, %v8863, %v8927
      %v8960 = vld [vmem:[%s7] sm:$0xff]
      %v8961 = vld [vmem:[%s7 + $0x8] sm:$0xff]
      %v8962 = vld [vmem:[%s7 + $0x10] sm:$0xff]
      %v8963 = vld [vmem:[%s7 + $0x18] sm:$0xff]
      %v8964 = vld [vmem:[%s7 + $0x20] sm:$0xff]
      %v8965 = vld [vmem:[%s7 + $0x28] sm:$0xff]
      %v8966 = vld [vmem:[%s7 + $0x30] sm:$0xff]
      %v8967 = vld [vmem:[%s7 + $0x38] sm:$0xff]
      %v8968 = vld [vmem:[%s7 + $0x40] sm:$0xff]
      %v8969 = vld [vmem:[%s7 + $0x48] sm:$0xff]
      %v8970 = vld [vmem:[%s7 + $0x50] sm:$0xff]
      %v8971 = vld [vmem:[%s7 + $0x58] sm:$0xff]
      %v8972 = vld [vmem:[%s7 + $0x60] sm:$0xff]
      %v8973 = vld [vmem:[%s7 + $0x68] sm:$0xff]
      %v8974 = vld [vmem:[%s7 + $0x70] sm:$0xff]
      %v8975 = vld [vmem:[%s7 + $0x78] sm:$0xff]
      %8976 = vmatprep.subr.mxu0 0.0
      %8977 = vmatpush1.msra.mxu0 %v8943
      %8978 = vmatprep.subr.mxu0 0.0
      %8979 = vmatpush1.msra.mxu0 %v8942
      %8980 = vmatprep.subr.mxu0 0.0
      %8981 = vmatpush1.msra.mxu0 %v8941
      %8982 = vmatprep.subr.mxu0 0.0
      %8983 = vmatpush1.msra.mxu0 %v8940
      %8984 = vmatprep.subr.mxu0 0.0
      %8985 = vmatpush1.msra.mxu0 %v8939
      %8986 = vmatprep.subr.mxu0 0.0
      %8987 = vmatpush1.msra.mxu0 %v8938
      %8988 = vmatprep.subr.mxu0 0.0
      %8989 = vmatpush1.msra.mxu0 %v8937
      %8990 = vmatprep.subr.mxu0 0.0
      %8991 = vmatpush1.msra.mxu0 %v8936
      %8992 = vmatprep.subr.mxu0 0.0
      %8993 = vmatpush1.msra.mxu0 %v8935
      %8994 = vmatprep.subr.mxu0 0.0
      %8995 = vmatpush1.msra.mxu0 %v8934
      %8996 = vmatprep.subr.mxu0 0.0
      %8997 = vmatpush1.msra.mxu0 %v8933
      %8998 = vmatprep.subr.mxu0 0.0
      %8999 = vmatpush1.msra.mxu0 %v8932
      %9000 = vmatprep.subr.mxu0 0.0
      %9001 = vmatpush1.msra.mxu0 %v8931
      %9002 = vmatprep.subr.mxu0 0.0
      %9003 = vmatpush1.msra.mxu0 %v8930
      %9004 = vmatprep.subr.mxu0 0.0
      %9005 = vmatpush1.msra.mxu0 %v8929
      %9006 = vmatprep.subr.mxu0 0.0
      %9007 = vmatpush1.msra.mxu0 %v8928
      %9008 = vmatprep.subr.mxu0 0.0
      %9009 = vmatpush2.msra.mxu0 %v8959
      %9010 = vmatprep.subr.mxu0 0.0
      %9011 = vmatpush2.msra.mxu0 %v8958
      %9012 = vmatprep.subr.mxu0 0.0
      %9013 = vmatpush2.msra.mxu0 %v8957
      %9014 = vmatprep.subr.mxu0 0.0
      %9015 = vmatpush2.msra.mxu0 %v8956
      %9016 = vmatprep.subr.mxu0 0.0
      %9017 = vmatpush2.msra.mxu0 %v8955
      %9018 = vmatprep.subr.mxu0 0.0
      %9019 = vmatpush2.msra.mxu0 %v8954
      %9020 = vmatprep.subr.mxu0 0.0
      %9021 = vmatpush2.msra.mxu0 %v8953
      %9022 = vmatprep.subr.mxu0 0.0
      %9023 = vmatpush2.msra.mxu0 %v8952
      %9024 = vmatprep.subr.mxu0 0.0
      %9025 = vmatpush2.msra.mxu0 %v8951
      %9026 = vmatprep.subr.mxu0 0.0
      %9027 = vmatpush2.msra.mxu0 %v8950
      %9028 = vmatprep.subr.mxu0 0.0
      %9029 = vmatpush2.msra.mxu0 %v8949
      %9030 = vmatprep.subr.mxu0 0.0
      %9031 = vmatpush2.msra.mxu0 %v8948
      %9032 = vmatprep.subr.mxu0 0.0
      %9033 = vmatpush2.msra.mxu0 %v8947
      %9034 = vmatprep.subr.mxu0 0.0
      %9035 = vmatpush2.msra.mxu0 %v8946
      %9036 = vmatprep.subr.mxu0 0.0
      %9037 = vmatpush2.msra.mxu0 %v8945
      %9038 = vmatprep.subr.mxu0 0.0
      %9039 = vmatpush2.msra.mxu0 %v8944
      %9040 = vmatprep.mubr.f32.mxu0 %v8961
      %9041 = vmatmul.mubr.f32.gmra.mxu0 %v8960
      %v9042 = vpop.f32.mrf.mxu0
      %v9043 = vadd.f32 0.0, %v9042
      %v9044 = vpop.f32.mrf.mxu0
      %9045 = vmatprep.mubr.f32.mxu0 %v8963
      %9046 = vmatmul.mubr.f32.gmra.mxu0 %v8962
      %v9047 = vpop.f32.mrf.mxu0
      %v9048 = vadd.f32 0.0, %v9047
      %v9049 = vpop.f32.mrf.mxu0
      %9050 = vmatprep.mubr.f32.mxu0 %v8965
      %9051 = vmatmul.mubr.f32.gmra.mxu0 %v8964
      %v9052 = vpop.f32.mrf.mxu0
      %v9053 = vadd.f32 0.0, %v9052
      %v9054 = vpop.f32.mrf.mxu0
      %9055 = vmatprep.mubr.f32.mxu0 %v8967
      %9056 = vmatmul.mubr.f32.gmra.mxu0 %v8966
      %v9057 = vpop.f32.mrf.mxu0
      %v9058 = vadd.f32 0.0, %v9057
      %v9059 = vpop.f32.mrf.mxu0
      %9060 = vmatprep.mubr.f32.mxu0 %v8969
      %9061 = vmatmul.mubr.f32.gmra.mxu0 %v8968
      %v9062 = vpop.f32.mrf.mxu0
      %v9063 = vadd.f32 0.0, %v9062
      %v9064 = vpop.f32.mrf.mxu0
      %9065 = vmatprep.mubr.f32.mxu0 %v8971
      %9066 = vmatmul.mubr.f32.gmra.mxu0 %v8970
      %v9067 = vpop.f32.mrf.mxu0
      %v9068 = vadd.f32 0.0, %v9067
      %v9069 = vpop.f32.mrf.mxu0
      %9070 = vmatprep.mubr.f32.mxu0 %v8973
      %9071 = vmatmul.mubr.f32.gmra.mxu0 %v8972
      %v9072 = vpop.f32.mrf.mxu0
      %v9073 = vadd.f32 0.0, %v9072
      %v9074 = vpop.f32.mrf.mxu0
      %9075 = vmatprep.mubr.f32.mxu0 %v8975
      %9076 = vmatmul.mubr.f32.gmra.mxu0 %v8974
      %v9077 = vpop.f32.mrf.mxu0
      %v9078 = vadd.f32 0.0, %v9077
      %v9079 = vpop.f32.mrf.mxu0
      %9080 = vdwg.mxu0
      %9081 = vxpose.xlu0.b32.start [1/16] %v9043, 128
      %9082 = vxpose.xlu0.b32.cont [2/16] %v9048, 128
      %9083 = vxpose.xlu0.b32.cont [3/16] %v9053, 128
      %9084 = vxpose.xlu0.b32.cont [4/16] %v9058, 128
      %9085 = vxpose.xlu0.b32.cont [5/16] %v9063, 128
      %9086 = vxpose.xlu0.b32.cont [6/16] %v9068, 128
      %9087 = vxpose.xlu0.b32.cont [7/16] %v9073, 128
      %9088 = vxpose.xlu0.b32.cont [8/16] %v9078, 128
      %9089 = vxpose.xlu0.b32.cont [9/16] 0.0, 128
      %9090 = vxpose.xlu0.b32.cont [10/16] 0.0, 128
      %9091 = vxpose.xlu0.b32.cont [11/16] 0.0, 128
      %9092 = vxpose.xlu0.b32.cont [12/16] 0.0, 128
      %9093 = vxpose.xlu0.b32.cont [13/16] 0.0, 128
      %9094 = vxpose.xlu0.b32.cont [14/16] 0.0, 128
      %9095 = vxpose.xlu0.b32.cont [15/16] 0.0, 128
      %9096 = vxpose.xlu0.b32.end [16/16] 0.0, 128
      %v9097 = vpop.trf.xlu0
      %v9098 = vpop.trf.xlu0
      %v9099 = vpop.trf.xlu0
      %v9100 = vpop.trf.xlu0
      %v9101 = vpop.trf.xlu0
      %v9102 = vpop.trf.xlu0
      %v9103 = vpop.trf.xlu0
      %v9104 = vpop.trf.xlu0
      %v9105 = vpop.trf.xlu0
      %v9106 = vpop.trf.xlu0
      %v9107 = vpop.trf.xlu0
      %v9108 = vpop.trf.xlu0
      %v9109 = vpop.trf.xlu0
      %v9110 = vpop.trf.xlu0
      %v9111 = vpop.trf.xlu0
      %v9112 = vpop.trf.xlu0
      %v9113 = vld [vmem:[%s8] sm:$0xff]
      %v9114 = vld [vmem:[%s8 + $0x8] sm:$0xff]
      %v9115 = vld [vmem:[%s8 + $0x10] sm:$0xff]
      %v9116 = vld [vmem:[%s8 + $0x18] sm:$0xff]
      %v9117 = vld [vmem:[%s8 + $0x20] sm:$0xff]
      %v9118 = vld [vmem:[%s8 + $0x28] sm:$0xff]
      %v9119 = vld [vmem:[%s8 + $0x30] sm:$0xff]
      %v9120 = vld [vmem:[%s8 + $0x38] sm:$0xff]
      %s9121 = scalar_lea.vmem %s8, 64
      %v9122 = vld [vmem:[%s9121] sm:$0xff]
      %v9123 = vld [vmem:[%s9121 + $0x8] sm:$0xff]
      %v9124 = vld [vmem:[%s9121 + $0x10] sm:$0xff]
      %v9125 = vld [vmem:[%s9121 + $0x18] sm:$0xff]
      %v9126 = vld [vmem:[%s9121 + $0x20] sm:$0xff]
      %v9127 = vld [vmem:[%s9121 + $0x28] sm:$0xff]
      %v9128 = vld [vmem:[%s9121 + $0x30] sm:$0xff]
      %v9129 = vld [vmem:[%s9121 + $0x38] sm:$0xff]
      %v9131 = vrot.slane %v9097, 1
      %vm9132 = vcmask 523264
      %v9133 = vsel %vm9132, %v9131, 0
      %9135 = vmatprep.subr.mxu0 0.0
      %9136 = vmatpush1.msra.mxu0 0.0
      %9137 = vmatprep.subr.mxu0 0.0
      %9138 = vmatpush1.msra.mxu0 0.0
      %9139 = vmatprep.subr.mxu0 0.0
      %9140 = vmatpush1.msra.mxu0 0.0
      %9141 = vmatprep.subr.mxu0 0.0
      %9142 = vmatpush1.msra.mxu0 0.0
      %9143 = vmatprep.subr.mxu0 0.0
      %9144 = vmatpush1.msra.mxu0 0.0
      %9145 = vmatprep.subr.mxu0 0.0
      %9146 = vmatpush1.msra.mxu0 0.0
      %9147 = vmatprep.subr.mxu0 0.0
      %9148 = vmatpush1.msra.mxu0 0.0
      %9149 = vmatprep.subr.mxu0 0.0
      %9150 = vmatpush1.msra.mxu0 0.0
      %9151 = vmatprep.subr.mxu0 0.0
      %9152 = vmatpush1.msra.mxu0 %v9129
      %9153 = vmatprep.subr.mxu0 0.0
      %9154 = vmatpush1.msra.mxu0 %v9128
      %9155 = vmatprep.subr.mxu0 0.0
      %9156 = vmatpush1.msra.mxu0 %v9127
      %9157 = vmatprep.subr.mxu0 0.0
      %9158 = vmatpush1.msra.mxu0 %v9126
      %9159 = vmatprep.subr.mxu0 0.0
      %9160 = vmatpush1.msra.mxu0 %v9125
      %9161 = vmatprep.subr.mxu0 0.0
      %9162 = vmatpush1.msra.mxu0 %v9124
      %9163 = vmatprep.subr.mxu0 0.0
      %9164 = vmatpush1.msra.mxu0 %v9123
      %9165 = vmatprep.subr.mxu0 0.0
      %9166 = vmatpush1.msra.mxu0 %v9122
      %9167 = vmatprep.subr.mxu0 0.0
      %9168 = vmatpush2.msra.mxu0 0.0
      %9169 = vmatprep.subr.mxu0 0.0
      %9170 = vmatpush2.msra.mxu0 0.0
      %9171 = vmatprep.subr.mxu0 0.0
      %9172 = vmatpush2.msra.mxu0 0.0
      %9173 = vmatprep.subr.mxu0 0.0
      %9174 = vmatpush2.msra.mxu0 0.0
      %9175 = vmatprep.subr.mxu0 0.0
      %9176 = vmatpush2.msra.mxu0 0.0
      %9177 = vmatprep.subr.mxu0 0.0
      %9178 = vmatpush2.msra.mxu0 0.0
      %9179 = vmatprep.subr.mxu0 0.0
      %9180 = vmatpush2.msra.mxu0 0.0
      %9181 = vmatprep.subr.mxu0 0.0
      %9182 = vmatpush2.msra.mxu0 0.0
      %9183 = vmatprep.subr.mxu0 0.0
      %9184 = vmatpush2.msra.mxu0 0.0
      %9185 = vmatprep.subr.mxu0 0.0
      %9186 = vmatpush2.msra.mxu0 0.0
      %9187 = vmatprep.subr.mxu0 0.0
      %9188 = vmatpush2.msra.mxu0 0.0
      %9189 = vmatprep.subr.mxu0 0.0
      %9190 = vmatpush2.msra.mxu0 0.0
      %9191 = vmatprep.subr.mxu0 0.0
      %9192 = vmatpush2.msra.mxu0 0.0
      %9193 = vmatprep.subr.mxu0 0.0
      %9194 = vmatpush2.msra.mxu0 0.0
      %9195 = vmatprep.subr.mxu0 0.0
      %9196 = vmatpush2.msra.mxu0 0.0
      %9197 = vmatprep.subr.mxu0 0.0
      %9198 = vmatpush2.msra.mxu0 0.0
      %9199 = vmatprep.mubr.f32.mxu0 0.0
      %9200 = vmatmul.mubr.f32.gmra.mxu0 %v9133
      %v9201 = vpop.f32.mrf.mxu0
      %v9202 = vadd.f32 0.0, %v9201
      %v9203 = vpop.f32.mrf.mxu0
      %9204 = vdwg.mxu0
      %v9205 = vsel %vm9132, %v9097, 0
      %9207 = vmatprep.subr.mxu0 0.0
      %9208 = vmatpush1.msra.mxu0 0.0
      %9209 = vmatprep.subr.mxu0 0.0
      %9210 = vmatpush1.msra.mxu0 0.0
      %9211 = vmatprep.subr.mxu0 0.0
      %9212 = vmatpush1.msra.mxu0 0.0
      %9213 = vmatprep.subr.mxu0 0.0
      %9214 = vmatpush1.msra.mxu0 0.0
      %9215 = vmatprep.subr.mxu0 0.0
      %9216 = vmatpush1.msra.mxu0 0.0
      %9217 = vmatprep.subr.mxu0 0.0
      %9218 = vmatpush1.msra.mxu0 0.0
      %9219 = vmatprep.subr.mxu0 0.0
      %9220 = vmatpush1.msra.mxu0 0.0
      %9221 = vmatprep.subr.mxu0 0.0
      %9222 = vmatpush1.msra.mxu0 0.0
      %9223 = vmatprep.subr.mxu0 0.0
      %9224 = vmatpush1.msra.mxu0 %v9120
      %9225 = vmatprep.subr.mxu0 0.0
      %9226 = vmatpush1.msra.mxu0 %v9119
      %9227 = vmatprep.subr.mxu0 0.0
      %9228 = vmatpush1.msra.mxu0 %v9118
      %9229 = vmatprep.subr.mxu0 0.0
      %9230 = vmatpush1.msra.mxu0 %v9117
      %9231 = vmatprep.subr.mxu0 0.0
      %9232 = vmatpush1.msra.mxu0 %v9116
      %9233 = vmatprep.subr.mxu0 0.0
      %9234 = vmatpush1.msra.mxu0 %v9115
      %9235 = vmatprep.subr.mxu0 0.0
      %9236 = vmatpush1.msra.mxu0 %v9114
      %9237 = vmatprep.subr.mxu0 0.0
      %9238 = vmatpush1.msra.mxu0 %v9113
      %9239 = vmatprep.subr.mxu0 0.0
      %9240 = vmatpush2.msra.mxu0 0.0
      %9241 = vmatprep.subr.mxu0 0.0
      %9242 = vmatpush2.msra.mxu0 0.0
      %9243 = vmatprep.subr.mxu0 0.0
      %9244 = vmatpush2.msra.mxu0 0.0
      %9245 = vmatprep.subr.mxu0 0.0
      %9246 = vmatpush2.msra.mxu0 0.0
      %9247 = vmatprep.subr.mxu0 0.0
      %9248 = vmatpush2.msra.mxu0 0.0
      %9249 = vmatprep.subr.mxu0 0.0
      %9250 = vmatpush2.msra.mxu0 0.0
      %9251 = vmatprep.subr.mxu0 0.0
      %9252 = vmatpush2.msra.mxu0 0.0
      %9253 = vmatprep.subr.mxu0 0.0
      %9254 = vmatpush2.msra.mxu0 0.0
      %9255 = vmatprep.subr.mxu0 0.0
      %9256 = vmatpush2.msra.mxu0 0.0
      %9257 = vmatprep.subr.mxu0 0.0
      %9258 = vmatpush2.msra.mxu0 0.0
      %9259 = vmatprep.subr.mxu0 0.0
      %9260 = vmatpush2.msra.mxu0 0.0
      %9261 = vmatprep.subr.mxu0 0.0
      %9262 = vmatpush2.msra.mxu0 0.0
      %9263 = vmatprep.subr.mxu0 0.0
      %9264 = vmatpush2.msra.mxu0 0.0
      %9265 = vmatprep.subr.mxu0 0.0
      %9266 = vmatpush2.msra.mxu0 0.0
      %9267 = vmatprep.subr.mxu0 0.0
      %9268 = vmatpush2.msra.mxu0 0.0
      %9269 = vmatprep.subr.mxu0 0.0
      %9270 = vmatpush2.msra.mxu0 0.0
      %9271 = vmatprep.mubr.f32.mxu0 0.0
      %9272 = vmatmul.mubr.f32.gmra.mxu0 %v9205
      %v9273 = vpop.f32.mrf.mxu0
      %v9274 = vadd.f32 %v9202, %v9273
      %v9275 = vpop.f32.mrf.mxu0
      %9276 = vdwg.mxu0
      %s9277 = scalar_lea.vmem %s8, 128
      %v9278 = vld [vmem:[%s9277] sm:$0xff]
      %v9279 = vld [vmem:[%s9277 + $0x8] sm:$0xff]
      %v9280 = vld [vmem:[%s9277 + $0x10] sm:$0xff]
      %v9281 = vld [vmem:[%s9277 + $0x18] sm:$0xff]
      %v9282 = vld [vmem:[%s9277 + $0x20] sm:$0xff]
      %v9283 = vld [vmem:[%s9277 + $0x28] sm:$0xff]
      %v9284 = vld [vmem:[%s9277 + $0x30] sm:$0xff]
      %v9285 = vld [vmem:[%s9277 + $0x38] sm:$0xff]
      %v9286 = vrot.slane %v9097, 2
      %v9287 = vsel %vm9132, %v9286, 0
      %9289 = vmatprep.subr.mxu0 0.0
      %9290 = vmatpush1.msra.mxu0 0.0
      %9291 = vmatprep.subr.mxu0 0.0
      %9292 = vmatpush1.msra.mxu0 0.0
      %9293 = vmatprep.subr.mxu0 0.0
      %9294 = vmatpush1.msra.mxu0 0.0
      %9295 = vmatprep.subr.mxu0 0.0
      %9296 = vmatpush1.msra.mxu0 0.0
      %9297 = vmatprep.subr.mxu0 0.0
      %9298 = vmatpush1.msra.mxu0 0.0
      %9299 = vmatprep.subr.mxu0 0.0
      %9300 = vmatpush1.msra.mxu0 0.0
      %9301 = vmatprep.subr.mxu0 0.0
      %9302 = vmatpush1.msra.mxu0 0.0
      %9303 = vmatprep.subr.mxu0 0.0
      %9304 = vmatpush1.msra.mxu0 0.0
      %9305 = vmatprep.subr.mxu0 0.0
      %9306 = vmatpush1.msra.mxu0 %v9285
      %9307 = vmatprep.subr.mxu0 0.0
      %9308 = vmatpush1.msra.mxu0 %v9284
      %9309 = vmatprep.subr.mxu0 0.0
      %9310 = vmatpush1.msra.mxu0 %v9283
      %9311 = vmatprep.subr.mxu0 0.0
      %9312 = vmatpush1.msra.mxu0 %v9282
      %9313 = vmatprep.subr.mxu0 0.0
      %9314 = vmatpush1.msra.mxu0 %v9281
      %9315 = vmatprep.subr.mxu0 0.0
      %9316 = vmatpush1.msra.mxu0 %v9280
      %9317 = vmatprep.subr.mxu0 0.0
      %9318 = vmatpush1.msra.mxu0 %v9279
      %9319 = vmatprep.subr.mxu0 0.0
      %9320 = vmatpush1.msra.mxu0 %v9278
      %9321 = vmatprep.subr.mxu0 0.0
      %9322 = vmatpush2.msra.mxu0 0.0
      %9323 = vmatprep.subr.mxu0 0.0
      %9324 = vmatpush2.msra.mxu0 0.0
      %9325 = vmatprep.subr.mxu0 0.0
      %9326 = vmatpush2.msra.mxu0 0.0
      %9327 = vmatprep.subr.mxu0 0.0
      %9328 = vmatpush2.msra.mxu0 0.0
      %9329 = vmatprep.subr.mxu0 0.0
      %9330 = vmatpush2.msra.mxu0 0.0
      %9331 = vmatprep.subr.mxu0 0.0
      %9332 = vmatpush2.msra.mxu0 0.0
      %9333 = vmatprep.subr.mxu0 0.0
      %9334 = vmatpush2.msra.mxu0 0.0
      %9335 = vmatprep.subr.mxu0 0.0
      %9336 = vmatpush2.msra.mxu0 0.0
      %9337 = vmatprep.subr.mxu0 0.0
      %9338 = vmatpush2.msra.mxu0 0.0
      %9339 = vmatprep.subr.mxu0 0.0
      %9340 = vmatpush2.msra.mxu0 0.0
      %9341 = vmatprep.subr.mxu0 0.0
      %9342 = vmatpush2.msra.mxu0 0.0
      %9343 = vmatprep.subr.mxu0 0.0
      %9344 = vmatpush2.msra.mxu0 0.0
      %9345 = vmatprep.subr.mxu0 0.0
      %9346 = vmatpush2.msra.mxu0 0.0
      %9347 = vmatprep.subr.mxu0 0.0
      %9348 = vmatpush2.msra.mxu0 0.0
      %9349 = vmatprep.subr.mxu0 0.0
      %9350 = vmatpush2.msra.mxu0 0.0
      %9351 = vmatprep.subr.mxu0 0.0
      %9352 = vmatpush2.msra.mxu0 0.0
      %9353 = vmatprep.mubr.f32.mxu0 0.0
      %9354 = vmatmul.mubr.f32.gmra.mxu0 %v9287
      %v9355 = vpop.f32.mrf.mxu0
      %v9356 = vadd.f32 0.0, %v9355
      %v9357 = vpop.f32.mrf.mxu0
      %9358 = vdwg.mxu0
      %v9359 = vadd.f32 %v9274, %v9356
      %s9360 = scalar_lea.vmem %s8, 192
      %v9361 = vld [vmem:[%s9360] sm:$0xff]
      %v9362 = vld [vmem:[%s9360 + $0x8] sm:$0xff]
      %v9363 = vld [vmem:[%s9360 + $0x10] sm:$0xff]
      %v9364 = vld [vmem:[%s9360 + $0x18] sm:$0xff]
      %v9365 = vld [vmem:[%s9360 + $0x20] sm:$0xff]
      %v9366 = vld [vmem:[%s9360 + $0x28] sm:$0xff]
      %v9367 = vld [vmem:[%s9360 + $0x30] sm:$0xff]
      %v9368 = vld [vmem:[%s9360 + $0x38] sm:$0xff]
      %v9369 = vrot.slane %v9097, 3
      %v9370 = vsel %vm9132, %v9369, 0
      %9372 = vmatprep.subr.mxu0 0.0
      %9373 = vmatpush1.msra.mxu0 0.0
      %9374 = vmatprep.subr.mxu0 0.0
      %9375 = vmatpush1.msra.mxu0 0.0
      %9376 = vmatprep.subr.mxu0 0.0
      %9377 = vmatpush1.msra.mxu0 0.0
      %9378 = vmatprep.subr.mxu0 0.0
      %9379 = vmatpush1.msra.mxu0 0.0
      %9380 = vmatprep.subr.mxu0 0.0
      %9381 = vmatpush1.msra.mxu0 0.0
      %9382 = vmatprep.subr.mxu0 0.0
      %9383 = vmatpush1.msra.mxu0 0.0
      %9384 = vmatprep.subr.mxu0 0.0
      %9385 = vmatpush1.msra.mxu0 0.0
      %9386 = vmatprep.subr.mxu0 0.0
      %9387 = vmatpush1.msra.mxu0 0.0
      %9388 = vmatprep.subr.mxu0 0.0
      %9389 = vmatpush1.msra.mxu0 %v9368
      %9390 = vmatprep.subr.mxu0 0.0
      %9391 = vmatpush1.msra.mxu0 %v9367
      %9392 = vmatprep.subr.mxu0 0.0
      %9393 = vmatpush1.msra.mxu0 %v9366
      %9394 = vmatprep.subr.mxu0 0.0
      %9395 = vmatpush1.msra.mxu0 %v9365
      %9396 = vmatprep.subr.mxu0 0.0
      %9397 = vmatpush1.msra.mxu0 %v9364
      %9398 = vmatprep.subr.mxu0 0.0
      %9399 = vmatpush1.msra.mxu0 %v9363
      %9400 = vmatprep.subr.mxu0 0.0
      %9401 = vmatpush1.msra.mxu0 %v9362
      %9402 = vmatprep.subr.mxu0 0.0
      %9403 = vmatpush1.msra.mxu0 %v9361
      %9404 = vmatprep.subr.mxu0 0.0
      %9405 = vmatpush2.msra.mxu0 0.0
      %9406 = vmatprep.subr.mxu0 0.0
      %9407 = vmatpush2.msra.mxu0 0.0
      %9408 = vmatprep.subr.mxu0 0.0
      %9409 = vmatpush2.msra.mxu0 0.0
      %9410 = vmatprep.subr.mxu0 0.0
      %9411 = vmatpush2.msra.mxu0 0.0
      %9412 = vmatprep.subr.mxu0 0.0
      %9413 = vmatpush2.msra.mxu0 0.0
      %9414 = vmatprep.subr.mxu0 0.0
      %9415 = vmatpush2.msra.mxu0 0.0
      %9416 = vmatprep.subr.mxu0 0.0
      %9417 = vmatpush2.msra.mxu0 0.0
      %9418 = vmatprep.subr.mxu0 0.0
      %9419 = vmatpush2.msra.mxu0 0.0
      %9420 = vmatprep.subr.mxu0 0.0
      %9421 = vmatpush2.msra.mxu0 0.0
      %9422 = vmatprep.subr.mxu0 0.0
      %9423 = vmatpush2.msra.mxu0 0.0
      %9424 = vmatprep.subr.mxu0 0.0
      %9425 = vmatpush2.msra.mxu0 0.0
      %9426 = vmatprep.subr.mxu0 0.0
      %9427 = vmatpush2.msra.mxu0 0.0
      %9428 = vmatprep.subr.mxu0 0.0
      %9429 = vmatpush2.msra.mxu0 0.0
      %9430 = vmatprep.subr.mxu0 0.0
      %9431 = vmatpush2.msra.mxu0 0.0
      %9432 = vmatprep.subr.mxu0 0.0
      %9433 = vmatpush2.msra.mxu0 0.0
      %9434 = vmatprep.subr.mxu0 0.0
      %9435 = vmatpush2.msra.mxu0 0.0
      %9436 = vmatprep.mubr.f32.mxu0 0.0
      %9437 = vmatmul.mubr.f32.gmra.mxu0 %v9370
      %v9438 = vpop.f32.mrf.mxu0
      %v9439 = vadd.f32 0.0, %v9438
      %v9440 = vpop.f32.mrf.mxu0
      %9441 = vdwg.mxu0
      %v9442 = vadd.f32 %v9359, %v9439
      %s9443 = scalar_lea.vmem %s8, 256
      %v9444 = vld [vmem:[%s9443] sm:$0xff]
      %v9445 = vld [vmem:[%s9443 + $0x8] sm:$0xff]
      %v9446 = vld [vmem:[%s9443 + $0x10] sm:$0xff]
      %v9447 = vld [vmem:[%s9443 + $0x18] sm:$0xff]
      %v9448 = vld [vmem:[%s9443 + $0x20] sm:$0xff]
      %v9449 = vld [vmem:[%s9443 + $0x28] sm:$0xff]
      %v9450 = vld [vmem:[%s9443 + $0x30] sm:$0xff]
      %v9451 = vld [vmem:[%s9443 + $0x38] sm:$0xff]
      %v9452 = vrot.slane %v9097, 4
      %v9453 = vsel %vm9132, %v9452, 0
      %9455 = vmatprep.subr.mxu0 0.0
      %9456 = vmatpush1.msra.mxu0 0.0
      %9457 = vmatprep.subr.mxu0 0.0
      %9458 = vmatpush1.msra.mxu0 0.0
      %9459 = vmatprep.subr.mxu0 0.0
      %9460 = vmatpush1.msra.mxu0 0.0
      %9461 = vmatprep.subr.mxu0 0.0
      %9462 = vmatpush1.msra.mxu0 0.0
      %9463 = vmatprep.subr.mxu0 0.0
      %9464 = vmatpush1.msra.mxu0 0.0
      %9465 = vmatprep.subr.mxu0 0.0
      %9466 = vmatpush1.msra.mxu0 0.0
      %9467 = vmatprep.subr.mxu0 0.0
      %9468 = vmatpush1.msra.mxu0 0.0
      %9469 = vmatprep.subr.mxu0 0.0
      %9470 = vmatpush1.msra.mxu0 0.0
      %9471 = vmatprep.subr.mxu0 0.0
      %9472 = vmatpush1.msra.mxu0 %v9451
      %9473 = vmatprep.subr.mxu0 0.0
      %9474 = vmatpush1.msra.mxu0 %v9450
      %9475 = vmatprep.subr.mxu0 0.0
      %9476 = vmatpush1.msra.mxu0 %v9449
      %9477 = vmatprep.subr.mxu0 0.0
      %9478 = vmatpush1.msra.mxu0 %v9448
      %9479 = vmatprep.subr.mxu0 0.0
      %9480 = vmatpush1.msra.mxu0 %v9447
      %9481 = vmatprep.subr.mxu0 0.0
      %9482 = vmatpush1.msra.mxu0 %v9446
      %9483 = vmatprep.subr.mxu0 0.0
      %9484 = vmatpush1.msra.mxu0 %v9445
      %9485 = vmatprep.subr.mxu0 0.0
      %9486 = vmatpush1.msra.mxu0 %v9444
      %9487 = vmatprep.subr.mxu0 0.0
      %9488 = vmatpush2.msra.mxu0 0.0
      %9489 = vmatprep.subr.mxu0 0.0
      %9490 = vmatpush2.msra.mxu0 0.0
      %9491 = vmatprep.subr.mxu0 0.0
      %9492 = vmatpush2.msra.mxu0 0.0
      %9493 = vmatprep.subr.mxu0 0.0
      %9494 = vmatpush2.msra.mxu0 0.0
      %9495 = vmatprep.subr.mxu0 0.0
      %9496 = vmatpush2.msra.mxu0 0.0
      %9497 = vmatprep.subr.mxu0 0.0
      %9498 = vmatpush2.msra.mxu0 0.0
      %9499 = vmatprep.subr.mxu0 0.0
      %9500 = vmatpush2.msra.mxu0 0.0
      %9501 = vmatprep.subr.mxu0 0.0
      %9502 = vmatpush2.msra.mxu0 0.0
      %9503 = vmatprep.subr.mxu0 0.0
      %9504 = vmatpush2.msra.mxu0 0.0
      %9505 = vmatprep.subr.mxu0 0.0
      %9506 = vmatpush2.msra.mxu0 0.0
      %9507 = vmatprep.subr.mxu0 0.0
      %9508 = vmatpush2.msra.mxu0 0.0
      %9509 = vmatprep.subr.mxu0 0.0
      %9510 = vmatpush2.msra.mxu0 0.0
      %9511 = vmatprep.subr.mxu0 0.0
      %9512 = vmatpush2.msra.mxu0 0.0
      %9513 = vmatprep.subr.mxu0 0.0
      %9514 = vmatpush2.msra.mxu0 0.0
      %9515 = vmatprep.subr.mxu0 0.0
      %9516 = vmatpush2.msra.mxu0 0.0
      %9517 = vmatprep.subr.mxu0 0.0
      %9518 = vmatpush2.msra.mxu0 0.0
      %9519 = vmatprep.mubr.f32.mxu0 0.0
      %9520 = vmatmul.mubr.f32.gmra.mxu0 %v9453
      %v9521 = vpop.f32.mrf.mxu0
      %v9522 = vadd.f32 0.0, %v9521
      %v9523 = vpop.f32.mrf.mxu0
      %9524 = vdwg.mxu0
      %v9525 = vadd.f32 %v9442, %v9522
      %s9526 = scalar_lea.vmem %s8, 320
      %v9527 = vld [vmem:[%s9526] sm:$0xff]
      %v9528 = vld [vmem:[%s9526 + $0x8] sm:$0xff]
      %v9529 = vld [vmem:[%s9526 + $0x10] sm:$0xff]
      %v9530 = vld [vmem:[%s9526 + $0x18] sm:$0xff]
      %v9531 = vld [vmem:[%s9526 + $0x20] sm:$0xff]
      %v9532 = vld [vmem:[%s9526 + $0x28] sm:$0xff]
      %v9533 = vld [vmem:[%s9526 + $0x30] sm:$0xff]
      %v9534 = vld [vmem:[%s9526 + $0x38] sm:$0xff]
      %v9535 = vrot.slane %v9097, 5
      %v9536 = vsel %vm9132, %v9535, 0
      %9538 = vmatprep.subr.mxu0 0.0
      %9539 = vmatpush1.msra.mxu0 0.0
      %9540 = vmatprep.subr.mxu0 0.0
      %9541 = vmatpush1.msra.mxu0 0.0
      %9542 = vmatprep.subr.mxu0 0.0
      %9543 = vmatpush1.msra.mxu0 0.0
      %9544 = vmatprep.subr.mxu0 0.0
      %9545 = vmatpush1.msra.mxu0 0.0
      %9546 = vmatprep.subr.mxu0 0.0
      %9547 = vmatpush1.msra.mxu0 0.0
      %9548 = vmatprep.subr.mxu0 0.0
      %9549 = vmatpush1.msra.mxu0 0.0
      %9550 = vmatprep.subr.mxu0 0.0
      %9551 = vmatpush1.msra.mxu0 0.0
      %9552 = vmatprep.subr.mxu0 0.0
      %9553 = vmatpush1.msra.mxu0 0.0
      %9554 = vmatprep.subr.mxu0 0.0
      %9555 = vmatpush1.msra.mxu0 %v9534
      %9556 = vmatprep.subr.mxu0 0.0
      %9557 = vmatpush1.msra.mxu0 %v9533
      %9558 = vmatprep.subr.mxu0 0.0
      %9559 = vmatpush1.msra.mxu0 %v9532
      %9560 = vmatprep.subr.mxu0 0.0
      %9561 = vmatpush1.msra.mxu0 %v9531
      %9562 = vmatprep.subr.mxu0 0.0
      %9563 = vmatpush1.msra.mxu0 %v9530
      %9564 = vmatprep.subr.mxu0 0.0
      %9565 = vmatpush1.msra.mxu0 %v9529
      %9566 = vmatprep.subr.mxu0 0.0
      %9567 = vmatpush1.msra.mxu0 %v9528
      %9568 = vmatprep.subr.mxu0 0.0
      %9569 = vmatpush1.msra.mxu0 %v9527
      %9570 = vmatprep.subr.mxu0 0.0
      %9571 = vmatpush2.msra.mxu0 0.0
      %9572 = vmatprep.subr.mxu0 0.0
      %9573 = vmatpush2.msra.mxu0 0.0
      %9574 = vmatprep.subr.mxu0 0.0
      %9575 = vmatpush2.msra.mxu0 0.0
      %9576 = vmatprep.subr.mxu0 0.0
      %9577 = vmatpush2.msra.mxu0 0.0
      %9578 = vmatprep.subr.mxu0 0.0
      %9579 = vmatpush2.msra.mxu0 0.0
      %9580 = vmatprep.subr.mxu0 0.0
      %9581 = vmatpush2.msra.mxu0 0.0
      %9582 = vmatprep.subr.mxu0 0.0
      %9583 = vmatpush2.msra.mxu0 0.0
      %9584 = vmatprep.subr.mxu0 0.0
      %9585 = vmatpush2.msra.mxu0 0.0
      %9586 = vmatprep.subr.mxu0 0.0
      %9587 = vmatpush2.msra.mxu0 0.0
      %9588 = vmatprep.subr.mxu0 0.0
      %9589 = vmatpush2.msra.mxu0 0.0
      %9590 = vmatprep.subr.mxu0 0.0
      %9591 = vmatpush2.msra.mxu0 0.0
      %9592 = vmatprep.subr.mxu0 0.0
      %9593 = vmatpush2.msra.mxu0 0.0
      %9594 = vmatprep.subr.mxu0 0.0
      %9595 = vmatpush2.msra.mxu0 0.0
      %9596 = vmatprep.subr.mxu0 0.0
      %9597 = vmatpush2.msra.mxu0 0.0
      %9598 = vmatprep.subr.mxu0 0.0
      %9599 = vmatpush2.msra.mxu0 0.0
      %9600 = vmatprep.subr.mxu0 0.0
      %9601 = vmatpush2.msra.mxu0 0.0
      %9602 = vmatprep.mubr.f32.mxu0 0.0
      %9603 = vmatmul.mubr.f32.gmra.mxu0 %v9536
      %v9604 = vpop.f32.mrf.mxu0
      %v9605 = vadd.f32 0.0, %v9604
      %v9606 = vpop.f32.mrf.mxu0
      %9607 = vdwg.mxu0
      %v9608 = vadd.f32 %v9525, %v9605
      %s9609 = scalar_lea.vmem %s8, 384
      %v9610 = vld [vmem:[%s9609] sm:$0xff]
      %v9611 = vld [vmem:[%s9609 + $0x8] sm:$0xff]
      %v9612 = vld [vmem:[%s9609 + $0x10] sm:$0xff]
      %v9613 = vld [vmem:[%s9609 + $0x18] sm:$0xff]
      %v9614 = vld [vmem:[%s9609 + $0x20] sm:$0xff]
      %v9615 = vld [vmem:[%s9609 + $0x28] sm:$0xff]
      %v9616 = vld [vmem:[%s9609 + $0x30] sm:$0xff]
      %v9617 = vld [vmem:[%s9609 + $0x38] sm:$0xff]
      %v9618 = vrot.slane %v9097, 6
      %v9619 = vsel %vm9132, %v9618, 0
      %9621 = vmatprep.subr.mxu0 0.0
      %9622 = vmatpush1.msra.mxu0 0.0
      %9623 = vmatprep.subr.mxu0 0.0
      %9624 = vmatpush1.msra.mxu0 0.0
      %9625 = vmatprep.subr.mxu0 0.0
      %9626 = vmatpush1.msra.mxu0 0.0
      %9627 = vmatprep.subr.mxu0 0.0
      %9628 = vmatpush1.msra.mxu0 0.0
      %9629 = vmatprep.subr.mxu0 0.0
      %9630 = vmatpush1.msra.mxu0 0.0
      %9631 = vmatprep.subr.mxu0 0.0
      %9632 = vmatpush1.msra.mxu0 0.0
      %9633 = vmatprep.subr.mxu0 0.0
      %9634 = vmatpush1.msra.mxu0 0.0
      %9635 = vmatprep.subr.mxu0 0.0
      %9636 = vmatpush1.msra.mxu0 0.0
      %9637 = vmatprep.subr.mxu0 0.0
      %9638 = vmatpush1.msra.mxu0 %v9617
      %9639 = vmatprep.subr.mxu0 0.0
      %9640 = vmatpush1.msra.mxu0 %v9616
      %9641 = vmatprep.subr.mxu0 0.0
      %9642 = vmatpush1.msra.mxu0 %v9615
      %9643 = vmatprep.subr.mxu0 0.0
      %9644 = vmatpush1.msra.mxu0 %v9614
      %9645 = vmatprep.subr.mxu0 0.0
      %9646 = vmatpush1.msra.mxu0 %v9613
      %9647 = vmatprep.subr.mxu0 0.0
      %9648 = vmatpush1.msra.mxu0 %v9612
      %9649 = vmatprep.subr.mxu0 0.0
      %9650 = vmatpush1.msra.mxu0 %v9611
      %9651 = vmatprep.subr.mxu0 0.0
      %9652 = vmatpush1.msra.mxu0 %v9610
      %9653 = vmatprep.subr.mxu0 0.0
      %9654 = vmatpush2.msra.mxu0 0.0
      %9655 = vmatprep.subr.mxu0 0.0
      %9656 = vmatpush2.msra.mxu0 0.0
      %9657 = vmatprep.subr.mxu0 0.0
      %9658 = vmatpush2.msra.mxu0 0.0
      %9659 = vmatprep.subr.mxu0 0.0
      %9660 = vmatpush2.msra.mxu0 0.0
      %9661 = vmatprep.subr.mxu0 0.0
      %9662 = vmatpush2.msra.mxu0 0.0
      %9663 = vmatprep.subr.mxu0 0.0
      %9664 = vmatpush2.msra.mxu0 0.0
      %9665 = vmatprep.subr.mxu0 0.0
      %9666 = vmatpush2.msra.mxu0 0.0
      %9667 = vmatprep.subr.mxu0 0.0
      %9668 = vmatpush2.msra.mxu0 0.0
      %9669 = vmatprep.subr.mxu0 0.0
      %9670 = vmatpush2.msra.mxu0 0.0
      %9671 = vmatprep.subr.mxu0 0.0
      %9672 = vmatpush2.msra.mxu0 0.0
      %9673 = vmatprep.subr.mxu0 0.0
      %9674 = vmatpush2.msra.mxu0 0.0
      %9675 = vmatprep.subr.mxu0 0.0
      %9676 = vmatpush2.msra.mxu0 0.0
      %9677 = vmatprep.subr.mxu0 0.0
      %9678 = vmatpush2.msra.mxu0 0.0
      %9679 = vmatprep.subr.mxu0 0.0
      %9680 = vmatpush2.msra.mxu0 0.0
      %9681 = vmatprep.subr.mxu0 0.0
      %9682 = vmatpush2.msra.mxu0 0.0
      %9683 = vmatprep.subr.mxu0 0.0
      %9684 = vmatpush2.msra.mxu0 0.0
      %9685 = vmatprep.mubr.f32.mxu0 0.0
      %9686 = vmatmul.mubr.f32.gmra.mxu0 %v9619
      %v9687 = vpop.f32.mrf.mxu0
      %v9688 = vadd.f32 0.0, %v9687
      %v9689 = vpop.f32.mrf.mxu0
      %9690 = vdwg.mxu0
      %v9691 = vadd.f32 %v9608, %v9688
      %s9692 = scalar_lea.vmem %s8, 448
      %v9693 = vld [vmem:[%s9692] sm:$0xff]
      %v9694 = vld [vmem:[%s9692 + $0x8] sm:$0xff]
      %v9695 = vld [vmem:[%s9692 + $0x10] sm:$0xff]
      %v9696 = vld [vmem:[%s9692 + $0x18] sm:$0xff]
      %v9697 = vld [vmem:[%s9692 + $0x20] sm:$0xff]
      %v9698 = vld [vmem:[%s9692 + $0x28] sm:$0xff]
      %v9699 = vld [vmem:[%s9692 + $0x30] sm:$0xff]
      %v9700 = vld [vmem:[%s9692 + $0x38] sm:$0xff]
      %v9701 = vrot.slane %v9097, 7
      %v9702 = vsel %vm9132, %v9701, 0
      %9704 = vmatprep.subr.mxu0 0.0
      %9705 = vmatpush1.msra.mxu0 0.0
      %9706 = vmatprep.subr.mxu0 0.0
      %9707 = vmatpush1.msra.mxu0 0.0
      %9708 = vmatprep.subr.mxu0 0.0
      %9709 = vmatpush1.msra.mxu0 0.0
      %9710 = vmatprep.subr.mxu0 0.0
      %9711 = vmatpush1.msra.mxu0 0.0
      %9712 = vmatprep.subr.mxu0 0.0
      %9713 = vmatpush1.msra.mxu0 0.0
      %9714 = vmatprep.subr.mxu0 0.0
      %9715 = vmatpush1.msra.mxu0 0.0
      %9716 = vmatprep.subr.mxu0 0.0
      %9717 = vmatpush1.msra.mxu0 0.0
      %9718 = vmatprep.subr.mxu0 0.0
      %9719 = vmatpush1.msra.mxu0 0.0
      %9720 = vmatprep.subr.mxu0 0.0
      %9721 = vmatpush1.msra.mxu0 %v9700
      %9722 = vmatprep.subr.mxu0 0.0
      %9723 = vmatpush1.msra.mxu0 %v9699
      %9724 = vmatprep.subr.mxu0 0.0
      %9725 = vmatpush1.msra.mxu0 %v9698
      %9726 = vmatprep.subr.mxu0 0.0
      %9727 = vmatpush1.msra.mxu0 %v9697
      %9728 = vmatprep.subr.mxu0 0.0
      %9729 = vmatpush1.msra.mxu0 %v9696
      %9730 = vmatprep.subr.mxu0 0.0
      %9731 = vmatpush1.msra.mxu0 %v9695
      %9732 = vmatprep.subr.mxu0 0.0
      %9733 = vmatpush1.msra.mxu0 %v9694
      %9734 = vmatprep.subr.mxu0 0.0
      %9735 = vmatpush1.msra.mxu0 %v9693
      %9736 = vmatprep.subr.mxu0 0.0
      %9737 = vmatpush2.msra.mxu0 0.0
      %9738 = vmatprep.subr.mxu0 0.0
      %9739 = vmatpush2.msra.mxu0 0.0
      %9740 = vmatprep.subr.mxu0 0.0
      %9741 = vmatpush2.msra.mxu0 0.0
      %9742 = vmatprep.subr.mxu0 0.0
      %9743 = vmatpush2.msra.mxu0 0.0
      %9744 = vmatprep.subr.mxu0 0.0
      %9745 = vmatpush2.msra.mxu0 0.0
      %9746 = vmatprep.subr.mxu0 0.0
      %9747 = vmatpush2.msra.mxu0 0.0
      %9748 = vmatprep.subr.mxu0 0.0
      %9749 = vmatpush2.msra.mxu0 0.0
      %9750 = vmatprep.subr.mxu0 0.0
      %9751 = vmatpush2.msra.mxu0 0.0
      %9752 = vmatprep.subr.mxu0 0.0
      %9753 = vmatpush2.msra.mxu0 0.0
      %9754 = vmatprep.subr.mxu0 0.0
      %9755 = vmatpush2.msra.mxu0 0.0
      %9756 = vmatprep.subr.mxu0 0.0
      %9757 = vmatpush2.msra.mxu0 0.0
      %9758 = vmatprep.subr.mxu0 0.0
      %9759 = vmatpush2.msra.mxu0 0.0
      %9760 = vmatprep.subr.mxu0 0.0
      %9761 = vmatpush2.msra.mxu0 0.0
      %9762 = vmatprep.subr.mxu0 0.0
      %9763 = vmatpush2.msra.mxu0 0.0
      %9764 = vmatprep.subr.mxu0 0.0
      %9765 = vmatpush2.msra.mxu0 0.0
      %9766 = vmatprep.subr.mxu0 0.0
      %9767 = vmatpush2.msra.mxu0 0.0
      %9768 = vmatprep.mubr.f32.mxu0 0.0
      %9769 = vmatmul.mubr.f32.gmra.mxu0 %v9702
      %v9770 = vpop.f32.mrf.mxu0
      %v9771 = vadd.f32 0.0, %v9770
      %v9772 = vpop.f32.mrf.mxu0
      %9773 = vdwg.mxu0
      %v9774 = vadd.f32 %v9691, %v9771
      %s9775 = scalar_lea.vmem %s8, 512
      %v9776 = vld [vmem:[%s9775] sm:$0xff]
      %v9777 = vld [vmem:[%s9775 + $0x8] sm:$0xff]
      %v9778 = vld [vmem:[%s9775 + $0x10] sm:$0xff]
      %v9779 = vld [vmem:[%s9775 + $0x18] sm:$0xff]
      %v9780 = vld [vmem:[%s9775 + $0x20] sm:$0xff]
      %v9781 = vld [vmem:[%s9775 + $0x28] sm:$0xff]
      %v9782 = vld [vmem:[%s9775 + $0x30] sm:$0xff]
      %v9783 = vld [vmem:[%s9775 + $0x38] sm:$0xff]
      %v9785 = vsel %vm9132, %v9098, 0
      %9787 = vmatprep.subr.mxu0 0.0
      %9788 = vmatpush1.msra.mxu0 0.0
      %9789 = vmatprep.subr.mxu0 0.0
      %9790 = vmatpush1.msra.mxu0 0.0
      %9791 = vmatprep.subr.mxu0 0.0
      %9792 = vmatpush1.msra.mxu0 0.0
      %9793 = vmatprep.subr.mxu0 0.0
      %9794 = vmatpush1.msra.mxu0 0.0
      %9795 = vmatprep.subr.mxu0 0.0
      %9796 = vmatpush1.msra.mxu0 0.0
      %9797 = vmatprep.subr.mxu0 0.0
      %9798 = vmatpush1.msra.mxu0 0.0
      %9799 = vmatprep.subr.mxu0 0.0
      %9800 = vmatpush1.msra.mxu0 0.0
      %9801 = vmatprep.subr.mxu0 0.0
      %9802 = vmatpush1.msra.mxu0 0.0
      %9803 = vmatprep.subr.mxu0 0.0
      %9804 = vmatpush1.msra.mxu0 %v9783
      %9805 = vmatprep.subr.mxu0 0.0
      %9806 = vmatpush1.msra.mxu0 %v9782
      %9807 = vmatprep.subr.mxu0 0.0
      %9808 = vmatpush1.msra.mxu0 %v9781
      %9809 = vmatprep.subr.mxu0 0.0
      %9810 = vmatpush1.msra.mxu0 %v9780
      %9811 = vmatprep.subr.mxu0 0.0
      %9812 = vmatpush1.msra.mxu0 %v9779
      %9813 = vmatprep.subr.mxu0 0.0
      %9814 = vmatpush1.msra.mxu0 %v9778
      %9815 = vmatprep.subr.mxu0 0.0
      %9816 = vmatpush1.msra.mxu0 %v9777
      %9817 = vmatprep.subr.mxu0 0.0
      %9818 = vmatpush1.msra.mxu0 %v9776
      %9819 = vmatprep.subr.mxu0 0.0
      %9820 = vmatpush2.msra.mxu0 0.0
      %9821 = vmatprep.subr.mxu0 0.0
      %9822 = vmatpush2.msra.mxu0 0.0
      %9823 = vmatprep.subr.mxu0 0.0
      %9824 = vmatpush2.msra.mxu0 0.0
      %9825 = vmatprep.subr.mxu0 0.0
      %9826 = vmatpush2.msra.mxu0 0.0
      %9827 = vmatprep.subr.mxu0 0.0
      %9828 = vmatpush2.msra.mxu0 0.0
      %9829 = vmatprep.subr.mxu0 0.0
      %9830 = vmatpush2.msra.mxu0 0.0
      %9831 = vmatprep.subr.mxu0 0.0
      %9832 = vmatpush2.msra.mxu0 0.0
      %9833 = vmatprep.subr.mxu0 0.0
      %9834 = vmatpush2.msra.mxu0 0.0
      %9835 = vmatprep.subr.mxu0 0.0
      %9836 = vmatpush2.msra.mxu0 0.0
      %9837 = vmatprep.subr.mxu0 0.0
      %9838 = vmatpush2.msra.mxu0 0.0
      %9839 = vmatprep.subr.mxu0 0.0
      %9840 = vmatpush2.msra.mxu0 0.0
      %9841 = vmatprep.subr.mxu0 0.0
      %9842 = vmatpush2.msra.mxu0 0.0
      %9843 = vmatprep.subr.mxu0 0.0
      %9844 = vmatpush2.msra.mxu0 0.0
      %9845 = vmatprep.subr.mxu0 0.0
      %9846 = vmatpush2.msra.mxu0 0.0
      %9847 = vmatprep.subr.mxu0 0.0
      %9848 = vmatpush2.msra.mxu0 0.0
      %9849 = vmatprep.subr.mxu0 0.0
      %9850 = vmatpush2.msra.mxu0 0.0
      %9851 = vmatprep.mubr.f32.mxu0 0.0
      %9852 = vmatmul.mubr.f32.gmra.mxu0 %v9785
      %v9853 = vpop.f32.mrf.mxu0
      %v9854 = vadd.f32 0.0, %v9853
      %v9855 = vpop.f32.mrf.mxu0
      %9856 = vdwg.mxu0
      %v9857 = vadd.f32 %v9774, %v9854
      %s9858 = scalar_lea.vmem %s8, 576
      %v9859 = vld [vmem:[%s9858] sm:$0xff]
      %v9860 = vld [vmem:[%s9858 + $0x8] sm:$0xff]
      %v9861 = vld [vmem:[%s9858 + $0x10] sm:$0xff]
      %v9862 = vld [vmem:[%s9858 + $0x18] sm:$0xff]
      %v9863 = vld [vmem:[%s9858 + $0x20] sm:$0xff]
      %v9864 = vld [vmem:[%s9858 + $0x28] sm:$0xff]
      %v9865 = vld [vmem:[%s9858 + $0x30] sm:$0xff]
      %v9866 = vld [vmem:[%s9858 + $0x38] sm:$0xff]
      %v9867 = vrot.slane %v9098, 1
      %v9868 = vsel %vm9132, %v9867, 0
      %9870 = vmatprep.subr.mxu0 0.0
      %9871 = vmatpush1.msra.mxu0 0.0
      %9872 = vmatprep.subr.mxu0 0.0
      %9873 = vmatpush1.msra.mxu0 0.0
      %9874 = vmatprep.subr.mxu0 0.0
      %9875 = vmatpush1.msra.mxu0 0.0
      %9876 = vmatprep.subr.mxu0 0.0
      %9877 = vmatpush1.msra.mxu0 0.0
      %9878 = vmatprep.subr.mxu0 0.0
      %9879 = vmatpush1.msra.mxu0 0.0
      %9880 = vmatprep.subr.mxu0 0.0
      %9881 = vmatpush1.msra.mxu0 0.0
      %9882 = vmatprep.subr.mxu0 0.0
      %9883 = vmatpush1.msra.mxu0 0.0
      %9884 = vmatprep.subr.mxu0 0.0
      %9885 = vmatpush1.msra.mxu0 0.0
      %9886 = vmatprep.subr.mxu0 0.0
      %9887 = vmatpush1.msra.mxu0 %v9866
      %9888 = vmatprep.subr.mxu0 0.0
      %9889 = vmatpush1.msra.mxu0 %v9865
      %9890 = vmatprep.subr.mxu0 0.0
      %9891 = vmatpush1.msra.mxu0 %v9864
      %9892 = vmatprep.subr.mxu0 0.0
      %9893 = vmatpush1.msra.mxu0 %v9863
      %9894 = vmatprep.subr.mxu0 0.0
      %9895 = vmatpush1.msra.mxu0 %v9862
      %9896 = vmatprep.subr.mxu0 0.0
      %9897 = vmatpush1.msra.mxu0 %v9861
      %9898 = vmatprep.subr.mxu0 0.0
      %9899 = vmatpush1.msra.mxu0 %v9860
      %9900 = vmatprep.subr.mxu0 0.0
      %9901 = vmatpush1.msra.mxu0 %v9859
      %9902 = vmatprep.subr.mxu0 0.0
      %9903 = vmatpush2.msra.mxu0 0.0
      %9904 = vmatprep.subr.mxu0 0.0
      %9905 = vmatpush2.msra.mxu0 0.0
      %9906 = vmatprep.subr.mxu0 0.0
      %9907 = vmatpush2.msra.mxu0 0.0
      %9908 = vmatprep.subr.mxu0 0.0
      %9909 = vmatpush2.msra.mxu0 0.0
      %9910 = vmatprep.subr.mxu0 0.0
      %9911 = vmatpush2.msra.mxu0 0.0
      %9912 = vmatprep.subr.mxu0 0.0
      %9913 = vmatpush2.msra.mxu0 0.0
      %9914 = vmatprep.subr.mxu0 0.0
      %9915 = vmatpush2.msra.mxu0 0.0
      %9916 = vmatprep.subr.mxu0 0.0
      %9917 = vmatpush2.msra.mxu0 0.0
      %9918 = vmatprep.subr.mxu0 0.0
      %9919 = vmatpush2.msra.mxu0 0.0
      %9920 = vmatprep.subr.mxu0 0.0
      %9921 = vmatpush2.msra.mxu0 0.0
      %9922 = vmatprep.subr.mxu0 0.0
      %9923 = vmatpush2.msra.mxu0 0.0
      %9924 = vmatprep.subr.mxu0 0.0
      %9925 = vmatpush2.msra.mxu0 0.0
      %9926 = vmatprep.subr.mxu0 0.0
      %9927 = vmatpush2.msra.mxu0 0.0
      %9928 = vmatprep.subr.mxu0 0.0
      %9929 = vmatpush2.msra.mxu0 0.0
      %9930 = vmatprep.subr.mxu0 0.0
      %9931 = vmatpush2.msra.mxu0 0.0
      %9932 = vmatprep.subr.mxu0 0.0
      %9933 = vmatpush2.msra.mxu0 0.0
      %9934 = vmatprep.mubr.f32.mxu0 0.0
      %9935 = vmatmul.mubr.f32.gmra.mxu0 %v9868
      %v9936 = vpop.f32.mrf.mxu0
      %v9937 = vadd.f32 0.0, %v9936
      %v9938 = vpop.f32.mrf.mxu0
      %9939 = vdwg.mxu0
      %v9940 = vadd.f32 %v9857, %v9937
      %s9941 = scalar_lea.vmem %s8, 640
      %v9942 = vld [vmem:[%s9941] sm:$0xff]
      %v9943 = vld [vmem:[%s9941 + $0x8] sm:$0xff]
      %v9944 = vld [vmem:[%s9941 + $0x10] sm:$0xff]
      %v9945 = vld [vmem:[%s9941 + $0x18] sm:$0xff]
      %v9946 = vld [vmem:[%s9941 + $0x20] sm:$0xff]
      %v9947 = vld [vmem:[%s9941 + $0x28] sm:$0xff]
      %v9948 = vld [vmem:[%s9941 + $0x30] sm:$0xff]
      %v9949 = vld [vmem:[%s9941 + $0x38] sm:$0xff]
      %v9950 = vrot.slane %v9098, 2
      %v9951 = vsel %vm9132, %v9950, 0
      %9953 = vmatprep.subr.mxu0 0.0
      %9954 = vmatpush1.msra.mxu0 0.0
      %9955 = vmatprep.subr.mxu0 0.0
      %9956 = vmatpush1.msra.mxu0 0.0
      %9957 = vmatprep.subr.mxu0 0.0
      %9958 = vmatpush1.msra.mxu0 0.0
      %9959 = vmatprep.subr.mxu0 0.0
      %9960 = vmatpush1.msra.mxu0 0.0
      %9961 = vmatprep.subr.mxu0 0.0
      %9962 = vmatpush1.msra.mxu0 0.0
      %9963 = vmatprep.subr.mxu0 0.0
      %9964 = vmatpush1.msra.mxu0 0.0
      %9965 = vmatprep.subr.mxu0 0.0
      %9966 = vmatpush1.msra.mxu0 0.0
      %9967 = vmatprep.subr.mxu0 0.0
      %9968 = vmatpush1.msra.mxu0 0.0
      %9969 = vmatprep.subr.mxu0 0.0
      %9970 = vmatpush1.msra.mxu0 %v9949
      %9971 = vmatprep.subr.mxu0 0.0
      %9972 = vmatpush1.msra.mxu0 %v9948
      %9973 = vmatprep.subr.mxu0 0.0
      %9974 = vmatpush1.msra.mxu0 %v9947
      %9975 = vmatprep.subr.mxu0 0.0
      %9976 = vmatpush1.msra.mxu0 %v9946
      %9977 = vmatprep.subr.mxu0 0.0
      %9978 = vmatpush1.msra.mxu0 %v9945
      %9979 = vmatprep.subr.mxu0 0.0
      %9980 = vmatpush1.msra.mxu0 %v9944
      %9981 = vmatprep.subr.mxu0 0.0
      %9982 = vmatpush1.msra.mxu0 %v9943
      %9983 = vmatprep.subr.mxu0 0.0
      %9984 = vmatpush1.msra.mxu0 %v9942
      %9985 = vmatprep.subr.mxu0 0.0
      %9986 = vmatpush2.msra.mxu0 0.0
      %9987 = vmatprep.subr.mxu0 0.0
      %9988 = vmatpush2.msra.mxu0 0.0
      %9989 = vmatprep.subr.mxu0 0.0
      %9990 = vmatpush2.msra.mxu0 0.0
      %9991 = vmatprep.subr.mxu0 0.0
      %9992 = vmatpush2.msra.mxu0 0.0
      %9993 = vmatprep.subr.mxu0 0.0
      %9994 = vmatpush2.msra.mxu0 0.0
      %9995 = vmatprep.subr.mxu0 0.0
      %9996 = vmatpush2.msra.mxu0 0.0
      %9997 = vmatprep.subr.mxu0 0.0
      %9998 = vmatpush2.msra.mxu0 0.0
      %9999 = vmatprep.subr.mxu0 0.0
      %10000 = vmatpush2.msra.mxu0 0.0
      %10001 = vmatprep.subr.mxu0 0.0
      %10002 = vmatpush2.msra.mxu0 0.0
      %10003 = vmatprep.subr.mxu0 0.0
      %10004 = vmatpush2.msra.mxu0 0.0
      %10005 = vmatprep.subr.mxu0 0.0
      %10006 = vmatpush2.msra.mxu0 0.0
      %10007 = vmatprep.subr.mxu0 0.0
      %10008 = vmatpush2.msra.mxu0 0.0
      %10009 = vmatprep.subr.mxu0 0.0
      %10010 = vmatpush2.msra.mxu0 0.0
      %10011 = vmatprep.subr.mxu0 0.0
      %10012 = vmatpush2.msra.mxu0 0.0
      %10013 = vmatprep.subr.mxu0 0.0
      %10014 = vmatpush2.msra.mxu0 0.0
      %10015 = vmatprep.subr.mxu0 0.0
      %10016 = vmatpush2.msra.mxu0 0.0
      %10017 = vmatprep.mubr.f32.mxu0 0.0
      %10018 = vmatmul.mubr.f32.gmra.mxu0 %v9951
      %v10019 = vpop.f32.mrf.mxu0
      %v10020 = vadd.f32 0.0, %v10019
      %v10021 = vpop.f32.mrf.mxu0
      %10022 = vdwg.mxu0
      %v10023 = vadd.f32 %v9940, %v10020
      %s10024 = scalar_lea.vmem %s8, 704
      %v10025 = vld [vmem:[%s10024] sm:$0xff]
      %v10026 = vld [vmem:[%s10024 + $0x8] sm:$0xff]
      %v10027 = vld [vmem:[%s10024 + $0x10] sm:$0xff]
      %v10028 = vld [vmem:[%s10024 + $0x18] sm:$0xff]
      %v10029 = vld [vmem:[%s10024 + $0x20] sm:$0xff]
      %v10030 = vld [vmem:[%s10024 + $0x28] sm:$0xff]
      %v10031 = vld [vmem:[%s10024 + $0x30] sm:$0xff]
      %v10032 = vld [vmem:[%s10024 + $0x38] sm:$0xff]
      %v10033 = vrot.slane %v9098, 3
      %v10034 = vsel %vm9132, %v10033, 0
      %10036 = vmatprep.subr.mxu0 0.0
      %10037 = vmatpush1.msra.mxu0 0.0
      %10038 = vmatprep.subr.mxu0 0.0
      %10039 = vmatpush1.msra.mxu0 0.0
      %10040 = vmatprep.subr.mxu0 0.0
      %10041 = vmatpush1.msra.mxu0 0.0
      %10042 = vmatprep.subr.mxu0 0.0
      %10043 = vmatpush1.msra.mxu0 0.0
      %10044 = vmatprep.subr.mxu0 0.0
      %10045 = vmatpush1.msra.mxu0 0.0
      %10046 = vmatprep.subr.mxu0 0.0
      %10047 = vmatpush1.msra.mxu0 0.0
      %10048 = vmatprep.subr.mxu0 0.0
      %10049 = vmatpush1.msra.mxu0 0.0
      %10050 = vmatprep.subr.mxu0 0.0
      %10051 = vmatpush1.msra.mxu0 0.0
      %10052 = vmatprep.subr.mxu0 0.0
      %10053 = vmatpush1.msra.mxu0 %v10032
      %10054 = vmatprep.subr.mxu0 0.0
      %10055 = vmatpush1.msra.mxu0 %v10031
      %10056 = vmatprep.subr.mxu0 0.0
      %10057 = vmatpush1.msra.mxu0 %v10030
      %10058 = vmatprep.subr.mxu0 0.0
      %10059 = vmatpush1.msra.mxu0 %v10029
      %10060 = vmatprep.subr.mxu0 0.0
      %10061 = vmatpush1.msra.mxu0 %v10028
      %10062 = vmatprep.subr.mxu0 0.0
      %10063 = vmatpush1.msra.mxu0 %v10027
      %10064 = vmatprep.subr.mxu0 0.0
      %10065 = vmatpush1.msra.mxu0 %v10026
      %10066 = vmatprep.subr.mxu0 0.0
      %10067 = vmatpush1.msra.mxu0 %v10025
      %10068 = vmatprep.subr.mxu0 0.0
      %10069 = vmatpush2.msra.mxu0 0.0
      %10070 = vmatprep.subr.mxu0 0.0
      %10071 = vmatpush2.msra.mxu0 0.0
      %10072 = vmatprep.subr.mxu0 0.0
      %10073 = vmatpush2.msra.mxu0 0.0
      %10074 = vmatprep.subr.mxu0 0.0
      %10075 = vmatpush2.msra.mxu0 0.0
      %10076 = vmatprep.subr.mxu0 0.0
      %10077 = vmatpush2.msra.mxu0 0.0
      %10078 = vmatprep.subr.mxu0 0.0
      %10079 = vmatpush2.msra.mxu0 0.0
      %10080 = vmatprep.subr.mxu0 0.0
      %10081 = vmatpush2.msra.mxu0 0.0
      %10082 = vmatprep.subr.mxu0 0.0
      %10083 = vmatpush2.msra.mxu0 0.0
      %10084 = vmatprep.subr.mxu0 0.0
      %10085 = vmatpush2.msra.mxu0 0.0
      %10086 = vmatprep.subr.mxu0 0.0
      %10087 = vmatpush2.msra.mxu0 0.0
      %10088 = vmatprep.subr.mxu0 0.0
      %10089 = vmatpush2.msra.mxu0 0.0
      %10090 = vmatprep.subr.mxu0 0.0
      %10091 = vmatpush2.msra.mxu0 0.0
      %10092 = vmatprep.subr.mxu0 0.0
      %10093 = vmatpush2.msra.mxu0 0.0
      %10094 = vmatprep.subr.mxu0 0.0
      %10095 = vmatpush2.msra.mxu0 0.0
      %10096 = vmatprep.subr.mxu0 0.0
      %10097 = vmatpush2.msra.mxu0 0.0
      %10098 = vmatprep.subr.mxu0 0.0
      %10099 = vmatpush2.msra.mxu0 0.0
      %10100 = vmatprep.mubr.f32.mxu0 0.0
      %10101 = vmatmul.mubr.f32.gmra.mxu0 %v10034
      %v10102 = vpop.f32.mrf.mxu0
      %v10103 = vadd.f32 0.0, %v10102
      %v10104 = vpop.f32.mrf.mxu0
      %10105 = vdwg.mxu0
      %v10106 = vadd.f32 %v10023, %v10103
      %s10107 = scalar_lea.vmem %s8, 768
      %v10108 = vld [vmem:[%s10107] sm:$0xff]
      %v10109 = vld [vmem:[%s10107 + $0x8] sm:$0xff]
      %v10110 = vld [vmem:[%s10107 + $0x10] sm:$0xff]
      %v10111 = vld [vmem:[%s10107 + $0x18] sm:$0xff]
      %v10112 = vld [vmem:[%s10107 + $0x20] sm:$0xff]
      %v10113 = vld [vmem:[%s10107 + $0x28] sm:$0xff]
      %v10114 = vld [vmem:[%s10107 + $0x30] sm:$0xff]
      %v10115 = vld [vmem:[%s10107 + $0x38] sm:$0xff]
      %v10116 = vrot.slane %v9098, 4
      %v10117 = vsel %vm9132, %v10116, 0
      %10119 = vmatprep.subr.mxu0 0.0
      %10120 = vmatpush1.msra.mxu0 0.0
      %10121 = vmatprep.subr.mxu0 0.0
      %10122 = vmatpush1.msra.mxu0 0.0
      %10123 = vmatprep.subr.mxu0 0.0
      %10124 = vmatpush1.msra.mxu0 0.0
      %10125 = vmatprep.subr.mxu0 0.0
      %10126 = vmatpush1.msra.mxu0 0.0
      %10127 = vmatprep.subr.mxu0 0.0
      %10128 = vmatpush1.msra.mxu0 0.0
      %10129 = vmatprep.subr.mxu0 0.0
      %10130 = vmatpush1.msra.mxu0 0.0
      %10131 = vmatprep.subr.mxu0 0.0
      %10132 = vmatpush1.msra.mxu0 0.0
      %10133 = vmatprep.subr.mxu0 0.0
      %10134 = vmatpush1.msra.mxu0 0.0
      %10135 = vmatprep.subr.mxu0 0.0
      %10136 = vmatpush1.msra.mxu0 %v10115
      %10137 = vmatprep.subr.mxu0 0.0
      %10138 = vmatpush1.msra.mxu0 %v10114
      %10139 = vmatprep.subr.mxu0 0.0
      %10140 = vmatpush1.msra.mxu0 %v10113
      %10141 = vmatprep.subr.mxu0 0.0
      %10142 = vmatpush1.msra.mxu0 %v10112
      %10143 = vmatprep.subr.mxu0 0.0
      %10144 = vmatpush1.msra.mxu0 %v10111
      %10145 = vmatprep.subr.mxu0 0.0
      %10146 = vmatpush1.msra.mxu0 %v10110
      %10147 = vmatprep.subr.mxu0 0.0
      %10148 = vmatpush1.msra.mxu0 %v10109
      %10149 = vmatprep.subr.mxu0 0.0
      %10150 = vmatpush1.msra.mxu0 %v10108
      %10151 = vmatprep.subr.mxu0 0.0
      %10152 = vmatpush2.msra.mxu0 0.0
      %10153 = vmatprep.subr.mxu0 0.0
      %10154 = vmatpush2.msra.mxu0 0.0
      %10155 = vmatprep.subr.mxu0 0.0
      %10156 = vmatpush2.msra.mxu0 0.0
      %10157 = vmatprep.subr.mxu0 0.0
      %10158 = vmatpush2.msra.mxu0 0.0
      %10159 = vmatprep.subr.mxu0 0.0
      %10160 = vmatpush2.msra.mxu0 0.0
      %10161 = vmatprep.subr.mxu0 0.0
      %10162 = vmatpush2.msra.mxu0 0.0
      %10163 = vmatprep.subr.mxu0 0.0
      %10164 = vmatpush2.msra.mxu0 0.0
      %10165 = vmatprep.subr.mxu0 0.0
      %10166 = vmatpush2.msra.mxu0 0.0
      %10167 = vmatprep.subr.mxu0 0.0
      %10168 = vmatpush2.msra.mxu0 0.0
      %10169 = vmatprep.subr.mxu0 0.0
      %10170 = vmatpush2.msra.mxu0 0.0
      %10171 = vmatprep.subr.mxu0 0.0
      %10172 = vmatpush2.msra.mxu0 0.0
      %10173 = vmatprep.subr.mxu0 0.0
      %10174 = vmatpush2.msra.mxu0 0.0
      %10175 = vmatprep.subr.mxu0 0.0
      %10176 = vmatpush2.msra.mxu0 0.0
      %10177 = vmatprep.subr.mxu0 0.0
      %10178 = vmatpush2.msra.mxu0 0.0
      %10179 = vmatprep.subr.mxu0 0.0
      %10180 = vmatpush2.msra.mxu0 0.0
      %10181 = vmatprep.subr.mxu0 0.0
      %10182 = vmatpush2.msra.mxu0 0.0
      %10183 = vmatprep.mubr.f32.mxu0 0.0
      %10184 = vmatmul.mubr.f32.gmra.mxu0 %v10117
      %v10185 = vpop.f32.mrf.mxu0
      %v10186 = vadd.f32 0.0, %v10185
      %v10187 = vpop.f32.mrf.mxu0
      %10188 = vdwg.mxu0
      %v10189 = vadd.f32 %v10106, %v10186
      %s10190 = scalar_lea.vmem %s8, 832
      %v10191 = vld [vmem:[%s10190] sm:$0xff]
      %v10192 = vld [vmem:[%s10190 + $0x8] sm:$0xff]
      %v10193 = vld [vmem:[%s10190 + $0x10] sm:$0xff]
      %v10194 = vld [vmem:[%s10190 + $0x18] sm:$0xff]
      %v10195 = vld [vmem:[%s10190 + $0x20] sm:$0xff]
      %v10196 = vld [vmem:[%s10190 + $0x28] sm:$0xff]
      %v10197 = vld [vmem:[%s10190 + $0x30] sm:$0xff]
      %v10198 = vld [vmem:[%s10190 + $0x38] sm:$0xff]
      %v10199 = vrot.slane %v9098, 5
      %v10200 = vsel %vm9132, %v10199, 0
      %10202 = vmatprep.subr.mxu0 0.0
      %10203 = vmatpush1.msra.mxu0 0.0
      %10204 = vmatprep.subr.mxu0 0.0
      %10205 = vmatpush1.msra.mxu0 0.0
      %10206 = vmatprep.subr.mxu0 0.0
      %10207 = vmatpush1.msra.mxu0 0.0
      %10208 = vmatprep.subr.mxu0 0.0
      %10209 = vmatpush1.msra.mxu0 0.0
      %10210 = vmatprep.subr.mxu0 0.0
      %10211 = vmatpush1.msra.mxu0 0.0
      %10212 = vmatprep.subr.mxu0 0.0
      %10213 = vmatpush1.msra.mxu0 0.0
      %10214 = vmatprep.subr.mxu0 0.0
      %10215 = vmatpush1.msra.mxu0 0.0
      %10216 = vmatprep.subr.mxu0 0.0
      %10217 = vmatpush1.msra.mxu0 0.0
      %10218 = vmatprep.subr.mxu0 0.0
      %10219 = vmatpush1.msra.mxu0 %v10198
      %10220 = vmatprep.subr.mxu0 0.0
      %10221 = vmatpush1.msra.mxu0 %v10197
      %10222 = vmatprep.subr.mxu0 0.0
      %10223 = vmatpush1.msra.mxu0 %v10196
      %10224 = vmatprep.subr.mxu0 0.0
      %10225 = vmatpush1.msra.mxu0 %v10195
      %10226 = vmatprep.subr.mxu0 0.0
      %10227 = vmatpush1.msra.mxu0 %v10194
      %10228 = vmatprep.subr.mxu0 0.0
      %10229 = vmatpush1.msra.mxu0 %v10193
      %10230 = vmatprep.subr.mxu0 0.0
      %10231 = vmatpush1.msra.mxu0 %v10192
      %10232 = vmatprep.subr.mxu0 0.0
      %10233 = vmatpush1.msra.mxu0 %v10191
      %10234 = vmatprep.subr.mxu0 0.0
      %10235 = vmatpush2.msra.mxu0 0.0
      %10236 = vmatprep.subr.mxu0 0.0
      %10237 = vmatpush2.msra.mxu0 0.0
      %10238 = vmatprep.subr.mxu0 0.0
      %10239 = vmatpush2.msra.mxu0 0.0
      %10240 = vmatprep.subr.mxu0 0.0
      %10241 = vmatpush2.msra.mxu0 0.0
      %10242 = vmatprep.subr.mxu0 0.0
      %10243 = vmatpush2.msra.mxu0 0.0
      %10244 = vmatprep.subr.mxu0 0.0
      %10245 = vmatpush2.msra.mxu0 0.0
      %10246 = vmatprep.subr.mxu0 0.0
      %10247 = vmatpush2.msra.mxu0 0.0
      %10248 = vmatprep.subr.mxu0 0.0
      %10249 = vmatpush2.msra.mxu0 0.0
      %10250 = vmatprep.subr.mxu0 0.0
      %10251 = vmatpush2.msra.mxu0 0.0
      %10252 = vmatprep.subr.mxu0 0.0
      %10253 = vmatpush2.msra.mxu0 0.0
      %10254 = vmatprep.subr.mxu0 0.0
      %10255 = vmatpush2.msra.mxu0 0.0
      %10256 = vmatprep.subr.mxu0 0.0
      %10257 = vmatpush2.msra.mxu0 0.0
      %10258 = vmatprep.subr.mxu0 0.0
      %10259 = vmatpush2.msra.mxu0 0.0
      %10260 = vmatprep.subr.mxu0 0.0
      %10261 = vmatpush2.msra.mxu0 0.0
      %10262 = vmatprep.subr.mxu0 0.0
      %10263 = vmatpush2.msra.mxu0 0.0
      %10264 = vmatprep.subr.mxu0 0.0
      %10265 = vmatpush2.msra.mxu0 0.0
      %10266 = vmatprep.mubr.f32.mxu0 0.0
      %10267 = vmatmul.mubr.f32.gmra.mxu0 %v10200
      %v10268 = vpop.f32.mrf.mxu0
      %v10269 = vadd.f32 0.0, %v10268
      %v10270 = vpop.f32.mrf.mxu0
      %10271 = vdwg.mxu0
      %v10272 = vadd.f32 %v10189, %v10269
      %s10273 = scalar_lea.vmem %s8, 896
      %v10274 = vld [vmem:[%s10273] sm:$0xff]
      %v10275 = vld [vmem:[%s10273 + $0x8] sm:$0xff]
      %v10276 = vld [vmem:[%s10273 + $0x10] sm:$0xff]
      %v10277 = vld [vmem:[%s10273 + $0x18] sm:$0xff]
      %v10278 = vld [vmem:[%s10273 + $0x20] sm:$0xff]
      %v10279 = vld [vmem:[%s10273 + $0x28] sm:$0xff]
      %v10280 = vld [vmem:[%s10273 + $0x30] sm:$0xff]
      %v10281 = vld [vmem:[%s10273 + $0x38] sm:$0xff]
      %v10282 = vrot.slane %v9098, 6
      %v10283 = vsel %vm9132, %v10282, 0
      %10285 = vmatprep.subr.mxu0 0.0
      %10286 = vmatpush1.msra.mxu0 0.0
      %10287 = vmatprep.subr.mxu0 0.0
      %10288 = vmatpush1.msra.mxu0 0.0
      %10289 = vmatprep.subr.mxu0 0.0
      %10290 = vmatpush1.msra.mxu0 0.0
      %10291 = vmatprep.subr.mxu0 0.0
      %10292 = vmatpush1.msra.mxu0 0.0
      %10293 = vmatprep.subr.mxu0 0.0
      %10294 = vmatpush1.msra.mxu0 0.0
      %10295 = vmatprep.subr.mxu0 0.0
      %10296 = vmatpush1.msra.mxu0 0.0
      %10297 = vmatprep.subr.mxu0 0.0
      %10298 = vmatpush1.msra.mxu0 0.0
      %10299 = vmatprep.subr.mxu0 0.0
      %10300 = vmatpush1.msra.mxu0 0.0
      %10301 = vmatprep.subr.mxu0 0.0
      %10302 = vmatpush1.msra.mxu0 %v10281
      %10303 = vmatprep.subr.mxu0 0.0
      %10304 = vmatpush1.msra.mxu0 %v10280
      %10305 = vmatprep.subr.mxu0 0.0
      %10306 = vmatpush1.msra.mxu0 %v10279
      %10307 = vmatprep.subr.mxu0 0.0
      %10308 = vmatpush1.msra.mxu0 %v10278
      %10309 = vmatprep.subr.mxu0 0.0
      %10310 = vmatpush1.msra.mxu0 %v10277
      %10311 = vmatprep.subr.mxu0 0.0
      %10312 = vmatpush1.msra.mxu0 %v10276
      %10313 = vmatprep.subr.mxu0 0.0
      %10314 = vmatpush1.msra.mxu0 %v10275
      %10315 = vmatprep.subr.mxu0 0.0
      %10316 = vmatpush1.msra.mxu0 %v10274
      %10317 = vmatprep.subr.mxu0 0.0
      %10318 = vmatpush2.msra.mxu0 0.0
      %10319 = vmatprep.subr.mxu0 0.0
      %10320 = vmatpush2.msra.mxu0 0.0
      %10321 = vmatprep.subr.mxu0 0.0
      %10322 = vmatpush2.msra.mxu0 0.0
      %10323 = vmatprep.subr.mxu0 0.0
      %10324 = vmatpush2.msra.mxu0 0.0
      %10325 = vmatprep.subr.mxu0 0.0
      %10326 = vmatpush2.msra.mxu0 0.0
      %10327 = vmatprep.subr.mxu0 0.0
      %10328 = vmatpush2.msra.mxu0 0.0
      %10329 = vmatprep.subr.mxu0 0.0
      %10330 = vmatpush2.msra.mxu0 0.0
      %10331 = vmatprep.subr.mxu0 0.0
      %10332 = vmatpush2.msra.mxu0 0.0
      %10333 = vmatprep.subr.mxu0 0.0
      %10334 = vmatpush2.msra.mxu0 0.0
      %10335 = vmatprep.subr.mxu0 0.0
      %10336 = vmatpush2.msra.mxu0 0.0
      %10337 = vmatprep.subr.mxu0 0.0
      %10338 = vmatpush2.msra.mxu0 0.0
      %10339 = vmatprep.subr.mxu0 0.0
      %10340 = vmatpush2.msra.mxu0 0.0
      %10341 = vmatprep.subr.mxu0 0.0
      %10342 = vmatpush2.msra.mxu0 0.0
      %10343 = vmatprep.subr.mxu0 0.0
      %10344 = vmatpush2.msra.mxu0 0.0
      %10345 = vmatprep.subr.mxu0 0.0
      %10346 = vmatpush2.msra.mxu0 0.0
      %10347 = vmatprep.subr.mxu0 0.0
      %10348 = vmatpush2.msra.mxu0 0.0
      %10349 = vmatprep.mubr.f32.mxu0 0.0
      %10350 = vmatmul.mubr.f32.gmra.mxu0 %v10283
      %v10351 = vpop.f32.mrf.mxu0
      %v10352 = vadd.f32 0.0, %v10351
      %v10353 = vpop.f32.mrf.mxu0
      %10354 = vdwg.mxu0
      %v10355 = vadd.f32 %v10272, %v10352
      %s10356 = scalar_lea.vmem %s8, 960
      %v10357 = vld [vmem:[%s10356] sm:$0xff]
      %v10358 = vld [vmem:[%s10356 + $0x8] sm:$0xff]
      %v10359 = vld [vmem:[%s10356 + $0x10] sm:$0xff]
      %v10360 = vld [vmem:[%s10356 + $0x18] sm:$0xff]
      %v10361 = vld [vmem:[%s10356 + $0x20] sm:$0xff]
      %v10362 = vld [vmem:[%s10356 + $0x28] sm:$0xff]
      %v10363 = vld [vmem:[%s10356 + $0x30] sm:$0xff]
      %v10364 = vld [vmem:[%s10356 + $0x38] sm:$0xff]
      %v10365 = vrot.slane %v9098, 7
      %v10366 = vsel %vm9132, %v10365, 0
      %10368 = vmatprep.subr.mxu0 0.0
      %10369 = vmatpush1.msra.mxu0 0.0
      %10370 = vmatprep.subr.mxu0 0.0
      %10371 = vmatpush1.msra.mxu0 0.0
      %10372 = vmatprep.subr.mxu0 0.0
      %10373 = vmatpush1.msra.mxu0 0.0
      %10374 = vmatprep.subr.mxu0 0.0
      %10375 = vmatpush1.msra.mxu0 0.0
      %10376 = vmatprep.subr.mxu0 0.0
      %10377 = vmatpush1.msra.mxu0 0.0
      %10378 = vmatprep.subr.mxu0 0.0
      %10379 = vmatpush1.msra.mxu0 0.0
      %10380 = vmatprep.subr.mxu0 0.0
      %10381 = vmatpush1.msra.mxu0 0.0
      %10382 = vmatprep.subr.mxu0 0.0
      %10383 = vmatpush1.msra.mxu0 0.0
      %10384 = vmatprep.subr.mxu0 0.0
      %10385 = vmatpush1.msra.mxu0 %v10364
      %10386 = vmatprep.subr.mxu0 0.0
      %10387 = vmatpush1.msra.mxu0 %v10363
      %10388 = vmatprep.subr.mxu0 0.0
      %10389 = vmatpush1.msra.mxu0 %v10362
      %10390 = vmatprep.subr.mxu0 0.0
      %10391 = vmatpush1.msra.mxu0 %v10361
      %10392 = vmatprep.subr.mxu0 0.0
      %10393 = vmatpush1.msra.mxu0 %v10360
      %10394 = vmatprep.subr.mxu0 0.0
      %10395 = vmatpush1.msra.mxu0 %v10359
      %10396 = vmatprep.subr.mxu0 0.0
      %10397 = vmatpush1.msra.mxu0 %v10358
      %10398 = vmatprep.subr.mxu0 0.0
      %10399 = vmatpush1.msra.mxu0 %v10357
      %10400 = vmatprep.subr.mxu0 0.0
      %10401 = vmatpush2.msra.mxu0 0.0
      %10402 = vmatprep.subr.mxu0 0.0
      %10403 = vmatpush2.msra.mxu0 0.0
      %10404 = vmatprep.subr.mxu0 0.0
      %10405 = vmatpush2.msra.mxu0 0.0
      %10406 = vmatprep.subr.mxu0 0.0
      %10407 = vmatpush2.msra.mxu0 0.0
      %10408 = vmatprep.subr.mxu0 0.0
      %10409 = vmatpush2.msra.mxu0 0.0
      %10410 = vmatprep.subr.mxu0 0.0
      %10411 = vmatpush2.msra.mxu0 0.0
      %10412 = vmatprep.subr.mxu0 0.0
      %10413 = vmatpush2.msra.mxu0 0.0
      %10414 = vmatprep.subr.mxu0 0.0
      %10415 = vmatpush2.msra.mxu0 0.0
      %10416 = vmatprep.subr.mxu0 0.0
      %10417 = vmatpush2.msra.mxu0 0.0
      %10418 = vmatprep.subr.mxu0 0.0
      %10419 = vmatpush2.msra.mxu0 0.0
      %10420 = vmatprep.subr.mxu0 0.0
      %10421 = vmatpush2.msra.mxu0 0.0
      %10422 = vmatprep.subr.mxu0 0.0
      %10423 = vmatpush2.msra.mxu0 0.0
      %10424 = vmatprep.subr.mxu0 0.0
      %10425 = vmatpush2.msra.mxu0 0.0
      %10426 = vmatprep.subr.mxu0 0.0
      %10427 = vmatpush2.msra.mxu0 0.0
      %10428 = vmatprep.subr.mxu0 0.0
      %10429 = vmatpush2.msra.mxu0 0.0
      %10430 = vmatprep.subr.mxu0 0.0
      %10431 = vmatpush2.msra.mxu0 0.0
      %10432 = vmatprep.mubr.f32.mxu0 0.0
      %10433 = vmatmul.mubr.f32.gmra.mxu0 %v10366
      %v10434 = vpop.f32.mrf.mxu0
      %v10435 = vadd.f32 0.0, %v10434
      %v10436 = vpop.f32.mrf.mxu0
      %10437 = vdwg.mxu0
      %v10438 = vadd.f32 %v10355, %v10435
      %v10439 = vld [vmem:[%s9] sm:$0x1]
      %v10440 = vadd.f32 %v10438, %v10439
      %vm10441 = vcmp.ge.f32.partialorder %v10440, 0.0
      %v10442 = vmul.f32 %v10440, 0.01
      %v10443 = vsel %vm10441, %v10440, %v10442
      %v10444 = vld [vmem:[%s10] sm:$0xff]
      %v10445 = vld [vmem:[%s10 + $0x8] sm:$0xff]
      %v10446 = vld [vmem:[%s10 + $0x10] sm:$0xff]
      %v10447 = vld [vmem:[%s10 + $0x18] sm:$0xff]
      %v10448 = vld [vmem:[%s10 + $0x20] sm:$0xff]
      %v10449 = vld [vmem:[%s10 + $0x28] sm:$0xff]
      %v10450 = vld [vmem:[%s10 + $0x30] sm:$0xff]
      %v10451 = vld [vmem:[%s10 + $0x38] sm:$0xff]
      %v10452 = vld [vmem:[%s10 + $0x40] sm:$0xff]
      %v10453 = vld [vmem:[%s10 + $0x48] sm:$0xff]
      %v10454 = vld [vmem:[%s10 + $0x50] sm:$0xff]
      %v10455 = vld [vmem:[%s10 + $0x58] sm:$0xff]
      %v10456 = vld [vmem:[%s10 + $0x60] sm:$0xff]
      %v10457 = vld [vmem:[%s10 + $0x68] sm:$0xff]
      %v10458 = vld [vmem:[%s10 + $0x70] sm:$0xff]
      %v10459 = vld [vmem:[%s10 + $0x78] sm:$0xff]
      %v10460 = vld [vmem:[%s11] sm:$0x1]
      %10461 = vmatprep.subr.mxu0 0.0
      %10462 = vmatpush1.msra.mxu0 %v10459
      %10463 = vmatprep.subr.mxu0 0.0
      %10464 = vmatpush1.msra.mxu0 %v10458
      %10465 = vmatprep.subr.mxu0 0.0
      %10466 = vmatpush1.msra.mxu0 %v10457
      %10467 = vmatprep.subr.mxu0 0.0
      %10468 = vmatpush1.msra.mxu0 %v10456
      %10469 = vmatprep.subr.mxu0 0.0
      %10470 = vmatpush1.msra.mxu0 %v10455
      %10471 = vmatprep.subr.mxu0 0.0
      %10472 = vmatpush1.msra.mxu0 %v10454
      %10473 = vmatprep.subr.mxu0 0.0
      %10474 = vmatpush1.msra.mxu0 %v10453
      %10475 = vmatprep.subr.mxu0 0.0
      %10476 = vmatpush1.msra.mxu0 %v10452
      %10477 = vmatprep.subr.mxu0 0.0
      %10478 = vmatpush1.msra.mxu0 %v10451
      %10479 = vmatprep.subr.mxu0 0.0
      %10480 = vmatpush1.msra.mxu0 %v10450
      %10481 = vmatprep.subr.mxu0 0.0
      %10482 = vmatpush1.msra.mxu0 %v10449
      %10483 = vmatprep.subr.mxu0 0.0
      %10484 = vmatpush1.msra.mxu0 %v10448
      %10485 = vmatprep.subr.mxu0 0.0
      %10486 = vmatpush1.msra.mxu0 %v10447
      %10487 = vmatprep.subr.mxu0 0.0
      %10488 = vmatpush1.msra.mxu0 %v10446
      %10489 = vmatprep.subr.mxu0 0.0
      %10490 = vmatpush1.msra.mxu0 %v10445
      %10491 = vmatprep.subr.mxu0 0.0
      %10492 = vmatpush1.msra.mxu0 %v10444
      %10493 = vmatprep.subr.mxu0 0.0
      %10494 = vmatpush2.msra.mxu0 0.0
      %10495 = vmatprep.subr.mxu0 0.0
      %10496 = vmatpush2.msra.mxu0 0.0
      %10497 = vmatprep.subr.mxu0 0.0
      %10498 = vmatpush2.msra.mxu0 0.0
      %10499 = vmatprep.subr.mxu0 0.0
      %10500 = vmatpush2.msra.mxu0 0.0
      %10501 = vmatprep.subr.mxu0 0.0
      %10502 = vmatpush2.msra.mxu0 0.0
      %10503 = vmatprep.subr.mxu0 0.0
      %10504 = vmatpush2.msra.mxu0 0.0
      %10505 = vmatprep.subr.mxu0 0.0
      %10506 = vmatpush2.msra.mxu0 0.0
      %10507 = vmatprep.subr.mxu0 0.0
      %10508 = vmatpush2.msra.mxu0 0.0
      %10509 = vmatprep.subr.mxu0 0.0
      %10510 = vmatpush2.msra.mxu0 0.0
      %10511 = vmatprep.subr.mxu0 0.0
      %10512 = vmatpush2.msra.mxu0 0.0
      %10513 = vmatprep.subr.mxu0 0.0
      %10514 = vmatpush2.msra.mxu0 0.0
      %10515 = vmatprep.subr.mxu0 0.0
      %10516 = vmatpush2.msra.mxu0 0.0
      %10517 = vmatprep.subr.mxu0 0.0
      %10518 = vmatpush2.msra.mxu0 0.0
      %10519 = vmatprep.subr.mxu0 0.0
      %10520 = vmatpush2.msra.mxu0 0.0
      %10521 = vmatprep.subr.mxu0 0.0
      %10522 = vmatpush2.msra.mxu0 0.0
      %10523 = vmatprep.subr.mxu0 0.0
      %10524 = vmatpush2.msra.mxu0 0.0
      %10525 = vmatprep.mubr.f32.mxu0 0.0
      %10526 = vmatmul.mubr.f32.gmra.mxu0 %v10443
      %v10527 = vpop.f32.mrf.mxu0
      %v10528 = vadd.f32 %v10460, %v10527
      %v10529 = vpop.f32.mrf.mxu0
      %10530 = vdwg.mxu0
      %v10531 = vlaneseq
      %v10532 = vshrl.u32 %v10531, 7
      %v10533 = vsub.s32 0, %v10532
      %v10534 = vrot.slane %v10528, %v10533
      %10535 = vst [vmem:[%s413] sm:$0xff] %v10534
      %p10536 = scmp.lt.s32.totalorder %s23, 1
      %s10537 = scalar_select %p10536, %s23, 1
      %s10538 = smul.addr %s10537, 8
      %s10539 = scalar_lea.vmem %s12, %s10538
      // Predicated region
      $region69: #{dqn_forward.1} parent=67 // pred_check
        %p10540 = pneg %p298
      $region70: #{dqn_forward.1} parent=67 // pred_check_branch
        %10542 = sbr.rel (%p10540) target = $region72
      $region71: #{dqn_forward.1} parent=67 // pred_region
        _
      $region72: #{dqn_forward.1} parent=67 // pred_fallthru
        _
    $region68: #{dqn_forward.1} parent=5 // pred_fallthru
      _
    %p10543 = scmp.le.s32.totalorder 2, %s18
    // Predicated region
    $region73: #{dqn_forward.1} parent=5 // pred_check
      %p10544 = pneg %p10543
    $region74: #{dqn_forward.1} parent=5 // pred_check_branch
      %10546 = sbr.rel (%p10544) target = $region76
    $region75: #{dqn_forward.1} parent=5 // pred_region
      %s10547 = ssub.s32 %s18, 2
      // Predicated region
      $region77: #{dqn_forward.1} parent=75 // pred_check
        %p10548 = pneg %p304
      $region78: #{dqn_forward.1} parent=75 // pred_check_branch
        %10550 = sbr.rel (%p10548) target = $region80
      $region79: #{dqn_forward.1} parent=75 // pred_region
        %p10551 = scmp.lt.s32.totalorder %s24, 1
        %s10552 = scalar_select %p10551, %s24, 1
        %s10553 = smul.addr %s10552, 8
        %s10554 = scalar_lea.vmem %s12, %s10553
      $region80: #{dqn_forward.1} parent=75 // pred_fallthru
        _
    $region76: #{dqn_forward.1} parent=5 // pred_fallthru
      _
  $region6: #{dqn_forward.1} parent=0 // loop_footer
    %s22 = sadd.s32 1, %s18
  $region7: #{dqn_forward.1} parent=0 // loop_footer_branch
    %17 = sbr.rel target = $region3
  $region8: #{dqn_forward.1} parent=0 // loop_exit
    _

</llo_original>
